<compile_context>
chip_gen: v5e
topology: v5e:2x2
jax: 0.10.0
libtpu: 0.0.40
codegen_flags: <defaults>
</compile_context>

<pallas_src>
import jax
import jax.numpy as jnp
import numpy as np
from jax.experimental import pallas as pl
from jax.experimental.pallas import tpu as pltpu

_WEIGHT_DTYPE = jnp.bfloat16     # HBM storage dtype for the folded NoisyLinear weights

# conv stack of the torch module: (out_channels, kernel, stride)
_CONV_CFG = ((16, 5, 3), (32, 4, 2), (64, 3, 1))


def _round_up(v, m):
    return -(-v // m) * m


# ----------------------------- Pallas kernels ------------------------------

def _conv_gemm_kernel(x_ref, w_ref, b_ref, o_ref):
    """im2col GEMM + bias + ReLU for one conv layer (single block = whole problem)."""
    out = jnp.dot(x_ref[...], w_ref[...], preferred_element_type=jnp.float32)
    o_ref[...] = jnp.maximum(out + b_ref[...], 0.0).astype(o_ref.dtype)


def _fused_dense_kernel(x_ref, w1_ref, b1_ref, w2_ref, b2_ref, o_ref):
    """q = relu(x @ W1_eff + b1_eff) @ W2_eff + b2_eff.
    Noise already folded into W/b at prep time; weights stream as bf16, f32 accumulation.
    h1 (8x512 f32) stays on-chip; q is written directly (one kernel launch for the head)."""
    x = x_ref[...].astype(w1_ref.dtype)
    h1 = jnp.dot(x, w1_ref[...], preferred_element_type=jnp.float32)
    h1 = jnp.maximum(h1 + b1_ref[...], 0.0)
    q = jnp.dot(h1.astype(w2_ref.dtype), w2_ref[...], preferred_element_type=jnp.float32)
    o_ref[...] = (q + b2_ref[...]).astype(o_ref.dtype)


# ----------------------------- kernel wrappers -----------------------------

def conv_gemm(x, wp, bp):
    """Single-shot GEMM + bias + ReLU.  wp: [Kp, oc] (rows zero-padded), bp: [1, oc]."""
    M, K = x.shape
    Kp, oc = wp.shape
    Mp = _round_up(M, 8)
    xp = jnp.pad(x, ((0, Mp - M), (0, Kp - K)))
    ce = pl.CostEstimate(
        flops=2 * Mp * Kp * oc, transcendentals=0,
        bytes_accessed=xp.size * 4 + wp.size * 4 + bp.size * 4 + Mp * oc * 4)
    out = pl.pallas_call(
        _conv_gemm_kernel,
        out_shape=jax.ShapeDtypeStruct((Mp, oc), jnp.float32),
        grid=(1,),
        in_specs=[pl.BlockSpec((Mp, Kp), lambda i: (0, 0)),
                  pl.BlockSpec((Kp, oc), lambda i: (0, 0)),
                  pl.BlockSpec((1, oc), lambda i: (0, 0))],
        out_specs=pl.BlockSpec((Mp, oc), lambda i: (0, 0)),
        compiler_params=pltpu.CompilerParams(dimension_semantics=("arbitrary",)),
        cost_estimate=ce,
    )(xp, wp, bp)
    return out[:M]


def conv2d_relu_nhwc(x, wp, bp, oc, k, stride):
    """NHWC Conv2d (VALID, stride) + ReLU via channels-last im2col + fused Pallas GEMM."""
    B, H, W, C = x.shape
    OH = (H - k) // stride + 1
    OW = (W - k) // stride + 1
    cols = []
    for i in range(k):
        for j in range(k):
            cols.append(x[:, i:i + stride * OH:stride, j:j + stride * OW:stride, :])
    patches = jnp.concatenate(cols, axis=-1).reshape(B * OH * OW, k * k * C)
    out = conv_gemm(patches, wp, bp)
    return out.reshape(B, OH, OW, oc)


def fused_noisy_dense(flat, w1, b1, w2, b2, n_actions):
    """relu(flat @ W1_eff + b1_eff) @ W2_eff + b2_eff in one single-shot pallas_call."""
    M, K = flat.shape
    Kp, N1 = w1.shape
    N2 = w2.shape[1]
    Mp = _round_up(M, 8)
    xp = jnp.pad(flat, ((0, Mp - M), (0, Kp - K)))
    ce = pl.CostEstimate(
        flops=2 * Mp * Kp * N1 + 2 * Mp * N1 * N2, transcendentals=0,
        bytes_accessed=(xp.size * 4 + w1.size * 2 + b1.size * 4 +
                        w2.size * 2 + b2.size * 4 + Mp * N2 * 4))
    q = pl.pallas_call(
        _fused_dense_kernel,
        out_shape=jax.ShapeDtypeStruct((Mp, N2), jnp.float32),
        grid=(1,),
        in_specs=[pl.BlockSpec((Mp, Kp), lambda i: (0, 0)),
                  pl.BlockSpec((Kp, N1), lambda i: (0, 0)),
                  pl.BlockSpec((1, N1), lambda i: (0, 0)),
                  pl.BlockSpec((N1, N2), lambda i: (0, 0)),
                  pl.BlockSpec((1, N2), lambda i: (0, 0))],
        out_specs=pl.BlockSpec((Mp, N2), lambda i: (0, 0)),
        compiler_params=pltpu.CompilerParams(dimension_semantics=("arbitrary",)),
        cost_estimate=ce,
    )(xp, w1, b1, w2, b2)
    return q[:M, :n_actions]


# ----------------------------- one-time preprocessing ----------------------

def prepare_params(params, eps):
    """One-time layout/cast hoisting AND eps folding.
    IMPORTANT: torch's NoisyLinear resamples eps inside every forward; this fold bakes a
    specific eps sample into the effective weights, so prepare_params must be re-run
    whenever eps is resampled."""
    prep = {}
    # Conv GEMM matrices, rows ordered (kh, kw, c) to match the NHWC im2col; kept f32 (tiny).
    for idx, (oc, k, s) in enumerate(_CONV_CFG, start=1):
        name = f"conv{idx}"
        w = params[name + "_w"]                               # [OC, C, KH, KW] (torch layout)
        wg = jnp.transpose(w, (2, 3, 1, 0)).reshape(-1, oc)   # [k*k*C, oc]
        K = wg.shape[0]
        Kp = _round_up(K, 128)
        prep[name + "_w"] = jnp.pad(wg, ((0, Kp - K), (0, 0)))
        prep[name + "_b"] = params[name + "_b"].reshape(1, -1)

    def fold(name, ein, eout, nhwc_reorder):
        m = params[name + "_matrix"]                          # [N, K]
        vm = params[name + "_var_matrix"]
        N, K = m.shape
        w_eff = (m + vm * jnp.outer(eout, ein)).T             # [K, N], f32 fold
        if nhwc_reorder:
            # torch Flatten order is (c, h, w); the conv stack here is NHWC, so reorder rows
            # to (h, w, c) so the forward needs no transpose before the dense kernel.
            c_last = _CONV_CFG[-1][0]
            p_last = K // c_last
            w_eff = w_eff.reshape(c_last, p_last, N).transpose(1, 0, 2).reshape(K, N)
        Kp = _round_up(K, 128)
        Np = _round_up(N, 128)
        prep[name + "_w"] = jnp.pad(w_eff, ((0, Kp - K), (0, Np - N))).astype(_WEIGHT_DTYPE)
        b_eff = params[name + "_bias"] + params[name + "_var_bias"] * eout
        prep[name + "_b"] = jnp.pad(b_eff.reshape(1, -1), ((0, 0), (0, Np - N)))

    fold("nl1", eps["in1"], eps["out1"], nhwc_reorder=True)
    fold("nl2", eps["in2"], eps["out2"], nhwc_reorder=False)
    return prep


# ----------------------------- model forward -------------------------------

def noisy_dqn_forward(prep, x, n_actions):
    B = x.shape[0]
    h = jnp.transpose(x, (0, 2, 3, 1))                 # NCHW -> NHWC once, at the boundary
    for idx, (oc, k, s) in enumerate(_CONV_CFG, start=1):
        h = conv2d_relu_nhwc(h, prep[f"conv{idx}_w"], prep[f"conv{idx}_b"], oc, k, s)
    flat = h.reshape(B, -1)                            # NHWC flatten; W1_eff rows pre-reordered
    return fused_noisy_dense(flat, prep["nl1_w"], prep["nl1_b"],
                             prep["nl2_w"], prep["nl2_b"], n_actions)


forward_jit = jax.jit(noisy_dqn_forward, static_argnums=(2,))


# ----------------------------- pure-jnp references -------------------------

def reference_forward(params, x, eps, bf16_dense=True):
    """Pure-jnp reference. bf16_dense=True mirrors the kernel numerics (eps folded in f32,
    dense weights/activations rounded to bf16, f32 accumulation); bf16_dense=False is the
    pure-f32 torch-equivalent math (the torch NoisyLinear uses raw normal eps, no transform)."""

    def conv(x, w, b, s):
        OC, C, KH, KW = w.shape
        B, _, H, W = x.shape
        OH = (H - KH) // s + 1
        OW = (W - KW) // s + 1
        cols = []
        for i in range(KH):
            for j in range(KW):
                cols.append(x[:, :, i:i + s * OH:s, j:j + s * OW:s])
        p = jnp.stack(cols, axis=-1).transpose(0, 2, 3, 1, 4)
        p = p.reshape(B * OH * OW, C * KH * KW)
        out = jnp.maximum(p @ w.reshape(OC, -1).T + b, 0.0)
        return out.reshape(B, OH, OW, OC).transpose(0, 3, 1, 2)

    def maybe_bf16(a):
        return a.astype(jnp.bfloat16).astype(jnp.float32) if bf16_dense else a

    def noisy(h, m, vm, b, vb, ei, eo, relu):
        w_eff = (m + vm * jnp.outer(eo, ei)).T             # same fold as prepare_params
        b_eff = b + vb * eo
        out = maybe_bf16(h) @ maybe_bf16(w_eff) + b_eff
        return jnp.maximum(out, 0.0) if relu else out

    h = conv(x, params['conv1_w'], params['conv1_b'], 3)
    h = conv(h, params['conv2_w'], params['conv2_b'], 2)
    h = conv(h, params['conv3_w'], params['conv3_b'], 1)
    flat = h.reshape(x.shape[0], -1)                       # torch (c,h,w) flatten order
    h1 = noisy(flat, params['nl1_matrix'], params['nl1_var_matrix'],
               params['nl1_bias'], params['nl1_var_bias'],
               eps['in1'], eps['out1'], True)
    return noisy(h1, params['nl2_matrix'], params['nl2_var_matrix'],
                 params['nl2_bias'], params['nl2_var_bias'],
                 eps['in2'], eps['out2'], False)


# ----------------------------- param / noise init --------------------------

def init_params(key, state_shape, n_actions):
    C = state_shape[0]
    keys = jax.random.split(key, 10)

    def uni(k, shape, fan_in):
        bound = 1.0 / np.sqrt(fan_in)
        return jax.random.uniform(k, shape, jnp.float32, -bound, bound)

    in1 = 64 * 49
    return {
        'conv1_w': uni(keys[0], (16, C, 5, 5), C * 25),
        'conv1_b': uni(keys[1], (16,), C * 25),
        'conv2_w': uni(keys[2], (32, 16, 4, 4), 16 * 16),
        'conv2_b': uni(keys[3], (32,), 16 * 16),
        'conv3_w': uni(keys[4], (64, 32, 3, 3), 32 * 9),
        'conv3_b': uni(keys[5], (64,), 32 * 9),
        'nl1_matrix': uni(keys[6], (512, in1), in1),
        'nl1_var_matrix': jnp.full((512, in1), 0.5 / np.sqrt(in1), jnp.float32),
        'nl1_bias': uni(keys[7], (512,), in1),
        'nl1_var_bias': jnp.full((512,), 0.5 / np.sqrt(in1), jnp.float32),
        'nl2_matrix': uni(keys[8], (n_actions, 512), 512),
        'nl2_var_matrix': jnp.full((n_actions, 512), 0.5 / np.sqrt(512), jnp.float32),
        'nl2_bias': uni(keys[9], (n_actions,), 512),
        'nl2_var_bias': jnp.full((n_actions,), 0.5 / np.sqrt(512), jnp.float32),
    }


if __name__ == "__main__":
    # The architecture hard-codes Flatten dim 64*49 => conv3 output is 7x7
    # => input spatial must be 62x62 with these kernels/strides.
    batch, n_actions = 2, 6
    state_shape = (4, 62, 62)

    key = jax.random.PRNGKey(0)
    kx, kp, k1, k2, k3, k4 = jax.random.split(key, 6)

    x = jax.random.normal(kx, (batch,) + state_shape, jnp.float32)
    params = init_params(kp, state_shape, n_actions)
    # factorised NoisyLinear noise (torch.randn equivalents). torch resamples these inside
    # every forward; here they are explicit inputs folded into the effective weights by
    # prepare_params, so prepare_params must be re-run per noise sample.
    eps = {
        'in1': jax.random.normal(k1, (64 * 49,), jnp.float32),
        'out1': jax.random.normal(k2, (512,), jnp.float32),
        'in2': jax.random.normal(k3, (512,), jnp.float32),
        'out2': jax.random.normal(k4, (n_actions,), jnp.float32),
    }

    prep = prepare_params(params, eps)          # one-time layout hoisting + eps folding

    q = forward_jit(prep, x, n_actions)
    q = jax.block_until_ready(q)
    assert q.shape == (batch, n_actions), q.shape

    # Tight check against a reference mirroring the kernel numerics (bf16 dense weights).
    q_ref = jax.block_until_ready(reference_forward(params, x, eps, bf16_dense=True))
    np.testing.assert_allclose(np.asarray(q), np.asarray(q_ref), rtol=2e-3, atol=2e-3)
    # Loose sanity check against the pure-f32 torch-equivalent math.
    q_f32 = jax.block_until_ready(reference_forward(params, x, eps, bf16_dense=False))
    np.testing.assert_allclose(np.asarray(q), np.asarray(q_f32), rtol=5e-2, atol=5e-2)

    print("KERNEL_OK")
</pallas_src>

<mosaic_0001>
module attributes {stable_mosaic.version = 11 : i64} {
  func.func @_conv_gemm_kernel(%arg0: i32, %arg1: memref<800x128xf32, #tpu.memory_space<vmem>>, %arg2: memref<128x16xf32, #tpu.memory_space<vmem>>, %arg3: memref<1x16xf32, #tpu.memory_space<vmem>>, %arg4: memref<800x16xf32, #tpu.memory_space<vmem>>) attributes {dimension_semantics = [#tpu.dimension_semantics<arbitrary>], iteration_bounds = array<i64: 1>, scalar_prefetch = 0 : i64, scratch_operands = 0 : i64, tpu.core_type = #tpu.core_type<tc>, window_params = [{pipeline_mode = #tpu.pipeline_mode<synchronous>, transform_indices = @transform_0, window_bounds = array<i64: 800, 128>}, {pipeline_mode = #tpu.pipeline_mode<synchronous>, transform_indices = @transform_1, window_bounds = array<i64: 128, 16>}, {pipeline_mode = #tpu.pipeline_mode<synchronous>, transform_indices = @transform_2, window_bounds = array<i64: 1, 16>}, {pipeline_mode = #tpu.pipeline_mode<synchronous>, transform_indices = @transform_3, window_bounds = array<i64: 800, 16>}]} {
    %c0 = arith.constant 0 : index
    %c0_0 = arith.constant 0 : index
    %0 = vector.load %arg1[%c0, %c0_0] : memref<800x128xf32, #tpu.memory_space<vmem>>, vector<800x128xf32>
    %c0_1 = arith.constant 0 : index
    %c0_2 = arith.constant 0 : index
    %1 = vector.load %arg2[%c0_1, %c0_2] : memref<128x16xf32, #tpu.memory_space<vmem>>, vector<128x16xf32>
    %cst = arith.constant dense<0.000000e+00> : vector<800x16xf32>
    %2 = tpu.matmul %0, %1, %cst {dimension_numbers = #tpu.dot_dimension_numbers<[1], [0], [0], [1], [0, 0, 1, 1], [], []>} : vector<800x128xf32>, vector<128x16xf32>, vector<800x16xf32> -> vector<800x16xf32>
    %c0_3 = arith.constant 0 : index
    %c0_4 = arith.constant 0 : index
    %3 = vector.load %arg3[%c0_3, %c0_4] : memref<1x16xf32, #tpu.memory_space<vmem>>, vector<1x16xf32>
    %4 = vector.broadcast %3 : vector<1x16xf32> to vector<800x16xf32>
    %5 = arith.addf %2, %4 : vector<800x16xf32>
    %cst_5 = arith.constant 0.000000e+00 : f32
    %6 = vector.broadcast %cst_5 : f32 to vector<800x16xf32>
    %7 = arith.maximumf %5, %6 : vector<800x16xf32>
    %c0_6 = arith.constant 0 : index
    %c0_7 = arith.constant 0 : index
    %8 = vector.load %arg4[%c0_6, %c0_7] : memref<800x16xf32, #tpu.memory_space<vmem>>, vector<800x16xf32>
    tpu.vector_store %arg4[%c0_6, %c0_7], %7 {strides = array<i32>} : memref<800x16xf32, #tpu.memory_space<vmem>>, vector<800x16xf32>,
    return
  }
  func.func @transform_0(%arg0: i32) -> (i32, i32) {
    %c0_i32 = arith.constant 0 : i32
    %c0_i32_0 = arith.constant 0 : i32
    %c0_i32_1 = arith.constant 0 : i32
    return %c0_i32, %c0_i32_0 : i32, i32
  }
  func.func @transform_1(%arg0: i32) -> (i32, i32) {
    %c0_i32 = arith.constant 0 : i32
    %c0_i32_0 = arith.constant 0 : i32
    %c0_i32_1 = arith.constant 0 : i32
    return %c0_i32, %c0_i32_0 : i32, i32
  }
  func.func @transform_2(%arg0: i32) -> (i32, i32) {
    %c0_i32 = arith.constant 0 : i32
    %c0_i32_0 = arith.constant 0 : i32
    %c0_i32_1 = arith.constant 0 : i32
    return %c0_i32, %c0_i32_0 : i32, i32
  }
  func.func @transform_3(%arg0: i32) -> (i32, i32) {
    %c0_i32 = arith.constant 0 : i32
    %c0_i32_0 = arith.constant 0 : i32
    %c0_i32_1 = arith.constant 0 : i32
    return %c0_i32, %c0_i32_0 : i32, i32
  }
}

module attributes {stable_mosaic.version = 11 : i64} {
  func.func @_conv_gemm_kernel(%arg0: i32, %arg1: memref<168x256xf32, #tpu.memory_space<vmem>>, %arg2: memref<256x32xf32, #tpu.memory_space<vmem>>, %arg3: memref<1x32xf32, #tpu.memory_space<vmem>>, %arg4: memref<168x32xf32, #tpu.memory_space<vmem>>) attributes {dimension_semantics = [#tpu.dimension_semantics<arbitrary>], iteration_bounds = array<i64: 1>, scalar_prefetch = 0 : i64, scratch_operands = 0 : i64, tpu.core_type = #tpu.core_type<tc>, window_params = [{pipeline_mode = #tpu.pipeline_mode<synchronous>, transform_indices = @transform_0, window_bounds = array<i64: 168, 256>}, {pipeline_mode = #tpu.pipeline_mode<synchronous>, transform_indices = @transform_1, window_bounds = array<i64: 256, 32>}, {pipeline_mode = #tpu.pipeline_mode<synchronous>, transform_indices = @transform_2, window_bounds = array<i64: 1, 32>}, {pipeline_mode = #tpu.pipeline_mode<synchronous>, transform_indices = @transform_3, window_bounds = array<i64: 168, 32>}]} {
    %c0 = arith.constant 0 : index
    %c0_0 = arith.constant 0 : index
    %0 = vector.load %arg1[%c0, %c0_0] : memref<168x256xf32, #tpu.memory_space<vmem>>, vector<168x256xf32>
    %c0_1 = arith.constant 0 : index
    %c0_2 = arith.constant 0 : index
    %1 = vector.load %arg2[%c0_1, %c0_2] : memref<256x32xf32, #tpu.memory_space<vmem>>, vector<256x32xf32>
    %cst = arith.constant dense<0.000000e+00> : vector<168x32xf32>
    %2 = tpu.matmul %0, %1, %cst {dimension_numbers = #tpu.dot_dimension_numbers<[1], [0], [0], [1], [0, 0, 1, 1], [], []>} : vector<168x256xf32>, vector<256x32xf32>, vector<168x32xf32> -> vector<168x32xf32>
    %c0_3 = arith.constant 0 : index
    %c0_4 = arith.constant 0 : index
    %3 = vector.load %arg3[%c0_3, %c0_4] : memref<1x32xf32, #tpu.memory_space<vmem>>, vector<1x32xf32>
    %4 = vector.broadcast %3 : vector<1x32xf32> to vector<168x32xf32>
    %5 = arith.addf %2, %4 : vector<168x32xf32>
    %cst_5 = arith.constant 0.000000e+00 : f32
    %6 = vector.broadcast %cst_5 : f32 to vector<168x32xf32>
    %7 = arith.maximumf %5, %6 : vector<168x32xf32>
    %c0_6 = arith.constant 0 : index
    %c0_7 = arith.constant 0 : index
    %8 = vector.load %arg4[%c0_6, %c0_7] : memref<168x32xf32, #tpu.memory_space<vmem>>, vector<168x32xf32>
    tpu.vector_store %arg4[%c0_6, %c0_7], %7 {strides = array<i32>} : memref<168x32xf32, #tpu.memory_space<vmem>>, vector<168x32xf32>,
    return
  }
  func.func @transform_0(%arg0: i32) -> (i32, i32) {
    %c0_i32 = arith.constant 0 : i32
    %c0_i32_0 = arith.constant 0 : i32
    %c0_i32_1 = arith.constant 0 : i32
    return %c0_i32, %c0_i32_0 : i32, i32
  }
  func.func @transform_1(%arg0: i32) -> (i32, i32) {
    %c0_i32 = arith.constant 0 : i32
    %c0_i32_0 = arith.constant 0 : i32
    %c0_i32_1 = arith.constant 0 : i32
    return %c0_i32, %c0_i32_0 : i32, i32
  }
  func.func @transform_2(%arg0: i32) -> (i32, i32) {
    %c0_i32 = arith.constant 0 : i32
    %c0_i32_0 = arith.constant 0 : i32
    %c0_i32_1 = arith.constant 0 : i32
    return %c0_i32, %c0_i32_0 : i32, i32
  }
  func.func @transform_3(%arg0: i32) -> (i32, i32) {
    %c0_i32 = arith.constant 0 : i32
    %c0_i32_0 = arith.constant 0 : i32
    %c0_i32_1 = arith.constant 0 : i32
    return %c0_i32, %c0_i32_0 : i32, i32
  }
}

module attributes {stable_mosaic.version = 11 : i64} {
  func.func @_conv_gemm_kernel(%arg0: i32, %arg1: memref<104x384xf32, #tpu.memory_space<vmem>>, %arg2: memref<384x64xf32, #tpu.memory_space<vmem>>, %arg3: memref<1x64xf32, #tpu.memory_space<vmem>>, %arg4: memref<104x64xf32, #tpu.memory_space<vmem>>) attributes {dimension_semantics = [#tpu.dimension_semantics<arbitrary>], iteration_bounds = array<i64: 1>, scalar_prefetch = 0 : i64, scratch_operands = 0 : i64, tpu.core_type = #tpu.core_type<tc>, window_params = [{pipeline_mode = #tpu.pipeline_mode<synchronous>, transform_indices = @transform_0, window_bounds = array<i64: 104, 384>}, {pipeline_mode = #tpu.pipeline_mode<synchronous>, transform_indices = @transform_1, window_bounds = array<i64: 384, 64>}, {pipeline_mode = #tpu.pipeline_mode<synchronous>, transform_indices = @transform_2, window_bounds = array<i64: 1, 64>}, {pipeline_mode = #tpu.pipeline_mode<synchronous>, transform_indices = @transform_3, window_bounds = array<i64: 104, 64>}]} {
    %c0 = arith.constant 0 : index
    %c0_0 = arith.constant 0 : index
    %0 = vector.load %arg1[%c0, %c0_0] : memref<104x384xf32, #tpu.memory_space<vmem>>, vector<104x384xf32>
    %c0_1 = arith.constant 0 : index
    %c0_2 = arith.constant 0 : index
    %1 = vector.load %arg2[%c0_1, %c0_2] : memref<384x64xf32, #tpu.memory_space<vmem>>, vector<384x64xf32>
    %cst = arith.constant dense<0.000000e+00> : vector<104x64xf32>
    %2 = tpu.matmul %0, %1, %cst {dimension_numbers = #tpu.dot_dimension_numbers<[1], [0], [0], [1], [0, 0, 1, 1], [], []>} : vector<104x384xf32>, vector<384x64xf32>, vector<104x64xf32> -> vector<104x64xf32>
    %c0_3 = arith.constant 0 : index
    %c0_4 = arith.constant 0 : index
    %3 = vector.load %arg3[%c0_3, %c0_4] : memref<1x64xf32, #tpu.memory_space<vmem>>, vector<1x64xf32>
    %4 = vector.broadcast %3 : vector<1x64xf32> to vector<104x64xf32>
    %5 = arith.addf %2, %4 : vector<104x64xf32>
    %cst_5 = arith.constant 0.000000e+00 : f32
    %6 = vector.broadcast %cst_5 : f32 to vector<104x64xf32>
    %7 = arith.maximumf %5, %6 : vector<104x64xf32>
    %c0_6 = arith.constant 0 : index
    %c0_7 = arith.constant 0 : index
    %8 = vector.load %arg4[%c0_6, %c0_7] : memref<104x64xf32, #tpu.memory_space<vmem>>, vector<104x64xf32>
    tpu.vector_store %arg4[%c0_6, %c0_7], %7 {strides = array<i32>} : memref<104x64xf32, #tpu.memory_space<vmem>>, vector<104x64xf32>,
    return
  }
  func.func @transform_0(%arg0: i32) -> (i32, i32) {
    %c0_i32 = arith.constant 0 : i32
    %c0_i32_0 = arith.constant 0 : i32
    %c0_i32_1 = arith.constant 0 : i32
    return %c0_i32, %c0_i32_0 : i32, i32
  }
  func.func @transform_1(%arg0: i32) -> (i32, i32) {
    %c0_i32 = arith.constant 0 : i32
    %c0_i32_0 = arith.constant 0 : i32
    %c0_i32_1 = arith.constant 0 : i32
    return %c0_i32, %c0_i32_0 : i32, i32
  }
  func.func @transform_2(%arg0: i32) -> (i32, i32) {
    %c0_i32 = arith.constant 0 : i32
    %c0_i32_0 = arith.constant 0 : i32
    %c0_i32_1 = arith.constant 0 : i32
    return %c0_i32, %c0_i32_0 : i32, i32
  }
  func.func @transform_3(%arg0: i32) -> (i32, i32) {
    %c0_i32 = arith.constant 0 : i32
    %c0_i32_0 = arith.constant 0 : i32
    %c0_i32_1 = arith.constant 0 : i32
    return %c0_i32, %c0_i32_0 : i32, i32
  }
}

module attributes {stable_mosaic.version = 11 : i64} {
  func.func @_fused_dense_kernel(%arg0: i32, %arg1: memref<8x3200xf32, #tpu.memory_space<vmem>>, %arg2: memref<3200x512xbf16, #tpu.memory_space<vmem>>, %arg3: memref<1x512xf32, #tpu.memory_space<vmem>>, %arg4: memref<512x128xbf16, #tpu.memory_space<vmem>>, %arg5: memref<1x128xf32, #tpu.memory_space<vmem>>, %arg6: memref<8x128xf32, #tpu.memory_space<vmem>>) attributes {dimension_semantics = [#tpu.dimension_semantics<arbitrary>], iteration_bounds = array<i64: 1>, scalar_prefetch = 0 : i64, scratch_operands = 0 : i64, tpu.core_type = #tpu.core_type<tc>, window_params = [{pipeline_mode = #tpu.pipeline_mode<synchronous>, transform_indices = @transform_0, window_bounds = array<i64: 8, 3200>}, {pipeline_mode = #tpu.pipeline_mode<synchronous>, transform_indices = @transform_1, window_bounds = array<i64: 3200, 512>}, {pipeline_mode = #tpu.pipeline_mode<synchronous>, transform_indices = @transform_2, window_bounds = array<i64: 1, 512>}, {pipeline_mode = #tpu.pipeline_mode<synchronous>, transform_indices = @transform_3, window_bounds = array<i64: 512, 128>}, {pipeline_mode = #tpu.pipeline_mode<synchronous>, transform_indices = @transform_4, window_bounds = array<i64: 1, 128>}, {pipeline_mode = #tpu.pipeline_mode<synchronous>, transform_indices = @transform_5, window_bounds = array<i64: 8, 128>}]} {
    %c0 = arith.constant 0 : index
    %c0_0 = arith.constant 0 : index
    %0 = vector.load %arg1[%c0, %c0_0] : memref<8x3200xf32, #tpu.memory_space<vmem>>, vector<8x3200xf32>
    %1 = arith.truncf %0 : vector<8x3200xf32> to vector<8x3200xbf16>
    %c0_1 = arith.constant 0 : index
    %c0_2 = arith.constant 0 : index
    %2 = vector.load %arg2[%c0_1, %c0_2] : memref<3200x512xbf16, #tpu.memory_space<vmem>>, vector<3200x512xbf16>
    %cst = arith.constant dense<0.000000e+00> : vector<8x512xf32>
    %3 = tpu.matmul %1, %2, %cst {dimension_numbers = #tpu.dot_dimension_numbers<[1], [0], [0], [1], [0, 0, 1, 1], [], []>} : vector<8x3200xbf16>, vector<3200x512xbf16>, vector<8x512xf32> -> vector<8x512xf32>
    %c0_3 = arith.constant 0 : index
    %c0_4 = arith.constant 0 : index
    %4 = vector.load %arg3[%c0_3, %c0_4] : memref<1x512xf32, #tpu.memory_space<vmem>>, vector<1x512xf32>
    %5 = vector.broadcast %4 : vector<1x512xf32> to vector<8x512xf32>
    %6 = arith.addf %3, %5 : vector<8x512xf32>
    %cst_5 = arith.constant 0.000000e+00 : f32
    %7 = vector.broadcast %cst_5 : f32 to vector<8x512xf32>
    %8 = arith.maximumf %6, %7 : vector<8x512xf32>
    %9 = arith.truncf %8 : vector<8x512xf32> to vector<8x512xbf16>
    %c0_6 = arith.constant 0 : index
    %c0_7 = arith.constant 0 : index
    %10 = vector.load %arg4[%c0_6, %c0_7] : memref<512x128xbf16, #tpu.memory_space<vmem>>, vector<512x128xbf16>
    %cst_8 = arith.constant dense<0.000000e+00> : vector<8x128xf32>
    %11 = tpu.matmul %9, %10, %cst_8 {dimension_numbers = #tpu.dot_dimension_numbers<[1], [0], [0], [1], [0, 0, 1, 1], [], []>} : vector<8x512xbf16>, vector<512x128xbf16>, vector<8x128xf32> -> vector<8x128xf32>
    %c0_9 = arith.constant 0 : index
    %c0_10 = arith.constant 0 : index
    %12 = vector.load %arg5[%c0_9, %c0_10] : memref<1x128xf32, #tpu.memory_space<vmem>>, vector<1x128xf32>
    %13 = vector.broadcast %12 : vector<1x128xf32> to vector<8x128xf32>
    %14 = arith.addf %11, %13 : vector<8x128xf32>
    %c0_11 = arith.constant 0 : index
    %c0_12 = arith.constant 0 : index
    %15 = vector.load %arg6[%c0_11, %c0_12] : memref<8x128xf32, #tpu.memory_space<vmem>>, vector<8x128xf32>
    tpu.vector_store %arg6[%c0_11, %c0_12], %14 {strides = array<i32>} : memref<8x128xf32, #tpu.memory_space<vmem>>, vector<8x128xf32>,
    return
  }
  func.func @transform_0(%arg0: i32) -> (i32, i32) {
    %c0_i32 = arith.constant 0 : i32
    %c0_i32_0 = arith.constant 0 : i32
    %c0_i32_1 = arith.constant 0 : i32
    return %c0_i32, %c0_i32_0 : i32, i32
  }
  func.func @transform_1(%arg0: i32) -> (i32, i32) {
    %c0_i32 = arith.constant 0 : i32
    %c0_i32_0 = arith.constant 0 : i32
    %c0_i32_1 = arith.constant 0 : i32
    return %c0_i32, %c0_i32_0 : i32, i32
  }
  func.func @transform_2(%arg0: i32) -> (i32, i32) {
    %c0_i32 = arith.constant 0 : i32
    %c0_i32_0 = arith.constant 0 : i32
    %c0_i32_1 = arith.constant 0 : i32
    return %c0_i32, %c0_i32_0 : i32, i32
  }
  func.func @transform_3(%arg0: i32) -> (i32, i32) {
    %c0_i32 = arith.constant 0 : i32
    %c0_i32_0 = arith.constant 0 : i32
    %c0_i32_1 = arith.constant 0 : i32
    return %c0_i32, %c0_i32_0 : i32, i32
  }
  func.func @transform_4(%arg0: i32) -> (i32, i32) {
    %c0_i32 = arith.constant 0 : i32
    %c0_i32_0 = arith.constant 0 : i32
    %c0_i32_1 = arith.constant 0 : i32
    return %c0_i32, %c0_i32_0 : i32, i32
  }
  func.func @transform_5(%arg0: i32) -> (i32, i32) {
    %c0_i32 = arith.constant 0 : i32
    %c0_i32_0 = arith.constant 0 : i32
    %c0_i32_1 = arith.constant 0 : i32
    return %c0_i32, %c0_i32_0 : i32, i32
  }
}

</mosaic_0001>

<llo_original>
// kernel: noisy_dqn_forward.4
$region0: #{noisy_dqn_forward.4}
  #allocation0 [shape = 'u32[]', space=smem, size = 0x4, offset = 0x4, fixed_abs, tag = 'smem constant byte address 0x4 - core index']
  #allocation1 [shape = 'u32[72,128]{1,0:T(1,128)}', space=vmem, size = 0x9000, scoped, tag = 'internal scratch']
  %s0 = inlined_call_operand.vmem [shape: f32[800,128], index: 0, kind: input, shape index: {}]
  %s1 = inlined_call_operand.vmem [shape: f32[128,16], index: 1, kind: input, shape index: {}]
  %s2 = inlined_call_operand.vmem [shape: f32[1,16], index: 2, kind: input, shape index: {}]
  %s3 = inlined_call_operand.vmem [shape: f32[800,16], index: 3, kind: output, shape index: {}]
  %s4 = sld [smem:[#allocation0]]
  $region22: #{noisy_dqn_forward.4} parent=0
    _
  %s6 = ssub.s32 1, %s4
  %s7 = scalar_select 0, %s6, %s4
  // Predicated region
  $region2: #{noisy_dqn_forward.4} parent=0 // pred_check
    _
  $region3: #{noisy_dqn_forward.4} parent=0 // pred_check_branch
    %9 = sbr.rel (0) target = $region5
  $region4: #{noisy_dqn_forward.4} parent=0 // pred_region
    _
  $region5: #{noisy_dqn_forward.4} parent=0 // pred_fallthru
    _
  // Predicated region
  $region6: #{noisy_dqn_forward.4} parent=0 // pred_check
    _
  $region7: #{noisy_dqn_forward.4} parent=0 // pred_check_branch
    %11 = sbr.rel (0) target = $region9
  $region8: #{noisy_dqn_forward.4} parent=0 // pred_region
    _
  $region9: #{noisy_dqn_forward.4} parent=0 // pred_fallthru
    _
  // Predicated region
  $region10: #{noisy_dqn_forward.4} parent=0 // pred_check
    _
  $region11: #{noisy_dqn_forward.4} parent=0 // pred_check_branch
    %13 = sbr.rel (0) target = $region13
  $region12: #{noisy_dqn_forward.4} parent=0 // pred_region
    _
  $region13: #{noisy_dqn_forward.4} parent=0 // pred_fallthru
    _
  %v14 = vld [vmem:[%s0] sm:$0xff]
  %v15 = vld [vmem:[%s0 + $0x8] sm:$0xff]
  %v16 = vld [vmem:[%s0 + $0x10] sm:$0xff]
  %v17 = vld [vmem:[%s0 + $0x18] sm:$0xff]
  %v18 = vld [vmem:[%s0 + $0x20] sm:$0xff]
  %v19 = vld [vmem:[%s0 + $0x28] sm:$0xff]
  %v20 = vld [vmem:[%s0 + $0x30] sm:$0xff]
  %v21 = vld [vmem:[%s0 + $0x38] sm:$0xff]
  %v22 = vld [vmem:[%s0 + $0x40] sm:$0xff]
  %v23 = vld [vmem:[%s0 + $0x48] sm:$0xff]
  %v24 = vld [vmem:[%s0 + $0x50] sm:$0xff]
  %v25 = vld [vmem:[%s0 + $0x58] sm:$0xff]
  %v26 = vld [vmem:[%s0 + $0x60] sm:$0xff]
  %v27 = vld [vmem:[%s0 + $0x68] sm:$0xff]
  %v28 = vld [vmem:[%s0 + $0x70] sm:$0xff]
  %v29 = vld [vmem:[%s0 + $0x78] sm:$0xff]
  %v30 = vld [vmem:[%s0 + $0x80] sm:$0xff]
  %v31 = vld [vmem:[%s0 + $0x88] sm:$0xff]
  %v32 = vld [vmem:[%s0 + $0x90] sm:$0xff]
  %v33 = vld [vmem:[%s0 + $0x98] sm:$0xff]
  %v34 = vld [vmem:[%s0 + $0xa0] sm:$0xff]
  %v35 = vld [vmem:[%s0 + $0xa8] sm:$0xff]
  %v36 = vld [vmem:[%s0 + $0xb0] sm:$0xff]
  %v37 = vld [vmem:[%s0 + $0xb8] sm:$0xff]
  %v38 = vld [vmem:[%s0 + $0xc0] sm:$0xff]
  %v39 = vld [vmem:[%s0 + $0xc8] sm:$0xff]
  %v40 = vld [vmem:[%s0 + $0xd0] sm:$0xff]
  %v41 = vld [vmem:[%s0 + $0xd8] sm:$0xff]
  %v42 = vld [vmem:[%s0 + $0xe0] sm:$0xff]
  %v43 = vld [vmem:[%s0 + $0xe8] sm:$0xff]
  %v44 = vld [vmem:[%s0 + $0xf0] sm:$0xff]
  %v45 = vld [vmem:[%s0 + $0xf8] sm:$0xff]
  %v46 = vld [vmem:[%s0 + $0x100] sm:$0xff]
  %v47 = vld [vmem:[%s0 + $0x108] sm:$0xff]
  %v48 = vld [vmem:[%s0 + $0x110] sm:$0xff]
  %v49 = vld [vmem:[%s0 + $0x118] sm:$0xff]
  %v50 = vld [vmem:[%s0 + $0x120] sm:$0xff]
  %v51 = vld [vmem:[%s0 + $0x128] sm:$0xff]
  %v52 = vld [vmem:[%s0 + $0x130] sm:$0xff]
  %v53 = vld [vmem:[%s0 + $0x138] sm:$0xff]
  %v54 = vld [vmem:[%s0 + $0x140] sm:$0xff]
  %v55 = vld [vmem:[%s0 + $0x148] sm:$0xff]
  %v56 = vld [vmem:[%s0 + $0x150] sm:$0xff]
  %v57 = vld [vmem:[%s0 + $0x158] sm:$0xff]
  %v58 = vld [vmem:[%s0 + $0x160] sm:$0xff]
  %v59 = vld [vmem:[%s0 + $0x168] sm:$0xff]
  %v60 = vld [vmem:[%s0 + $0x170] sm:$0xff]
  %v61 = vld [vmem:[%s0 + $0x178] sm:$0xff]
  %v62 = vld [vmem:[%s0 + $0x180] sm:$0xff]
  %v63 = vld [vmem:[%s0 + $0x188] sm:$0xff]
  %v64 = vld [vmem:[%s0 + $0x190] sm:$0xff]
  %v65 = vld [vmem:[%s0 + $0x198] sm:$0xff]
  %v66 = vld [vmem:[%s0 + $0x1a0] sm:$0xff]
  %v67 = vld [vmem:[%s0 + $0x1a8] sm:$0xff]
  %v68 = vld [vmem:[%s0 + $0x1b0] sm:$0xff]
  %v69 = vld [vmem:[%s0 + $0x1b8] sm:$0xff]
  %v70 = vld [vmem:[%s0 + $0x1c0] sm:$0xff]
  %v71 = vld [vmem:[%s0 + $0x1c8] sm:$0xff]
  %v72 = vld [vmem:[%s0 + $0x1d0] sm:$0xff]
  %v73 = vld [vmem:[%s0 + $0x1d8] sm:$0xff]
  %v74 = vld [vmem:[%s0 + $0x1e0] sm:$0xff]
  %v75 = vld [vmem:[%s0 + $0x1e8] sm:$0xff]
  %v76 = vld [vmem:[%s0 + $0x1f0] sm:$0xff]
  %v77 = vld [vmem:[%s0 + $0x1f8] sm:$0xff]
  %v78 = vld [vmem:[%s0 + $0x200] sm:$0xff]
  %v79 = vld [vmem:[%s0 + $0x208] sm:$0xff]
  %v80 = vld [vmem:[%s0 + $0x210] sm:$0xff]
  %v81 = vld [vmem:[%s0 + $0x218] sm:$0xff]
  %v82 = vld [vmem:[%s0 + $0x220] sm:$0xff]
  %v83 = vld [vmem:[%s0 + $0x228] sm:$0xff]
  %v84 = vld [vmem:[%s0 + $0x230] sm:$0xff]
  %v85 = vld [vmem:[%s0 + $0x238] sm:$0xff]
  %v86 = vld [vmem:[%s0 + $0x240] sm:$0xff]
  %v87 = vld [vmem:[%s0 + $0x248] sm:$0xff]
  %v88 = vld [vmem:[%s0 + $0x250] sm:$0xff]
  %v89 = vld [vmem:[%s0 + $0x258] sm:$0xff]
  %v90 = vld [vmem:[%s0 + $0x260] sm:$0xff]
  %v91 = vld [vmem:[%s0 + $0x268] sm:$0xff]
  %v92 = vld [vmem:[%s0 + $0x270] sm:$0xff]
  %v93 = vld [vmem:[%s0 + $0x278] sm:$0xff]
  %v94 = vld [vmem:[%s0 + $0x280] sm:$0xff]
  %v95 = vld [vmem:[%s0 + $0x288] sm:$0xff]
  %v96 = vld [vmem:[%s0 + $0x290] sm:$0xff]
  %v97 = vld [vmem:[%s0 + $0x298] sm:$0xff]
  %v98 = vld [vmem:[%s0 + $0x2a0] sm:$0xff]
  %v99 = vld [vmem:[%s0 + $0x2a8] sm:$0xff]
  %v100 = vld [vmem:[%s0 + $0x2b0] sm:$0xff]
  %v101 = vld [vmem:[%s0 + $0x2b8] sm:$0xff]
  %v102 = vld [vmem:[%s0 + $0x2c0] sm:$0xff]
  %v103 = vld [vmem:[%s0 + $0x2c8] sm:$0xff]
  %v104 = vld [vmem:[%s0 + $0x2d0] sm:$0xff]
  %v105 = vld [vmem:[%s0 + $0x2d8] sm:$0xff]
  %v106 = vld [vmem:[%s0 + $0x2e0] sm:$0xff]
  %v107 = vld [vmem:[%s0 + $0x2e8] sm:$0xff]
  %v108 = vld [vmem:[%s0 + $0x2f0] sm:$0xff]
  %v109 = vld [vmem:[%s0 + $0x2f8] sm:$0xff]
  %v110 = vld [vmem:[%s0 + $0x300] sm:$0xff]
  %v111 = vld [vmem:[%s0 + $0x308] sm:$0xff]
  %v112 = vld [vmem:[%s0 + $0x310] sm:$0xff]
  %v113 = vld [vmem:[%s0 + $0x318] sm:$0xff]
  %v114 = vld [vmem:[%s1] sm:$0xff]
  %v115 = vld [vmem:[%s1 + $0x8] sm:$0xff]
  %v116 = vld [vmem:[%s1 + $0x10] sm:$0xff]
  %v117 = vld [vmem:[%s1 + $0x18] sm:$0xff]
  %v118 = vld [vmem:[%s1 + $0x20] sm:$0xff]
  %v119 = vld [vmem:[%s1 + $0x28] sm:$0xff]
  %v120 = vld [vmem:[%s1 + $0x30] sm:$0xff]
  %v121 = vld [vmem:[%s1 + $0x38] sm:$0xff]
  %v122 = vld [vmem:[%s1 + $0x40] sm:$0xff]
  %v123 = vld [vmem:[%s1 + $0x48] sm:$0xff]
  %v124 = vld [vmem:[%s1 + $0x50] sm:$0xff]
  %v125 = vld [vmem:[%s1 + $0x58] sm:$0xff]
  %v126 = vld [vmem:[%s1 + $0x60] sm:$0xff]
  %v127 = vld [vmem:[%s1 + $0x68] sm:$0xff]
  %v128 = vld [vmem:[%s1 + $0x70] sm:$0xff]
  %v129 = vld [vmem:[%s1 + $0x78] sm:$0xff]
  %v130 = vld [vmem:[%s2] sm:$0x1]
  %v132 = vperm.slane %v130, 0
  %134 = vmatpush.msra.mxu0 %v129
  %135 = vmatpush.msra.mxu0 %v128
  %136 = vmatpush.msra.mxu0 %v127
  %137 = vmatpush.msra.mxu0 %v126
  %138 = vmatpush.msra.mxu0 %v125
  %139 = vmatpush.msra.mxu0 %v124
  %140 = vmatpush.msra.mxu0 %v123
  %141 = vmatpush.msra.mxu0 %v122
  %142 = vmatpush.msra.mxu0 %v121
  %143 = vmatpush.msra.mxu0 %v120
  %144 = vmatpush.msra.mxu0 %v119
  %145 = vmatpush.msra.mxu0 %v118
  %146 = vmatpush.msra.mxu0 %v117
  %147 = vmatpush.msra.mxu0 %v116
  %148 = vmatpush.msra.mxu0 %v115
  %149 = vmatpush.msra.mxu0 %v114
  %150 = vmatmul.f32.gmra.mxu0 %v14
  %v151 = vpop.f32.mrf.mxu0
  %v152 = vadd.f32 %v132, %v151
  %153 = vmatmul.f32.gmra.mxu0 %v15
  %v154 = vpop.f32.mrf.mxu0
  %v155 = vadd.f32 %v132, %v154
  %156 = vmatmul.f32.gmra.mxu0 %v16
  %v157 = vpop.f32.mrf.mxu0
  %v158 = vadd.f32 %v132, %v157
  %159 = vmatmul.f32.gmra.mxu0 %v17
  %v160 = vpop.f32.mrf.mxu0
  %v161 = vadd.f32 %v132, %v160
  %162 = vmatmul.f32.gmra.mxu0 %v18
  %v163 = vpop.f32.mrf.mxu0
  %v164 = vadd.f32 %v132, %v163
  %165 = vmatmul.f32.gmra.mxu0 %v19
  %v166 = vpop.f32.mrf.mxu0
  %v167 = vadd.f32 %v132, %v166
  %168 = vmatmul.f32.gmra.mxu0 %v20
  %v169 = vpop.f32.mrf.mxu0
  %v170 = vadd.f32 %v132, %v169
  %171 = vmatmul.f32.gmra.mxu0 %v21
  %v172 = vpop.f32.mrf.mxu0
  %v173 = vadd.f32 %v132, %v172
  %174 = vmatmul.f32.gmra.mxu0 %v22
  %v175 = vpop.f32.mrf.mxu0
  %v176 = vadd.f32 %v132, %v175
  %177 = vmatmul.f32.gmra.mxu0 %v23
  %v178 = vpop.f32.mrf.mxu0
  %v179 = vadd.f32 %v132, %v178
  %180 = vmatmul.f32.gmra.mxu0 %v24
  %v181 = vpop.f32.mrf.mxu0
  %v182 = vadd.f32 %v132, %v181
  %183 = vmatmul.f32.gmra.mxu0 %v25
  %v184 = vpop.f32.mrf.mxu0
  %v185 = vadd.f32 %v132, %v184
  %186 = vmatmul.f32.gmra.mxu0 %v26
  %v187 = vpop.f32.mrf.mxu0
  %v188 = vadd.f32 %v132, %v187
  %189 = vmatmul.f32.gmra.mxu0 %v27
  %v190 = vpop.f32.mrf.mxu0
  %v191 = vadd.f32 %v132, %v190
  %192 = vmatmul.f32.gmra.mxu0 %v28
  %v193 = vpop.f32.mrf.mxu0
  %v194 = vadd.f32 %v132, %v193
  %195 = vmatmul.f32.gmra.mxu0 %v29
  %v196 = vpop.f32.mrf.mxu0
  %v197 = vadd.f32 %v132, %v196
  %198 = vmatmul.f32.gmra.mxu0 %v30
  %v199 = vpop.f32.mrf.mxu0
  %v200 = vadd.f32 %v132, %v199
  %201 = vmatmul.f32.gmra.mxu0 %v31
  %v202 = vpop.f32.mrf.mxu0
  %v203 = vadd.f32 %v132, %v202
  %204 = vmatmul.f32.gmra.mxu0 %v32
  %v205 = vpop.f32.mrf.mxu0
  %v206 = vadd.f32 %v132, %v205
  %207 = vmatmul.f32.gmra.mxu0 %v33
  %v208 = vpop.f32.mrf.mxu0
  %v209 = vadd.f32 %v132, %v208
  %210 = vmatmul.f32.gmra.mxu0 %v34
  %v211 = vpop.f32.mrf.mxu0
  %v212 = vadd.f32 %v132, %v211
  %213 = vmatmul.f32.gmra.mxu0 %v35
  %v214 = vpop.f32.mrf.mxu0
  %v215 = vadd.f32 %v132, %v214
  %216 = vmatmul.f32.gmra.mxu0 %v36
  %v217 = vpop.f32.mrf.mxu0
  %v218 = vadd.f32 %v132, %v217
  %219 = vmatmul.f32.gmra.mxu0 %v37
  %v220 = vpop.f32.mrf.mxu0
  %v221 = vadd.f32 %v132, %v220
  %222 = vmatmul.f32.gmra.mxu0 %v38
  %v223 = vpop.f32.mrf.mxu0
  %v224 = vadd.f32 %v132, %v223
  %225 = vmatmul.f32.gmra.mxu0 %v39
  %v226 = vpop.f32.mrf.mxu0
  %v227 = vadd.f32 %v132, %v226
  %228 = vmatmul.f32.gmra.mxu0 %v40
  %v229 = vpop.f32.mrf.mxu0
  %v230 = vadd.f32 %v132, %v229
  %231 = vmatmul.f32.gmra.mxu0 %v41
  %v232 = vpop.f32.mrf.mxu0
  %v233 = vadd.f32 %v132, %v232
  %234 = vmatmul.f32.gmra.mxu0 %v42
  %v235 = vpop.f32.mrf.mxu0
  %v236 = vadd.f32 %v132, %v235
  %237 = vmatmul.f32.gmra.mxu0 %v43
  %v238 = vpop.f32.mrf.mxu0
  %v239 = vadd.f32 %v132, %v238
  %240 = vmatmul.f32.gmra.mxu0 %v44
  %v241 = vpop.f32.mrf.mxu0
  %v242 = vadd.f32 %v132, %v241
  %243 = vmatmul.f32.gmra.mxu0 %v45
  %v244 = vpop.f32.mrf.mxu0
  %v245 = vadd.f32 %v132, %v244
  %246 = vmatmul.f32.gmra.mxu0 %v46
  %v247 = vpop.f32.mrf.mxu0
  %v248 = vadd.f32 %v132, %v247
  %249 = vmatmul.f32.gmra.mxu0 %v47
  %v250 = vpop.f32.mrf.mxu0
  %v251 = vadd.f32 %v132, %v250
  %252 = vmatmul.f32.gmra.mxu0 %v48
  %v253 = vpop.f32.mrf.mxu0
  %v254 = vadd.f32 %v132, %v253
  %255 = vmatmul.f32.gmra.mxu0 %v49
  %v256 = vpop.f32.mrf.mxu0
  %v257 = vadd.f32 %v132, %v256
  %258 = vmatmul.f32.gmra.mxu0 %v50
  %v259 = vpop.f32.mrf.mxu0
  %v260 = vadd.f32 %v132, %v259
  %261 = vmatmul.f32.gmra.mxu0 %v51
  %v262 = vpop.f32.mrf.mxu0
  %v263 = vadd.f32 %v132, %v262
  %264 = vmatmul.f32.gmra.mxu0 %v52
  %v265 = vpop.f32.mrf.mxu0
  %v266 = vadd.f32 %v132, %v265
  %267 = vmatmul.f32.gmra.mxu0 %v53
  %v268 = vpop.f32.mrf.mxu0
  %v269 = vadd.f32 %v132, %v268
  %270 = vmatmul.f32.gmra.mxu0 %v54
  %v271 = vpop.f32.mrf.mxu0
  %v272 = vadd.f32 %v132, %v271
  %273 = vmatmul.f32.gmra.mxu0 %v55
  %v274 = vpop.f32.mrf.mxu0
  %v275 = vadd.f32 %v132, %v274
  %276 = vmatmul.f32.gmra.mxu0 %v56
  %v277 = vpop.f32.mrf.mxu0
  %v278 = vadd.f32 %v132, %v277
  %279 = vmatmul.f32.gmra.mxu0 %v57
  %v280 = vpop.f32.mrf.mxu0
  %v281 = vadd.f32 %v132, %v280
  %282 = vmatmul.f32.gmra.mxu0 %v58
  %v283 = vpop.f32.mrf.mxu0
  %v284 = vadd.f32 %v132, %v283
  %285 = vmatmul.f32.gmra.mxu0 %v59
  %v286 = vpop.f32.mrf.mxu0
  %v287 = vadd.f32 %v132, %v286
  %288 = vmatmul.f32.gmra.mxu0 %v60
  %v289 = vpop.f32.mrf.mxu0
  %v290 = vadd.f32 %v132, %v289
  %291 = vmatmul.f32.gmra.mxu0 %v61
  %v292 = vpop.f32.mrf.mxu0
  %v293 = vadd.f32 %v132, %v292
  %294 = vmatmul.f32.gmra.mxu0 %v62
  %v295 = vpop.f32.mrf.mxu0
  %v296 = vadd.f32 %v132, %v295
  %297 = vmatmul.f32.gmra.mxu0 %v63
  %v298 = vpop.f32.mrf.mxu0
  %v299 = vadd.f32 %v132, %v298
  %300 = vmatmul.f32.gmra.mxu0 %v64
  %v301 = vpop.f32.mrf.mxu0
  %v302 = vadd.f32 %v132, %v301
  %303 = vmatmul.f32.gmra.mxu0 %v65
  %v304 = vpop.f32.mrf.mxu0
  %v305 = vadd.f32 %v132, %v304
  %306 = vmatmul.f32.gmra.mxu0 %v66
  %v307 = vpop.f32.mrf.mxu0
  %v308 = vadd.f32 %v132, %v307
  %309 = vmatmul.f32.gmra.mxu0 %v67
  %v310 = vpop.f32.mrf.mxu0
  %v311 = vadd.f32 %v132, %v310
  %312 = vmatmul.f32.gmra.mxu0 %v68
  %v313 = vpop.f32.mrf.mxu0
  %v314 = vadd.f32 %v132, %v313
  %315 = vmatmul.f32.gmra.mxu0 %v69
  %v316 = vpop.f32.mrf.mxu0
  %v317 = vadd.f32 %v132, %v316
  %318 = vmatmul.f32.gmra.mxu0 %v70
  %v319 = vpop.f32.mrf.mxu0
  %v320 = vadd.f32 %v132, %v319
  %321 = vmatmul.f32.gmra.mxu0 %v71
  %v322 = vpop.f32.mrf.mxu0
  %v323 = vadd.f32 %v132, %v322
  %324 = vmatmul.f32.gmra.mxu0 %v72
  %v325 = vpop.f32.mrf.mxu0
  %v326 = vadd.f32 %v132, %v325
  %327 = vmatmul.f32.gmra.mxu0 %v73
  %v328 = vpop.f32.mrf.mxu0
  %v329 = vadd.f32 %v132, %v328
  %330 = vmatmul.f32.gmra.mxu0 %v74
  %v331 = vpop.f32.mrf.mxu0
  %v332 = vadd.f32 %v132, %v331
  %333 = vmatmul.f32.gmra.mxu0 %v75
  %v334 = vpop.f32.mrf.mxu0
  %v335 = vadd.f32 %v132, %v334
  %336 = vmatmul.f32.gmra.mxu0 %v76
  %v337 = vpop.f32.mrf.mxu0
  %v338 = vadd.f32 %v132, %v337
  %339 = vmatmul.f32.gmra.mxu0 %v77
  %v340 = vpop.f32.mrf.mxu0
  %v341 = vadd.f32 %v132, %v340
  %342 = vmatmul.f32.gmra.mxu0 %v78
  %v343 = vpop.f32.mrf.mxu0
  %v344 = vadd.f32 %v132, %v343
  %345 = vmatmul.f32.gmra.mxu0 %v79
  %v346 = vpop.f32.mrf.mxu0
  %v347 = vadd.f32 %v132, %v346
  %348 = vmatmul.f32.gmra.mxu0 %v80
  %v349 = vpop.f32.mrf.mxu0
  %v350 = vadd.f32 %v132, %v349
  %351 = vmatmul.f32.gmra.mxu0 %v81
  %v352 = vpop.f32.mrf.mxu0
  %v353 = vadd.f32 %v132, %v352
  %354 = vmatmul.f32.gmra.mxu0 %v82
  %v355 = vpop.f32.mrf.mxu0
  %v356 = vadd.f32 %v132, %v355
  %357 = vmatmul.f32.gmra.mxu0 %v83
  %v358 = vpop.f32.mrf.mxu0
  %v359 = vadd.f32 %v132, %v358
  %360 = vmatmul.f32.gmra.mxu0 %v84
  %v361 = vpop.f32.mrf.mxu0
  %v362 = vadd.f32 %v132, %v361
  %363 = vmatmul.f32.gmra.mxu0 %v85
  %v364 = vpop.f32.mrf.mxu0
  %v365 = vadd.f32 %v132, %v364
  %366 = vmatmul.f32.gmra.mxu0 %v86
  %v367 = vpop.f32.mrf.mxu0
  %v368 = vadd.f32 %v132, %v367
  %369 = vmatmul.f32.gmra.mxu0 %v87
  %v370 = vpop.f32.mrf.mxu0
  %v371 = vadd.f32 %v132, %v370
  %372 = vmatmul.f32.gmra.mxu0 %v88
  %v373 = vpop.f32.mrf.mxu0
  %v374 = vadd.f32 %v132, %v373
  %375 = vmatmul.f32.gmra.mxu0 %v89
  %v376 = vpop.f32.mrf.mxu0
  %v377 = vadd.f32 %v132, %v376
  %378 = vmatmul.f32.gmra.mxu0 %v90
  %v379 = vpop.f32.mrf.mxu0
  %v380 = vadd.f32 %v132, %v379
  %381 = vmatmul.f32.gmra.mxu0 %v91
  %v382 = vpop.f32.mrf.mxu0
  %v383 = vadd.f32 %v132, %v382
  %384 = vmatmul.f32.gmra.mxu0 %v92
  %v385 = vpop.f32.mrf.mxu0
  %v386 = vadd.f32 %v132, %v385
  %387 = vmatmul.f32.gmra.mxu0 %v93
  %v388 = vpop.f32.mrf.mxu0
  %v389 = vadd.f32 %v132, %v388
  %390 = vmatmul.f32.gmra.mxu0 %v94
  %v391 = vpop.f32.mrf.mxu0
  %v392 = vadd.f32 %v132, %v391
  %393 = vmatmul.f32.gmra.mxu0 %v95
  %v394 = vpop.f32.mrf.mxu0
  %v395 = vadd.f32 %v132, %v394
  %396 = vmatmul.f32.gmra.mxu0 %v96
  %v397 = vpop.f32.mrf.mxu0
  %v398 = vadd.f32 %v132, %v397
  %399 = vmatmul.f32.gmra.mxu0 %v97
  %v400 = vpop.f32.mrf.mxu0
  %v401 = vadd.f32 %v132, %v400
  %402 = vmatmul.f32.gmra.mxu0 %v98
  %v403 = vpop.f32.mrf.mxu0
  %v404 = vadd.f32 %v132, %v403
  %405 = vmatmul.f32.gmra.mxu0 %v99
  %v406 = vpop.f32.mrf.mxu0
  %v407 = vadd.f32 %v132, %v406
  %408 = vmatmul.f32.gmra.mxu0 %v100
  %v409 = vpop.f32.mrf.mxu0
  %v410 = vadd.f32 %v132, %v409
  %411 = vmatmul.f32.gmra.mxu0 %v101
  %v412 = vpop.f32.mrf.mxu0
  %v413 = vadd.f32 %v132, %v412
  %414 = vmatmul.f32.gmra.mxu0 %v102
  %v415 = vpop.f32.mrf.mxu0
  %v416 = vadd.f32 %v132, %v415
  %417 = vmatmul.f32.gmra.mxu0 %v103
  %v418 = vpop.f32.mrf.mxu0
  %v419 = vadd.f32 %v132, %v418
  %420 = vmatmul.f32.gmra.mxu0 %v104
  %v421 = vpop.f32.mrf.mxu0
  %v422 = vadd.f32 %v132, %v421
  %423 = vmatmul.f32.gmra.mxu0 %v105
  %v424 = vpop.f32.mrf.mxu0
  %v425 = vadd.f32 %v132, %v424
  %426 = vmatmul.f32.gmra.mxu0 %v106
  %v427 = vpop.f32.mrf.mxu0
  %v428 = vadd.f32 %v132, %v427
  %429 = vmatmul.f32.gmra.mxu0 %v107
  %v430 = vpop.f32.mrf.mxu0
  %v431 = vadd.f32 %v132, %v430
  %432 = vmatmul.f32.gmra.mxu0 %v108
  %v433 = vpop.f32.mrf.mxu0
  %v434 = vadd.f32 %v132, %v433
  %435 = vmatmul.f32.gmra.mxu0 %v109
  %v436 = vpop.f32.mrf.mxu0
  %v437 = vadd.f32 %v132, %v436
  %438 = vmatmul.f32.gmra.mxu0 %v110
  %v439 = vpop.f32.mrf.mxu0
  %v440 = vadd.f32 %v132, %v439
  %441 = vmatmul.f32.gmra.mxu0 %v111
  %v442 = vpop.f32.mrf.mxu0
  %v443 = vadd.f32 %v132, %v442
  %444 = vmatmul.f32.gmra.mxu0 %v112
  %v445 = vpop.f32.mrf.mxu0
  %v446 = vadd.f32 %v132, %v445
  %447 = vmatmul.f32.gmra.mxu0 %v113
  %v448 = vpop.f32.mrf.mxu0
  %v449 = vadd.f32 %v132, %v448
  %450 = vdwg.mxu0
  %v451 = vmax.f32 %v152, 0.0
  %v452 = vmax.f32 %v155, 0.0
  %v453 = vmax.f32 %v158, 0.0
  %v454 = vmax.f32 %v161, 0.0
  %v455 = vmax.f32 %v164, 0.0
  %v456 = vmax.f32 %v167, 0.0
  %v457 = vmax.f32 %v170, 0.0
  %v458 = vmax.f32 %v173, 0.0
  %v459 = vmax.f32 %v176, 0.0
  %v460 = vmax.f32 %v179, 0.0
  %v461 = vmax.f32 %v182, 0.0
  %v462 = vmax.f32 %v185, 0.0
  %v463 = vmax.f32 %v188, 0.0
  %v464 = vmax.f32 %v191, 0.0
  %v465 = vmax.f32 %v194, 0.0
  %v466 = vmax.f32 %v197, 0.0
  %v467 = vmax.f32 %v200, 0.0
  %v468 = vmax.f32 %v203, 0.0
  %v469 = vmax.f32 %v206, 0.0
  %v470 = vmax.f32 %v209, 0.0
  %v471 = vmax.f32 %v212, 0.0
  %v472 = vmax.f32 %v215, 0.0
  %v473 = vmax.f32 %v218, 0.0
  %v474 = vmax.f32 %v221, 0.0
  %v475 = vmax.f32 %v224, 0.0
  %v476 = vmax.f32 %v227, 0.0
  %v477 = vmax.f32 %v230, 0.0
  %v478 = vmax.f32 %v233, 0.0
  %v479 = vmax.f32 %v236, 0.0
  %v480 = vmax.f32 %v239, 0.0
  %v481 = vmax.f32 %v242, 0.0
  %v482 = vmax.f32 %v245, 0.0
  %v483 = vmax.f32 %v248, 0.0
  %v484 = vmax.f32 %v251, 0.0
  %v485 = vmax.f32 %v254, 0.0
  %v486 = vmax.f32 %v257, 0.0
  %v487 = vmax.f32 %v260, 0.0
  %v488 = vmax.f32 %v263, 0.0
  %v489 = vmax.f32 %v266, 0.0
  %v490 = vmax.f32 %v269, 0.0
  %v491 = vmax.f32 %v272, 0.0
  %v492 = vmax.f32 %v275, 0.0
  %v493 = vmax.f32 %v278, 0.0
  %v494 = vmax.f32 %v281, 0.0
  %v495 = vmax.f32 %v284, 0.0
  %v496 = vmax.f32 %v287, 0.0
  %v497 = vmax.f32 %v290, 0.0
  %v498 = vmax.f32 %v293, 0.0
  %v499 = vmax.f32 %v296, 0.0
  %v500 = vmax.f32 %v299, 0.0
  %v501 = vmax.f32 %v302, 0.0
  %v502 = vmax.f32 %v305, 0.0
  %v503 = vmax.f32 %v308, 0.0
  %v504 = vmax.f32 %v311, 0.0
  %v505 = vmax.f32 %v314, 0.0
  %v506 = vmax.f32 %v317, 0.0
  %v507 = vmax.f32 %v320, 0.0
  %v508 = vmax.f32 %v323, 0.0
  %v509 = vmax.f32 %v326, 0.0
  %v510 = vmax.f32 %v329, 0.0
  %v511 = vmax.f32 %v332, 0.0
  %v512 = vmax.f32 %v335, 0.0
  %v513 = vmax.f32 %v338, 0.0
  %v514 = vmax.f32 %v341, 0.0
  %v515 = vmax.f32 %v344, 0.0
  %v516 = vmax.f32 %v347, 0.0
  %v517 = vmax.f32 %v350, 0.0
  %v518 = vmax.f32 %v353, 0.0
  %v519 = vmax.f32 %v356, 0.0
  %v520 = vmax.f32 %v359, 0.0
  %v521 = vmax.f32 %v362, 0.0
  %v522 = vmax.f32 %v365, 0.0
  %v523 = vmax.f32 %v368, 0.0
  %v524 = vmax.f32 %v371, 0.0
  %v525 = vmax.f32 %v374, 0.0
  %v526 = vmax.f32 %v377, 0.0
  %v527 = vmax.f32 %v380, 0.0
  %v528 = vmax.f32 %v383, 0.0
  %v529 = vmax.f32 %v386, 0.0
  %v530 = vmax.f32 %v389, 0.0
  %v531 = vmax.f32 %v392, 0.0
  %v532 = vmax.f32 %v395, 0.0
  %v533 = vmax.f32 %v398, 0.0
  %v534 = vmax.f32 %v401, 0.0
  %v535 = vmax.f32 %v404, 0.0
  %v536 = vmax.f32 %v407, 0.0
  %v537 = vmax.f32 %v410, 0.0
  %v538 = vmax.f32 %v413, 0.0
  %v539 = vmax.f32 %v416, 0.0
  %v540 = vmax.f32 %v419, 0.0
  %v541 = vmax.f32 %v422, 0.0
  %v542 = vmax.f32 %v425, 0.0
  %v543 = vmax.f32 %v428, 0.0
  %v544 = vmax.f32 %v431, 0.0
  %v545 = vmax.f32 %v434, 0.0
  %v546 = vmax.f32 %v437, 0.0
  %v547 = vmax.f32 %v440, 0.0
  %v548 = vmax.f32 %v443, 0.0
  %v549 = vmax.f32 %v446, 0.0
  %v550 = vmax.f32 %v449, 0.0
  %vm551 = vcmask 130048
  %552 = vst.msk [vmem:[%s3] sm:$0xff] %vm551, %v451
  %553 = vst.msk [vmem:[%s3 + $0x8] sm:$0xff] %vm551, %v452
  %554 = vst.msk [vmem:[%s3 + $0x10] sm:$0xff] %vm551, %v453
  %555 = vst.msk [vmem:[%s3 + $0x18] sm:$0xff] %vm551, %v454
  %556 = vst.msk [vmem:[%s3 + $0x20] sm:$0xff] %vm551, %v455
  %557 = vst.msk [vmem:[%s3 + $0x28] sm:$0xff] %vm551, %v456
  %558 = vst.msk [vmem:[%s3 + $0x30] sm:$0xff] %vm551, %v457
  %559 = vst.msk [vmem:[%s3 + $0x38] sm:$0xff] %vm551, %v458
  %560 = vst.msk [vmem:[%s3 + $0x40] sm:$0xff] %vm551, %v459
  %561 = vst.msk [vmem:[%s3 + $0x48] sm:$0xff] %vm551, %v460
  %562 = vst.msk [vmem:[%s3 + $0x50] sm:$0xff] %vm551, %v461
  %563 = vst.msk [vmem:[%s3 + $0x58] sm:$0xff] %vm551, %v462
  %564 = vst.msk [vmem:[%s3 + $0x60] sm:$0xff] %vm551, %v463
  %565 = vst.msk [vmem:[%s3 + $0x68] sm:$0xff] %vm551, %v464
  %566 = vst.msk [vmem:[%s3 + $0x70] sm:$0xff] %vm551, %v465
  %567 = vst.msk [vmem:[%s3 + $0x78] sm:$0xff] %vm551, %v466
  %568 = vst.msk [vmem:[%s3 + $0x80] sm:$0xff] %vm551, %v467
  %569 = vst.msk [vmem:[%s3 + $0x88] sm:$0xff] %vm551, %v468
  %570 = vst.msk [vmem:[%s3 + $0x90] sm:$0xff] %vm551, %v469
  %571 = vst.msk [vmem:[%s3 + $0x98] sm:$0xff] %vm551, %v470
  %572 = vst.msk [vmem:[%s3 + $0xa0] sm:$0xff] %vm551, %v471
  %573 = vst.msk [vmem:[%s3 + $0xa8] sm:$0xff] %vm551, %v472
  %574 = vst.msk [vmem:[%s3 + $0xb0] sm:$0xff] %vm551, %v473
  %575 = vst.msk [vmem:[%s3 + $0xb8] sm:$0xff] %vm551, %v474
  %576 = vst.msk [vmem:[%s3 + $0xc0] sm:$0xff] %vm551, %v475
  %577 = vst.msk [vmem:[%s3 + $0xc8] sm:$0xff] %vm551, %v476
  %578 = vst.msk [vmem:[%s3 + $0xd0] sm:$0xff] %vm551, %v477
  %579 = vst.msk [vmem:[%s3 + $0xd8] sm:$0xff] %vm551, %v478
  %580 = vst.msk [vmem:[%s3 + $0xe0] sm:$0xff] %vm551, %v479
  %581 = vst.msk [vmem:[%s3 + $0xe8] sm:$0xff] %vm551, %v480
  %582 = vst.msk [vmem:[%s3 + $0xf0] sm:$0xff] %vm551, %v481
  %583 = vst.msk [vmem:[%s3 + $0xf8] sm:$0xff] %vm551, %v482
  %584 = vst.msk [vmem:[%s3 + $0x100] sm:$0xff] %vm551, %v483
  %585 = vst.msk [vmem:[%s3 + $0x108] sm:$0xff] %vm551, %v484
  %586 = vst.msk [vmem:[%s3 + $0x110] sm:$0xff] %vm551, %v485
  %587 = vst.msk [vmem:[%s3 + $0x118] sm:$0xff] %vm551, %v486
  %588 = vst.msk [vmem:[%s3 + $0x120] sm:$0xff] %vm551, %v487
  %589 = vst.msk [vmem:[%s3 + $0x128] sm:$0xff] %vm551, %v488
  %590 = vst.msk [vmem:[%s3 + $0x130] sm:$0xff] %vm551, %v489
  %591 = vst.msk [vmem:[%s3 + $0x138] sm:$0xff] %vm551, %v490
  %592 = vst.msk [vmem:[%s3 + $0x140] sm:$0xff] %vm551, %v491
  %593 = vst.msk [vmem:[%s3 + $0x148] sm:$0xff] %vm551, %v492
  %594 = vst.msk [vmem:[%s3 + $0x150] sm:$0xff] %vm551, %v493
  %595 = vst.msk [vmem:[%s3 + $0x158] sm:$0xff] %vm551, %v494
  %596 = vst.msk [vmem:[%s3 + $0x160] sm:$0xff] %vm551, %v495
  %597 = vst.msk [vmem:[%s3 + $0x168] sm:$0xff] %vm551, %v496
  %598 = vst.msk [vmem:[%s3 + $0x170] sm:$0xff] %vm551, %v497
  %599 = vst.msk [vmem:[%s3 + $0x178] sm:$0xff] %vm551, %v498
  %600 = vst.msk [vmem:[%s3 + $0x180] sm:$0xff] %vm551, %v499
  %601 = vst.msk [vmem:[%s3 + $0x188] sm:$0xff] %vm551, %v500
  %602 = vst.msk [vmem:[%s3 + $0x190] sm:$0xff] %vm551, %v501
  %603 = vst.msk [vmem:[%s3 + $0x198] sm:$0xff] %vm551, %v502
  %604 = vst.msk [vmem:[%s3 + $0x1a0] sm:$0xff] %vm551, %v503
  %605 = vst.msk [vmem:[%s3 + $0x1a8] sm:$0xff] %vm551, %v504
  %606 = vst.msk [vmem:[%s3 + $0x1b0] sm:$0xff] %vm551, %v505
  %607 = vst.msk [vmem:[%s3 + $0x1b8] sm:$0xff] %vm551, %v506
  %608 = vst.msk [vmem:[%s3 + $0x1c0] sm:$0xff] %vm551, %v507
  %609 = vst.msk [vmem:[%s3 + $0x1c8] sm:$0xff] %vm551, %v508
  %610 = vst.msk [vmem:[%s3 + $0x1d0] sm:$0xff] %vm551, %v509
  %611 = vst.msk [vmem:[%s3 + $0x1d8] sm:$0xff] %vm551, %v510
  %612 = vst.msk [vmem:[%s3 + $0x1e0] sm:$0xff] %vm551, %v511
  %613 = vst.msk [vmem:[%s3 + $0x1e8] sm:$0xff] %vm551, %v512
  %614 = vst.msk [vmem:[%s3 + $0x1f0] sm:$0xff] %vm551, %v513
  %615 = vst.msk [vmem:[%s3 + $0x1f8] sm:$0xff] %vm551, %v514
  %616 = vst.msk [vmem:[%s3 + $0x200] sm:$0xff] %vm551, %v515
  %617 = vst.msk [vmem:[%s3 + $0x208] sm:$0xff] %vm551, %v516
  %618 = vst.msk [vmem:[%s3 + $0x210] sm:$0xff] %vm551, %v517
  %619 = vst.msk [vmem:[%s3 + $0x218] sm:$0xff] %vm551, %v518
  %620 = vst.msk [vmem:[%s3 + $0x220] sm:$0xff] %vm551, %v519
  %621 = vst.msk [vmem:[%s3 + $0x228] sm:$0xff] %vm551, %v520
  %622 = vst.msk [vmem:[%s3 + $0x230] sm:$0xff] %vm551, %v521
  %623 = vst.msk [vmem:[%s3 + $0x238] sm:$0xff] %vm551, %v522
  %624 = vst.msk [vmem:[%s3 + $0x240] sm:$0xff] %vm551, %v523
  %625 = vst.msk [vmem:[%s3 + $0x248] sm:$0xff] %vm551, %v524
  %626 = vst.msk [vmem:[%s3 + $0x250] sm:$0xff] %vm551, %v525
  %627 = vst.msk [vmem:[%s3 + $0x258] sm:$0xff] %vm551, %v526
  %628 = vst.msk [vmem:[%s3 + $0x260] sm:$0xff] %vm551, %v527
  %629 = vst.msk [vmem:[%s3 + $0x268] sm:$0xff] %vm551, %v528
  %630 = vst.msk [vmem:[%s3 + $0x270] sm:$0xff] %vm551, %v529
  %631 = vst.msk [vmem:[%s3 + $0x278] sm:$0xff] %vm551, %v530
  %632 = vst.msk [vmem:[%s3 + $0x280] sm:$0xff] %vm551, %v531
  %633 = vst.msk [vmem:[%s3 + $0x288] sm:$0xff] %vm551, %v532
  %634 = vst.msk [vmem:[%s3 + $0x290] sm:$0xff] %vm551, %v533
  %635 = vst.msk [vmem:[%s3 + $0x298] sm:$0xff] %vm551, %v534
  %636 = vst.msk [vmem:[%s3 + $0x2a0] sm:$0xff] %vm551, %v535
  %637 = vst.msk [vmem:[%s3 + $0x2a8] sm:$0xff] %vm551, %v536
  %638 = vst.msk [vmem:[%s3 + $0x2b0] sm:$0xff] %vm551, %v537
  %639 = vst.msk [vmem:[%s3 + $0x2b8] sm:$0xff] %vm551, %v538
  %640 = vst.msk [vmem:[%s3 + $0x2c0] sm:$0xff] %vm551, %v539
  %641 = vst.msk [vmem:[%s3 + $0x2c8] sm:$0xff] %vm551, %v540
  %642 = vst.msk [vmem:[%s3 + $0x2d0] sm:$0xff] %vm551, %v541
  %643 = vst.msk [vmem:[%s3 + $0x2d8] sm:$0xff] %vm551, %v542
  %644 = vst.msk [vmem:[%s3 + $0x2e0] sm:$0xff] %vm551, %v543
  %645 = vst.msk [vmem:[%s3 + $0x2e8] sm:$0xff] %vm551, %v544
  %646 = vst.msk [vmem:[%s3 + $0x2f0] sm:$0xff] %vm551, %v545
  %647 = vst.msk [vmem:[%s3 + $0x2f8] sm:$0xff] %vm551, %v546
  %648 = vst.msk [vmem:[%s3 + $0x300] sm:$0xff] %vm551, %v547
  %649 = vst.msk [vmem:[%s3 + $0x308] sm:$0xff] %vm551, %v548
  %650 = vst.msk [vmem:[%s3 + $0x310] sm:$0xff] %vm551, %v549
  %651 = vst.msk [vmem:[%s3 + $0x318] sm:$0xff] %vm551, %v550
  // Predicated region
  $region14: #{noisy_dqn_forward.4} parent=0 // pred_check
    _
  $region15: #{noisy_dqn_forward.4} parent=0 // pred_check_branch
    %653 = sbr.rel (0) target = $region17
  $region16: #{noisy_dqn_forward.4} parent=0 // pred_region
    _
  $region17: #{noisy_dqn_forward.4} parent=0 // pred_fallthru
    _
  // Predicated region
  $region18: #{noisy_dqn_forward.4} parent=0 // pred_check
    _
  $region19: #{noisy_dqn_forward.4} parent=0 // pred_check_branch
    %655 = sbr.rel (0) target = $region21
  $region20: #{noisy_dqn_forward.4} parent=0 // pred_region
    _
  $region21: #{noisy_dqn_forward.4} parent=0 // pred_fallthru
    _

// kernel: noisy_dqn_forward.5
$region0: #{noisy_dqn_forward.5}
  #allocation0 [shape = 'u32[]', space=smem, size = 0x4, offset = 0x4, fixed_abs, tag = 'smem constant byte address 0x4 - core index']
  #allocation1 [shape = 'u32[72,128]{1,0:T(1,128)}', space=vmem, size = 0x9000, scoped, tag = 'internal scratch']
  %s0 = inlined_call_operand.vmem [shape: f32[168,256], index: 0, kind: input, shape index: {}]
  %s1 = inlined_call_operand.vmem [shape: f32[256,32], index: 1, kind: input, shape index: {}]
  %s2 = inlined_call_operand.vmem [shape: f32[1,32], index: 2, kind: input, shape index: {}]
  %s3 = inlined_call_operand.vmem [shape: f32[168,32], index: 3, kind: output, shape index: {}]
  %s4 = sld [smem:[#allocation0]]
  $region22: #{noisy_dqn_forward.5} parent=0
    _
  %s6 = ssub.s32 1, %s4
  %s7 = scalar_select 0, %s6, %s4
  // Predicated region
  $region2: #{noisy_dqn_forward.5} parent=0 // pred_check
    _
  $region3: #{noisy_dqn_forward.5} parent=0 // pred_check_branch
    %9 = sbr.rel (0) target = $region5
  $region4: #{noisy_dqn_forward.5} parent=0 // pred_region
    _
  $region5: #{noisy_dqn_forward.5} parent=0 // pred_fallthru
    _
  // Predicated region
  $region6: #{noisy_dqn_forward.5} parent=0 // pred_check
    _
  $region7: #{noisy_dqn_forward.5} parent=0 // pred_check_branch
    %11 = sbr.rel (0) target = $region9
  $region8: #{noisy_dqn_forward.5} parent=0 // pred_region
    _
  $region9: #{noisy_dqn_forward.5} parent=0 // pred_fallthru
    _
  // Predicated region
  $region10: #{noisy_dqn_forward.5} parent=0 // pred_check
    _
  $region11: #{noisy_dqn_forward.5} parent=0 // pred_check_branch
    %13 = sbr.rel (0) target = $region13
  $region12: #{noisy_dqn_forward.5} parent=0 // pred_region
    _
  $region13: #{noisy_dqn_forward.5} parent=0 // pred_fallthru
    _
  %v14 = vld [vmem:[%s0] sm:$0xff]
  %v15 = vld [vmem:[%s0 + $0x8] sm:$0xff]
  %v16 = vld [vmem:[%s0 + $0x10] sm:$0xff]
  %v17 = vld [vmem:[%s0 + $0x18] sm:$0xff]
  %v18 = vld [vmem:[%s0 + $0x20] sm:$0xff]
  %v19 = vld [vmem:[%s0 + $0x28] sm:$0xff]
  %v20 = vld [vmem:[%s0 + $0x30] sm:$0xff]
  %v21 = vld [vmem:[%s0 + $0x38] sm:$0xff]
  %v22 = vld [vmem:[%s0 + $0x40] sm:$0xff]
  %v23 = vld [vmem:[%s0 + $0x48] sm:$0xff]
  %v24 = vld [vmem:[%s0 + $0x50] sm:$0xff]
  %v25 = vld [vmem:[%s0 + $0x58] sm:$0xff]
  %v26 = vld [vmem:[%s0 + $0x60] sm:$0xff]
  %v27 = vld [vmem:[%s0 + $0x68] sm:$0xff]
  %v28 = vld [vmem:[%s0 + $0x70] sm:$0xff]
  %v29 = vld [vmem:[%s0 + $0x78] sm:$0xff]
  %v30 = vld [vmem:[%s0 + $0x80] sm:$0xff]
  %v31 = vld [vmem:[%s0 + $0x88] sm:$0xff]
  %v32 = vld [vmem:[%s0 + $0x90] sm:$0xff]
  %v33 = vld [vmem:[%s0 + $0x98] sm:$0xff]
  %v34 = vld [vmem:[%s0 + $0xa0] sm:$0xff]
  %v35 = vld [vmem:[%s0 + $0xa8] sm:$0xff]
  %v36 = vld [vmem:[%s0 + $0xb0] sm:$0xff]
  %v37 = vld [vmem:[%s0 + $0xb8] sm:$0xff]
  %v38 = vld [vmem:[%s0 + $0xc0] sm:$0xff]
  %v39 = vld [vmem:[%s0 + $0xc8] sm:$0xff]
  %v40 = vld [vmem:[%s0 + $0xd0] sm:$0xff]
  %v41 = vld [vmem:[%s0 + $0xd8] sm:$0xff]
  %v42 = vld [vmem:[%s0 + $0xe0] sm:$0xff]
  %v43 = vld [vmem:[%s0 + $0xe8] sm:$0xff]
  %v44 = vld [vmem:[%s0 + $0xf0] sm:$0xff]
  %v45 = vld [vmem:[%s0 + $0xf8] sm:$0xff]
  %v46 = vld [vmem:[%s0 + $0x100] sm:$0xff]
  %v47 = vld [vmem:[%s0 + $0x108] sm:$0xff]
  %v48 = vld [vmem:[%s0 + $0x110] sm:$0xff]
  %v49 = vld [vmem:[%s0 + $0x118] sm:$0xff]
  %v50 = vld [vmem:[%s0 + $0x120] sm:$0xff]
  %v51 = vld [vmem:[%s0 + $0x128] sm:$0xff]
  %v52 = vld [vmem:[%s0 + $0x130] sm:$0xff]
  %v53 = vld [vmem:[%s0 + $0x138] sm:$0xff]
  %v54 = vld [vmem:[%s0 + $0x140] sm:$0xff]
  %v55 = vld [vmem:[%s0 + $0x148] sm:$0xff]
  %v56 = vld [vmem:[%s1] sm:$0xff]
  %v57 = vld [vmem:[%s1 + $0x8] sm:$0xff]
  %v58 = vld [vmem:[%s1 + $0x10] sm:$0xff]
  %v59 = vld [vmem:[%s1 + $0x18] sm:$0xff]
  %v60 = vld [vmem:[%s1 + $0x20] sm:$0xff]
  %v61 = vld [vmem:[%s1 + $0x28] sm:$0xff]
  %v62 = vld [vmem:[%s1 + $0x30] sm:$0xff]
  %v63 = vld [vmem:[%s1 + $0x38] sm:$0xff]
  %v64 = vld [vmem:[%s1 + $0x40] sm:$0xff]
  %v65 = vld [vmem:[%s1 + $0x48] sm:$0xff]
  %v66 = vld [vmem:[%s1 + $0x50] sm:$0xff]
  %v67 = vld [vmem:[%s1 + $0x58] sm:$0xff]
  %v68 = vld [vmem:[%s1 + $0x60] sm:$0xff]
  %v69 = vld [vmem:[%s1 + $0x68] sm:$0xff]
  %v70 = vld [vmem:[%s1 + $0x70] sm:$0xff]
  %v71 = vld [vmem:[%s1 + $0x78] sm:$0xff]
  %v72 = vld [vmem:[%s1 + $0x80] sm:$0xff]
  %v73 = vld [vmem:[%s1 + $0x88] sm:$0xff]
  %v74 = vld [vmem:[%s1 + $0x90] sm:$0xff]
  %v75 = vld [vmem:[%s1 + $0x98] sm:$0xff]
  %v76 = vld [vmem:[%s1 + $0xa0] sm:$0xff]
  %v77 = vld [vmem:[%s1 + $0xa8] sm:$0xff]
  %v78 = vld [vmem:[%s1 + $0xb0] sm:$0xff]
  %v79 = vld [vmem:[%s1 + $0xb8] sm:$0xff]
  %v80 = vld [vmem:[%s1 + $0xc0] sm:$0xff]
  %v81 = vld [vmem:[%s1 + $0xc8] sm:$0xff]
  %v82 = vld [vmem:[%s1 + $0xd0] sm:$0xff]
  %v83 = vld [vmem:[%s1 + $0xd8] sm:$0xff]
  %v84 = vld [vmem:[%s1 + $0xe0] sm:$0xff]
  %v85 = vld [vmem:[%s1 + $0xe8] sm:$0xff]
  %v86 = vld [vmem:[%s1 + $0xf0] sm:$0xff]
  %v87 = vld [vmem:[%s1 + $0xf8] sm:$0xff]
  %v88 = vld [vmem:[%s2] sm:$0x1]
  %v90 = vperm.slane %v88, 0
  %92 = vmatpush.msra.mxu0 %v71
  %93 = vmatpush.msra.mxu0 %v70
  %94 = vmatpush.msra.mxu0 %v69
  %95 = vmatpush.msra.mxu0 %v68
  %96 = vmatpush.msra.mxu0 %v67
  %97 = vmatpush.msra.mxu0 %v66
  %98 = vmatpush.msra.mxu0 %v65
  %99 = vmatpush.msra.mxu0 %v64
  %100 = vmatpush.msra.mxu0 %v63
  %101 = vmatpush.msra.mxu0 %v62
  %102 = vmatpush.msra.mxu0 %v61
  %103 = vmatpush.msra.mxu0 %v60
  %104 = vmatpush.msra.mxu0 %v59
  %105 = vmatpush.msra.mxu0 %v58
  %106 = vmatpush.msra.mxu0 %v57
  %107 = vmatpush.msra.mxu0 %v56
  %108 = vmatmul.f32.gmra.mxu0 %v14
  %v109 = vpop.f32.mrf.mxu0
  %v110 = vadd.f32 %v90, %v109
  %111 = vmatmul.f32.gmra.mxu0 %v16
  %v112 = vpop.f32.mrf.mxu0
  %v113 = vadd.f32 %v90, %v112
  %114 = vmatmul.f32.gmra.mxu0 %v18
  %v115 = vpop.f32.mrf.mxu0
  %v116 = vadd.f32 %v90, %v115
  %117 = vmatmul.f32.gmra.mxu0 %v20
  %v118 = vpop.f32.mrf.mxu0
  %v119 = vadd.f32 %v90, %v118
  %120 = vmatmul.f32.gmra.mxu0 %v22
  %v121 = vpop.f32.mrf.mxu0
  %v122 = vadd.f32 %v90, %v121
  %123 = vmatmul.f32.gmra.mxu0 %v24
  %v124 = vpop.f32.mrf.mxu0
  %v125 = vadd.f32 %v90, %v124
  %126 = vmatmul.f32.gmra.mxu0 %v26
  %v127 = vpop.f32.mrf.mxu0
  %v128 = vadd.f32 %v90, %v127
  %129 = vmatmul.f32.gmra.mxu0 %v28
  %v130 = vpop.f32.mrf.mxu0
  %v131 = vadd.f32 %v90, %v130
  %132 = vmatmul.f32.gmra.mxu0 %v30
  %v133 = vpop.f32.mrf.mxu0
  %v134 = vadd.f32 %v90, %v133
  %135 = vmatmul.f32.gmra.mxu0 %v32
  %v136 = vpop.f32.mrf.mxu0
  %v137 = vadd.f32 %v90, %v136
  %138 = vmatmul.f32.gmra.mxu0 %v34
  %v139 = vpop.f32.mrf.mxu0
  %v140 = vadd.f32 %v90, %v139
  %141 = vmatmul.f32.gmra.mxu0 %v36
  %v142 = vpop.f32.mrf.mxu0
  %v143 = vadd.f32 %v90, %v142
  %144 = vmatmul.f32.gmra.mxu0 %v38
  %v145 = vpop.f32.mrf.mxu0
  %v146 = vadd.f32 %v90, %v145
  %147 = vmatmul.f32.gmra.mxu0 %v40
  %v148 = vpop.f32.mrf.mxu0
  %v149 = vadd.f32 %v90, %v148
  %150 = vmatmul.f32.gmra.mxu0 %v42
  %v151 = vpop.f32.mrf.mxu0
  %v152 = vadd.f32 %v90, %v151
  %153 = vmatmul.f32.gmra.mxu0 %v44
  %v154 = vpop.f32.mrf.mxu0
  %v155 = vadd.f32 %v90, %v154
  %156 = vmatmul.f32.gmra.mxu0 %v46
  %v157 = vpop.f32.mrf.mxu0
  %v158 = vadd.f32 %v90, %v157
  %159 = vmatmul.f32.gmra.mxu0 %v48
  %v160 = vpop.f32.mrf.mxu0
  %v161 = vadd.f32 %v90, %v160
  %162 = vmatmul.f32.gmra.mxu0 %v50
  %v163 = vpop.f32.mrf.mxu0
  %v164 = vadd.f32 %v90, %v163
  %165 = vmatmul.f32.gmra.mxu0 %v52
  %v166 = vpop.f32.mrf.mxu0
  %v167 = vadd.f32 %v90, %v166
  %168 = vmatmul.f32.gmra.mxu0 %v54
  %v169 = vpop.f32.mrf.mxu0
  %v170 = vadd.f32 %v90, %v169
  %171 = vdwg.mxu0
  %172 = vmatpush.msra.mxu0 %v87
  %173 = vmatpush.msra.mxu0 %v86
  %174 = vmatpush.msra.mxu0 %v85
  %175 = vmatpush.msra.mxu0 %v84
  %176 = vmatpush.msra.mxu0 %v83
  %177 = vmatpush.msra.mxu0 %v82
  %178 = vmatpush.msra.mxu0 %v81
  %179 = vmatpush.msra.mxu0 %v80
  %180 = vmatpush.msra.mxu0 %v79
  %181 = vmatpush.msra.mxu0 %v78
  %182 = vmatpush.msra.mxu0 %v77
  %183 = vmatpush.msra.mxu0 %v76
  %184 = vmatpush.msra.mxu0 %v75
  %185 = vmatpush.msra.mxu0 %v74
  %186 = vmatpush.msra.mxu0 %v73
  %187 = vmatpush.msra.mxu0 %v72
  %188 = vmatmul.f32.gmra.mxu0 %v15
  %v189 = vpop.f32.mrf.mxu0
  %v190 = vadd.f32 %v110, %v189
  %191 = vmatmul.f32.gmra.mxu0 %v17
  %v192 = vpop.f32.mrf.mxu0
  %v193 = vadd.f32 %v113, %v192
  %194 = vmatmul.f32.gmra.mxu0 %v19
  %v195 = vpop.f32.mrf.mxu0
  %v196 = vadd.f32 %v116, %v195
  %197 = vmatmul.f32.gmra.mxu0 %v21
  %v198 = vpop.f32.mrf.mxu0
  %v199 = vadd.f32 %v119, %v198
  %200 = vmatmul.f32.gmra.mxu0 %v23
  %v201 = vpop.f32.mrf.mxu0
  %v202 = vadd.f32 %v122, %v201
  %203 = vmatmul.f32.gmra.mxu0 %v25
  %v204 = vpop.f32.mrf.mxu0
  %v205 = vadd.f32 %v125, %v204
  %206 = vmatmul.f32.gmra.mxu0 %v27
  %v207 = vpop.f32.mrf.mxu0
  %v208 = vadd.f32 %v128, %v207
  %209 = vmatmul.f32.gmra.mxu0 %v29
  %v210 = vpop.f32.mrf.mxu0
  %v211 = vadd.f32 %v131, %v210
  %212 = vmatmul.f32.gmra.mxu0 %v31
  %v213 = vpop.f32.mrf.mxu0
  %v214 = vadd.f32 %v134, %v213
  %215 = vmatmul.f32.gmra.mxu0 %v33
  %v216 = vpop.f32.mrf.mxu0
  %v217 = vadd.f32 %v137, %v216
  %218 = vmatmul.f32.gmra.mxu0 %v35
  %v219 = vpop.f32.mrf.mxu0
  %v220 = vadd.f32 %v140, %v219
  %221 = vmatmul.f32.gmra.mxu0 %v37
  %v222 = vpop.f32.mrf.mxu0
  %v223 = vadd.f32 %v143, %v222
  %224 = vmatmul.f32.gmra.mxu0 %v39
  %v225 = vpop.f32.mrf.mxu0
  %v226 = vadd.f32 %v146, %v225
  %227 = vmatmul.f32.gmra.mxu0 %v41
  %v228 = vpop.f32.mrf.mxu0
  %v229 = vadd.f32 %v149, %v228
  %230 = vmatmul.f32.gmra.mxu0 %v43
  %v231 = vpop.f32.mrf.mxu0
  %v232 = vadd.f32 %v152, %v231
  %233 = vmatmul.f32.gmra.mxu0 %v45
  %v234 = vpop.f32.mrf.mxu0
  %v235 = vadd.f32 %v155, %v234
  %236 = vmatmul.f32.gmra.mxu0 %v47
  %v237 = vpop.f32.mrf.mxu0
  %v238 = vadd.f32 %v158, %v237
  %239 = vmatmul.f32.gmra.mxu0 %v49
  %v240 = vpop.f32.mrf.mxu0
  %v241 = vadd.f32 %v161, %v240
  %242 = vmatmul.f32.gmra.mxu0 %v51
  %v243 = vpop.f32.mrf.mxu0
  %v244 = vadd.f32 %v164, %v243
  %245 = vmatmul.f32.gmra.mxu0 %v53
  %v246 = vpop.f32.mrf.mxu0
  %v247 = vadd.f32 %v167, %v246
  %248 = vmatmul.f32.gmra.mxu0 %v55
  %v249 = vpop.f32.mrf.mxu0
  %v250 = vadd.f32 %v170, %v249
  %251 = vdwg.mxu0
  %v252 = vmax.f32 %v190, 0.0
  %v253 = vmax.f32 %v193, 0.0
  %v254 = vmax.f32 %v196, 0.0
  %v255 = vmax.f32 %v199, 0.0
  %v256 = vmax.f32 %v202, 0.0
  %v257 = vmax.f32 %v205, 0.0
  %v258 = vmax.f32 %v208, 0.0
  %v259 = vmax.f32 %v211, 0.0
  %v260 = vmax.f32 %v214, 0.0
  %v261 = vmax.f32 %v217, 0.0
  %v262 = vmax.f32 %v220, 0.0
  %v263 = vmax.f32 %v223, 0.0
  %v264 = vmax.f32 %v226, 0.0
  %v265 = vmax.f32 %v229, 0.0
  %v266 = vmax.f32 %v232, 0.0
  %v267 = vmax.f32 %v235, 0.0
  %v268 = vmax.f32 %v238, 0.0
  %v269 = vmax.f32 %v241, 0.0
  %v270 = vmax.f32 %v244, 0.0
  %v271 = vmax.f32 %v247, 0.0
  %v272 = vmax.f32 %v250, 0.0
  %vm273 = vcmask 261120
  %274 = vst.msk [vmem:[%s3] sm:$0xff] %vm273, %v252
  %275 = vst.msk [vmem:[%s3 + $0x8] sm:$0xff] %vm273, %v253
  %276 = vst.msk [vmem:[%s3 + $0x10] sm:$0xff] %vm273, %v254
  %277 = vst.msk [vmem:[%s3 + $0x18] sm:$0xff] %vm273, %v255
  %278 = vst.msk [vmem:[%s3 + $0x20] sm:$0xff] %vm273, %v256
  %279 = vst.msk [vmem:[%s3 + $0x28] sm:$0xff] %vm273, %v257
  %280 = vst.msk [vmem:[%s3 + $0x30] sm:$0xff] %vm273, %v258
  %281 = vst.msk [vmem:[%s3 + $0x38] sm:$0xff] %vm273, %v259
  %282 = vst.msk [vmem:[%s3 + $0x40] sm:$0xff] %vm273, %v260
  %283 = vst.msk [vmem:[%s3 + $0x48] sm:$0xff] %vm273, %v261
  %284 = vst.msk [vmem:[%s3 + $0x50] sm:$0xff] %vm273, %v262
  %285 = vst.msk [vmem:[%s3 + $0x58] sm:$0xff] %vm273, %v263
  %286 = vst.msk [vmem:[%s3 + $0x60] sm:$0xff] %vm273, %v264
  %287 = vst.msk [vmem:[%s3 + $0x68] sm:$0xff] %vm273, %v265
  %288 = vst.msk [vmem:[%s3 + $0x70] sm:$0xff] %vm273, %v266
  %289 = vst.msk [vmem:[%s3 + $0x78] sm:$0xff] %vm273, %v267
  %290 = vst.msk [vmem:[%s3 + $0x80] sm:$0xff] %vm273, %v268
  %291 = vst.msk [vmem:[%s3 + $0x88] sm:$0xff] %vm273, %v269
  %292 = vst.msk [vmem:[%s3 + $0x90] sm:$0xff] %vm273, %v270
  %293 = vst.msk [vmem:[%s3 + $0x98] sm:$0xff] %vm273, %v271
  %294 = vst.msk [vmem:[%s3 + $0xa0] sm:$0xff] %vm273, %v272
  // Predicated region
  $region14: #{noisy_dqn_forward.5} parent=0 // pred_check
    _
  $region15: #{noisy_dqn_forward.5} parent=0 // pred_check_branch
    %296 = sbr.rel (0) target = $region17
  $region16: #{noisy_dqn_forward.5} parent=0 // pred_region
    _
  $region17: #{noisy_dqn_forward.5} parent=0 // pred_fallthru
    _
  // Predicated region
  $region18: #{noisy_dqn_forward.5} parent=0 // pred_check
    _
  $region19: #{noisy_dqn_forward.5} parent=0 // pred_check_branch
    %298 = sbr.rel (0) target = $region21
  $region20: #{noisy_dqn_forward.5} parent=0 // pred_region
    _
  $region21: #{noisy_dqn_forward.5} parent=0 // pred_fallthru
    _

// kernel: noisy_dqn_forward.6
$region0: #{noisy_dqn_forward.6}
  #allocation0 [shape = 'u32[]', space=smem, size = 0x4, offset = 0x4, fixed_abs, tag = 'smem constant byte address 0x4 - core index']
  #allocation1 [shape = 'u32[72,128]{1,0:T(1,128)}', space=vmem, size = 0x9000, scoped, tag = 'internal scratch']
  %s0 = inlined_call_operand.vmem [shape: f32[104,384], index: 0, kind: input, shape index: {}]
  %s1 = inlined_call_operand.vmem [shape: f32[384,64], index: 1, kind: input, shape index: {}]
  %s2 = inlined_call_operand.vmem [shape: f32[1,64], index: 2, kind: input, shape index: {}]
  %s3 = inlined_call_operand.vmem [shape: f32[104,64], index: 3, kind: output, shape index: {}]
  %s4 = sld [smem:[#allocation0]]
  $region22: #{noisy_dqn_forward.6} parent=0
    _
  %s6 = ssub.s32 1, %s4
  %s7 = scalar_select 0, %s6, %s4
  // Predicated region
  $region2: #{noisy_dqn_forward.6} parent=0 // pred_check
    _
  $region3: #{noisy_dqn_forward.6} parent=0 // pred_check_branch
    %9 = sbr.rel (0) target = $region5
  $region4: #{noisy_dqn_forward.6} parent=0 // pred_region
    _
  $region5: #{noisy_dqn_forward.6} parent=0 // pred_fallthru
    _
  // Predicated region
  $region6: #{noisy_dqn_forward.6} parent=0 // pred_check
    _
  $region7: #{noisy_dqn_forward.6} parent=0 // pred_check_branch
    %11 = sbr.rel (0) target = $region9
  $region8: #{noisy_dqn_forward.6} parent=0 // pred_region
    _
  $region9: #{noisy_dqn_forward.6} parent=0 // pred_fallthru
    _
  // Predicated region
  $region10: #{noisy_dqn_forward.6} parent=0 // pred_check
    _
  $region11: #{noisy_dqn_forward.6} parent=0 // pred_check_branch
    %13 = sbr.rel (0) target = $region13
  $region12: #{noisy_dqn_forward.6} parent=0 // pred_region
    _
  $region13: #{noisy_dqn_forward.6} parent=0 // pred_fallthru
    _
  %v14 = vld [vmem:[%s0] sm:$0xff]
  %v15 = vld [vmem:[%s0 + $0x8] sm:$0xff]
  %v16 = vld [vmem:[%s0 + $0x10] sm:$0xff]
  %v17 = vld [vmem:[%s0 + $0x18] sm:$0xff]
  %v18 = vld [vmem:[%s0 + $0x20] sm:$0xff]
  %v19 = vld [vmem:[%s0 + $0x28] sm:$0xff]
  %v20 = vld [vmem:[%s0 + $0x30] sm:$0xff]
  %v21 = vld [vmem:[%s0 + $0x38] sm:$0xff]
  %v22 = vld [vmem:[%s0 + $0x40] sm:$0xff]
  %v23 = vld [vmem:[%s0 + $0x48] sm:$0xff]
  %v24 = vld [vmem:[%s0 + $0x50] sm:$0xff]
  %v25 = vld [vmem:[%s0 + $0x58] sm:$0xff]
  %v26 = vld [vmem:[%s0 + $0x60] sm:$0xff]
  %v27 = vld [vmem:[%s0 + $0x68] sm:$0xff]
  %v28 = vld [vmem:[%s0 + $0x70] sm:$0xff]
  %v29 = vld [vmem:[%s0 + $0x78] sm:$0xff]
  %v30 = vld [vmem:[%s0 + $0x80] sm:$0xff]
  %v31 = vld [vmem:[%s0 + $0x88] sm:$0xff]
  %v32 = vld [vmem:[%s0 + $0x90] sm:$0xff]
  %v33 = vld [vmem:[%s0 + $0x98] sm:$0xff]
  %v34 = vld [vmem:[%s0 + $0xa0] sm:$0xff]
  %v35 = vld [vmem:[%s0 + $0xa8] sm:$0xff]
  %v36 = vld [vmem:[%s0 + $0xb0] sm:$0xff]
  %v37 = vld [vmem:[%s0 + $0xb8] sm:$0xff]
  %v38 = vld [vmem:[%s0 + $0xc0] sm:$0xff]
  %v39 = vld [vmem:[%s0 + $0xc8] sm:$0xff]
  %v40 = vld [vmem:[%s0 + $0xd0] sm:$0xff]
  %v41 = vld [vmem:[%s0 + $0xd8] sm:$0xff]
  %v42 = vld [vmem:[%s0 + $0xe0] sm:$0xff]
  %v43 = vld [vmem:[%s0 + $0xe8] sm:$0xff]
  %v44 = vld [vmem:[%s0 + $0xf0] sm:$0xff]
  %v45 = vld [vmem:[%s0 + $0xf8] sm:$0xff]
  %v46 = vld [vmem:[%s0 + $0x100] sm:$0xff]
  %v47 = vld [vmem:[%s0 + $0x108] sm:$0xff]
  %v48 = vld [vmem:[%s0 + $0x110] sm:$0xff]
  %v49 = vld [vmem:[%s0 + $0x118] sm:$0xff]
  %v50 = vld [vmem:[%s0 + $0x120] sm:$0xff]
  %v51 = vld [vmem:[%s0 + $0x128] sm:$0xff]
  %v52 = vld [vmem:[%s0 + $0x130] sm:$0xff]
  %v53 = vld [vmem:[%s1] sm:$0xff]
  %v54 = vld [vmem:[%s1 + $0x8] sm:$0xff]
  %v55 = vld [vmem:[%s1 + $0x10] sm:$0xff]
  %v56 = vld [vmem:[%s1 + $0x18] sm:$0xff]
  %v57 = vld [vmem:[%s1 + $0x20] sm:$0xff]
  %v58 = vld [vmem:[%s1 + $0x28] sm:$0xff]
  %v59 = vld [vmem:[%s1 + $0x30] sm:$0xff]
  %v60 = vld [vmem:[%s1 + $0x38] sm:$0xff]
  %v61 = vld [vmem:[%s1 + $0x40] sm:$0xff]
  %v62 = vld [vmem:[%s1 + $0x48] sm:$0xff]
  %v63 = vld [vmem:[%s1 + $0x50] sm:$0xff]
  %v64 = vld [vmem:[%s1 + $0x58] sm:$0xff]
  %v65 = vld [vmem:[%s1 + $0x60] sm:$0xff]
  %v66 = vld [vmem:[%s1 + $0x68] sm:$0xff]
  %v67 = vld [vmem:[%s1 + $0x70] sm:$0xff]
  %v68 = vld [vmem:[%s1 + $0x78] sm:$0xff]
  %v69 = vld [vmem:[%s1 + $0x80] sm:$0xff]
  %v70 = vld [vmem:[%s1 + $0x88] sm:$0xff]
  %v71 = vld [vmem:[%s1 + $0x90] sm:$0xff]
  %v72 = vld [vmem:[%s1 + $0x98] sm:$0xff]
  %v73 = vld [vmem:[%s1 + $0xa0] sm:$0xff]
  %v74 = vld [vmem:[%s1 + $0xa8] sm:$0xff]
  %v75 = vld [vmem:[%s1 + $0xb0] sm:$0xff]
  %v76 = vld [vmem:[%s1 + $0xb8] sm:$0xff]
  %v77 = vld [vmem:[%s1 + $0xc0] sm:$0xff]
  %v78 = vld [vmem:[%s1 + $0xc8] sm:$0xff]
  %v79 = vld [vmem:[%s1 + $0xd0] sm:$0xff]
  %v80 = vld [vmem:[%s1 + $0xd8] sm:$0xff]
  %v81 = vld [vmem:[%s1 + $0xe0] sm:$0xff]
  %v82 = vld [vmem:[%s1 + $0xe8] sm:$0xff]
  %v83 = vld [vmem:[%s1 + $0xf0] sm:$0xff]
  %v84 = vld [vmem:[%s1 + $0xf8] sm:$0xff]
  %v85 = vld [vmem:[%s1 + $0x100] sm:$0xff]
  %v86 = vld [vmem:[%s1 + $0x108] sm:$0xff]
  %v87 = vld [vmem:[%s1 + $0x110] sm:$0xff]
  %v88 = vld [vmem:[%s1 + $0x118] sm:$0xff]
  %v89 = vld [vmem:[%s1 + $0x120] sm:$0xff]
  %v90 = vld [vmem:[%s1 + $0x128] sm:$0xff]
  %v91 = vld [vmem:[%s1 + $0x130] sm:$0xff]
  %v92 = vld [vmem:[%s1 + $0x138] sm:$0xff]
  %v93 = vld [vmem:[%s1 + $0x140] sm:$0xff]
  %v94 = vld [vmem:[%s1 + $0x148] sm:$0xff]
  %v95 = vld [vmem:[%s1 + $0x150] sm:$0xff]
  %v96 = vld [vmem:[%s1 + $0x158] sm:$0xff]
  %v97 = vld [vmem:[%s1 + $0x160] sm:$0xff]
  %v98 = vld [vmem:[%s1 + $0x168] sm:$0xff]
  %v99 = vld [vmem:[%s1 + $0x170] sm:$0xff]
  %v100 = vld [vmem:[%s1 + $0x178] sm:$0xff]
  %v101 = vld [vmem:[%s2] sm:$0x1]
  %v103 = vperm.slane %v101, 0
  %105 = vmatpush.msra.mxu0 %v68
  %106 = vmatpush.msra.mxu0 %v67
  %107 = vmatpush.msra.mxu0 %v66
  %108 = vmatpush.msra.mxu0 %v65
  %109 = vmatpush.msra.mxu0 %v64
  %110 = vmatpush.msra.mxu0 %v63
  %111 = vmatpush.msra.mxu0 %v62
  %112 = vmatpush.msra.mxu0 %v61
  %113 = vmatpush.msra.mxu0 %v60
  %114 = vmatpush.msra.mxu0 %v59
  %115 = vmatpush.msra.mxu0 %v58
  %116 = vmatpush.msra.mxu0 %v57
  %117 = vmatpush.msra.mxu0 %v56
  %118 = vmatpush.msra.mxu0 %v55
  %119 = vmatpush.msra.mxu0 %v54
  %120 = vmatpush.msra.mxu0 %v53
  %121 = vmatmul.f32.gmra.mxu0 %v14
  %v122 = vpop.f32.mrf.mxu0
  %v123 = vadd.f32 %v103, %v122
  %124 = vmatmul.f32.gmra.mxu0 %v17
  %v125 = vpop.f32.mrf.mxu0
  %v126 = vadd.f32 %v103, %v125
  %127 = vmatmul.f32.gmra.mxu0 %v20
  %v128 = vpop.f32.mrf.mxu0
  %v129 = vadd.f32 %v103, %v128
  %130 = vmatmul.f32.gmra.mxu0 %v23
  %v131 = vpop.f32.mrf.mxu0
  %v132 = vadd.f32 %v103, %v131
  %133 = vmatmul.f32.gmra.mxu0 %v26
  %v134 = vpop.f32.mrf.mxu0
  %v135 = vadd.f32 %v103, %v134
  %136 = vmatmul.f32.gmra.mxu0 %v29
  %v137 = vpop.f32.mrf.mxu0
  %v138 = vadd.f32 %v103, %v137
  %139 = vmatmul.f32.gmra.mxu0 %v32
  %v140 = vpop.f32.mrf.mxu0
  %v141 = vadd.f32 %v103, %v140
  %142 = vmatmul.f32.gmra.mxu0 %v35
  %v143 = vpop.f32.mrf.mxu0
  %v144 = vadd.f32 %v103, %v143
  %145 = vmatmul.f32.gmra.mxu0 %v38
  %v146 = vpop.f32.mrf.mxu0
  %v147 = vadd.f32 %v103, %v146
  %148 = vmatmul.f32.gmra.mxu0 %v41
  %v149 = vpop.f32.mrf.mxu0
  %v150 = vadd.f32 %v103, %v149
  %151 = vmatmul.f32.gmra.mxu0 %v44
  %v152 = vpop.f32.mrf.mxu0
  %v153 = vadd.f32 %v103, %v152
  %154 = vmatmul.f32.gmra.mxu0 %v47
  %v155 = vpop.f32.mrf.mxu0
  %v156 = vadd.f32 %v103, %v155
  %157 = vmatmul.f32.gmra.mxu0 %v50
  %v158 = vpop.f32.mrf.mxu0
  %v159 = vadd.f32 %v103, %v158
  %160 = vdwg.mxu0
  %161 = vmatpush.msra.mxu0 %v84
  %162 = vmatpush.msra.mxu0 %v83
  %163 = vmatpush.msra.mxu0 %v82
  %164 = vmatpush.msra.mxu0 %v81
  %165 = vmatpush.msra.mxu0 %v80
  %166 = vmatpush.msra.mxu0 %v79
  %167 = vmatpush.msra.mxu0 %v78
  %168 = vmatpush.msra.mxu0 %v77
  %169 = vmatpush.msra.mxu0 %v76
  %170 = vmatpush.msra.mxu0 %v75
  %171 = vmatpush.msra.mxu0 %v74
  %172 = vmatpush.msra.mxu0 %v73
  %173 = vmatpush.msra.mxu0 %v72
  %174 = vmatpush.msra.mxu0 %v71
  %175 = vmatpush.msra.mxu0 %v70
  %176 = vmatpush.msra.mxu0 %v69
  %177 = vmatmul.f32.gmra.mxu0 %v15
  %v178 = vpop.f32.mrf.mxu0
  %v179 = vadd.f32 %v123, %v178
  %180 = vmatmul.f32.gmra.mxu0 %v18
  %v181 = vpop.f32.mrf.mxu0
  %v182 = vadd.f32 %v126, %v181
  %183 = vmatmul.f32.gmra.mxu0 %v21
  %v184 = vpop.f32.mrf.mxu0
  %v185 = vadd.f32 %v129, %v184
  %186 = vmatmul.f32.gmra.mxu0 %v24
  %v187 = vpop.f32.mrf.mxu0
  %v188 = vadd.f32 %v132, %v187
  %189 = vmatmul.f32.gmra.mxu0 %v27
  %v190 = vpop.f32.mrf.mxu0
  %v191 = vadd.f32 %v135, %v190
  %192 = vmatmul.f32.gmra.mxu0 %v30
  %v193 = vpop.f32.mrf.mxu0
  %v194 = vadd.f32 %v138, %v193
  %195 = vmatmul.f32.gmra.mxu0 %v33
  %v196 = vpop.f32.mrf.mxu0
  %v197 = vadd.f32 %v141, %v196
  %198 = vmatmul.f32.gmra.mxu0 %v36
  %v199 = vpop.f32.mrf.mxu0
  %v200 = vadd.f32 %v144, %v199
  %201 = vmatmul.f32.gmra.mxu0 %v39
  %v202 = vpop.f32.mrf.mxu0
  %v203 = vadd.f32 %v147, %v202
  %204 = vmatmul.f32.gmra.mxu0 %v42
  %v205 = vpop.f32.mrf.mxu0
  %v206 = vadd.f32 %v150, %v205
  %207 = vmatmul.f32.gmra.mxu0 %v45
  %v208 = vpop.f32.mrf.mxu0
  %v209 = vadd.f32 %v153, %v208
  %210 = vmatmul.f32.gmra.mxu0 %v48
  %v211 = vpop.f32.mrf.mxu0
  %v212 = vadd.f32 %v156, %v211
  %213 = vmatmul.f32.gmra.mxu0 %v51
  %v214 = vpop.f32.mrf.mxu0
  %v215 = vadd.f32 %v159, %v214
  %216 = vdwg.mxu0
  %217 = vmatpush.msra.mxu0 %v100
  %218 = vmatpush.msra.mxu0 %v99
  %219 = vmatpush.msra.mxu0 %v98
  %220 = vmatpush.msra.mxu0 %v97
  %221 = vmatpush.msra.mxu0 %v96
  %222 = vmatpush.msra.mxu0 %v95
  %223 = vmatpush.msra.mxu0 %v94
  %224 = vmatpush.msra.mxu0 %v93
  %225 = vmatpush.msra.mxu0 %v92
  %226 = vmatpush.msra.mxu0 %v91
  %227 = vmatpush.msra.mxu0 %v90
  %228 = vmatpush.msra.mxu0 %v89
  %229 = vmatpush.msra.mxu0 %v88
  %230 = vmatpush.msra.mxu0 %v87
  %231 = vmatpush.msra.mxu0 %v86
  %232 = vmatpush.msra.mxu0 %v85
  %233 = vmatmul.f32.gmra.mxu0 %v16
  %v234 = vpop.f32.mrf.mxu0
  %v235 = vadd.f32 %v179, %v234
  %236 = vmatmul.f32.gmra.mxu0 %v19
  %v237 = vpop.f32.mrf.mxu0
  %v238 = vadd.f32 %v182, %v237
  %239 = vmatmul.f32.gmra.mxu0 %v22
  %v240 = vpop.f32.mrf.mxu0
  %v241 = vadd.f32 %v185, %v240
  %242 = vmatmul.f32.gmra.mxu0 %v25
  %v243 = vpop.f32.mrf.mxu0
  %v244 = vadd.f32 %v188, %v243
  %245 = vmatmul.f32.gmra.mxu0 %v28
  %v246 = vpop.f32.mrf.mxu0
  %v247 = vadd.f32 %v191, %v246
  %248 = vmatmul.f32.gmra.mxu0 %v31
  %v249 = vpop.f32.mrf.mxu0
  %v250 = vadd.f32 %v194, %v249
  %251 = vmatmul.f32.gmra.mxu0 %v34
  %v252 = vpop.f32.mrf.mxu0
  %v253 = vadd.f32 %v197, %v252
  %254 = vmatmul.f32.gmra.mxu0 %v37
  %v255 = vpop.f32.mrf.mxu0
  %v256 = vadd.f32 %v200, %v255
  %257 = vmatmul.f32.gmra.mxu0 %v40
  %v258 = vpop.f32.mrf.mxu0
  %v259 = vadd.f32 %v203, %v258
  %260 = vmatmul.f32.gmra.mxu0 %v43
  %v261 = vpop.f32.mrf.mxu0
  %v262 = vadd.f32 %v206, %v261
  %263 = vmatmul.f32.gmra.mxu0 %v46
  %v264 = vpop.f32.mrf.mxu0
  %v265 = vadd.f32 %v209, %v264
  %266 = vmatmul.f32.gmra.mxu0 %v49
  %v267 = vpop.f32.mrf.mxu0
  %v268 = vadd.f32 %v212, %v267
  %269 = vmatmul.f32.gmra.mxu0 %v52
  %v270 = vpop.f32.mrf.mxu0
  %v271 = vadd.f32 %v215, %v270
  %272 = vdwg.mxu0
  %v273 = vmax.f32 %v235, 0.0
  %v274 = vmax.f32 %v238, 0.0
  %v275 = vmax.f32 %v241, 0.0
  %v276 = vmax.f32 %v244, 0.0
  %v277 = vmax.f32 %v247, 0.0
  %v278 = vmax.f32 %v250, 0.0
  %v279 = vmax.f32 %v253, 0.0
  %v280 = vmax.f32 %v256, 0.0
  %v281 = vmax.f32 %v259, 0.0
  %v282 = vmax.f32 %v262, 0.0
  %v283 = vmax.f32 %v265, 0.0
  %v284 = vmax.f32 %v268, 0.0
  %v285 = vmax.f32 %v271, 0.0
  %vm286 = vcmask 523264
  %287 = vst.msk [vmem:[%s3] sm:$0xff] %vm286, %v273
  %288 = vst.msk [vmem:[%s3 + $0x8] sm:$0xff] %vm286, %v274
  %289 = vst.msk [vmem:[%s3 + $0x10] sm:$0xff] %vm286, %v275
  %290 = vst.msk [vmem:[%s3 + $0x18] sm:$0xff] %vm286, %v276
  %291 = vst.msk [vmem:[%s3 + $0x20] sm:$0xff] %vm286, %v277
  %292 = vst.msk [vmem:[%s3 + $0x28] sm:$0xff] %vm286, %v278
  %293 = vst.msk [vmem:[%s3 + $0x30] sm:$0xff] %vm286, %v279
  %294 = vst.msk [vmem:[%s3 + $0x38] sm:$0xff] %vm286, %v280
  %295 = vst.msk [vmem:[%s3 + $0x40] sm:$0xff] %vm286, %v281
  %296 = vst.msk [vmem:[%s3 + $0x48] sm:$0xff] %vm286, %v282
  %297 = vst.msk [vmem:[%s3 + $0x50] sm:$0xff] %vm286, %v283
  %298 = vst.msk [vmem:[%s3 + $0x58] sm:$0xff] %vm286, %v284
  %299 = vst.msk [vmem:[%s3 + $0x60] sm:$0xff] %vm286, %v285
  // Predicated region
  $region14: #{noisy_dqn_forward.6} parent=0 // pred_check
    _
  $region15: #{noisy_dqn_forward.6} parent=0 // pred_check_branch
    %301 = sbr.rel (0) target = $region17
  $region16: #{noisy_dqn_forward.6} parent=0 // pred_region
    _
  $region17: #{noisy_dqn_forward.6} parent=0 // pred_fallthru
    _
  // Predicated region
  $region18: #{noisy_dqn_forward.6} parent=0 // pred_check
    _
  $region19: #{noisy_dqn_forward.6} parent=0 // pred_check_branch
    %303 = sbr.rel (0) target = $region21
  $region20: #{noisy_dqn_forward.6} parent=0 // pred_region
    _
  $region21: #{noisy_dqn_forward.6} parent=0 // pred_fallthru
    _

// kernel: noisy_dqn_forward.7
$region0: #{noisy_dqn_forward.7}
  #allocation0 [shape = 'u32[]', space=smem, size = 0x4, offset = 0x4, fixed_abs, tag = 'smem constant byte address 0x4 - core index']
  #allocation1 [shape = 'u32[72,128]{1,0:T(1,128)}', space=vmem, size = 0x9000, scoped, tag = 'internal scratch']
  %s0 = inlined_call_operand.vmem [shape: f32[8,3200], index: 0, kind: input, shape index: {}]
  %s1 = inlined_call_operand.vmem [shape: bf16[3200,512], index: 1, kind: input, shape index: {}]
  %s2 = inlined_call_operand.vmem [shape: f32[1,512], index: 2, kind: input, shape index: {}]
  %s3 = inlined_call_operand.vmem [shape: bf16[512,128], index: 3, kind: input, shape index: {}]
  %s4 = inlined_call_operand.vmem [shape: f32[1,128], index: 4, kind: input, shape index: {}]
  %s5 = inlined_call_operand.vmem [shape: f32[8,128], index: 5, kind: output, shape index: {}]
  %s6 = sld [smem:[#allocation0]]
  $region30: #{noisy_dqn_forward.7} parent=0
    _
  %s8 = ssub.s32 1, %s6
  %s9 = scalar_select 0, %s8, %s6
  // Predicated region
  $region2: #{noisy_dqn_forward.7} parent=0 // pred_check
    _
  $region3: #{noisy_dqn_forward.7} parent=0 // pred_check_branch
    %11 = sbr.rel (0) target = $region5
  $region4: #{noisy_dqn_forward.7} parent=0 // pred_region
    _
  $region5: #{noisy_dqn_forward.7} parent=0 // pred_fallthru
    _
  // Predicated region
  $region6: #{noisy_dqn_forward.7} parent=0 // pred_check
    _
  $region7: #{noisy_dqn_forward.7} parent=0 // pred_check_branch
    %13 = sbr.rel (0) target = $region9
  $region8: #{noisy_dqn_forward.7} parent=0 // pred_region
    _
  $region9: #{noisy_dqn_forward.7} parent=0 // pred_fallthru
    _
  // Predicated region
  $region10: #{noisy_dqn_forward.7} parent=0 // pred_check
    _
  $region11: #{noisy_dqn_forward.7} parent=0 // pred_check_branch
    %15 = sbr.rel (0) target = $region13
  $region12: #{noisy_dqn_forward.7} parent=0 // pred_region
    _
  $region13: #{noisy_dqn_forward.7} parent=0 // pred_fallthru
    _
  // Predicated region
  $region14: #{noisy_dqn_forward.7} parent=0 // pred_check
    _
  $region15: #{noisy_dqn_forward.7} parent=0 // pred_check_branch
    %17 = sbr.rel (0) target = $region17
  $region16: #{noisy_dqn_forward.7} parent=0 // pred_region
    _
  $region17: #{noisy_dqn_forward.7} parent=0 // pred_fallthru
    _
  // Predicated region
  $region18: #{noisy_dqn_forward.7} parent=0 // pred_check
    _
  $region19: #{noisy_dqn_forward.7} parent=0 // pred_check_branch
    %19 = sbr.rel (0) target = $region21
  $region20: #{noisy_dqn_forward.7} parent=0 // pred_region
    _
  $region21: #{noisy_dqn_forward.7} parent=0 // pred_fallthru
    _
  %v20 = vld [vmem:[%s0] sm:$0xff]
  %v21 = vld [vmem:[%s0 + $0x8] sm:$0xff]
  %v22 = vld [vmem:[%s0 + $0x10] sm:$0xff]
  %v23 = vld [vmem:[%s0 + $0x18] sm:$0xff]
  %v24 = vld [vmem:[%s0 + $0x20] sm:$0xff]
  %v25 = vld [vmem:[%s0 + $0x28] sm:$0xff]
  %v26 = vld [vmem:[%s0 + $0x30] sm:$0xff]
  %v27 = vld [vmem:[%s0 + $0x38] sm:$0xff]
  %v28 = vld [vmem:[%s0 + $0x40] sm:$0xff]
  %v29 = vld [vmem:[%s0 + $0x48] sm:$0xff]
  %v30 = vld [vmem:[%s0 + $0x50] sm:$0xff]
  %v31 = vld [vmem:[%s0 + $0x58] sm:$0xff]
  %v32 = vld [vmem:[%s0 + $0x60] sm:$0xff]
  %v33 = vld [vmem:[%s0 + $0x68] sm:$0xff]
  %v34 = vld [vmem:[%s0 + $0x70] sm:$0xff]
  %v35 = vld [vmem:[%s0 + $0x78] sm:$0xff]
  %v36 = vld [vmem:[%s0 + $0x80] sm:$0xff]
  %v37 = vld [vmem:[%s0 + $0x88] sm:$0xff]
  %v38 = vld [vmem:[%s0 + $0x90] sm:$0xff]
  %v39 = vld [vmem:[%s0 + $0x98] sm:$0xff]
  %v40 = vld [vmem:[%s0 + $0xa0] sm:$0xff]
  %v41 = vld [vmem:[%s0 + $0xa8] sm:$0xff]
  %v42 = vld [vmem:[%s0 + $0xb0] sm:$0xff]
  %v43 = vld [vmem:[%s0 + $0xb8] sm:$0xff]
  %v44 = vld [vmem:[%s0 + $0xc0] sm:$0xff]
  %v45 = vpack.c.bf16 %v20, %v20
  %v46 = vpack.c.bf16 %v21, %v21
  %v47 = vpack.c.bf16 %v22, %v22
  %v48 = vpack.c.bf16 %v23, %v23
  %v49 = vpack.c.bf16 %v24, %v24
  %v50 = vpack.c.bf16 %v25, %v25
  %v51 = vpack.c.bf16 %v26, %v26
  %v52 = vpack.c.bf16 %v27, %v27
  %v53 = vpack.c.bf16 %v28, %v28
  %v54 = vpack.c.bf16 %v29, %v29
  %v55 = vpack.c.bf16 %v30, %v30
  %v56 = vpack.c.bf16 %v31, %v31
  %v57 = vpack.c.bf16 %v32, %v32
  %v58 = vpack.c.bf16 %v33, %v33
  %v59 = vpack.c.bf16 %v34, %v34
  %v60 = vpack.c.bf16 %v35, %v35
  %v61 = vpack.c.bf16 %v36, %v36
  %v62 = vpack.c.bf16 %v37, %v37
  %v63 = vpack.c.bf16 %v38, %v38
  %v64 = vpack.c.bf16 %v39, %v39
  %v65 = vpack.c.bf16 %v40, %v40
  %v66 = vpack.c.bf16 %v41, %v41
  %v67 = vpack.c.bf16 %v42, %v42
  %v68 = vpack.c.bf16 %v43, %v43
  %v69 = vpack.c.bf16 %v44, %v44
  %v70 = vld [vmem:[%s1] sm:$0xff]
  %v71 = vld [vmem:[%s1 + $0x8] sm:$0xff]
  %v72 = vld [vmem:[%s1 + $0x10] sm:$0xff]
  %v73 = vld [vmem:[%s1 + $0x18] sm:$0xff]
  %v74 = vld [vmem:[%s1 + $0x20] sm:$0xff]
  %v75 = vld [vmem:[%s1 + $0x28] sm:$0xff]
  %v76 = vld [vmem:[%s1 + $0x30] sm:$0xff]
  %v77 = vld [vmem:[%s1 + $0x38] sm:$0xff]
  %v78 = vld [vmem:[%s1 + $0x40] sm:$0xff]
  %v79 = vld [vmem:[%s1 + $0x48] sm:$0xff]
  %v80 = vld [vmem:[%s1 + $0x50] sm:$0xff]
  %v81 = vld [vmem:[%s1 + $0x58] sm:$0xff]
  %v82 = vld [vmem:[%s1 + $0x60] sm:$0xff]
  %v83 = vld [vmem:[%s1 + $0x68] sm:$0xff]
  %v84 = vld [vmem:[%s1 + $0x70] sm:$0xff]
  %v85 = vld [vmem:[%s1 + $0x78] sm:$0xff]
  %v86 = vld [vmem:[%s1 + $0x80] sm:$0xff]
  %v87 = vld [vmem:[%s1 + $0x88] sm:$0xff]
  %v88 = vld [vmem:[%s1 + $0x90] sm:$0xff]
  %v89 = vld [vmem:[%s1 + $0x98] sm:$0xff]
  %v90 = vld [vmem:[%s1 + $0xa0] sm:$0xff]
  %v91 = vld [vmem:[%s1 + $0xa8] sm:$0xff]
  %v92 = vld [vmem:[%s1 + $0xb0] sm:$0xff]
  %v93 = vld [vmem:[%s1 + $0xb8] sm:$0xff]
  %v94 = vld [vmem:[%s1 + $0xc0] sm:$0xff]
  %v95 = vld [vmem:[%s1 + $0xc8] sm:$0xff]
  %v96 = vld [vmem:[%s1 + $0xd0] sm:$0xff]
  %v97 = vld [vmem:[%s1 + $0xd8] sm:$0xff]
  %v98 = vld [vmem:[%s1 + $0xe0] sm:$0xff]
  %v99 = vld [vmem:[%s1 + $0xe8] sm:$0xff]
  %v100 = vld [vmem:[%s1 + $0xf0] sm:$0xff]
  %v101 = vld [vmem:[%s1 + $0xf8] sm:$0xff]
  %v102 = vld [vmem:[%s1 + $0x100] sm:$0xff]
  %v103 = vld [vmem:[%s1 + $0x108] sm:$0xff]
  %v104 = vld [vmem:[%s1 + $0x110] sm:$0xff]
  %v105 = vld [vmem:[%s1 + $0x118] sm:$0xff]
  %v106 = vld [vmem:[%s1 + $0x120] sm:$0xff]
  %v107 = vld [vmem:[%s1 + $0x128] sm:$0xff]
  %v108 = vld [vmem:[%s1 + $0x130] sm:$0xff]
  %v109 = vld [vmem:[%s1 + $0x138] sm:$0xff]
  %v110 = vld [vmem:[%s1 + $0x140] sm:$0xff]
  %v111 = vld [vmem:[%s1 + $0x148] sm:$0xff]
  %v112 = vld [vmem:[%s1 + $0x150] sm:$0xff]
  %v113 = vld [vmem:[%s1 + $0x158] sm:$0xff]
  %v114 = vld [vmem:[%s1 + $0x160] sm:$0xff]
  %v115 = vld [vmem:[%s1 + $0x168] sm:$0xff]
  %v116 = vld [vmem:[%s1 + $0x170] sm:$0xff]
  %v117 = vld [vmem:[%s1 + $0x178] sm:$0xff]
  %v118 = vld [vmem:[%s1 + $0x180] sm:$0xff]
  %v119 = vld [vmem:[%s1 + $0x188] sm:$0xff]
  %v120 = vld [vmem:[%s1 + $0x190] sm:$0xff]
  %v121 = vld [vmem:[%s1 + $0x198] sm:$0xff]
  %v122 = vld [vmem:[%s1 + $0x1a0] sm:$0xff]
  %v123 = vld [vmem:[%s1 + $0x1a8] sm:$0xff]
  %v124 = vld [vmem:[%s1 + $0x1b0] sm:$0xff]
  %v125 = vld [vmem:[%s1 + $0x1b8] sm:$0xff]
  %v126 = vld [vmem:[%s1 + $0x1c0] sm:$0xff]
  %v127 = vld [vmem:[%s1 + $0x1c8] sm:$0xff]
  %v128 = vld [vmem:[%s1 + $0x1d0] sm:$0xff]
  %v129 = vld [vmem:[%s1 + $0x1d8] sm:$0xff]
  %v130 = vld [vmem:[%s1 + $0x1e0] sm:$0xff]
  %v131 = vld [vmem:[%s1 + $0x1e8] sm:$0xff]
  %v132 = vld [vmem:[%s1 + $0x1f0] sm:$0xff]
  %v133 = vld [vmem:[%s1 + $0x1f8] sm:$0xff]
  %v134 = vld [vmem:[%s1 + $0x200] sm:$0xff]
  %v135 = vld [vmem:[%s1 + $0x208] sm:$0xff]
  %v136 = vld [vmem:[%s1 + $0x210] sm:$0xff]
  %v137 = vld [vmem:[%s1 + $0x218] sm:$0xff]
  %v138 = vld [vmem:[%s1 + $0x220] sm:$0xff]
  %v139 = vld [vmem:[%s1 + $0x228] sm:$0xff]
  %v140 = vld [vmem:[%s1 + $0x230] sm:$0xff]
  %v141 = vld [vmem:[%s1 + $0x238] sm:$0xff]
  %v142 = vld [vmem:[%s1 + $0x240] sm:$0xff]
  %v143 = vld [vmem:[%s1 + $0x248] sm:$0xff]
  %v144 = vld [vmem:[%s1 + $0x250] sm:$0xff]
  %v145 = vld [vmem:[%s1 + $0x258] sm:$0xff]
  %v146 = vld [vmem:[%s1 + $0x260] sm:$0xff]
  %v147 = vld [vmem:[%s1 + $0x268] sm:$0xff]
  %v148 = vld [vmem:[%s1 + $0x270] sm:$0xff]
  %v149 = vld [vmem:[%s1 + $0x278] sm:$0xff]
  %v150 = vld [vmem:[%s1 + $0x280] sm:$0xff]
  %v151 = vld [vmem:[%s1 + $0x288] sm:$0xff]
  %v152 = vld [vmem:[%s1 + $0x290] sm:$0xff]
  %v153 = vld [vmem:[%s1 + $0x298] sm:$0xff]
  %v154 = vld [vmem:[%s1 + $0x2a0] sm:$0xff]
  %v155 = vld [vmem:[%s1 + $0x2a8] sm:$0xff]
  %v156 = vld [vmem:[%s1 + $0x2b0] sm:$0xff]
  %v157 = vld [vmem:[%s1 + $0x2b8] sm:$0xff]
  %v158 = vld [vmem:[%s1 + $0x2c0] sm:$0xff]
  %v159 = vld [vmem:[%s1 + $0x2c8] sm:$0xff]
  %v160 = vld [vmem:[%s1 + $0x2d0] sm:$0xff]
  %v161 = vld [vmem:[%s1 + $0x2d8] sm:$0xff]
  %v162 = vld [vmem:[%s1 + $0x2e0] sm:$0xff]
  %v163 = vld [vmem:[%s1 + $0x2e8] sm:$0xff]
  %v164 = vld [vmem:[%s1 + $0x2f0] sm:$0xff]
  %v165 = vld [vmem:[%s1 + $0x2f8] sm:$0xff]
  %v166 = vld [vmem:[%s1 + $0x300] sm:$0xff]
  %v167 = vld [vmem:[%s1 + $0x308] sm:$0xff]
  %v168 = vld [vmem:[%s1 + $0x310] sm:$0xff]
  %v169 = vld [vmem:[%s1 + $0x318] sm:$0xff]
  %v170 = vld [vmem:[%s1 + $0x320] sm:$0xff]
  %v171 = vld [vmem:[%s1 + $0x328] sm:$0xff]
  %v172 = vld [vmem:[%s1 + $0x330] sm:$0xff]
  %v173 = vld [vmem:[%s1 + $0x338] sm:$0xff]
  %v174 = vld [vmem:[%s1 + $0x340] sm:$0xff]
  %v175 = vld [vmem:[%s1 + $0x348] sm:$0xff]
  %v176 = vld [vmem:[%s1 + $0x350] sm:$0xff]
  %v177 = vld [vmem:[%s1 + $0x358] sm:$0xff]
  %v178 = vld [vmem:[%s1 + $0x360] sm:$0xff]
  %v179 = vld [vmem:[%s1 + $0x368] sm:$0xff]
  %v180 = vld [vmem:[%s1 + $0x370] sm:$0xff]
  %v181 = vld [vmem:[%s1 + $0x378] sm:$0xff]
  %v182 = vld [vmem:[%s1 + $0x380] sm:$0xff]
  %v183 = vld [vmem:[%s1 + $0x388] sm:$0xff]
  %v184 = vld [vmem:[%s1 + $0x390] sm:$0xff]
  %v185 = vld [vmem:[%s1 + $0x398] sm:$0xff]
  %v186 = vld [vmem:[%s1 + $0x3a0] sm:$0xff]
  %v187 = vld [vmem:[%s1 + $0x3a8] sm:$0xff]
  %v188 = vld [vmem:[%s1 + $0x3b0] sm:$0xff]
  %v189 = vld [vmem:[%s1 + $0x3b8] sm:$0xff]
  %v190 = vld [vmem:[%s1 + $0x3c0] sm:$0xff]
  %v191 = vld [vmem:[%s1 + $0x3c8] sm:$0xff]
  %v192 = vld [vmem:[%s1 + $0x3d0] sm:$0xff]
  %v193 = vld [vmem:[%s1 + $0x3d8] sm:$0xff]
  %v194 = vld [vmem:[%s1 + $0x3e0] sm:$0xff]
  %v195 = vld [vmem:[%s1 + $0x3e8] sm:$0xff]
  %v196 = vld [vmem:[%s1 + $0x3f0] sm:$0xff]
  %v197 = vld [vmem:[%s1 + $0x3f8] sm:$0xff]
  %v198 = vld [vmem:[%s1 + $0x400] sm:$0xff]
  %v199 = vld [vmem:[%s1 + $0x408] sm:$0xff]
  %v200 = vld [vmem:[%s1 + $0x410] sm:$0xff]
  %v201 = vld [vmem:[%s1 + $0x418] sm:$0xff]
  %v202 = vld [vmem:[%s1 + $0x420] sm:$0xff]
  %v203 = vld [vmem:[%s1 + $0x428] sm:$0xff]
  %v204 = vld [vmem:[%s1 + $0x430] sm:$0xff]
  %v205 = vld [vmem:[%s1 + $0x438] sm:$0xff]
  %v206 = vld [vmem:[%s1 + $0x440] sm:$0xff]
  %v207 = vld [vmem:[%s1 + $0x448] sm:$0xff]
  %v208 = vld [vmem:[%s1 + $0x450] sm:$0xff]
  %v209 = vld [vmem:[%s1 + $0x458] sm:$0xff]
  %v210 = vld [vmem:[%s1 + $0x460] sm:$0xff]
  %v211 = vld [vmem:[%s1 + $0x468] sm:$0xff]
  %v212 = vld [vmem:[%s1 + $0x470] sm:$0xff]
  %v213 = vld [vmem:[%s1 + $0x478] sm:$0xff]
  %v214 = vld [vmem:[%s1 + $0x480] sm:$0xff]
  %v215 = vld [vmem:[%s1 + $0x488] sm:$0xff]
  %v216 = vld [vmem:[%s1 + $0x490] sm:$0xff]
  %v217 = vld [vmem:[%s1 + $0x498] sm:$0xff]
  %v218 = vld [vmem:[%s1 + $0x4a0] sm:$0xff]
  %v219 = vld [vmem:[%s1 + $0x4a8] sm:$0xff]
  %v220 = vld [vmem:[%s1 + $0x4b0] sm:$0xff]
  %v221 = vld [vmem:[%s1 + $0x4b8] sm:$0xff]
  %v222 = vld [vmem:[%s1 + $0x4c0] sm:$0xff]
  %v223 = vld [vmem:[%s1 + $0x4c8] sm:$0xff]
  %v224 = vld [vmem:[%s1 + $0x4d0] sm:$0xff]
  %v225 = vld [vmem:[%s1 + $0x4d8] sm:$0xff]
  %v226 = vld [vmem:[%s1 + $0x4e0] sm:$0xff]
  %v227 = vld [vmem:[%s1 + $0x4e8] sm:$0xff]
  %v228 = vld [vmem:[%s1 + $0x4f0] sm:$0xff]
  %v229 = vld [vmem:[%s1 + $0x4f8] sm:$0xff]
  %v230 = vld [vmem:[%s1 + $0x500] sm:$0xff]
  %v231 = vld [vmem:[%s1 + $0x508] sm:$0xff]
  %v232 = vld [vmem:[%s1 + $0x510] sm:$0xff]
  %v233 = vld [vmem:[%s1 + $0x518] sm:$0xff]
  %v234 = vld [vmem:[%s1 + $0x520] sm:$0xff]
  %v235 = vld [vmem:[%s1 + $0x528] sm:$0xff]
  %v236 = vld [vmem:[%s1 + $0x530] sm:$0xff]
  %v237 = vld [vmem:[%s1 + $0x538] sm:$0xff]
  %v238 = vld [vmem:[%s1 + $0x540] sm:$0xff]
  %v239 = vld [vmem:[%s1 + $0x548] sm:$0xff]
  %v240 = vld [vmem:[%s1 + $0x550] sm:$0xff]
  %v241 = vld [vmem:[%s1 + $0x558] sm:$0xff]
  %v242 = vld [vmem:[%s1 + $0x560] sm:$0xff]
  %v243 = vld [vmem:[%s1 + $0x568] sm:$0xff]
  %v244 = vld [vmem:[%s1 + $0x570] sm:$0xff]
  %v245 = vld [vmem:[%s1 + $0x578] sm:$0xff]
  %v246 = vld [vmem:[%s1 + $0x580] sm:$0xff]
  %v247 = vld [vmem:[%s1 + $0x588] sm:$0xff]
  %v248 = vld [vmem:[%s1 + $0x590] sm:$0xff]
  %v249 = vld [vmem:[%s1 + $0x598] sm:$0xff]
  %v250 = vld [vmem:[%s1 + $0x5a0] sm:$0xff]
  %v251 = vld [vmem:[%s1 + $0x5a8] sm:$0xff]
  %v252 = vld [vmem:[%s1 + $0x5b0] sm:$0xff]
  %v253 = vld [vmem:[%s1 + $0x5b8] sm:$0xff]
  %v254 = vld [vmem:[%s1 + $0x5c0] sm:$0xff]
  %v255 = vld [vmem:[%s1 + $0x5c8] sm:$0xff]
  %v256 = vld [vmem:[%s1 + $0x5d0] sm:$0xff]
  %v257 = vld [vmem:[%s1 + $0x5d8] sm:$0xff]
  %v258 = vld [vmem:[%s1 + $0x5e0] sm:$0xff]
  %v259 = vld [vmem:[%s1 + $0x5e8] sm:$0xff]
  %v260 = vld [vmem:[%s1 + $0x5f0] sm:$0xff]
  %v261 = vld [vmem:[%s1 + $0x5f8] sm:$0xff]
  %v262 = vld [vmem:[%s1 + $0x600] sm:$0xff]
  %v263 = vld [vmem:[%s1 + $0x608] sm:$0xff]
  %v264 = vld [vmem:[%s1 + $0x610] sm:$0xff]
  %v265 = vld [vmem:[%s1 + $0x618] sm:$0xff]
  %v266 = vld [vmem:[%s1 + $0x620] sm:$0xff]
  %v267 = vld [vmem:[%s1 + $0x628] sm:$0xff]
  %v268 = vld [vmem:[%s1 + $0x630] sm:$0xff]
  %v269 = vld [vmem:[%s1 + $0x638] sm:$0xff]
  %v270 = vld [vmem:[%s1 + $0x640] sm:$0xff]
  %v271 = vld [vmem:[%s1 + $0x648] sm:$0xff]
  %v272 = vld [vmem:[%s1 + $0x650] sm:$0xff]
  %v273 = vld [vmem:[%s1 + $0x658] sm:$0xff]
  %v274 = vld [vmem:[%s1 + $0x660] sm:$0xff]
  %v275 = vld [vmem:[%s1 + $0x668] sm:$0xff]
  %v276 = vld [vmem:[%s1 + $0x670] sm:$0xff]
  %v277 = vld [vmem:[%s1 + $0x678] sm:$0xff]
  %v278 = vld [vmem:[%s1 + $0x680] sm:$0xff]
  %v279 = vld [vmem:[%s1 + $0x688] sm:$0xff]
  %v280 = vld [vmem:[%s1 + $0x690] sm:$0xff]
  %v281 = vld [vmem:[%s1 + $0x698] sm:$0xff]
  %v282 = vld [vmem:[%s1 + $0x6a0] sm:$0xff]
  %v283 = vld [vmem:[%s1 + $0x6a8] sm:$0xff]
  %v284 = vld [vmem:[%s1 + $0x6b0] sm:$0xff]
  %v285 = vld [vmem:[%s1 + $0x6b8] sm:$0xff]
  %v286 = vld [vmem:[%s1 + $0x6c0] sm:$0xff]
  %v287 = vld [vmem:[%s1 + $0x6c8] sm:$0xff]
  %v288 = vld [vmem:[%s1 + $0x6d0] sm:$0xff]
  %v289 = vld [vmem:[%s1 + $0x6d8] sm:$0xff]
  %v290 = vld [vmem:[%s1 + $0x6e0] sm:$0xff]
  %v291 = vld [vmem:[%s1 + $0x6e8] sm:$0xff]
  %v292 = vld [vmem:[%s1 + $0x6f0] sm:$0xff]
  %v293 = vld [vmem:[%s1 + $0x6f8] sm:$0xff]
  %v294 = vld [vmem:[%s1 + $0x700] sm:$0xff]
  %v295 = vld [vmem:[%s1 + $0x708] sm:$0xff]
  %v296 = vld [vmem:[%s1 + $0x710] sm:$0xff]
  %v297 = vld [vmem:[%s1 + $0x718] sm:$0xff]
  %v298 = vld [vmem:[%s1 + $0x720] sm:$0xff]
  %v299 = vld [vmem:[%s1 + $0x728] sm:$0xff]
  %v300 = vld [vmem:[%s1 + $0x730] sm:$0xff]
  %v301 = vld [vmem:[%s1 + $0x738] sm:$0xff]
  %v302 = vld [vmem:[%s1 + $0x740] sm:$0xff]
  %v303 = vld [vmem:[%s1 + $0x748] sm:$0xff]
  %v304 = vld [vmem:[%s1 + $0x750] sm:$0xff]
  %v305 = vld [vmem:[%s1 + $0x758] sm:$0xff]
  %v306 = vld [vmem:[%s1 + $0x760] sm:$0xff]
  %v307 = vld [vmem:[%s1 + $0x768] sm:$0xff]
  %v308 = vld [vmem:[%s1 + $0x770] sm:$0xff]
  %v309 = vld [vmem:[%s1 + $0x778] sm:$0xff]
  %v310 = vld [vmem:[%s1 + $0x780] sm:$0xff]
  %v311 = vld [vmem:[%s1 + $0x788] sm:$0xff]
  %v312 = vld [vmem:[%s1 + $0x790] sm:$0xff]
  %v313 = vld [vmem:[%s1 + $0x798] sm:$0xff]
  %v314 = vld [vmem:[%s1 + $0x7a0] sm:$0xff]
  %v315 = vld [vmem:[%s1 + $0x7a8] sm:$0xff]
  %v316 = vld [vmem:[%s1 + $0x7b0] sm:$0xff]
  %v317 = vld [vmem:[%s1 + $0x7b8] sm:$0xff]
  %v318 = vld [vmem:[%s1 + $0x7c0] sm:$0xff]
  %v319 = vld [vmem:[%s1 + $0x7c8] sm:$0xff]
  %v320 = vld [vmem:[%s1 + $0x7d0] sm:$0xff]
  %v321 = vld [vmem:[%s1 + $0x7d8] sm:$0xff]
  %v322 = vld [vmem:[%s1 + $0x7e0] sm:$0xff]
  %v323 = vld [vmem:[%s1 + $0x7e8] sm:$0xff]
  %v324 = vld [vmem:[%s1 + $0x7f0] sm:$0xff]
  %v325 = vld [vmem:[%s1 + $0x7f8] sm:$0xff]
  %v326 = vld [vmem:[%s1 + $0x800] sm:$0xff]
  %v327 = vld [vmem:[%s1 + $0x808] sm:$0xff]
  %v328 = vld [vmem:[%s1 + $0x810] sm:$0xff]
  %v329 = vld [vmem:[%s1 + $0x818] sm:$0xff]
  %v330 = vld [vmem:[%s1 + $0x820] sm:$0xff]
  %v331 = vld [vmem:[%s1 + $0x828] sm:$0xff]
  %v332 = vld [vmem:[%s1 + $0x830] sm:$0xff]
  %v333 = vld [vmem:[%s1 + $0x838] sm:$0xff]
  %v334 = vld [vmem:[%s1 + $0x840] sm:$0xff]
  %v335 = vld [vmem:[%s1 + $0x848] sm:$0xff]
  %v336 = vld [vmem:[%s1 + $0x850] sm:$0xff]
  %v337 = vld [vmem:[%s1 + $0x858] sm:$0xff]
  %v338 = vld [vmem:[%s1 + $0x860] sm:$0xff]
  %v339 = vld [vmem:[%s1 + $0x868] sm:$0xff]
  %v340 = vld [vmem:[%s1 + $0x870] sm:$0xff]
  %v341 = vld [vmem:[%s1 + $0x878] sm:$0xff]
  %v342 = vld [vmem:[%s1 + $0x880] sm:$0xff]
  %v343 = vld [vmem:[%s1 + $0x888] sm:$0xff]
  %v344 = vld [vmem:[%s1 + $0x890] sm:$0xff]
  %v345 = vld [vmem:[%s1 + $0x898] sm:$0xff]
  %v346 = vld [vmem:[%s1 + $0x8a0] sm:$0xff]
  %v347 = vld [vmem:[%s1 + $0x8a8] sm:$0xff]
  %v348 = vld [vmem:[%s1 + $0x8b0] sm:$0xff]
  %v349 = vld [vmem:[%s1 + $0x8b8] sm:$0xff]
  %v350 = vld [vmem:[%s1 + $0x8c0] sm:$0xff]
  %v351 = vld [vmem:[%s1 + $0x8c8] sm:$0xff]
  %v352 = vld [vmem:[%s1 + $0x8d0] sm:$0xff]
  %v353 = vld [vmem:[%s1 + $0x8d8] sm:$0xff]
  %v354 = vld [vmem:[%s1 + $0x8e0] sm:$0xff]
  %v355 = vld [vmem:[%s1 + $0x8e8] sm:$0xff]
  %v356 = vld [vmem:[%s1 + $0x8f0] sm:$0xff]
  %v357 = vld [vmem:[%s1 + $0x8f8] sm:$0xff]
  %v358 = vld [vmem:[%s1 + $0x900] sm:$0xff]
  %v359 = vld [vmem:[%s1 + $0x908] sm:$0xff]
  %v360 = vld [vmem:[%s1 + $0x910] sm:$0xff]
  %v361 = vld [vmem:[%s1 + $0x918] sm:$0xff]
  %v362 = vld [vmem:[%s1 + $0x920] sm:$0xff]
  %v363 = vld [vmem:[%s1 + $0x928] sm:$0xff]
  %v364 = vld [vmem:[%s1 + $0x930] sm:$0xff]
  %v365 = vld [vmem:[%s1 + $0x938] sm:$0xff]
  %v366 = vld [vmem:[%s1 + $0x940] sm:$0xff]
  %v367 = vld [vmem:[%s1 + $0x948] sm:$0xff]
  %v368 = vld [vmem:[%s1 + $0x950] sm:$0xff]
  %v369 = vld [vmem:[%s1 + $0x958] sm:$0xff]
  %v370 = vld [vmem:[%s1 + $0x960] sm:$0xff]
  %v371 = vld [vmem:[%s1 + $0x968] sm:$0xff]
  %v372 = vld [vmem:[%s1 + $0x970] sm:$0xff]
  %v373 = vld [vmem:[%s1 + $0x978] sm:$0xff]
  %v374 = vld [vmem:[%s1 + $0x980] sm:$0xff]
  %v375 = vld [vmem:[%s1 + $0x988] sm:$0xff]
  %v376 = vld [vmem:[%s1 + $0x990] sm:$0xff]
  %v377 = vld [vmem:[%s1 + $0x998] sm:$0xff]
  %v378 = vld [vmem:[%s1 + $0x9a0] sm:$0xff]
  %v379 = vld [vmem:[%s1 + $0x9a8] sm:$0xff]
  %v380 = vld [vmem:[%s1 + $0x9b0] sm:$0xff]
  %v381 = vld [vmem:[%s1 + $0x9b8] sm:$0xff]
  %v382 = vld [vmem:[%s1 + $0x9c0] sm:$0xff]
  %v383 = vld [vmem:[%s1 + $0x9c8] sm:$0xff]
  %v384 = vld [vmem:[%s1 + $0x9d0] sm:$0xff]
  %v385 = vld [vmem:[%s1 + $0x9d8] sm:$0xff]
  %v386 = vld [vmem:[%s1 + $0x9e0] sm:$0xff]
  %v387 = vld [vmem:[%s1 + $0x9e8] sm:$0xff]
  %v388 = vld [vmem:[%s1 + $0x9f0] sm:$0xff]
  %v389 = vld [vmem:[%s1 + $0x9f8] sm:$0xff]
  %v390 = vld [vmem:[%s1 + $0xa00] sm:$0xff]
  %v391 = vld [vmem:[%s1 + $0xa08] sm:$0xff]
  %v392 = vld [vmem:[%s1 + $0xa10] sm:$0xff]
  %v393 = vld [vmem:[%s1 + $0xa18] sm:$0xff]
  %v394 = vld [vmem:[%s1 + $0xa20] sm:$0xff]
  %v395 = vld [vmem:[%s1 + $0xa28] sm:$0xff]
  %v396 = vld [vmem:[%s1 + $0xa30] sm:$0xff]
  %v397 = vld [vmem:[%s1 + $0xa38] sm:$0xff]
  %v398 = vld [vmem:[%s1 + $0xa40] sm:$0xff]
  %v399 = vld [vmem:[%s1 + $0xa48] sm:$0xff]
  %v400 = vld [vmem:[%s1 + $0xa50] sm:$0xff]
  %v401 = vld [vmem:[%s1 + $0xa58] sm:$0xff]
  %v402 = vld [vmem:[%s1 + $0xa60] sm:$0xff]
  %v403 = vld [vmem:[%s1 + $0xa68] sm:$0xff]
  %v404 = vld [vmem:[%s1 + $0xa70] sm:$0xff]
  %v405 = vld [vmem:[%s1 + $0xa78] sm:$0xff]
  %v406 = vld [vmem:[%s1 + $0xa80] sm:$0xff]
  %v407 = vld [vmem:[%s1 + $0xa88] sm:$0xff]
  %v408 = vld [vmem:[%s1 + $0xa90] sm:$0xff]
  %v409 = vld [vmem:[%s1 + $0xa98] sm:$0xff]
  %v410 = vld [vmem:[%s1 + $0xaa0] sm:$0xff]
  %v411 = vld [vmem:[%s1 + $0xaa8] sm:$0xff]
  %v412 = vld [vmem:[%s1 + $0xab0] sm:$0xff]
  %v413 = vld [vmem:[%s1 + $0xab8] sm:$0xff]
  %v414 = vld [vmem:[%s1 + $0xac0] sm:$0xff]
  %v415 = vld [vmem:[%s1 + $0xac8] sm:$0xff]
  %v416 = vld [vmem:[%s1 + $0xad0] sm:$0xff]
  %v417 = vld [vmem:[%s1 + $0xad8] sm:$0xff]
  %v418 = vld [vmem:[%s1 + $0xae0] sm:$0xff]
  %v419 = vld [vmem:[%s1 + $0xae8] sm:$0xff]
  %v420 = vld [vmem:[%s1 + $0xaf0] sm:$0xff]
  %v421 = vld [vmem:[%s1 + $0xaf8] sm:$0xff]
  %v422 = vld [vmem:[%s1 + $0xb00] sm:$0xff]
  %v423 = vld [vmem:[%s1 + $0xb08] sm:$0xff]
  %v424 = vld [vmem:[%s1 + $0xb10] sm:$0xff]
  %v425 = vld [vmem:[%s1 + $0xb18] sm:$0xff]
  %v426 = vld [vmem:[%s1 + $0xb20] sm:$0xff]
  %v427 = vld [vmem:[%s1 + $0xb28] sm:$0xff]
  %v428 = vld [vmem:[%s1 + $0xb30] sm:$0xff]
  %v429 = vld [vmem:[%s1 + $0xb38] sm:$0xff]
  %v430 = vld [vmem:[%s1 + $0xb40] sm:$0xff]
  %v431 = vld [vmem:[%s1 + $0xb48] sm:$0xff]
  %v432 = vld [vmem:[%s1 + $0xb50] sm:$0xff]
  %v433 = vld [vmem:[%s1 + $0xb58] sm:$0xff]
  %v434 = vld [vmem:[%s1 + $0xb60] sm:$0xff]
  %v435 = vld [vmem:[%s1 + $0xb68] sm:$0xff]
  %v436 = vld [vmem:[%s1 + $0xb70] sm:$0xff]
  %v437 = vld [vmem:[%s1 + $0xb78] sm:$0xff]
  %v438 = vld [vmem:[%s1 + $0xb80] sm:$0xff]
  %v439 = vld [vmem:[%s1 + $0xb88] sm:$0xff]
  %v440 = vld [vmem:[%s1 + $0xb90] sm:$0xff]
  %v441 = vld [vmem:[%s1 + $0xb98] sm:$0xff]
  %v442 = vld [vmem:[%s1 + $0xba0] sm:$0xff]
  %v443 = vld [vmem:[%s1 + $0xba8] sm:$0xff]
  %v444 = vld [vmem:[%s1 + $0xbb0] sm:$0xff]
  %v445 = vld [vmem:[%s1 + $0xbb8] sm:$0xff]
  %v446 = vld [vmem:[%s1 + $0xbc0] sm:$0xff]
  %v447 = vld [vmem:[%s1 + $0xbc8] sm:$0xff]
  %v448 = vld [vmem:[%s1 + $0xbd0] sm:$0xff]
  %v449 = vld [vmem:[%s1 + $0xbd8] sm:$0xff]
  %v450 = vld [vmem:[%s1 + $0xbe0] sm:$0xff]
  %v451 = vld [vmem:[%s1 + $0xbe8] sm:$0xff]
  %v452 = vld [vmem:[%s1 + $0xbf0] sm:$0xff]
  %v453 = vld [vmem:[%s1 + $0xbf8] sm:$0xff]
  %v454 = vld [vmem:[%s1 + $0xc00] sm:$0xff]
  %v455 = vld [vmem:[%s1 + $0xc08] sm:$0xff]
  %v456 = vld [vmem:[%s1 + $0xc10] sm:$0xff]
  %v457 = vld [vmem:[%s1 + $0xc18] sm:$0xff]
  %v458 = vld [vmem:[%s1 + $0xc20] sm:$0xff]
  %v459 = vld [vmem:[%s1 + $0xc28] sm:$0xff]
  %v460 = vld [vmem:[%s1 + $0xc30] sm:$0xff]
  %v461 = vld [vmem:[%s1 + $0xc38] sm:$0xff]
  %v462 = vld [vmem:[%s1 + $0xc40] sm:$0xff]
  %v463 = vld [vmem:[%s1 + $0xc48] sm:$0xff]
  %v464 = vld [vmem:[%s1 + $0xc50] sm:$0xff]
  %v465 = vld [vmem:[%s1 + $0xc58] sm:$0xff]
  %v466 = vld [vmem:[%s1 + $0xc60] sm:$0xff]
  %v467 = vld [vmem:[%s1 + $0xc68] sm:$0xff]
  %v468 = vld [vmem:[%s1 + $0xc70] sm:$0xff]
  %v469 = vld [vmem:[%s1 + $0xc78] sm:$0xff]
  %v470 = vld [vmem:[%s1 + $0xc80] sm:$0xff]
  %v471 = vld [vmem:[%s1 + $0xc88] sm:$0xff]
  %v472 = vld [vmem:[%s1 + $0xc90] sm:$0xff]
  %v473 = vld [vmem:[%s1 + $0xc98] sm:$0xff]
  %v474 = vld [vmem:[%s1 + $0xca0] sm:$0xff]
  %v475 = vld [vmem:[%s1 + $0xca8] sm:$0xff]
  %v476 = vld [vmem:[%s1 + $0xcb0] sm:$0xff]
  %v477 = vld [vmem:[%s1 + $0xcb8] sm:$0xff]
  %v478 = vld [vmem:[%s1 + $0xcc0] sm:$0xff]
  %v479 = vld [vmem:[%s1 + $0xcc8] sm:$0xff]
  %v480 = vld [vmem:[%s1 + $0xcd0] sm:$0xff]
  %v481 = vld [vmem:[%s1 + $0xcd8] sm:$0xff]
  %v482 = vld [vmem:[%s1 + $0xce0] sm:$0xff]
  %v483 = vld [vmem:[%s1 + $0xce8] sm:$0xff]
  %v484 = vld [vmem:[%s1 + $0xcf0] sm:$0xff]
  %v485 = vld [vmem:[%s1 + $0xcf8] sm:$0xff]
  %v486 = vld [vmem:[%s1 + $0xd00] sm:$0xff]
  %v487 = vld [vmem:[%s1 + $0xd08] sm:$0xff]
  %v488 = vld [vmem:[%s1 + $0xd10] sm:$0xff]
  %v489 = vld [vmem:[%s1 + $0xd18] sm:$0xff]
  %v490 = vld [vmem:[%s1 + $0xd20] sm:$0xff]
  %v491 = vld [vmem:[%s1 + $0xd28] sm:$0xff]
  %v492 = vld [vmem:[%s1 + $0xd30] sm:$0xff]
  %v493 = vld [vmem:[%s1 + $0xd38] sm:$0xff]
  %v494 = vld [vmem:[%s1 + $0xd40] sm:$0xff]
  %v495 = vld [vmem:[%s1 + $0xd48] sm:$0xff]
  %v496 = vld [vmem:[%s1 + $0xd50] sm:$0xff]
  %v497 = vld [vmem:[%s1 + $0xd58] sm:$0xff]
  %v498 = vld [vmem:[%s1 + $0xd60] sm:$0xff]
  %v499 = vld [vmem:[%s1 + $0xd68] sm:$0xff]
  %v500 = vld [vmem:[%s1 + $0xd70] sm:$0xff]
  %v501 = vld [vmem:[%s1 + $0xd78] sm:$0xff]
  %v502 = vld [vmem:[%s1 + $0xd80] sm:$0xff]
  %v503 = vld [vmem:[%s1 + $0xd88] sm:$0xff]
  %v504 = vld [vmem:[%s1 + $0xd90] sm:$0xff]
  %v505 = vld [vmem:[%s1 + $0xd98] sm:$0xff]
  %v506 = vld [vmem:[%s1 + $0xda0] sm:$0xff]
  %v507 = vld [vmem:[%s1 + $0xda8] sm:$0xff]
  %v508 = vld [vmem:[%s1 + $0xdb0] sm:$0xff]
  %v509 = vld [vmem:[%s1 + $0xdb8] sm:$0xff]
  %v510 = vld [vmem:[%s1 + $0xdc0] sm:$0xff]
  %v511 = vld [vmem:[%s1 + $0xdc8] sm:$0xff]
  %v512 = vld [vmem:[%s1 + $0xdd0] sm:$0xff]
  %v513 = vld [vmem:[%s1 + $0xdd8] sm:$0xff]
  %v514 = vld [vmem:[%s1 + $0xde0] sm:$0xff]
  %v515 = vld [vmem:[%s1 + $0xde8] sm:$0xff]
  %v516 = vld [vmem:[%s1 + $0xdf0] sm:$0xff]
  %v517 = vld [vmem:[%s1 + $0xdf8] sm:$0xff]
  %v518 = vld [vmem:[%s1 + $0xe00] sm:$0xff]
  %v519 = vld [vmem:[%s1 + $0xe08] sm:$0xff]
  %v520 = vld [vmem:[%s1 + $0xe10] sm:$0xff]
  %v521 = vld [vmem:[%s1 + $0xe18] sm:$0xff]
  %v522 = vld [vmem:[%s1 + $0xe20] sm:$0xff]
  %v523 = vld [vmem:[%s1 + $0xe28] sm:$0xff]
  %v524 = vld [vmem:[%s1 + $0xe30] sm:$0xff]
  %v525 = vld [vmem:[%s1 + $0xe38] sm:$0xff]
  %v526 = vld [vmem:[%s1 + $0xe40] sm:$0xff]
  %v527 = vld [vmem:[%s1 + $0xe48] sm:$0xff]
  %v528 = vld [vmem:[%s1 + $0xe50] sm:$0xff]
  %v529 = vld [vmem:[%s1 + $0xe58] sm:$0xff]
  %v530 = vld [vmem:[%s1 + $0xe60] sm:$0xff]
  %v531 = vld [vmem:[%s1 + $0xe68] sm:$0xff]
  %v532 = vld [vmem:[%s1 + $0xe70] sm:$0xff]
  %v533 = vld [vmem:[%s1 + $0xe78] sm:$0xff]
  %v534 = vld [vmem:[%s1 + $0xe80] sm:$0xff]
  %v535 = vld [vmem:[%s1 + $0xe88] sm:$0xff]
  %v536 = vld [vmem:[%s1 + $0xe90] sm:$0xff]
  %v537 = vld [vmem:[%s1 + $0xe98] sm:$0xff]
  %v538 = vld [vmem:[%s1 + $0xea0] sm:$0xff]
  %v539 = vld [vmem:[%s1 + $0xea8] sm:$0xff]
  %v540 = vld [vmem:[%s1 + $0xeb0] sm:$0xff]
  %v541 = vld [vmem:[%s1 + $0xeb8] sm:$0xff]
  %v542 = vld [vmem:[%s1 + $0xec0] sm:$0xff]
  %v543 = vld [vmem:[%s1 + $0xec8] sm:$0xff]
  %v544 = vld [vmem:[%s1 + $0xed0] sm:$0xff]
  %v545 = vld [vmem:[%s1 + $0xed8] sm:$0xff]
  %v546 = vld [vmem:[%s1 + $0xee0] sm:$0xff]
  %v547 = vld [vmem:[%s1 + $0xee8] sm:$0xff]
  %v548 = vld [vmem:[%s1 + $0xef0] sm:$0xff]
  %v549 = vld [vmem:[%s1 + $0xef8] sm:$0xff]
  %v550 = vld [vmem:[%s1 + $0xf00] sm:$0xff]
  %v551 = vld [vmem:[%s1 + $0xf08] sm:$0xff]
  %v552 = vld [vmem:[%s1 + $0xf10] sm:$0xff]
  %v553 = vld [vmem:[%s1 + $0xf18] sm:$0xff]
  %v554 = vld [vmem:[%s1 + $0xf20] sm:$0xff]
  %v555 = vld [vmem:[%s1 + $0xf28] sm:$0xff]
  %v556 = vld [vmem:[%s1 + $0xf30] sm:$0xff]
  %v557 = vld [vmem:[%s1 + $0xf38] sm:$0xff]
  %v558 = vld [vmem:[%s1 + $0xf40] sm:$0xff]
  %v559 = vld [vmem:[%s1 + $0xf48] sm:$0xff]
  %v560 = vld [vmem:[%s1 + $0xf50] sm:$0xff]
  %v561 = vld [vmem:[%s1 + $0xf58] sm:$0xff]
  %v562 = vld [vmem:[%s1 + $0xf60] sm:$0xff]
  %v563 = vld [vmem:[%s1 + $0xf68] sm:$0xff]
  %v564 = vld [vmem:[%s1 + $0xf70] sm:$0xff]
  %v565 = vld [vmem:[%s1 + $0xf78] sm:$0xff]
  %v566 = vld [vmem:[%s1 + $0xf80] sm:$0xff]
  %v567 = vld [vmem:[%s1 + $0xf88] sm:$0xff]
  %v568 = vld [vmem:[%s1 + $0xf90] sm:$0xff]
  %v569 = vld [vmem:[%s1 + $0xf98] sm:$0xff]
  %v570 = vld [vmem:[%s1 + $0xfa0] sm:$0xff]
  %v571 = vld [vmem:[%s1 + $0xfa8] sm:$0xff]
  %v572 = vld [vmem:[%s1 + $0xfb0] sm:$0xff]
  %v573 = vld [vmem:[%s1 + $0xfb8] sm:$0xff]
  %v574 = vld [vmem:[%s1 + $0xfc0] sm:$0xff]
  %v575 = vld [vmem:[%s1 + $0xfc8] sm:$0xff]
  %v576 = vld [vmem:[%s1 + $0xfd0] sm:$0xff]
  %v577 = vld [vmem:[%s1 + $0xfd8] sm:$0xff]
  %v578 = vld [vmem:[%s1 + $0xfe0] sm:$0xff]
  %v579 = vld [vmem:[%s1 + $0xfe8] sm:$0xff]
  %v580 = vld [vmem:[%s1 + $0xff0] sm:$0xff]
  %v581 = vld [vmem:[%s1 + $0xff8] sm:$0xff]
  %v582 = vld [vmem:[%s1 + $0x1000] sm:$0xff]
  %v583 = vld [vmem:[%s1 + $0x1008] sm:$0xff]
  %v584 = vld [vmem:[%s1 + $0x1010] sm:$0xff]
  %v585 = vld [vmem:[%s1 + $0x1018] sm:$0xff]
  %v586 = vld [vmem:[%s1 + $0x1020] sm:$0xff]
  %v587 = vld [vmem:[%s1 + $0x1028] sm:$0xff]
  %v588 = vld [vmem:[%s1 + $0x1030] sm:$0xff]
  %v589 = vld [vmem:[%s1 + $0x1038] sm:$0xff]
  %v590 = vld [vmem:[%s1 + $0x1040] sm:$0xff]
  %v591 = vld [vmem:[%s1 + $0x1048] sm:$0xff]
  %v592 = vld [vmem:[%s1 + $0x1050] sm:$0xff]
  %v593 = vld [vmem:[%s1 + $0x1058] sm:$0xff]
  %v594 = vld [vmem:[%s1 + $0x1060] sm:$0xff]
  %v595 = vld [vmem:[%s1 + $0x1068] sm:$0xff]
  %v596 = vld [vmem:[%s1 + $0x1070] sm:$0xff]
  %v597 = vld [vmem:[%s1 + $0x1078] sm:$0xff]
  %v598 = vld [vmem:[%s1 + $0x1080] sm:$0xff]
  %v599 = vld [vmem:[%s1 + $0x1088] sm:$0xff]
  %v600 = vld [vmem:[%s1 + $0x1090] sm:$0xff]
  %v601 = vld [vmem:[%s1 + $0x1098] sm:$0xff]
  %v602 = vld [vmem:[%s1 + $0x10a0] sm:$0xff]
  %v603 = vld [vmem:[%s1 + $0x10a8] sm:$0xff]
  %v604 = vld [vmem:[%s1 + $0x10b0] sm:$0xff]
  %v605 = vld [vmem:[%s1 + $0x10b8] sm:$0xff]
  %v606 = vld [vmem:[%s1 + $0x10c0] sm:$0xff]
  %v607 = vld [vmem:[%s1 + $0x10c8] sm:$0xff]
  %v608 = vld [vmem:[%s1 + $0x10d0] sm:$0xff]
  %v609 = vld [vmem:[%s1 + $0x10d8] sm:$0xff]
  %v610 = vld [vmem:[%s1 + $0x10e0] sm:$0xff]
  %v611 = vld [vmem:[%s1 + $0x10e8] sm:$0xff]
  %v612 = vld [vmem:[%s1 + $0x10f0] sm:$0xff]
  %v613 = vld [vmem:[%s1 + $0x10f8] sm:$0xff]
  %v614 = vld [vmem:[%s1 + $0x1100] sm:$0xff]
  %v615 = vld [vmem:[%s1 + $0x1108] sm:$0xff]
  %v616 = vld [vmem:[%s1 + $0x1110] sm:$0xff]
  %v617 = vld [vmem:[%s1 + $0x1118] sm:$0xff]
  %v618 = vld [vmem:[%s1 + $0x1120] sm:$0xff]
  %v619 = vld [vmem:[%s1 + $0x1128] sm:$0xff]
  %v620 = vld [vmem:[%s1 + $0x1130] sm:$0xff]
  %v621 = vld [vmem:[%s1 + $0x1138] sm:$0xff]
  %v622 = vld [vmem:[%s1 + $0x1140] sm:$0xff]
  %v623 = vld [vmem:[%s1 + $0x1148] sm:$0xff]
  %v624 = vld [vmem:[%s1 + $0x1150] sm:$0xff]
  %v625 = vld [vmem:[%s1 + $0x1158] sm:$0xff]
  %v626 = vld [vmem:[%s1 + $0x1160] sm:$0xff]
  %v627 = vld [vmem:[%s1 + $0x1168] sm:$0xff]
  %v628 = vld [vmem:[%s1 + $0x1170] sm:$0xff]
  %v629 = vld [vmem:[%s1 + $0x1178] sm:$0xff]
  %v630 = vld [vmem:[%s1 + $0x1180] sm:$0xff]
  %v631 = vld [vmem:[%s1 + $0x1188] sm:$0xff]
  %v632 = vld [vmem:[%s1 + $0x1190] sm:$0xff]
  %v633 = vld [vmem:[%s1 + $0x1198] sm:$0xff]
  %v634 = vld [vmem:[%s1 + $0x11a0] sm:$0xff]
  %v635 = vld [vmem:[%s1 + $0x11a8] sm:$0xff]
  %v636 = vld [vmem:[%s1 + $0x11b0] sm:$0xff]
  %v637 = vld [vmem:[%s1 + $0x11b8] sm:$0xff]
  %v638 = vld [vmem:[%s1 + $0x11c0] sm:$0xff]
  %v639 = vld [vmem:[%s1 + $0x11c8] sm:$0xff]
  %v640 = vld [vmem:[%s1 + $0x11d0] sm:$0xff]
  %v641 = vld [vmem:[%s1 + $0x11d8] sm:$0xff]
  %v642 = vld [vmem:[%s1 + $0x11e0] sm:$0xff]
  %v643 = vld [vmem:[%s1 + $0x11e8] sm:$0xff]
  %v644 = vld [vmem:[%s1 + $0x11f0] sm:$0xff]
  %v645 = vld [vmem:[%s1 + $0x11f8] sm:$0xff]
  %v646 = vld [vmem:[%s1 + $0x1200] sm:$0xff]
  %v647 = vld [vmem:[%s1 + $0x1208] sm:$0xff]
  %v648 = vld [vmem:[%s1 + $0x1210] sm:$0xff]
  %v649 = vld [vmem:[%s1 + $0x1218] sm:$0xff]
  %v650 = vld [vmem:[%s1 + $0x1220] sm:$0xff]
  %v651 = vld [vmem:[%s1 + $0x1228] sm:$0xff]
  %v652 = vld [vmem:[%s1 + $0x1230] sm:$0xff]
  %v653 = vld [vmem:[%s1 + $0x1238] sm:$0xff]
  %v654 = vld [vmem:[%s1 + $0x1240] sm:$0xff]
  %v655 = vld [vmem:[%s1 + $0x1248] sm:$0xff]
  %v656 = vld [vmem:[%s1 + $0x1250] sm:$0xff]
  %v657 = vld [vmem:[%s1 + $0x1258] sm:$0xff]
  %v658 = vld [vmem:[%s1 + $0x1260] sm:$0xff]
  %v659 = vld [vmem:[%s1 + $0x1268] sm:$0xff]
  %v660 = vld [vmem:[%s1 + $0x1270] sm:$0xff]
  %v661 = vld [vmem:[%s1 + $0x1278] sm:$0xff]
  %v662 = vld [vmem:[%s1 + $0x1280] sm:$0xff]
  %v663 = vld [vmem:[%s1 + $0x1288] sm:$0xff]
  %v664 = vld [vmem:[%s1 + $0x1290] sm:$0xff]
  %v665 = vld [vmem:[%s1 + $0x1298] sm:$0xff]
  %v666 = vld [vmem:[%s1 + $0x12a0] sm:$0xff]
  %v667 = vld [vmem:[%s1 + $0x12a8] sm:$0xff]
  %v668 = vld [vmem:[%s1 + $0x12b0] sm:$0xff]
  %v669 = vld [vmem:[%s1 + $0x12b8] sm:$0xff]
  %v670 = vld [vmem:[%s1 + $0x12c0] sm:$0xff]
  %v671 = vld [vmem:[%s1 + $0x12c8] sm:$0xff]
  %v672 = vld [vmem:[%s1 + $0x12d0] sm:$0xff]
  %v673 = vld [vmem:[%s1 + $0x12d8] sm:$0xff]
  %v674 = vld [vmem:[%s1 + $0x12e0] sm:$0xff]
  %v675 = vld [vmem:[%s1 + $0x12e8] sm:$0xff]
  %v676 = vld [vmem:[%s1 + $0x12f0] sm:$0xff]
  %v677 = vld [vmem:[%s1 + $0x12f8] sm:$0xff]
  %v678 = vld [vmem:[%s1 + $0x1300] sm:$0xff]
  %v679 = vld [vmem:[%s1 + $0x1308] sm:$0xff]
  %v680 = vld [vmem:[%s1 + $0x1310] sm:$0xff]
  %v681 = vld [vmem:[%s1 + $0x1318] sm:$0xff]
  %v682 = vld [vmem:[%s1 + $0x1320] sm:$0xff]
  %v683 = vld [vmem:[%s1 + $0x1328] sm:$0xff]
  %v684 = vld [vmem:[%s1 + $0x1330] sm:$0xff]
  %v685 = vld [vmem:[%s1 + $0x1338] sm:$0xff]
  %v686 = vld [vmem:[%s1 + $0x1340] sm:$0xff]
  %v687 = vld [vmem:[%s1 + $0x1348] sm:$0xff]
  %v688 = vld [vmem:[%s1 + $0x1350] sm:$0xff]
  %v689 = vld [vmem:[%s1 + $0x1358] sm:$0xff]
  %v690 = vld [vmem:[%s1 + $0x1360] sm:$0xff]
  %v691 = vld [vmem:[%s1 + $0x1368] sm:$0xff]
  %v692 = vld [vmem:[%s1 + $0x1370] sm:$0xff]
  %v693 = vld [vmem:[%s1 + $0x1378] sm:$0xff]
  %v694 = vld [vmem:[%s1 + $0x1380] sm:$0xff]
  %v695 = vld [vmem:[%s1 + $0x1388] sm:$0xff]
  %v696 = vld [vmem:[%s1 + $0x1390] sm:$0xff]
  %v697 = vld [vmem:[%s1 + $0x1398] sm:$0xff]
  %v698 = vld [vmem:[%s1 + $0x13a0] sm:$0xff]
  %v699 = vld [vmem:[%s1 + $0x13a8] sm:$0xff]
  %v700 = vld [vmem:[%s1 + $0x13b0] sm:$0xff]
  %v701 = vld [vmem:[%s1 + $0x13b8] sm:$0xff]
  %v702 = vld [vmem:[%s1 + $0x13c0] sm:$0xff]
  %v703 = vld [vmem:[%s1 + $0x13c8] sm:$0xff]
  %v704 = vld [vmem:[%s1 + $0x13d0] sm:$0xff]
  %v705 = vld [vmem:[%s1 + $0x13d8] sm:$0xff]
  %v706 = vld [vmem:[%s1 + $0x13e0] sm:$0xff]
  %v707 = vld [vmem:[%s1 + $0x13e8] sm:$0xff]
  %v708 = vld [vmem:[%s1 + $0x13f0] sm:$0xff]
  %v709 = vld [vmem:[%s1 + $0x13f8] sm:$0xff]
  %v710 = vld [vmem:[%s1 + $0x1400] sm:$0xff]
  %v711 = vld [vmem:[%s1 + $0x1408] sm:$0xff]
  %v712 = vld [vmem:[%s1 + $0x1410] sm:$0xff]
  %v713 = vld [vmem:[%s1 + $0x1418] sm:$0xff]
  %v714 = vld [vmem:[%s1 + $0x1420] sm:$0xff]
  %v715 = vld [vmem:[%s1 + $0x1428] sm:$0xff]
  %v716 = vld [vmem:[%s1 + $0x1430] sm:$0xff]
  %v717 = vld [vmem:[%s1 + $0x1438] sm:$0xff]
  %v718 = vld [vmem:[%s1 + $0x1440] sm:$0xff]
  %v719 = vld [vmem:[%s1 + $0x1448] sm:$0xff]
  %v720 = vld [vmem:[%s1 + $0x1450] sm:$0xff]
  %v721 = vld [vmem:[%s1 + $0x1458] sm:$0xff]
  %v722 = vld [vmem:[%s1 + $0x1460] sm:$0xff]
  %v723 = vld [vmem:[%s1 + $0x1468] sm:$0xff]
  %v724 = vld [vmem:[%s1 + $0x1470] sm:$0xff]
  %v725 = vld [vmem:[%s1 + $0x1478] sm:$0xff]
  %v726 = vld [vmem:[%s1 + $0x1480] sm:$0xff]
  %v727 = vld [vmem:[%s1 + $0x1488] sm:$0xff]
  %v728 = vld [vmem:[%s1 + $0x1490] sm:$0xff]
  %v729 = vld [vmem:[%s1 + $0x1498] sm:$0xff]
  %v730 = vld [vmem:[%s1 + $0x14a0] sm:$0xff]
  %v731 = vld [vmem:[%s1 + $0x14a8] sm:$0xff]
  %v732 = vld [vmem:[%s1 + $0x14b0] sm:$0xff]
  %v733 = vld [vmem:[%s1 + $0x14b8] sm:$0xff]
  %v734 = vld [vmem:[%s1 + $0x14c0] sm:$0xff]
  %v735 = vld [vmem:[%s1 + $0x14c8] sm:$0xff]
  %v736 = vld [vmem:[%s1 + $0x14d0] sm:$0xff]
  %v737 = vld [vmem:[%s1 + $0x14d8] sm:$0xff]
  %v738 = vld [vmem:[%s1 + $0x14e0] sm:$0xff]
  %v739 = vld [vmem:[%s1 + $0x14e8] sm:$0xff]
  %v740 = vld [vmem:[%s1 + $0x14f0] sm:$0xff]
  %v741 = vld [vmem:[%s1 + $0x14f8] sm:$0xff]
  %v742 = vld [vmem:[%s1 + $0x1500] sm:$0xff]
  %v743 = vld [vmem:[%s1 + $0x1508] sm:$0xff]
  %v744 = vld [vmem:[%s1 + $0x1510] sm:$0xff]
  %v745 = vld [vmem:[%s1 + $0x1518] sm:$0xff]
  %v746 = vld [vmem:[%s1 + $0x1520] sm:$0xff]
  %v747 = vld [vmem:[%s1 + $0x1528] sm:$0xff]
  %v748 = vld [vmem:[%s1 + $0x1530] sm:$0xff]
  %v749 = vld [vmem:[%s1 + $0x1538] sm:$0xff]
  %v750 = vld [vmem:[%s1 + $0x1540] sm:$0xff]
  %v751 = vld [vmem:[%s1 + $0x1548] sm:$0xff]
  %v752 = vld [vmem:[%s1 + $0x1550] sm:$0xff]
  %v753 = vld [vmem:[%s1 + $0x1558] sm:$0xff]
  %v754 = vld [vmem:[%s1 + $0x1560] sm:$0xff]
  %v755 = vld [vmem:[%s1 + $0x1568] sm:$0xff]
  %v756 = vld [vmem:[%s1 + $0x1570] sm:$0xff]
  %v757 = vld [vmem:[%s1 + $0x1578] sm:$0xff]
  %v758 = vld [vmem:[%s1 + $0x1580] sm:$0xff]
  %v759 = vld [vmem:[%s1 + $0x1588] sm:$0xff]
  %v760 = vld [vmem:[%s1 + $0x1590] sm:$0xff]
  %v761 = vld [vmem:[%s1 + $0x1598] sm:$0xff]
  %v762 = vld [vmem:[%s1 + $0x15a0] sm:$0xff]
  %v763 = vld [vmem:[%s1 + $0x15a8] sm:$0xff]
  %v764 = vld [vmem:[%s1 + $0x15b0] sm:$0xff]
  %v765 = vld [vmem:[%s1 + $0x15b8] sm:$0xff]
  %v766 = vld [vmem:[%s1 + $0x15c0] sm:$0xff]
  %v767 = vld [vmem:[%s1 + $0x15c8] sm:$0xff]
  %v768 = vld [vmem:[%s1 + $0x15d0] sm:$0xff]
  %v769 = vld [vmem:[%s1 + $0x15d8] sm:$0xff]
  %v770 = vld [vmem:[%s1 + $0x15e0] sm:$0xff]
  %v771 = vld [vmem:[%s1 + $0x15e8] sm:$0xff]
  %v772 = vld [vmem:[%s1 + $0x15f0] sm:$0xff]
  %v773 = vld [vmem:[%s1 + $0x15f8] sm:$0xff]
  %v774 = vld [vmem:[%s1 + $0x1600] sm:$0xff]
  %v775 = vld [vmem:[%s1 + $0x1608] sm:$0xff]
  %v776 = vld [vmem:[%s1 + $0x1610] sm:$0xff]
  %v777 = vld [vmem:[%s1 + $0x1618] sm:$0xff]
  %v778 = vld [vmem:[%s1 + $0x1620] sm:$0xff]
  %v779 = vld [vmem:[%s1 + $0x1628] sm:$0xff]
  %v780 = vld [vmem:[%s1 + $0x1630] sm:$0xff]
  %v781 = vld [vmem:[%s1 + $0x1638] sm:$0xff]
  %v782 = vld [vmem:[%s1 + $0x1640] sm:$0xff]
  %v783 = vld [vmem:[%s1 + $0x1648] sm:$0xff]
  %v784 = vld [vmem:[%s1 + $0x1650] sm:$0xff]
  %v785 = vld [vmem:[%s1 + $0x1658] sm:$0xff]
  %v786 = vld [vmem:[%s1 + $0x1660] sm:$0xff]
  %v787 = vld [vmem:[%s1 + $0x1668] sm:$0xff]
  %v788 = vld [vmem:[%s1 + $0x1670] sm:$0xff]
  %v789 = vld [vmem:[%s1 + $0x1678] sm:$0xff]
  %v790 = vld [vmem:[%s1 + $0x1680] sm:$0xff]
  %v791 = vld [vmem:[%s1 + $0x1688] sm:$0xff]
  %v792 = vld [vmem:[%s1 + $0x1690] sm:$0xff]
  %v793 = vld [vmem:[%s1 + $0x1698] sm:$0xff]
  %v794 = vld [vmem:[%s1 + $0x16a0] sm:$0xff]
  %v795 = vld [vmem:[%s1 + $0x16a8] sm:$0xff]
  %v796 = vld [vmem:[%s1 + $0x16b0] sm:$0xff]
  %v797 = vld [vmem:[%s1 + $0x16b8] sm:$0xff]
  %v798 = vld [vmem:[%s1 + $0x16c0] sm:$0xff]
  %v799 = vld [vmem:[%s1 + $0x16c8] sm:$0xff]
  %v800 = vld [vmem:[%s1 + $0x16d0] sm:$0xff]
  %v801 = vld [vmem:[%s1 + $0x16d8] sm:$0xff]
  %v802 = vld [vmem:[%s1 + $0x16e0] sm:$0xff]
  %v803 = vld [vmem:[%s1 + $0x16e8] sm:$0xff]
  %v804 = vld [vmem:[%s1 + $0x16f0] sm:$0xff]
  %v805 = vld [vmem:[%s1 + $0x16f8] sm:$0xff]
  %v806 = vld [vmem:[%s1 + $0x1700] sm:$0xff]
  %v807 = vld [vmem:[%s1 + $0x1708] sm:$0xff]
  %v808 = vld [vmem:[%s1 + $0x1710] sm:$0xff]
  %v809 = vld [vmem:[%s1 + $0x1718] sm:$0xff]
  %v810 = vld [vmem:[%s1 + $0x1720] sm:$0xff]
  %v811 = vld [vmem:[%s1 + $0x1728] sm:$0xff]
  %v812 = vld [vmem:[%s1 + $0x1730] sm:$0xff]
  %v813 = vld [vmem:[%s1 + $0x1738] sm:$0xff]
  %v814 = vld [vmem:[%s1 + $0x1740] sm:$0xff]
  %v815 = vld [vmem:[%s1 + $0x1748] sm:$0xff]
  %v816 = vld [vmem:[%s1 + $0x1750] sm:$0xff]
  %v817 = vld [vmem:[%s1 + $0x1758] sm:$0xff]
  %v818 = vld [vmem:[%s1 + $0x1760] sm:$0xff]
  %v819 = vld [vmem:[%s1 + $0x1768] sm:$0xff]
  %v820 = vld [vmem:[%s1 + $0x1770] sm:$0xff]
  %v821 = vld [vmem:[%s1 + $0x1778] sm:$0xff]
  %v822 = vld [vmem:[%s1 + $0x1780] sm:$0xff]
  %v823 = vld [vmem:[%s1 + $0x1788] sm:$0xff]
  %v824 = vld [vmem:[%s1 + $0x1790] sm:$0xff]
  %v825 = vld [vmem:[%s1 + $0x1798] sm:$0xff]
  %v826 = vld [vmem:[%s1 + $0x17a0] sm:$0xff]
  %v827 = vld [vmem:[%s1 + $0x17a8] sm:$0xff]
  %v828 = vld [vmem:[%s1 + $0x17b0] sm:$0xff]
  %v829 = vld [vmem:[%s1 + $0x17b8] sm:$0xff]
  %v830 = vld [vmem:[%s1 + $0x17c0] sm:$0xff]
  %v831 = vld [vmem:[%s1 + $0x17c8] sm:$0xff]
  %v832 = vld [vmem:[%s1 + $0x17d0] sm:$0xff]
  %v833 = vld [vmem:[%s1 + $0x17d8] sm:$0xff]
  %v834 = vld [vmem:[%s1 + $0x17e0] sm:$0xff]
  %v835 = vld [vmem:[%s1 + $0x17e8] sm:$0xff]
  %v836 = vld [vmem:[%s1 + $0x17f0] sm:$0xff]
  %v837 = vld [vmem:[%s1 + $0x17f8] sm:$0xff]
  %v838 = vld [vmem:[%s1 + $0x1800] sm:$0xff]
  %v839 = vld [vmem:[%s1 + $0x1808] sm:$0xff]
  %v840 = vld [vmem:[%s1 + $0x1810] sm:$0xff]
  %v841 = vld [vmem:[%s1 + $0x1818] sm:$0xff]
  %v842 = vld [vmem:[%s1 + $0x1820] sm:$0xff]
  %v843 = vld [vmem:[%s1 + $0x1828] sm:$0xff]
  %v844 = vld [vmem:[%s1 + $0x1830] sm:$0xff]
  %v845 = vld [vmem:[%s1 + $0x1838] sm:$0xff]
  %v846 = vld [vmem:[%s1 + $0x1840] sm:$0xff]
  %v847 = vld [vmem:[%s1 + $0x1848] sm:$0xff]
  %v848 = vld [vmem:[%s1 + $0x1850] sm:$0xff]
  %v849 = vld [vmem:[%s1 + $0x1858] sm:$0xff]
  %v850 = vld [vmem:[%s1 + $0x1860] sm:$0xff]
  %v851 = vld [vmem:[%s1 + $0x1868] sm:$0xff]
  %v852 = vld [vmem:[%s1 + $0x1870] sm:$0xff]
  %v853 = vld [vmem:[%s1 + $0x1878] sm:$0xff]
  %v854 = vld [vmem:[%s1 + $0x1880] sm:$0xff]
  %v855 = vld [vmem:[%s1 + $0x1888] sm:$0xff]
  %v856 = vld [vmem:[%s1 + $0x1890] sm:$0xff]
  %v857 = vld [vmem:[%s1 + $0x1898] sm:$0xff]
  %v858 = vld [vmem:[%s1 + $0x18a0] sm:$0xff]
  %v859 = vld [vmem:[%s1 + $0x18a8] sm:$0xff]
  %v860 = vld [vmem:[%s1 + $0x18b0] sm:$0xff]
  %v861 = vld [vmem:[%s1 + $0x18b8] sm:$0xff]
  %v862 = vld [vmem:[%s1 + $0x18c0] sm:$0xff]
  %v863 = vld [vmem:[%s1 + $0x18c8] sm:$0xff]
  %v864 = vld [vmem:[%s1 + $0x18d0] sm:$0xff]
  %v865 = vld [vmem:[%s1 + $0x18d8] sm:$0xff]
  %v866 = vld [vmem:[%s1 + $0x18e0] sm:$0xff]
  %v867 = vld [vmem:[%s1 + $0x18e8] sm:$0xff]
  %v868 = vld [vmem:[%s1 + $0x18f0] sm:$0xff]
  %v869 = vld [vmem:[%s1 + $0x18f8] sm:$0xff]
  %v870 = vld [vmem:[%s2] sm:$0xf]
  %v872 = vperm.slane %v870, 0
  %v873 = vperm.slane %v870, 1
  %v874 = vperm.slane %v870, 2
  %v875 = vperm.slane %v870, 3
  %v1680 = vunpack.c.l.b16 %v70
  %v1681 = vunpack.c.h.b16 %v70
  %v1682 = vunpack.c.l.b16 %v71
  %v1683 = vunpack.c.h.b16 %v71
  %v1684 = vunpack.c.l.b16 %v72
  %v1685 = vunpack.c.h.b16 %v72
  %v1686 = vunpack.c.l.b16 %v73
  %v1687 = vunpack.c.h.b16 %v73
  %v1688 = vunpack.c.l.b16 %v74
  %v1689 = vunpack.c.h.b16 %v74
  %v1690 = vunpack.c.l.b16 %v75
  %v1691 = vunpack.c.h.b16 %v75
  %v1692 = vunpack.c.l.b16 %v76
  %v1693 = vunpack.c.h.b16 %v76
  %v1694 = vunpack.c.l.b16 %v77
  %v1695 = vunpack.c.h.b16 %v77
  %v1696 = vunpack.c.l.b16 %v78
  %v1697 = vunpack.c.h.b16 %v78
  %v1698 = vunpack.c.l.b16 %v79
  %v1699 = vunpack.c.h.b16 %v79
  %v1700 = vunpack.c.l.b16 %v80
  %v1701 = vunpack.c.h.b16 %v80
  %v1702 = vunpack.c.l.b16 %v81
  %v1703 = vunpack.c.h.b16 %v81
  %v1704 = vunpack.c.l.b16 %v82
  %v1705 = vunpack.c.h.b16 %v82
  %v1706 = vunpack.c.l.b16 %v83
  %v1707 = vunpack.c.h.b16 %v83
  %v1708 = vunpack.c.l.b16 %v84
  %v1709 = vunpack.c.h.b16 %v84
  %v1710 = vunpack.c.l.b16 %v85
  %v1711 = vunpack.c.h.b16 %v85
  %v1712 = vunpack.c.l.b16 %v86
  %v1713 = vunpack.c.h.b16 %v86
  %v1714 = vunpack.c.l.b16 %v87
  %v1715 = vunpack.c.h.b16 %v87
  %v1716 = vunpack.c.l.b16 %v88
  %v1717 = vunpack.c.h.b16 %v88
  %v1718 = vunpack.c.l.b16 %v89
  %v1719 = vunpack.c.h.b16 %v89
  %v1720 = vunpack.c.l.b16 %v90
  %v1721 = vunpack.c.h.b16 %v90
  %v1722 = vunpack.c.l.b16 %v91
  %v1723 = vunpack.c.h.b16 %v91
  %v1724 = vunpack.c.l.b16 %v92
  %v1725 = vunpack.c.h.b16 %v92
  %v1726 = vunpack.c.l.b16 %v93
  %v1727 = vunpack.c.h.b16 %v93
  %v1728 = vunpack.c.l.b16 %v94
  %v1729 = vunpack.c.h.b16 %v94
  %v1730 = vunpack.c.l.b16 %v95
  %v1731 = vunpack.c.h.b16 %v95
  %v1732 = vunpack.c.l.b16 %v96
  %v1733 = vunpack.c.h.b16 %v96
  %v1734 = vunpack.c.l.b16 %v97
  %v1735 = vunpack.c.h.b16 %v97
  %v1736 = vunpack.c.l.b16 %v98
  %v1737 = vunpack.c.h.b16 %v98
  %v1738 = vunpack.c.l.b16 %v99
  %v1739 = vunpack.c.h.b16 %v99
  %v1740 = vunpack.c.l.b16 %v100
  %v1741 = vunpack.c.h.b16 %v100
  %v1742 = vunpack.c.l.b16 %v101
  %v1743 = vunpack.c.h.b16 %v101
  %v1744 = vunpack.c.l.b16 %v102
  %v1745 = vunpack.c.h.b16 %v102
  %v1746 = vunpack.c.l.b16 %v103
  %v1747 = vunpack.c.h.b16 %v103
  %v1748 = vunpack.c.l.b16 %v104
  %v1749 = vunpack.c.h.b16 %v104
  %v1750 = vunpack.c.l.b16 %v105
  %v1751 = vunpack.c.h.b16 %v105
  %v1752 = vunpack.c.l.b16 %v106
  %v1753 = vunpack.c.h.b16 %v106
  %v1754 = vunpack.c.l.b16 %v107
  %v1755 = vunpack.c.h.b16 %v107
  %v1756 = vunpack.c.l.b16 %v108
  %v1757 = vunpack.c.h.b16 %v108
  %v1758 = vunpack.c.l.b16 %v109
  %v1759 = vunpack.c.h.b16 %v109
  %v1760 = vunpack.c.l.b16 %v110
  %v1761 = vunpack.c.h.b16 %v110
  %v1762 = vunpack.c.l.b16 %v111
  %v1763 = vunpack.c.h.b16 %v111
  %v1764 = vunpack.c.l.b16 %v112
  %v1765 = vunpack.c.h.b16 %v112
  %v1766 = vunpack.c.l.b16 %v113
  %v1767 = vunpack.c.h.b16 %v113
  %v1768 = vunpack.c.l.b16 %v114
  %v1769 = vunpack.c.h.b16 %v114
  %v1770 = vunpack.c.l.b16 %v115
  %v1771 = vunpack.c.h.b16 %v115
  %v1772 = vunpack.c.l.b16 %v116
  %v1773 = vunpack.c.h.b16 %v116
  %v1774 = vunpack.c.l.b16 %v117
  %v1775 = vunpack.c.h.b16 %v117
  %v1776 = vunpack.c.l.b16 %v118
  %v1777 = vunpack.c.h.b16 %v118
  %v1778 = vunpack.c.l.b16 %v119
  %v1779 = vunpack.c.h.b16 %v119
  %v1780 = vunpack.c.l.b16 %v120
  %v1781 = vunpack.c.h.b16 %v120
  %v1782 = vunpack.c.l.b16 %v121
  %v1783 = vunpack.c.h.b16 %v121
  %v1784 = vunpack.c.l.b16 %v122
  %v1785 = vunpack.c.h.b16 %v122
  %v1786 = vunpack.c.l.b16 %v123
  %v1787 = vunpack.c.h.b16 %v123
  %v1788 = vunpack.c.l.b16 %v124
  %v1789 = vunpack.c.h.b16 %v124
  %v1790 = vunpack.c.l.b16 %v125
  %v1791 = vunpack.c.h.b16 %v125
  %v1792 = vunpack.c.l.b16 %v126
  %v1793 = vunpack.c.h.b16 %v126
  %v1794 = vunpack.c.l.b16 %v127
  %v1795 = vunpack.c.h.b16 %v127
  %v1796 = vunpack.c.l.b16 %v128
  %v1797 = vunpack.c.h.b16 %v128
  %v1798 = vunpack.c.l.b16 %v129
  %v1799 = vunpack.c.h.b16 %v129
  %v1800 = vunpack.c.l.b16 %v130
  %v1801 = vunpack.c.h.b16 %v130
  %v1802 = vunpack.c.l.b16 %v131
  %v1803 = vunpack.c.h.b16 %v131
  %v1804 = vunpack.c.l.b16 %v132
  %v1805 = vunpack.c.h.b16 %v132
  %v1806 = vunpack.c.l.b16 %v133
  %v1807 = vunpack.c.h.b16 %v133
  %v1808 = vunpack.c.l.b16 %v134
  %v1809 = vunpack.c.h.b16 %v134
  %v1810 = vunpack.c.l.b16 %v135
  %v1811 = vunpack.c.h.b16 %v135
  %v1812 = vunpack.c.l.b16 %v136
  %v1813 = vunpack.c.h.b16 %v136
  %v1814 = vunpack.c.l.b16 %v137
  %v1815 = vunpack.c.h.b16 %v137
  %v1816 = vunpack.c.l.b16 %v138
  %v1817 = vunpack.c.h.b16 %v138
  %v1818 = vunpack.c.l.b16 %v139
  %v1819 = vunpack.c.h.b16 %v139
  %v1820 = vunpack.c.l.b16 %v140
  %v1821 = vunpack.c.h.b16 %v140
  %v1822 = vunpack.c.l.b16 %v141
  %v1823 = vunpack.c.h.b16 %v141
  %v1824 = vunpack.c.l.b16 %v142
  %v1825 = vunpack.c.h.b16 %v142
  %v1826 = vunpack.c.l.b16 %v143
  %v1827 = vunpack.c.h.b16 %v143
  %v1828 = vunpack.c.l.b16 %v144
  %v1829 = vunpack.c.h.b16 %v144
  %v1830 = vunpack.c.l.b16 %v145
  %v1831 = vunpack.c.h.b16 %v145
  %v1832 = vunpack.c.l.b16 %v146
  %v1833 = vunpack.c.h.b16 %v146
  %v1834 = vunpack.c.l.b16 %v147
  %v1835 = vunpack.c.h.b16 %v147
  %v1836 = vunpack.c.l.b16 %v148
  %v1837 = vunpack.c.h.b16 %v148
  %v1838 = vunpack.c.l.b16 %v149
  %v1839 = vunpack.c.h.b16 %v149
  %v1840 = vunpack.c.l.b16 %v150
  %v1841 = vunpack.c.h.b16 %v150
  %v1842 = vunpack.c.l.b16 %v151
  %v1843 = vunpack.c.h.b16 %v151
  %v1844 = vunpack.c.l.b16 %v152
  %v1845 = vunpack.c.h.b16 %v152
  %v1846 = vunpack.c.l.b16 %v153
  %v1847 = vunpack.c.h.b16 %v153
  %v1848 = vunpack.c.l.b16 %v154
  %v1849 = vunpack.c.h.b16 %v154
  %v1850 = vunpack.c.l.b16 %v155
  %v1851 = vunpack.c.h.b16 %v155
  %v1852 = vunpack.c.l.b16 %v156
  %v1853 = vunpack.c.h.b16 %v156
  %v1854 = vunpack.c.l.b16 %v157
  %v1855 = vunpack.c.h.b16 %v157
  %v1856 = vunpack.c.l.b16 %v158
  %v1857 = vunpack.c.h.b16 %v158
  %v1858 = vunpack.c.l.b16 %v159
  %v1859 = vunpack.c.h.b16 %v159
  %v1860 = vunpack.c.l.b16 %v160
  %v1861 = vunpack.c.h.b16 %v160
  %v1862 = vunpack.c.l.b16 %v161
  %v1863 = vunpack.c.h.b16 %v161
  %v1864 = vunpack.c.l.b16 %v162
  %v1865 = vunpack.c.h.b16 %v162
  %v1866 = vunpack.c.l.b16 %v163
  %v1867 = vunpack.c.h.b16 %v163
  %v1868 = vunpack.c.l.b16 %v164
  %v1869 = vunpack.c.h.b16 %v164
  %v1870 = vunpack.c.l.b16 %v165
  %v1871 = vunpack.c.h.b16 %v165
  %v1872 = vunpack.c.l.b16 %v166
  %v1873 = vunpack.c.h.b16 %v166
  %v1874 = vunpack.c.l.b16 %v167
  %v1875 = vunpack.c.h.b16 %v167
  %v1876 = vunpack.c.l.b16 %v168
  %v1877 = vunpack.c.h.b16 %v168
  %v1878 = vunpack.c.l.b16 %v169
  %v1879 = vunpack.c.h.b16 %v169
  %v1880 = vunpack.c.l.b16 %v170
  %v1881 = vunpack.c.h.b16 %v170
  %v1882 = vunpack.c.l.b16 %v171
  %v1883 = vunpack.c.h.b16 %v171
  %v1884 = vunpack.c.l.b16 %v172
  %v1885 = vunpack.c.h.b16 %v172
  %v1886 = vunpack.c.l.b16 %v173
  %v1887 = vunpack.c.h.b16 %v173
  %v1888 = vunpack.c.l.b16 %v174
  %v1889 = vunpack.c.h.b16 %v174
  %v1890 = vunpack.c.l.b16 %v175
  %v1891 = vunpack.c.h.b16 %v175
  %v1892 = vunpack.c.l.b16 %v176
  %v1893 = vunpack.c.h.b16 %v176
  %v1894 = vunpack.c.l.b16 %v177
  %v1895 = vunpack.c.h.b16 %v177
  %v1896 = vunpack.c.l.b16 %v178
  %v1897 = vunpack.c.h.b16 %v178
  %v1898 = vunpack.c.l.b16 %v179
  %v1899 = vunpack.c.h.b16 %v179
  %v1900 = vunpack.c.l.b16 %v180
  %v1901 = vunpack.c.h.b16 %v180
  %v1902 = vunpack.c.l.b16 %v181
  %v1903 = vunpack.c.h.b16 %v181
  %v1904 = vunpack.c.l.b16 %v182
  %v1905 = vunpack.c.h.b16 %v182
  %v1906 = vunpack.c.l.b16 %v183
  %v1907 = vunpack.c.h.b16 %v183
  %v1908 = vunpack.c.l.b16 %v184
  %v1909 = vunpack.c.h.b16 %v184
  %v1910 = vunpack.c.l.b16 %v185
  %v1911 = vunpack.c.h.b16 %v185
  %v1912 = vunpack.c.l.b16 %v186
  %v1913 = vunpack.c.h.b16 %v186
  %v1914 = vunpack.c.l.b16 %v187
  %v1915 = vunpack.c.h.b16 %v187
  %v1916 = vunpack.c.l.b16 %v188
  %v1917 = vunpack.c.h.b16 %v188
  %v1918 = vunpack.c.l.b16 %v189
  %v1919 = vunpack.c.h.b16 %v189
  %v1920 = vunpack.c.l.b16 %v190
  %v1921 = vunpack.c.h.b16 %v190
  %v1922 = vunpack.c.l.b16 %v191
  %v1923 = vunpack.c.h.b16 %v191
  %v1924 = vunpack.c.l.b16 %v192
  %v1925 = vunpack.c.h.b16 %v192
  %v1926 = vunpack.c.l.b16 %v193
  %v1927 = vunpack.c.h.b16 %v193
  %v1928 = vunpack.c.l.b16 %v194
  %v1929 = vunpack.c.h.b16 %v194
  %v1930 = vunpack.c.l.b16 %v195
  %v1931 = vunpack.c.h.b16 %v195
  %v1932 = vunpack.c.l.b16 %v196
  %v1933 = vunpack.c.h.b16 %v196
  %v1934 = vunpack.c.l.b16 %v197
  %v1935 = vunpack.c.h.b16 %v197
  %v1936 = vunpack.c.l.b16 %v198
  %v1937 = vunpack.c.h.b16 %v198
  %v1938 = vunpack.c.l.b16 %v199
  %v1939 = vunpack.c.h.b16 %v199
  %v1940 = vunpack.c.l.b16 %v200
  %v1941 = vunpack.c.h.b16 %v200
  %v1942 = vunpack.c.l.b16 %v201
  %v1943 = vunpack.c.h.b16 %v201
  %v1944 = vunpack.c.l.b16 %v202
  %v1945 = vunpack.c.h.b16 %v202
  %v1946 = vunpack.c.l.b16 %v203
  %v1947 = vunpack.c.h.b16 %v203
  %v1948 = vunpack.c.l.b16 %v204
  %v1949 = vunpack.c.h.b16 %v204
  %v1950 = vunpack.c.l.b16 %v205
  %v1951 = vunpack.c.h.b16 %v205
  %v1952 = vunpack.c.l.b16 %v206
  %v1953 = vunpack.c.h.b16 %v206
  %v1954 = vunpack.c.l.b16 %v207
  %v1955 = vunpack.c.h.b16 %v207
  %v1956 = vunpack.c.l.b16 %v208
  %v1957 = vunpack.c.h.b16 %v208
  %v1958 = vunpack.c.l.b16 %v209
  %v1959 = vunpack.c.h.b16 %v209
  %v1960 = vunpack.c.l.b16 %v210
  %v1961 = vunpack.c.h.b16 %v210
  %v1962 = vunpack.c.l.b16 %v211
  %v1963 = vunpack.c.h.b16 %v211
  %v1964 = vunpack.c.l.b16 %v212
  %v1965 = vunpack.c.h.b16 %v212
  %v1966 = vunpack.c.l.b16 %v213
  %v1967 = vunpack.c.h.b16 %v213
  %v1968 = vunpack.c.l.b16 %v214
  %v1969 = vunpack.c.h.b16 %v214
  %v1970 = vunpack.c.l.b16 %v215
  %v1971 = vunpack.c.h.b16 %v215
  %v1972 = vunpack.c.l.b16 %v216
  %v1973 = vunpack.c.h.b16 %v216
  %v1974 = vunpack.c.l.b16 %v217
  %v1975 = vunpack.c.h.b16 %v217
  %v1976 = vunpack.c.l.b16 %v218
  %v1977 = vunpack.c.h.b16 %v218
  %v1978 = vunpack.c.l.b16 %v219
  %v1979 = vunpack.c.h.b16 %v219
  %v1980 = vunpack.c.l.b16 %v220
  %v1981 = vunpack.c.h.b16 %v220
  %v1982 = vunpack.c.l.b16 %v221
  %v1983 = vunpack.c.h.b16 %v221
  %v1984 = vunpack.c.l.b16 %v222
  %v1985 = vunpack.c.h.b16 %v222
  %v1986 = vunpack.c.l.b16 %v223
  %v1987 = vunpack.c.h.b16 %v223
  %v1988 = vunpack.c.l.b16 %v224
  %v1989 = vunpack.c.h.b16 %v224
  %v1990 = vunpack.c.l.b16 %v225
  %v1991 = vunpack.c.h.b16 %v225
  %v1992 = vunpack.c.l.b16 %v226
  %v1993 = vunpack.c.h.b16 %v226
  %v1994 = vunpack.c.l.b16 %v227
  %v1995 = vunpack.c.h.b16 %v227
  %v1996 = vunpack.c.l.b16 %v228
  %v1997 = vunpack.c.h.b16 %v228
  %v1998 = vunpack.c.l.b16 %v229
  %v1999 = vunpack.c.h.b16 %v229
  %v2000 = vunpack.c.l.b16 %v230
  %v2001 = vunpack.c.h.b16 %v230
  %v2002 = vunpack.c.l.b16 %v231
  %v2003 = vunpack.c.h.b16 %v231
  %v2004 = vunpack.c.l.b16 %v232
  %v2005 = vunpack.c.h.b16 %v232
  %v2006 = vunpack.c.l.b16 %v233
  %v2007 = vunpack.c.h.b16 %v233
  %v2008 = vunpack.c.l.b16 %v234
  %v2009 = vunpack.c.h.b16 %v234
  %v2010 = vunpack.c.l.b16 %v235
  %v2011 = vunpack.c.h.b16 %v235
  %v2012 = vunpack.c.l.b16 %v236
  %v2013 = vunpack.c.h.b16 %v236
  %v2014 = vunpack.c.l.b16 %v237
  %v2015 = vunpack.c.h.b16 %v237
  %v2016 = vunpack.c.l.b16 %v238
  %v2017 = vunpack.c.h.b16 %v238
  %v2018 = vunpack.c.l.b16 %v239
  %v2019 = vunpack.c.h.b16 %v239
  %v2020 = vunpack.c.l.b16 %v240
  %v2021 = vunpack.c.h.b16 %v240
  %v2022 = vunpack.c.l.b16 %v241
  %v2023 = vunpack.c.h.b16 %v241
  %v2024 = vunpack.c.l.b16 %v242
  %v2025 = vunpack.c.h.b16 %v242
  %v2026 = vunpack.c.l.b16 %v243
  %v2027 = vunpack.c.h.b16 %v243
  %v2028 = vunpack.c.l.b16 %v244
  %v2029 = vunpack.c.h.b16 %v244
  %v2030 = vunpack.c.l.b16 %v245
  %v2031 = vunpack.c.h.b16 %v245
  %v2032 = vunpack.c.l.b16 %v246
  %v2033 = vunpack.c.h.b16 %v246
  %v2034 = vunpack.c.l.b16 %v247
  %v2035 = vunpack.c.h.b16 %v247
  %v2036 = vunpack.c.l.b16 %v248
  %v2037 = vunpack.c.h.b16 %v248
  %v2038 = vunpack.c.l.b16 %v249
  %v2039 = vunpack.c.h.b16 %v249
  %v2040 = vunpack.c.l.b16 %v250
  %v2041 = vunpack.c.h.b16 %v250
  %v2042 = vunpack.c.l.b16 %v251
  %v2043 = vunpack.c.h.b16 %v251
  %v2044 = vunpack.c.l.b16 %v252
  %v2045 = vunpack.c.h.b16 %v252
  %v2046 = vunpack.c.l.b16 %v253
  %v2047 = vunpack.c.h.b16 %v253
  %v2048 = vunpack.c.l.b16 %v254
  %v2049 = vunpack.c.h.b16 %v254
  %v2050 = vunpack.c.l.b16 %v255
  %v2051 = vunpack.c.h.b16 %v255
  %v2052 = vunpack.c.l.b16 %v256
  %v2053 = vunpack.c.h.b16 %v256
  %v2054 = vunpack.c.l.b16 %v257
  %v2055 = vunpack.c.h.b16 %v257
  %v2056 = vunpack.c.l.b16 %v258
  %v2057 = vunpack.c.h.b16 %v258
  %v2058 = vunpack.c.l.b16 %v259
  %v2059 = vunpack.c.h.b16 %v259
  %v2060 = vunpack.c.l.b16 %v260
  %v2061 = vunpack.c.h.b16 %v260
  %v2062 = vunpack.c.l.b16 %v261
  %v2063 = vunpack.c.h.b16 %v261
  %v2064 = vunpack.c.l.b16 %v262
  %v2065 = vunpack.c.h.b16 %v262
  %v2066 = vunpack.c.l.b16 %v263
  %v2067 = vunpack.c.h.b16 %v263
  %v2068 = vunpack.c.l.b16 %v264
  %v2069 = vunpack.c.h.b16 %v264
  %v2070 = vunpack.c.l.b16 %v265
  %v2071 = vunpack.c.h.b16 %v265
  %v2072 = vunpack.c.l.b16 %v266
  %v2073 = vunpack.c.h.b16 %v266
  %v2074 = vunpack.c.l.b16 %v267
  %v2075 = vunpack.c.h.b16 %v267
  %v2076 = vunpack.c.l.b16 %v268
  %v2077 = vunpack.c.h.b16 %v268
  %v2078 = vunpack.c.l.b16 %v269
  %v2079 = vunpack.c.h.b16 %v269
  %v2080 = vunpack.c.l.b16 %v270
  %v2081 = vunpack.c.h.b16 %v270
  %v2082 = vunpack.c.l.b16 %v271
  %v2083 = vunpack.c.h.b16 %v271
  %v2084 = vunpack.c.l.b16 %v272
  %v2085 = vunpack.c.h.b16 %v272
  %v2086 = vunpack.c.l.b16 %v273
  %v2087 = vunpack.c.h.b16 %v273
  %v2088 = vunpack.c.l.b16 %v274
  %v2089 = vunpack.c.h.b16 %v274
  %v2090 = vunpack.c.l.b16 %v275
  %v2091 = vunpack.c.h.b16 %v275
  %v2092 = vunpack.c.l.b16 %v276
  %v2093 = vunpack.c.h.b16 %v276
  %v2094 = vunpack.c.l.b16 %v277
  %v2095 = vunpack.c.h.b16 %v277
  %v2096 = vunpack.c.l.b16 %v278
  %v2097 = vunpack.c.h.b16 %v278
  %v2098 = vunpack.c.l.b16 %v279
  %v2099 = vunpack.c.h.b16 %v279
  %v2100 = vunpack.c.l.b16 %v280
  %v2101 = vunpack.c.h.b16 %v280
  %v2102 = vunpack.c.l.b16 %v281
  %v2103 = vunpack.c.h.b16 %v281
  %v2104 = vunpack.c.l.b16 %v282
  %v2105 = vunpack.c.h.b16 %v282
  %v2106 = vunpack.c.l.b16 %v283
  %v2107 = vunpack.c.h.b16 %v283
  %v2108 = vunpack.c.l.b16 %v284
  %v2109 = vunpack.c.h.b16 %v284
  %v2110 = vunpack.c.l.b16 %v285
  %v2111 = vunpack.c.h.b16 %v285
  %v2112 = vunpack.c.l.b16 %v286
  %v2113 = vunpack.c.h.b16 %v286
  %v2114 = vunpack.c.l.b16 %v287
  %v2115 = vunpack.c.h.b16 %v287
  %v2116 = vunpack.c.l.b16 %v288
  %v2117 = vunpack.c.h.b16 %v288
  %v2118 = vunpack.c.l.b16 %v289
  %v2119 = vunpack.c.h.b16 %v289
  %v2120 = vunpack.c.l.b16 %v290
  %v2121 = vunpack.c.h.b16 %v290
  %v2122 = vunpack.c.l.b16 %v291
  %v2123 = vunpack.c.h.b16 %v291
  %v2124 = vunpack.c.l.b16 %v292
  %v2125 = vunpack.c.h.b16 %v292
  %v2126 = vunpack.c.l.b16 %v293
  %v2127 = vunpack.c.h.b16 %v293
  %v2128 = vunpack.c.l.b16 %v294
  %v2129 = vunpack.c.h.b16 %v294
  %v2130 = vunpack.c.l.b16 %v295
  %v2131 = vunpack.c.h.b16 %v295
  %v2132 = vunpack.c.l.b16 %v296
  %v2133 = vunpack.c.h.b16 %v296
  %v2134 = vunpack.c.l.b16 %v297
  %v2135 = vunpack.c.h.b16 %v297
  %v2136 = vunpack.c.l.b16 %v298
  %v2137 = vunpack.c.h.b16 %v298
  %v2138 = vunpack.c.l.b16 %v299
  %v2139 = vunpack.c.h.b16 %v299
  %v2140 = vunpack.c.l.b16 %v300
  %v2141 = vunpack.c.h.b16 %v300
  %v2142 = vunpack.c.l.b16 %v301
  %v2143 = vunpack.c.h.b16 %v301
  %v2144 = vunpack.c.l.b16 %v302
  %v2145 = vunpack.c.h.b16 %v302
  %v2146 = vunpack.c.l.b16 %v303
  %v2147 = vunpack.c.h.b16 %v303
  %v2148 = vunpack.c.l.b16 %v304
  %v2149 = vunpack.c.h.b16 %v304
  %v2150 = vunpack.c.l.b16 %v305
  %v2151 = vunpack.c.h.b16 %v305
  %v2152 = vunpack.c.l.b16 %v306
  %v2153 = vunpack.c.h.b16 %v306
  %v2154 = vunpack.c.l.b16 %v307
  %v2155 = vunpack.c.h.b16 %v307
  %v2156 = vunpack.c.l.b16 %v308
  %v2157 = vunpack.c.h.b16 %v308
  %v2158 = vunpack.c.l.b16 %v309
  %v2159 = vunpack.c.h.b16 %v309
  %v2160 = vunpack.c.l.b16 %v310
  %v2161 = vunpack.c.h.b16 %v310
  %v2162 = vunpack.c.l.b16 %v311
  %v2163 = vunpack.c.h.b16 %v311
  %v2164 = vunpack.c.l.b16 %v312
  %v2165 = vunpack.c.h.b16 %v312
  %v2166 = vunpack.c.l.b16 %v313
  %v2167 = vunpack.c.h.b16 %v313
  %v2168 = vunpack.c.l.b16 %v314
  %v2169 = vunpack.c.h.b16 %v314
  %v2170 = vunpack.c.l.b16 %v315
  %v2171 = vunpack.c.h.b16 %v315
  %v2172 = vunpack.c.l.b16 %v316
  %v2173 = vunpack.c.h.b16 %v316
  %v2174 = vunpack.c.l.b16 %v317
  %v2175 = vunpack.c.h.b16 %v317
  %v2176 = vunpack.c.l.b16 %v318
  %v2177 = vunpack.c.h.b16 %v318
  %v2178 = vunpack.c.l.b16 %v319
  %v2179 = vunpack.c.h.b16 %v319
  %v2180 = vunpack.c.l.b16 %v320
  %v2181 = vunpack.c.h.b16 %v320
  %v2182 = vunpack.c.l.b16 %v321
  %v2183 = vunpack.c.h.b16 %v321
  %v2184 = vunpack.c.l.b16 %v322
  %v2185 = vunpack.c.h.b16 %v322
  %v2186 = vunpack.c.l.b16 %v323
  %v2187 = vunpack.c.h.b16 %v323
  %v2188 = vunpack.c.l.b16 %v324
  %v2189 = vunpack.c.h.b16 %v324
  %v2190 = vunpack.c.l.b16 %v325
  %v2191 = vunpack.c.h.b16 %v325
  %v2192 = vunpack.c.l.b16 %v326
  %v2193 = vunpack.c.h.b16 %v326
  %v2194 = vunpack.c.l.b16 %v327
  %v2195 = vunpack.c.h.b16 %v327
  %v2196 = vunpack.c.l.b16 %v328
  %v2197 = vunpack.c.h.b16 %v328
  %v2198 = vunpack.c.l.b16 %v329
  %v2199 = vunpack.c.h.b16 %v329
  %v2200 = vunpack.c.l.b16 %v330
  %v2201 = vunpack.c.h.b16 %v330
  %v2202 = vunpack.c.l.b16 %v331
  %v2203 = vunpack.c.h.b16 %v331
  %v2204 = vunpack.c.l.b16 %v332
  %v2205 = vunpack.c.h.b16 %v332
  %v2206 = vunpack.c.l.b16 %v333
  %v2207 = vunpack.c.h.b16 %v333
  %v2208 = vunpack.c.l.b16 %v334
  %v2209 = vunpack.c.h.b16 %v334
  %v2210 = vunpack.c.l.b16 %v335
  %v2211 = vunpack.c.h.b16 %v335
  %v2212 = vunpack.c.l.b16 %v336
  %v2213 = vunpack.c.h.b16 %v336
  %v2214 = vunpack.c.l.b16 %v337
  %v2215 = vunpack.c.h.b16 %v337
  %v2216 = vunpack.c.l.b16 %v338
  %v2217 = vunpack.c.h.b16 %v338
  %v2218 = vunpack.c.l.b16 %v339
  %v2219 = vunpack.c.h.b16 %v339
  %v2220 = vunpack.c.l.b16 %v340
  %v2221 = vunpack.c.h.b16 %v340
  %v2222 = vunpack.c.l.b16 %v341
  %v2223 = vunpack.c.h.b16 %v341
  %v2224 = vunpack.c.l.b16 %v342
  %v2225 = vunpack.c.h.b16 %v342
  %v2226 = vunpack.c.l.b16 %v343
  %v2227 = vunpack.c.h.b16 %v343
  %v2228 = vunpack.c.l.b16 %v344
  %v2229 = vunpack.c.h.b16 %v344
  %v2230 = vunpack.c.l.b16 %v345
  %v2231 = vunpack.c.h.b16 %v345
  %v2232 = vunpack.c.l.b16 %v346
  %v2233 = vunpack.c.h.b16 %v346
  %v2234 = vunpack.c.l.b16 %v347
  %v2235 = vunpack.c.h.b16 %v347
  %v2236 = vunpack.c.l.b16 %v348
  %v2237 = vunpack.c.h.b16 %v348
  %v2238 = vunpack.c.l.b16 %v349
  %v2239 = vunpack.c.h.b16 %v349
  %v2240 = vunpack.c.l.b16 %v350
  %v2241 = vunpack.c.h.b16 %v350
  %v2242 = vunpack.c.l.b16 %v351
  %v2243 = vunpack.c.h.b16 %v351
  %v2244 = vunpack.c.l.b16 %v352
  %v2245 = vunpack.c.h.b16 %v352
  %v2246 = vunpack.c.l.b16 %v353
  %v2247 = vunpack.c.h.b16 %v353
  %v2248 = vunpack.c.l.b16 %v354
  %v2249 = vunpack.c.h.b16 %v354
  %v2250 = vunpack.c.l.b16 %v355
  %v2251 = vunpack.c.h.b16 %v355
  %v2252 = vunpack.c.l.b16 %v356
  %v2253 = vunpack.c.h.b16 %v356
  %v2254 = vunpack.c.l.b16 %v357
  %v2255 = vunpack.c.h.b16 %v357
  %v2256 = vunpack.c.l.b16 %v358
  %v2257 = vunpack.c.h.b16 %v358
  %v2258 = vunpack.c.l.b16 %v359
  %v2259 = vunpack.c.h.b16 %v359
  %v2260 = vunpack.c.l.b16 %v360
  %v2261 = vunpack.c.h.b16 %v360
  %v2262 = vunpack.c.l.b16 %v361
  %v2263 = vunpack.c.h.b16 %v361
  %v2264 = vunpack.c.l.b16 %v362
  %v2265 = vunpack.c.h.b16 %v362
  %v2266 = vunpack.c.l.b16 %v363
  %v2267 = vunpack.c.h.b16 %v363
  %v2268 = vunpack.c.l.b16 %v364
  %v2269 = vunpack.c.h.b16 %v364
  %v2270 = vunpack.c.l.b16 %v365
  %v2271 = vunpack.c.h.b16 %v365
  %v2272 = vunpack.c.l.b16 %v366
  %v2273 = vunpack.c.h.b16 %v366
  %v2274 = vunpack.c.l.b16 %v367
  %v2275 = vunpack.c.h.b16 %v367
  %v2276 = vunpack.c.l.b16 %v368
  %v2277 = vunpack.c.h.b16 %v368
  %v2278 = vunpack.c.l.b16 %v369
  %v2279 = vunpack.c.h.b16 %v369
  %v2280 = vunpack.c.l.b16 %v370
  %v2281 = vunpack.c.h.b16 %v370
  %v2282 = vunpack.c.l.b16 %v371
  %v2283 = vunpack.c.h.b16 %v371
  %v2284 = vunpack.c.l.b16 %v372
  %v2285 = vunpack.c.h.b16 %v372
  %v2286 = vunpack.c.l.b16 %v373
  %v2287 = vunpack.c.h.b16 %v373
  %v2288 = vunpack.c.l.b16 %v374
  %v2289 = vunpack.c.h.b16 %v374
  %v2290 = vunpack.c.l.b16 %v375
  %v2291 = vunpack.c.h.b16 %v375
  %v2292 = vunpack.c.l.b16 %v376
  %v2293 = vunpack.c.h.b16 %v376
  %v2294 = vunpack.c.l.b16 %v377
  %v2295 = vunpack.c.h.b16 %v377
  %v2296 = vunpack.c.l.b16 %v378
  %v2297 = vunpack.c.h.b16 %v378
  %v2298 = vunpack.c.l.b16 %v379
  %v2299 = vunpack.c.h.b16 %v379
  %v2300 = vunpack.c.l.b16 %v380
  %v2301 = vunpack.c.h.b16 %v380
  %v2302 = vunpack.c.l.b16 %v381
  %v2303 = vunpack.c.h.b16 %v381
  %v2304 = vunpack.c.l.b16 %v382
  %v2305 = vunpack.c.h.b16 %v382
  %v2306 = vunpack.c.l.b16 %v383
  %v2307 = vunpack.c.h.b16 %v383
  %v2308 = vunpack.c.l.b16 %v384
  %v2309 = vunpack.c.h.b16 %v384
  %v2310 = vunpack.c.l.b16 %v385
  %v2311 = vunpack.c.h.b16 %v385
  %v2312 = vunpack.c.l.b16 %v386
  %v2313 = vunpack.c.h.b16 %v386
  %v2314 = vunpack.c.l.b16 %v387
  %v2315 = vunpack.c.h.b16 %v387
  %v2316 = vunpack.c.l.b16 %v388
  %v2317 = vunpack.c.h.b16 %v388
  %v2318 = vunpack.c.l.b16 %v389
  %v2319 = vunpack.c.h.b16 %v389
  %v2320 = vunpack.c.l.b16 %v390
  %v2321 = vunpack.c.h.b16 %v390
  %v2322 = vunpack.c.l.b16 %v391
  %v2323 = vunpack.c.h.b16 %v391
  %v2324 = vunpack.c.l.b16 %v392
  %v2325 = vunpack.c.h.b16 %v392
  %v2326 = vunpack.c.l.b16 %v393
  %v2327 = vunpack.c.h.b16 %v393
  %v2328 = vunpack.c.l.b16 %v394
  %v2329 = vunpack.c.h.b16 %v394
  %v2330 = vunpack.c.l.b16 %v395
  %v2331 = vunpack.c.h.b16 %v395
  %v2332 = vunpack.c.l.b16 %v396
  %v2333 = vunpack.c.h.b16 %v396
  %v2334 = vunpack.c.l.b16 %v397
  %v2335 = vunpack.c.h.b16 %v397
  %v2336 = vunpack.c.l.b16 %v398
  %v2337 = vunpack.c.h.b16 %v398
  %v2338 = vunpack.c.l.b16 %v399
  %v2339 = vunpack.c.h.b16 %v399
  %v2340 = vunpack.c.l.b16 %v400
  %v2341 = vunpack.c.h.b16 %v400
  %v2342 = vunpack.c.l.b16 %v401
  %v2343 = vunpack.c.h.b16 %v401
  %v2344 = vunpack.c.l.b16 %v402
  %v2345 = vunpack.c.h.b16 %v402
  %v2346 = vunpack.c.l.b16 %v403
  %v2347 = vunpack.c.h.b16 %v403
  %v2348 = vunpack.c.l.b16 %v404
  %v2349 = vunpack.c.h.b16 %v404
  %v2350 = vunpack.c.l.b16 %v405
  %v2351 = vunpack.c.h.b16 %v405
  %v2352 = vunpack.c.l.b16 %v406
  %v2353 = vunpack.c.h.b16 %v406
  %v2354 = vunpack.c.l.b16 %v407
  %v2355 = vunpack.c.h.b16 %v407
  %v2356 = vunpack.c.l.b16 %v408
  %v2357 = vunpack.c.h.b16 %v408
  %v2358 = vunpack.c.l.b16 %v409
  %v2359 = vunpack.c.h.b16 %v409
  %v2360 = vunpack.c.l.b16 %v410
  %v2361 = vunpack.c.h.b16 %v410
  %v2362 = vunpack.c.l.b16 %v411
  %v2363 = vunpack.c.h.b16 %v411
  %v2364 = vunpack.c.l.b16 %v412
  %v2365 = vunpack.c.h.b16 %v412
  %v2366 = vunpack.c.l.b16 %v413
  %v2367 = vunpack.c.h.b16 %v413
  %v2368 = vunpack.c.l.b16 %v414
  %v2369 = vunpack.c.h.b16 %v414
  %v2370 = vunpack.c.l.b16 %v415
  %v2371 = vunpack.c.h.b16 %v415
  %v2372 = vunpack.c.l.b16 %v416
  %v2373 = vunpack.c.h.b16 %v416
  %v2374 = vunpack.c.l.b16 %v417
  %v2375 = vunpack.c.h.b16 %v417
  %v2376 = vunpack.c.l.b16 %v418
  %v2377 = vunpack.c.h.b16 %v418
  %v2378 = vunpack.c.l.b16 %v419
  %v2379 = vunpack.c.h.b16 %v419
  %v2380 = vunpack.c.l.b16 %v420
  %v2381 = vunpack.c.h.b16 %v420
  %v2382 = vunpack.c.l.b16 %v421
  %v2383 = vunpack.c.h.b16 %v421
  %v2384 = vunpack.c.l.b16 %v422
  %v2385 = vunpack.c.h.b16 %v422
  %v2386 = vunpack.c.l.b16 %v423
  %v2387 = vunpack.c.h.b16 %v423
  %v2388 = vunpack.c.l.b16 %v424
  %v2389 = vunpack.c.h.b16 %v424
  %v2390 = vunpack.c.l.b16 %v425
  %v2391 = vunpack.c.h.b16 %v425
  %v2392 = vunpack.c.l.b16 %v426
  %v2393 = vunpack.c.h.b16 %v426
  %v2394 = vunpack.c.l.b16 %v427
  %v2395 = vunpack.c.h.b16 %v427
  %v2396 = vunpack.c.l.b16 %v428
  %v2397 = vunpack.c.h.b16 %v428
  %v2398 = vunpack.c.l.b16 %v429
  %v2399 = vunpack.c.h.b16 %v429
  %v2400 = vunpack.c.l.b16 %v430
  %v2401 = vunpack.c.h.b16 %v430
  %v2402 = vunpack.c.l.b16 %v431
  %v2403 = vunpack.c.h.b16 %v431
  %v2404 = vunpack.c.l.b16 %v432
  %v2405 = vunpack.c.h.b16 %v432
  %v2406 = vunpack.c.l.b16 %v433
  %v2407 = vunpack.c.h.b16 %v433
  %v2408 = vunpack.c.l.b16 %v434
  %v2409 = vunpack.c.h.b16 %v434
  %v2410 = vunpack.c.l.b16 %v435
  %v2411 = vunpack.c.h.b16 %v435
  %v2412 = vunpack.c.l.b16 %v436
  %v2413 = vunpack.c.h.b16 %v436
  %v2414 = vunpack.c.l.b16 %v437
  %v2415 = vunpack.c.h.b16 %v437
  %v2416 = vunpack.c.l.b16 %v438
  %v2417 = vunpack.c.h.b16 %v438
  %v2418 = vunpack.c.l.b16 %v439
  %v2419 = vunpack.c.h.b16 %v439
  %v2420 = vunpack.c.l.b16 %v440
  %v2421 = vunpack.c.h.b16 %v440
  %v2422 = vunpack.c.l.b16 %v441
  %v2423 = vunpack.c.h.b16 %v441
  %v2424 = vunpack.c.l.b16 %v442
  %v2425 = vunpack.c.h.b16 %v442
  %v2426 = vunpack.c.l.b16 %v443
  %v2427 = vunpack.c.h.b16 %v443
  %v2428 = vunpack.c.l.b16 %v444
  %v2429 = vunpack.c.h.b16 %v444
  %v2430 = vunpack.c.l.b16 %v445
  %v2431 = vunpack.c.h.b16 %v445
  %v2432 = vunpack.c.l.b16 %v446
  %v2433 = vunpack.c.h.b16 %v446
  %v2434 = vunpack.c.l.b16 %v447
  %v2435 = vunpack.c.h.b16 %v447
  %v2436 = vunpack.c.l.b16 %v448
  %v2437 = vunpack.c.h.b16 %v448
  %v2438 = vunpack.c.l.b16 %v449
  %v2439 = vunpack.c.h.b16 %v449
  %v2440 = vunpack.c.l.b16 %v450
  %v2441 = vunpack.c.h.b16 %v450
  %v2442 = vunpack.c.l.b16 %v451
  %v2443 = vunpack.c.h.b16 %v451
  %v2444 = vunpack.c.l.b16 %v452
  %v2445 = vunpack.c.h.b16 %v452
  %v2446 = vunpack.c.l.b16 %v453
  %v2447 = vunpack.c.h.b16 %v453
  %v2448 = vunpack.c.l.b16 %v454
  %v2449 = vunpack.c.h.b16 %v454
  %v2450 = vunpack.c.l.b16 %v455
  %v2451 = vunpack.c.h.b16 %v455
  %v2452 = vunpack.c.l.b16 %v456
  %v2453 = vunpack.c.h.b16 %v456
  %v2454 = vunpack.c.l.b16 %v457
  %v2455 = vunpack.c.h.b16 %v457
  %v2456 = vunpack.c.l.b16 %v458
  %v2457 = vunpack.c.h.b16 %v458
  %v2458 = vunpack.c.l.b16 %v459
  %v2459 = vunpack.c.h.b16 %v459
  %v2460 = vunpack.c.l.b16 %v460
  %v2461 = vunpack.c.h.b16 %v460
  %v2462 = vunpack.c.l.b16 %v461
  %v2463 = vunpack.c.h.b16 %v461
  %v2464 = vunpack.c.l.b16 %v462
  %v2465 = vunpack.c.h.b16 %v462
  %v2466 = vunpack.c.l.b16 %v463
  %v2467 = vunpack.c.h.b16 %v463
  %v2468 = vunpack.c.l.b16 %v464
  %v2469 = vunpack.c.h.b16 %v464
  %v2470 = vunpack.c.l.b16 %v465
  %v2471 = vunpack.c.h.b16 %v465
  %v2472 = vunpack.c.l.b16 %v466
  %v2473 = vunpack.c.h.b16 %v466
  %v2474 = vunpack.c.l.b16 %v467
  %v2475 = vunpack.c.h.b16 %v467
  %v2476 = vunpack.c.l.b16 %v468
  %v2477 = vunpack.c.h.b16 %v468
  %v2478 = vunpack.c.l.b16 %v469
  %v2479 = vunpack.c.h.b16 %v469
  %v2480 = vunpack.c.l.b16 %v470
  %v2481 = vunpack.c.h.b16 %v470
  %v2482 = vunpack.c.l.b16 %v471
  %v2483 = vunpack.c.h.b16 %v471
  %v2484 = vunpack.c.l.b16 %v472
  %v2485 = vunpack.c.h.b16 %v472
  %v2486 = vunpack.c.l.b16 %v473
  %v2487 = vunpack.c.h.b16 %v473
  %v2488 = vunpack.c.l.b16 %v474
  %v2489 = vunpack.c.h.b16 %v474
  %v2490 = vunpack.c.l.b16 %v475
  %v2491 = vunpack.c.h.b16 %v475
  %v2492 = vunpack.c.l.b16 %v476
  %v2493 = vunpack.c.h.b16 %v476
  %v2494 = vunpack.c.l.b16 %v477
  %v2495 = vunpack.c.h.b16 %v477
  %v2496 = vunpack.c.l.b16 %v478
  %v2497 = vunpack.c.h.b16 %v478
  %v2498 = vunpack.c.l.b16 %v479
  %v2499 = vunpack.c.h.b16 %v479
  %v2500 = vunpack.c.l.b16 %v480
  %v2501 = vunpack.c.h.b16 %v480
  %v2502 = vunpack.c.l.b16 %v481
  %v2503 = vunpack.c.h.b16 %v481
  %v2504 = vunpack.c.l.b16 %v482
  %v2505 = vunpack.c.h.b16 %v482
  %v2506 = vunpack.c.l.b16 %v483
  %v2507 = vunpack.c.h.b16 %v483
  %v2508 = vunpack.c.l.b16 %v484
  %v2509 = vunpack.c.h.b16 %v484
  %v2510 = vunpack.c.l.b16 %v485
  %v2511 = vunpack.c.h.b16 %v485
  %v2512 = vunpack.c.l.b16 %v486
  %v2513 = vunpack.c.h.b16 %v486
  %v2514 = vunpack.c.l.b16 %v487
  %v2515 = vunpack.c.h.b16 %v487
  %v2516 = vunpack.c.l.b16 %v488
  %v2517 = vunpack.c.h.b16 %v488
  %v2518 = vunpack.c.l.b16 %v489
  %v2519 = vunpack.c.h.b16 %v489
  %v2520 = vunpack.c.l.b16 %v490
  %v2521 = vunpack.c.h.b16 %v490
  %v2522 = vunpack.c.l.b16 %v491
  %v2523 = vunpack.c.h.b16 %v491
  %v2524 = vunpack.c.l.b16 %v492
  %v2525 = vunpack.c.h.b16 %v492
  %v2526 = vunpack.c.l.b16 %v493
  %v2527 = vunpack.c.h.b16 %v493
  %v2528 = vunpack.c.l.b16 %v494
  %v2529 = vunpack.c.h.b16 %v494
  %v2530 = vunpack.c.l.b16 %v495
  %v2531 = vunpack.c.h.b16 %v495
  %v2532 = vunpack.c.l.b16 %v496
  %v2533 = vunpack.c.h.b16 %v496
  %v2534 = vunpack.c.l.b16 %v497
  %v2535 = vunpack.c.h.b16 %v497
  %v2536 = vunpack.c.l.b16 %v498
  %v2537 = vunpack.c.h.b16 %v498
  %v2538 = vunpack.c.l.b16 %v499
  %v2539 = vunpack.c.h.b16 %v499
  %v2540 = vunpack.c.l.b16 %v500
  %v2541 = vunpack.c.h.b16 %v500
  %v2542 = vunpack.c.l.b16 %v501
  %v2543 = vunpack.c.h.b16 %v501
  %v2544 = vunpack.c.l.b16 %v502
  %v2545 = vunpack.c.h.b16 %v502
  %v2546 = vunpack.c.l.b16 %v503
  %v2547 = vunpack.c.h.b16 %v503
  %v2548 = vunpack.c.l.b16 %v504
  %v2549 = vunpack.c.h.b16 %v504
  %v2550 = vunpack.c.l.b16 %v505
  %v2551 = vunpack.c.h.b16 %v505
  %v2552 = vunpack.c.l.b16 %v506
  %v2553 = vunpack.c.h.b16 %v506
  %v2554 = vunpack.c.l.b16 %v507
  %v2555 = vunpack.c.h.b16 %v507
  %v2556 = vunpack.c.l.b16 %v508
  %v2557 = vunpack.c.h.b16 %v508
  %v2558 = vunpack.c.l.b16 %v509
  %v2559 = vunpack.c.h.b16 %v509
  %v2560 = vunpack.c.l.b16 %v510
  %v2561 = vunpack.c.h.b16 %v510
  %v2562 = vunpack.c.l.b16 %v511
  %v2563 = vunpack.c.h.b16 %v511
  %v2564 = vunpack.c.l.b16 %v512
  %v2565 = vunpack.c.h.b16 %v512
  %v2566 = vunpack.c.l.b16 %v513
  %v2567 = vunpack.c.h.b16 %v513
  %v2568 = vunpack.c.l.b16 %v514
  %v2569 = vunpack.c.h.b16 %v514
  %v2570 = vunpack.c.l.b16 %v515
  %v2571 = vunpack.c.h.b16 %v515
  %v2572 = vunpack.c.l.b16 %v516
  %v2573 = vunpack.c.h.b16 %v516
  %v2574 = vunpack.c.l.b16 %v517
  %v2575 = vunpack.c.h.b16 %v517
  %v2576 = vunpack.c.l.b16 %v518
  %v2577 = vunpack.c.h.b16 %v518
  %v2578 = vunpack.c.l.b16 %v519
  %v2579 = vunpack.c.h.b16 %v519
  %v2580 = vunpack.c.l.b16 %v520
  %v2581 = vunpack.c.h.b16 %v520
  %v2582 = vunpack.c.l.b16 %v521
  %v2583 = vunpack.c.h.b16 %v521
  %v2584 = vunpack.c.l.b16 %v522
  %v2585 = vunpack.c.h.b16 %v522
  %v2586 = vunpack.c.l.b16 %v523
  %v2587 = vunpack.c.h.b16 %v523
  %v2588 = vunpack.c.l.b16 %v524
  %v2589 = vunpack.c.h.b16 %v524
  %v2590 = vunpack.c.l.b16 %v525
  %v2591 = vunpack.c.h.b16 %v525
  %v2592 = vunpack.c.l.b16 %v526
  %v2593 = vunpack.c.h.b16 %v526
  %v2594 = vunpack.c.l.b16 %v527
  %v2595 = vunpack.c.h.b16 %v527
  %v2596 = vunpack.c.l.b16 %v528
  %v2597 = vunpack.c.h.b16 %v528
  %v2598 = vunpack.c.l.b16 %v529
  %v2599 = vunpack.c.h.b16 %v529
  %v2600 = vunpack.c.l.b16 %v530
  %v2601 = vunpack.c.h.b16 %v530
  %v2602 = vunpack.c.l.b16 %v531
  %v2603 = vunpack.c.h.b16 %v531
  %v2604 = vunpack.c.l.b16 %v532
  %v2605 = vunpack.c.h.b16 %v532
  %v2606 = vunpack.c.l.b16 %v533
  %v2607 = vunpack.c.h.b16 %v533
  %v2608 = vunpack.c.l.b16 %v534
  %v2609 = vunpack.c.h.b16 %v534
  %v2610 = vunpack.c.l.b16 %v535
  %v2611 = vunpack.c.h.b16 %v535
  %v2612 = vunpack.c.l.b16 %v536
  %v2613 = vunpack.c.h.b16 %v536
  %v2614 = vunpack.c.l.b16 %v537
  %v2615 = vunpack.c.h.b16 %v537
  %v2616 = vunpack.c.l.b16 %v538
  %v2617 = vunpack.c.h.b16 %v538
  %v2618 = vunpack.c.l.b16 %v539
  %v2619 = vunpack.c.h.b16 %v539
  %v2620 = vunpack.c.l.b16 %v540
  %v2621 = vunpack.c.h.b16 %v540
  %v2622 = vunpack.c.l.b16 %v541
  %v2623 = vunpack.c.h.b16 %v541
  %v2624 = vunpack.c.l.b16 %v542
  %v2625 = vunpack.c.h.b16 %v542
  %v2626 = vunpack.c.l.b16 %v543
  %v2627 = vunpack.c.h.b16 %v543
  %v2628 = vunpack.c.l.b16 %v544
  %v2629 = vunpack.c.h.b16 %v544
  %v2630 = vunpack.c.l.b16 %v545
  %v2631 = vunpack.c.h.b16 %v545
  %v2632 = vunpack.c.l.b16 %v546
  %v2633 = vunpack.c.h.b16 %v546
  %v2634 = vunpack.c.l.b16 %v547
  %v2635 = vunpack.c.h.b16 %v547
  %v2636 = vunpack.c.l.b16 %v548
  %v2637 = vunpack.c.h.b16 %v548
  %v2638 = vunpack.c.l.b16 %v549
  %v2639 = vunpack.c.h.b16 %v549
  %v2640 = vunpack.c.l.b16 %v550
  %v2641 = vunpack.c.h.b16 %v550
  %v2642 = vunpack.c.l.b16 %v551
  %v2643 = vunpack.c.h.b16 %v551
  %v2644 = vunpack.c.l.b16 %v552
  %v2645 = vunpack.c.h.b16 %v552
  %v2646 = vunpack.c.l.b16 %v553
  %v2647 = vunpack.c.h.b16 %v553
  %v2648 = vunpack.c.l.b16 %v554
  %v2649 = vunpack.c.h.b16 %v554
  %v2650 = vunpack.c.l.b16 %v555
  %v2651 = vunpack.c.h.b16 %v555
  %v2652 = vunpack.c.l.b16 %v556
  %v2653 = vunpack.c.h.b16 %v556
  %v2654 = vunpack.c.l.b16 %v557
  %v2655 = vunpack.c.h.b16 %v557
  %v2656 = vunpack.c.l.b16 %v558
  %v2657 = vunpack.c.h.b16 %v558
  %v2658 = vunpack.c.l.b16 %v559
  %v2659 = vunpack.c.h.b16 %v559
  %v2660 = vunpack.c.l.b16 %v560
  %v2661 = vunpack.c.h.b16 %v560
  %v2662 = vunpack.c.l.b16 %v561
  %v2663 = vunpack.c.h.b16 %v561
  %v2664 = vunpack.c.l.b16 %v562
  %v2665 = vunpack.c.h.b16 %v562
  %v2666 = vunpack.c.l.b16 %v563
  %v2667 = vunpack.c.h.b16 %v563
  %v2668 = vunpack.c.l.b16 %v564
  %v2669 = vunpack.c.h.b16 %v564
  %v2670 = vunpack.c.l.b16 %v565
  %v2671 = vunpack.c.h.b16 %v565
  %v2672 = vunpack.c.l.b16 %v566
  %v2673 = vunpack.c.h.b16 %v566
  %v2674 = vunpack.c.l.b16 %v567
  %v2675 = vunpack.c.h.b16 %v567
  %v2676 = vunpack.c.l.b16 %v568
  %v2677 = vunpack.c.h.b16 %v568
  %v2678 = vunpack.c.l.b16 %v569
  %v2679 = vunpack.c.h.b16 %v569
  %v2680 = vunpack.c.l.b16 %v570
  %v2681 = vunpack.c.h.b16 %v570
  %v2682 = vunpack.c.l.b16 %v571
  %v2683 = vunpack.c.h.b16 %v571
  %v2684 = vunpack.c.l.b16 %v572
  %v2685 = vunpack.c.h.b16 %v572
  %v2686 = vunpack.c.l.b16 %v573
  %v2687 = vunpack.c.h.b16 %v573
  %v2688 = vunpack.c.l.b16 %v574
  %v2689 = vunpack.c.h.b16 %v574
  %v2690 = vunpack.c.l.b16 %v575
  %v2691 = vunpack.c.h.b16 %v575
  %v2692 = vunpack.c.l.b16 %v576
  %v2693 = vunpack.c.h.b16 %v576
  %v2694 = vunpack.c.l.b16 %v577
  %v2695 = vunpack.c.h.b16 %v577
  %v2696 = vunpack.c.l.b16 %v578
  %v2697 = vunpack.c.h.b16 %v578
  %v2698 = vunpack.c.l.b16 %v579
  %v2699 = vunpack.c.h.b16 %v579
  %v2700 = vunpack.c.l.b16 %v580
  %v2701 = vunpack.c.h.b16 %v580
  %v2702 = vunpack.c.l.b16 %v581
  %v2703 = vunpack.c.h.b16 %v581
  %v2704 = vunpack.c.l.b16 %v582
  %v2705 = vunpack.c.h.b16 %v582
  %v2706 = vunpack.c.l.b16 %v583
  %v2707 = vunpack.c.h.b16 %v583
  %v2708 = vunpack.c.l.b16 %v584
  %v2709 = vunpack.c.h.b16 %v584
  %v2710 = vunpack.c.l.b16 %v585
  %v2711 = vunpack.c.h.b16 %v585
  %v2712 = vunpack.c.l.b16 %v586
  %v2713 = vunpack.c.h.b16 %v586
  %v2714 = vunpack.c.l.b16 %v587
  %v2715 = vunpack.c.h.b16 %v587
  %v2716 = vunpack.c.l.b16 %v588
  %v2717 = vunpack.c.h.b16 %v588
  %v2718 = vunpack.c.l.b16 %v589
  %v2719 = vunpack.c.h.b16 %v589
  %v2720 = vunpack.c.l.b16 %v590
  %v2721 = vunpack.c.h.b16 %v590
  %v2722 = vunpack.c.l.b16 %v591
  %v2723 = vunpack.c.h.b16 %v591
  %v2724 = vunpack.c.l.b16 %v592
  %v2725 = vunpack.c.h.b16 %v592
  %v2726 = vunpack.c.l.b16 %v593
  %v2727 = vunpack.c.h.b16 %v593
  %v2728 = vunpack.c.l.b16 %v594
  %v2729 = vunpack.c.h.b16 %v594
  %v2730 = vunpack.c.l.b16 %v595
  %v2731 = vunpack.c.h.b16 %v595
  %v2732 = vunpack.c.l.b16 %v596
  %v2733 = vunpack.c.h.b16 %v596
  %v2734 = vunpack.c.l.b16 %v597
  %v2735 = vunpack.c.h.b16 %v597
  %v2736 = vunpack.c.l.b16 %v598
  %v2737 = vunpack.c.h.b16 %v598
  %v2738 = vunpack.c.l.b16 %v599
  %v2739 = vunpack.c.h.b16 %v599
  %v2740 = vunpack.c.l.b16 %v600
  %v2741 = vunpack.c.h.b16 %v600
  %v2742 = vunpack.c.l.b16 %v601
  %v2743 = vunpack.c.h.b16 %v601
  %v2744 = vunpack.c.l.b16 %v602
  %v2745 = vunpack.c.h.b16 %v602
  %v2746 = vunpack.c.l.b16 %v603
  %v2747 = vunpack.c.h.b16 %v603
  %v2748 = vunpack.c.l.b16 %v604
  %v2749 = vunpack.c.h.b16 %v604
  %v2750 = vunpack.c.l.b16 %v605
  %v2751 = vunpack.c.h.b16 %v605
  %v2752 = vunpack.c.l.b16 %v606
  %v2753 = vunpack.c.h.b16 %v606
  %v2754 = vunpack.c.l.b16 %v607
  %v2755 = vunpack.c.h.b16 %v607
  %v2756 = vunpack.c.l.b16 %v608
  %v2757 = vunpack.c.h.b16 %v608
  %v2758 = vunpack.c.l.b16 %v609
  %v2759 = vunpack.c.h.b16 %v609
  %v2760 = vunpack.c.l.b16 %v610
  %v2761 = vunpack.c.h.b16 %v610
  %v2762 = vunpack.c.l.b16 %v611
  %v2763 = vunpack.c.h.b16 %v611
  %v2764 = vunpack.c.l.b16 %v612
  %v2765 = vunpack.c.h.b16 %v612
  %v2766 = vunpack.c.l.b16 %v613
  %v2767 = vunpack.c.h.b16 %v613
  %v2768 = vunpack.c.l.b16 %v614
  %v2769 = vunpack.c.h.b16 %v614
  %v2770 = vunpack.c.l.b16 %v615
  %v2771 = vunpack.c.h.b16 %v615
  %v2772 = vunpack.c.l.b16 %v616
  %v2773 = vunpack.c.h.b16 %v616
  %v2774 = vunpack.c.l.b16 %v617
  %v2775 = vunpack.c.h.b16 %v617
  %v2776 = vunpack.c.l.b16 %v618
  %v2777 = vunpack.c.h.b16 %v618
  %v2778 = vunpack.c.l.b16 %v619
  %v2779 = vunpack.c.h.b16 %v619
  %v2780 = vunpack.c.l.b16 %v620
  %v2781 = vunpack.c.h.b16 %v620
  %v2782 = vunpack.c.l.b16 %v621
  %v2783 = vunpack.c.h.b16 %v621
  %v2784 = vunpack.c.l.b16 %v622
  %v2785 = vunpack.c.h.b16 %v622
  %v2786 = vunpack.c.l.b16 %v623
  %v2787 = vunpack.c.h.b16 %v623
  %v2788 = vunpack.c.l.b16 %v624
  %v2789 = vunpack.c.h.b16 %v624
  %v2790 = vunpack.c.l.b16 %v625
  %v2791 = vunpack.c.h.b16 %v625
  %v2792 = vunpack.c.l.b16 %v626
  %v2793 = vunpack.c.h.b16 %v626
  %v2794 = vunpack.c.l.b16 %v627
  %v2795 = vunpack.c.h.b16 %v627
  %v2796 = vunpack.c.l.b16 %v628
  %v2797 = vunpack.c.h.b16 %v628
  %v2798 = vunpack.c.l.b16 %v629
  %v2799 = vunpack.c.h.b16 %v629
  %v2800 = vunpack.c.l.b16 %v630
  %v2801 = vunpack.c.h.b16 %v630
  %v2802 = vunpack.c.l.b16 %v631
  %v2803 = vunpack.c.h.b16 %v631
  %v2804 = vunpack.c.l.b16 %v632
  %v2805 = vunpack.c.h.b16 %v632
  %v2806 = vunpack.c.l.b16 %v633
  %v2807 = vunpack.c.h.b16 %v633
  %v2808 = vunpack.c.l.b16 %v634
  %v2809 = vunpack.c.h.b16 %v634
  %v2810 = vunpack.c.l.b16 %v635
  %v2811 = vunpack.c.h.b16 %v635
  %v2812 = vunpack.c.l.b16 %v636
  %v2813 = vunpack.c.h.b16 %v636
  %v2814 = vunpack.c.l.b16 %v637
  %v2815 = vunpack.c.h.b16 %v637
  %v2816 = vunpack.c.l.b16 %v638
  %v2817 = vunpack.c.h.b16 %v638
  %v2818 = vunpack.c.l.b16 %v639
  %v2819 = vunpack.c.h.b16 %v639
  %v2820 = vunpack.c.l.b16 %v640
  %v2821 = vunpack.c.h.b16 %v640
  %v2822 = vunpack.c.l.b16 %v641
  %v2823 = vunpack.c.h.b16 %v641
  %v2824 = vunpack.c.l.b16 %v642
  %v2825 = vunpack.c.h.b16 %v642
  %v2826 = vunpack.c.l.b16 %v643
  %v2827 = vunpack.c.h.b16 %v643
  %v2828 = vunpack.c.l.b16 %v644
  %v2829 = vunpack.c.h.b16 %v644
  %v2830 = vunpack.c.l.b16 %v645
  %v2831 = vunpack.c.h.b16 %v645
  %v2832 = vunpack.c.l.b16 %v646
  %v2833 = vunpack.c.h.b16 %v646
  %v2834 = vunpack.c.l.b16 %v647
  %v2835 = vunpack.c.h.b16 %v647
  %v2836 = vunpack.c.l.b16 %v648
  %v2837 = vunpack.c.h.b16 %v648
  %v2838 = vunpack.c.l.b16 %v649
  %v2839 = vunpack.c.h.b16 %v649
  %v2840 = vunpack.c.l.b16 %v650
  %v2841 = vunpack.c.h.b16 %v650
  %v2842 = vunpack.c.l.b16 %v651
  %v2843 = vunpack.c.h.b16 %v651
  %v2844 = vunpack.c.l.b16 %v652
  %v2845 = vunpack.c.h.b16 %v652
  %v2846 = vunpack.c.l.b16 %v653
  %v2847 = vunpack.c.h.b16 %v653
  %v2848 = vunpack.c.l.b16 %v654
  %v2849 = vunpack.c.h.b16 %v654
  %v2850 = vunpack.c.l.b16 %v655
  %v2851 = vunpack.c.h.b16 %v655
  %v2852 = vunpack.c.l.b16 %v656
  %v2853 = vunpack.c.h.b16 %v656
  %v2854 = vunpack.c.l.b16 %v657
  %v2855 = vunpack.c.h.b16 %v657
  %v2856 = vunpack.c.l.b16 %v658
  %v2857 = vunpack.c.h.b16 %v658
  %v2858 = vunpack.c.l.b16 %v659
  %v2859 = vunpack.c.h.b16 %v659
  %v2860 = vunpack.c.l.b16 %v660
  %v2861 = vunpack.c.h.b16 %v660
  %v2862 = vunpack.c.l.b16 %v661
  %v2863 = vunpack.c.h.b16 %v661
  %v2864 = vunpack.c.l.b16 %v662
  %v2865 = vunpack.c.h.b16 %v662
  %v2866 = vunpack.c.l.b16 %v663
  %v2867 = vunpack.c.h.b16 %v663
  %v2868 = vunpack.c.l.b16 %v664
  %v2869 = vunpack.c.h.b16 %v664
  %v2870 = vunpack.c.l.b16 %v665
  %v2871 = vunpack.c.h.b16 %v665
  %v2872 = vunpack.c.l.b16 %v666
  %v2873 = vunpack.c.h.b16 %v666
  %v2874 = vunpack.c.l.b16 %v667
  %v2875 = vunpack.c.h.b16 %v667
  %v2876 = vunpack.c.l.b16 %v668
  %v2877 = vunpack.c.h.b16 %v668
  %v2878 = vunpack.c.l.b16 %v669
  %v2879 = vunpack.c.h.b16 %v669
  %v2880 = vunpack.c.l.b16 %v670
  %v2881 = vunpack.c.h.b16 %v670
  %v2882 = vunpack.c.l.b16 %v671
  %v2883 = vunpack.c.h.b16 %v671
  %v2884 = vunpack.c.l.b16 %v672
  %v2885 = vunpack.c.h.b16 %v672
  %v2886 = vunpack.c.l.b16 %v673
  %v2887 = vunpack.c.h.b16 %v673
  %v2888 = vunpack.c.l.b16 %v674
  %v2889 = vunpack.c.h.b16 %v674
  %v2890 = vunpack.c.l.b16 %v675
  %v2891 = vunpack.c.h.b16 %v675
  %v2892 = vunpack.c.l.b16 %v676
  %v2893 = vunpack.c.h.b16 %v676
  %v2894 = vunpack.c.l.b16 %v677
  %v2895 = vunpack.c.h.b16 %v677
  %v2896 = vunpack.c.l.b16 %v678
  %v2897 = vunpack.c.h.b16 %v678
  %v2898 = vunpack.c.l.b16 %v679
  %v2899 = vunpack.c.h.b16 %v679
  %v2900 = vunpack.c.l.b16 %v680
  %v2901 = vunpack.c.h.b16 %v680
  %v2902 = vunpack.c.l.b16 %v681
  %v2903 = vunpack.c.h.b16 %v681
  %v2904 = vunpack.c.l.b16 %v682
  %v2905 = vunpack.c.h.b16 %v682
  %v2906 = vunpack.c.l.b16 %v683
  %v2907 = vunpack.c.h.b16 %v683
  %v2908 = vunpack.c.l.b16 %v684
  %v2909 = vunpack.c.h.b16 %v684
  %v2910 = vunpack.c.l.b16 %v685
  %v2911 = vunpack.c.h.b16 %v685
  %v2912 = vunpack.c.l.b16 %v686
  %v2913 = vunpack.c.h.b16 %v686
  %v2914 = vunpack.c.l.b16 %v687
  %v2915 = vunpack.c.h.b16 %v687
  %v2916 = vunpack.c.l.b16 %v688
  %v2917 = vunpack.c.h.b16 %v688
  %v2918 = vunpack.c.l.b16 %v689
  %v2919 = vunpack.c.h.b16 %v689
  %v2920 = vunpack.c.l.b16 %v690
  %v2921 = vunpack.c.h.b16 %v690
  %v2922 = vunpack.c.l.b16 %v691
  %v2923 = vunpack.c.h.b16 %v691
  %v2924 = vunpack.c.l.b16 %v692
  %v2925 = vunpack.c.h.b16 %v692
  %v2926 = vunpack.c.l.b16 %v693
  %v2927 = vunpack.c.h.b16 %v693
  %v2928 = vunpack.c.l.b16 %v694
  %v2929 = vunpack.c.h.b16 %v694
  %v2930 = vunpack.c.l.b16 %v695
  %v2931 = vunpack.c.h.b16 %v695
  %v2932 = vunpack.c.l.b16 %v696
  %v2933 = vunpack.c.h.b16 %v696
  %v2934 = vunpack.c.l.b16 %v697
  %v2935 = vunpack.c.h.b16 %v697
  %v2936 = vunpack.c.l.b16 %v698
  %v2937 = vunpack.c.h.b16 %v698
  %v2938 = vunpack.c.l.b16 %v699
  %v2939 = vunpack.c.h.b16 %v699
  %v2940 = vunpack.c.l.b16 %v700
  %v2941 = vunpack.c.h.b16 %v700
  %v2942 = vunpack.c.l.b16 %v701
  %v2943 = vunpack.c.h.b16 %v701
  %v2944 = vunpack.c.l.b16 %v702
  %v2945 = vunpack.c.h.b16 %v702
  %v2946 = vunpack.c.l.b16 %v703
  %v2947 = vunpack.c.h.b16 %v703
  %v2948 = vunpack.c.l.b16 %v704
  %v2949 = vunpack.c.h.b16 %v704
  %v2950 = vunpack.c.l.b16 %v705
  %v2951 = vunpack.c.h.b16 %v705
  %v2952 = vunpack.c.l.b16 %v706
  %v2953 = vunpack.c.h.b16 %v706
  %v2954 = vunpack.c.l.b16 %v707
  %v2955 = vunpack.c.h.b16 %v707
  %v2956 = vunpack.c.l.b16 %v708
  %v2957 = vunpack.c.h.b16 %v708
  %v2958 = vunpack.c.l.b16 %v709
  %v2959 = vunpack.c.h.b16 %v709
  %v2960 = vunpack.c.l.b16 %v710
  %v2961 = vunpack.c.h.b16 %v710
  %v2962 = vunpack.c.l.b16 %v711
  %v2963 = vunpack.c.h.b16 %v711
  %v2964 = vunpack.c.l.b16 %v712
  %v2965 = vunpack.c.h.b16 %v712
  %v2966 = vunpack.c.l.b16 %v713
  %v2967 = vunpack.c.h.b16 %v713
  %v2968 = vunpack.c.l.b16 %v714
  %v2969 = vunpack.c.h.b16 %v714
  %v2970 = vunpack.c.l.b16 %v715
  %v2971 = vunpack.c.h.b16 %v715
  %v2972 = vunpack.c.l.b16 %v716
  %v2973 = vunpack.c.h.b16 %v716
  %v2974 = vunpack.c.l.b16 %v717
  %v2975 = vunpack.c.h.b16 %v717
  %v2976 = vunpack.c.l.b16 %v718
  %v2977 = vunpack.c.h.b16 %v718
  %v2978 = vunpack.c.l.b16 %v719
  %v2979 = vunpack.c.h.b16 %v719
  %v2980 = vunpack.c.l.b16 %v720
  %v2981 = vunpack.c.h.b16 %v720
  %v2982 = vunpack.c.l.b16 %v721
  %v2983 = vunpack.c.h.b16 %v721
  %v2984 = vunpack.c.l.b16 %v722
  %v2985 = vunpack.c.h.b16 %v722
  %v2986 = vunpack.c.l.b16 %v723
  %v2987 = vunpack.c.h.b16 %v723
  %v2988 = vunpack.c.l.b16 %v724
  %v2989 = vunpack.c.h.b16 %v724
  %v2990 = vunpack.c.l.b16 %v725
  %v2991 = vunpack.c.h.b16 %v725
  %v2992 = vunpack.c.l.b16 %v726
  %v2993 = vunpack.c.h.b16 %v726
  %v2994 = vunpack.c.l.b16 %v727
  %v2995 = vunpack.c.h.b16 %v727
  %v2996 = vunpack.c.l.b16 %v728
  %v2997 = vunpack.c.h.b16 %v728
  %v2998 = vunpack.c.l.b16 %v729
  %v2999 = vunpack.c.h.b16 %v729
  %v3000 = vunpack.c.l.b16 %v730
  %v3001 = vunpack.c.h.b16 %v730
  %v3002 = vunpack.c.l.b16 %v731
  %v3003 = vunpack.c.h.b16 %v731
  %v3004 = vunpack.c.l.b16 %v732
  %v3005 = vunpack.c.h.b16 %v732
  %v3006 = vunpack.c.l.b16 %v733
  %v3007 = vunpack.c.h.b16 %v733
  %v3008 = vunpack.c.l.b16 %v734
  %v3009 = vunpack.c.h.b16 %v734
  %v3010 = vunpack.c.l.b16 %v735
  %v3011 = vunpack.c.h.b16 %v735
  %v3012 = vunpack.c.l.b16 %v736
  %v3013 = vunpack.c.h.b16 %v736
  %v3014 = vunpack.c.l.b16 %v737
  %v3015 = vunpack.c.h.b16 %v737
  %v3016 = vunpack.c.l.b16 %v738
  %v3017 = vunpack.c.h.b16 %v738
  %v3018 = vunpack.c.l.b16 %v739
  %v3019 = vunpack.c.h.b16 %v739
  %v3020 = vunpack.c.l.b16 %v740
  %v3021 = vunpack.c.h.b16 %v740
  %v3022 = vunpack.c.l.b16 %v741
  %v3023 = vunpack.c.h.b16 %v741
  %v3024 = vunpack.c.l.b16 %v742
  %v3025 = vunpack.c.h.b16 %v742
  %v3026 = vunpack.c.l.b16 %v743
  %v3027 = vunpack.c.h.b16 %v743
  %v3028 = vunpack.c.l.b16 %v744
  %v3029 = vunpack.c.h.b16 %v744
  %v3030 = vunpack.c.l.b16 %v745
  %v3031 = vunpack.c.h.b16 %v745
  %v3032 = vunpack.c.l.b16 %v746
  %v3033 = vunpack.c.h.b16 %v746
  %v3034 = vunpack.c.l.b16 %v747
  %v3035 = vunpack.c.h.b16 %v747
  %v3036 = vunpack.c.l.b16 %v748
  %v3037 = vunpack.c.h.b16 %v748
  %v3038 = vunpack.c.l.b16 %v749
  %v3039 = vunpack.c.h.b16 %v749
  %v3040 = vunpack.c.l.b16 %v750
  %v3041 = vunpack.c.h.b16 %v750
  %v3042 = vunpack.c.l.b16 %v751
  %v3043 = vunpack.c.h.b16 %v751
  %v3044 = vunpack.c.l.b16 %v752
  %v3045 = vunpack.c.h.b16 %v752
  %v3046 = vunpack.c.l.b16 %v753
  %v3047 = vunpack.c.h.b16 %v753
  %v3048 = vunpack.c.l.b16 %v754
  %v3049 = vunpack.c.h.b16 %v754
  %v3050 = vunpack.c.l.b16 %v755
  %v3051 = vunpack.c.h.b16 %v755
  %v3052 = vunpack.c.l.b16 %v756
  %v3053 = vunpack.c.h.b16 %v756
  %v3054 = vunpack.c.l.b16 %v757
  %v3055 = vunpack.c.h.b16 %v757
  %v3056 = vunpack.c.l.b16 %v758
  %v3057 = vunpack.c.h.b16 %v758
  %v3058 = vunpack.c.l.b16 %v759
  %v3059 = vunpack.c.h.b16 %v759
  %v3060 = vunpack.c.l.b16 %v760
  %v3061 = vunpack.c.h.b16 %v760
  %v3062 = vunpack.c.l.b16 %v761
  %v3063 = vunpack.c.h.b16 %v761
  %v3064 = vunpack.c.l.b16 %v762
  %v3065 = vunpack.c.h.b16 %v762
  %v3066 = vunpack.c.l.b16 %v763
  %v3067 = vunpack.c.h.b16 %v763
  %v3068 = vunpack.c.l.b16 %v764
  %v3069 = vunpack.c.h.b16 %v764
  %v3070 = vunpack.c.l.b16 %v765
  %v3071 = vunpack.c.h.b16 %v765
  %v3072 = vunpack.c.l.b16 %v766
  %v3073 = vunpack.c.h.b16 %v766
  %v3074 = vunpack.c.l.b16 %v767
  %v3075 = vunpack.c.h.b16 %v767
  %v3076 = vunpack.c.l.b16 %v768
  %v3077 = vunpack.c.h.b16 %v768
  %v3078 = vunpack.c.l.b16 %v769
  %v3079 = vunpack.c.h.b16 %v769
  %v3080 = vunpack.c.l.b16 %v770
  %v3081 = vunpack.c.h.b16 %v770
  %v3082 = vunpack.c.l.b16 %v771
  %v3083 = vunpack.c.h.b16 %v771
  %v3084 = vunpack.c.l.b16 %v772
  %v3085 = vunpack.c.h.b16 %v772
  %v3086 = vunpack.c.l.b16 %v773
  %v3087 = vunpack.c.h.b16 %v773
  %v3088 = vunpack.c.l.b16 %v774
  %v3089 = vunpack.c.h.b16 %v774
  %v3090 = vunpack.c.l.b16 %v775
  %v3091 = vunpack.c.h.b16 %v775
  %v3092 = vunpack.c.l.b16 %v776
  %v3093 = vunpack.c.h.b16 %v776
  %v3094 = vunpack.c.l.b16 %v777
  %v3095 = vunpack.c.h.b16 %v777
  %v3096 = vunpack.c.l.b16 %v778
  %v3097 = vunpack.c.h.b16 %v778
  %v3098 = vunpack.c.l.b16 %v779
  %v3099 = vunpack.c.h.b16 %v779
  %v3100 = vunpack.c.l.b16 %v780
  %v3101 = vunpack.c.h.b16 %v780
  %v3102 = vunpack.c.l.b16 %v781
  %v3103 = vunpack.c.h.b16 %v781
  %v3104 = vunpack.c.l.b16 %v782
  %v3105 = vunpack.c.h.b16 %v782
  %v3106 = vunpack.c.l.b16 %v783
  %v3107 = vunpack.c.h.b16 %v783
  %v3108 = vunpack.c.l.b16 %v784
  %v3109 = vunpack.c.h.b16 %v784
  %v3110 = vunpack.c.l.b16 %v785
  %v3111 = vunpack.c.h.b16 %v785
  %v3112 = vunpack.c.l.b16 %v786
  %v3113 = vunpack.c.h.b16 %v786
  %v3114 = vunpack.c.l.b16 %v787
  %v3115 = vunpack.c.h.b16 %v787
  %v3116 = vunpack.c.l.b16 %v788
  %v3117 = vunpack.c.h.b16 %v788
  %v3118 = vunpack.c.l.b16 %v789
  %v3119 = vunpack.c.h.b16 %v789
  %v3120 = vunpack.c.l.b16 %v790
  %v3121 = vunpack.c.h.b16 %v790
  %v3122 = vunpack.c.l.b16 %v791
  %v3123 = vunpack.c.h.b16 %v791
  %v3124 = vunpack.c.l.b16 %v792
  %v3125 = vunpack.c.h.b16 %v792
  %v3126 = vunpack.c.l.b16 %v793
  %v3127 = vunpack.c.h.b16 %v793
  %v3128 = vunpack.c.l.b16 %v794
  %v3129 = vunpack.c.h.b16 %v794
  %v3130 = vunpack.c.l.b16 %v795
  %v3131 = vunpack.c.h.b16 %v795
  %v3132 = vunpack.c.l.b16 %v796
  %v3133 = vunpack.c.h.b16 %v796
  %v3134 = vunpack.c.l.b16 %v797
  %v3135 = vunpack.c.h.b16 %v797
  %v3136 = vunpack.c.l.b16 %v798
  %v3137 = vunpack.c.h.b16 %v798
  %v3138 = vunpack.c.l.b16 %v799
  %v3139 = vunpack.c.h.b16 %v799
  %v3140 = vunpack.c.l.b16 %v800
  %v3141 = vunpack.c.h.b16 %v800
  %v3142 = vunpack.c.l.b16 %v801
  %v3143 = vunpack.c.h.b16 %v801
  %v3144 = vunpack.c.l.b16 %v802
  %v3145 = vunpack.c.h.b16 %v802
  %v3146 = vunpack.c.l.b16 %v803
  %v3147 = vunpack.c.h.b16 %v803
  %v3148 = vunpack.c.l.b16 %v804
  %v3149 = vunpack.c.h.b16 %v804
  %v3150 = vunpack.c.l.b16 %v805
  %v3151 = vunpack.c.h.b16 %v805
  %v3152 = vunpack.c.l.b16 %v806
  %v3153 = vunpack.c.h.b16 %v806
  %v3154 = vunpack.c.l.b16 %v807
  %v3155 = vunpack.c.h.b16 %v807
  %v3156 = vunpack.c.l.b16 %v808
  %v3157 = vunpack.c.h.b16 %v808
  %v3158 = vunpack.c.l.b16 %v809
  %v3159 = vunpack.c.h.b16 %v809
  %v3160 = vunpack.c.l.b16 %v810
  %v3161 = vunpack.c.h.b16 %v810
  %v3162 = vunpack.c.l.b16 %v811
  %v3163 = vunpack.c.h.b16 %v811
  %v3164 = vunpack.c.l.b16 %v812
  %v3165 = vunpack.c.h.b16 %v812
  %v3166 = vunpack.c.l.b16 %v813
  %v3167 = vunpack.c.h.b16 %v813
  %v3168 = vunpack.c.l.b16 %v814
  %v3169 = vunpack.c.h.b16 %v814
  %v3170 = vunpack.c.l.b16 %v815
  %v3171 = vunpack.c.h.b16 %v815
  %v3172 = vunpack.c.l.b16 %v816
  %v3173 = vunpack.c.h.b16 %v816
  %v3174 = vunpack.c.l.b16 %v817
  %v3175 = vunpack.c.h.b16 %v817
  %v3176 = vunpack.c.l.b16 %v818
  %v3177 = vunpack.c.h.b16 %v818
  %v3178 = vunpack.c.l.b16 %v819
  %v3179 = vunpack.c.h.b16 %v819
  %v3180 = vunpack.c.l.b16 %v820
  %v3181 = vunpack.c.h.b16 %v820
  %v3182 = vunpack.c.l.b16 %v821
  %v3183 = vunpack.c.h.b16 %v821
  %v3184 = vunpack.c.l.b16 %v822
  %v3185 = vunpack.c.h.b16 %v822
  %v3186 = vunpack.c.l.b16 %v823
  %v3187 = vunpack.c.h.b16 %v823
  %v3188 = vunpack.c.l.b16 %v824
  %v3189 = vunpack.c.h.b16 %v824
  %v3190 = vunpack.c.l.b16 %v825
  %v3191 = vunpack.c.h.b16 %v825
  %v3192 = vunpack.c.l.b16 %v826
  %v3193 = vunpack.c.h.b16 %v826
  %v3194 = vunpack.c.l.b16 %v827
  %v3195 = vunpack.c.h.b16 %v827
  %v3196 = vunpack.c.l.b16 %v828
  %v3197 = vunpack.c.h.b16 %v828
  %v3198 = vunpack.c.l.b16 %v829
  %v3199 = vunpack.c.h.b16 %v829
  %v3200 = vunpack.c.l.b16 %v830
  %v3201 = vunpack.c.h.b16 %v830
  %v3202 = vunpack.c.l.b16 %v831
  %v3203 = vunpack.c.h.b16 %v831
  %v3204 = vunpack.c.l.b16 %v832
  %v3205 = vunpack.c.h.b16 %v832
  %v3206 = vunpack.c.l.b16 %v833
  %v3207 = vunpack.c.h.b16 %v833
  %v3208 = vunpack.c.l.b16 %v834
  %v3209 = vunpack.c.h.b16 %v834
  %v3210 = vunpack.c.l.b16 %v835
  %v3211 = vunpack.c.h.b16 %v835
  %v3212 = vunpack.c.l.b16 %v836
  %v3213 = vunpack.c.h.b16 %v836
  %v3214 = vunpack.c.l.b16 %v837
  %v3215 = vunpack.c.h.b16 %v837
  %v3216 = vunpack.c.l.b16 %v838
  %v3217 = vunpack.c.h.b16 %v838
  %v3218 = vunpack.c.l.b16 %v839
  %v3219 = vunpack.c.h.b16 %v839
  %v3220 = vunpack.c.l.b16 %v840
  %v3221 = vunpack.c.h.b16 %v840
  %v3222 = vunpack.c.l.b16 %v841
  %v3223 = vunpack.c.h.b16 %v841
  %v3224 = vunpack.c.l.b16 %v842
  %v3225 = vunpack.c.h.b16 %v842
  %v3226 = vunpack.c.l.b16 %v843
  %v3227 = vunpack.c.h.b16 %v843
  %v3228 = vunpack.c.l.b16 %v844
  %v3229 = vunpack.c.h.b16 %v844
  %v3230 = vunpack.c.l.b16 %v845
  %v3231 = vunpack.c.h.b16 %v845
  %v3232 = vunpack.c.l.b16 %v846
  %v3233 = vunpack.c.h.b16 %v846
  %v3234 = vunpack.c.l.b16 %v847
  %v3235 = vunpack.c.h.b16 %v847
  %v3236 = vunpack.c.l.b16 %v848
  %v3237 = vunpack.c.h.b16 %v848
  %v3238 = vunpack.c.l.b16 %v849
  %v3239 = vunpack.c.h.b16 %v849
  %v3240 = vunpack.c.l.b16 %v850
  %v3241 = vunpack.c.h.b16 %v850
  %v3242 = vunpack.c.l.b16 %v851
  %v3243 = vunpack.c.h.b16 %v851
  %v3244 = vunpack.c.l.b16 %v852
  %v3245 = vunpack.c.h.b16 %v852
  %v3246 = vunpack.c.l.b16 %v853
  %v3247 = vunpack.c.h.b16 %v853
  %v3248 = vunpack.c.l.b16 %v854
  %v3249 = vunpack.c.h.b16 %v854
  %v3250 = vunpack.c.l.b16 %v855
  %v3251 = vunpack.c.h.b16 %v855
  %v3252 = vunpack.c.l.b16 %v856
  %v3253 = vunpack.c.h.b16 %v856
  %v3254 = vunpack.c.l.b16 %v857
  %v3255 = vunpack.c.h.b16 %v857
  %v3256 = vunpack.c.l.b16 %v858
  %v3257 = vunpack.c.h.b16 %v858
  %v3258 = vunpack.c.l.b16 %v859
  %v3259 = vunpack.c.h.b16 %v859
  %v3260 = vunpack.c.l.b16 %v860
  %v3261 = vunpack.c.h.b16 %v860
  %v3262 = vunpack.c.l.b16 %v861
  %v3263 = vunpack.c.h.b16 %v861
  %v3264 = vunpack.c.l.b16 %v862
  %v3265 = vunpack.c.h.b16 %v862
  %v3266 = vunpack.c.l.b16 %v863
  %v3267 = vunpack.c.h.b16 %v863
  %v3268 = vunpack.c.l.b16 %v864
  %v3269 = vunpack.c.h.b16 %v864
  %v3270 = vunpack.c.l.b16 %v865
  %v3271 = vunpack.c.h.b16 %v865
  %v3272 = vunpack.c.l.b16 %v866
  %v3273 = vunpack.c.h.b16 %v866
  %v3274 = vunpack.c.l.b16 %v867
  %v3275 = vunpack.c.h.b16 %v867
  %v3276 = vunpack.c.l.b16 %v868
  %v3277 = vunpack.c.h.b16 %v868
  %v3278 = vunpack.c.l.b16 %v869
  %v3279 = vunpack.c.h.b16 %v869
  %v3280 = vpack.c.b16 %v1684, %v1680
  %v3281 = vpack.c.b16 %v1685, %v1681
  %v3282 = vpack.c.b16 %v1686, %v1682
  %v3283 = vpack.c.b16 %v1687, %v1683
  %v3284 = vpack.c.b16 %v1692, %v1688
  %v3285 = vpack.c.b16 %v1693, %v1689
  %v3286 = vpack.c.b16 %v1694, %v1690
  %v3287 = vpack.c.b16 %v1695, %v1691
  %v3288 = vpack.c.b16 %v1700, %v1696
  %v3289 = vpack.c.b16 %v1701, %v1697
  %v3290 = vpack.c.b16 %v1702, %v1698
  %v3291 = vpack.c.b16 %v1703, %v1699
  %v3292 = vpack.c.b16 %v1708, %v1704
  %v3293 = vpack.c.b16 %v1709, %v1705
  %v3294 = vpack.c.b16 %v1710, %v1706
  %v3295 = vpack.c.b16 %v1711, %v1707
  %v3296 = vpack.c.b16 %v1716, %v1712
  %v3297 = vpack.c.b16 %v1717, %v1713
  %v3298 = vpack.c.b16 %v1718, %v1714
  %v3299 = vpack.c.b16 %v1719, %v1715
  %v3300 = vpack.c.b16 %v1724, %v1720
  %v3301 = vpack.c.b16 %v1725, %v1721
  %v3302 = vpack.c.b16 %v1726, %v1722
  %v3303 = vpack.c.b16 %v1727, %v1723
  %v3304 = vpack.c.b16 %v1732, %v1728
  %v3305 = vpack.c.b16 %v1733, %v1729
  %v3306 = vpack.c.b16 %v1734, %v1730
  %v3307 = vpack.c.b16 %v1735, %v1731
  %v3308 = vpack.c.b16 %v1740, %v1736
  %v3309 = vpack.c.b16 %v1741, %v1737
  %v3310 = vpack.c.b16 %v1742, %v1738
  %v3311 = vpack.c.b16 %v1743, %v1739
  %v3312 = vpack.c.b16 %v1748, %v1744
  %v3313 = vpack.c.b16 %v1749, %v1745
  %v3314 = vpack.c.b16 %v1750, %v1746
  %v3315 = vpack.c.b16 %v1751, %v1747
  %v3316 = vpack.c.b16 %v1756, %v1752
  %v3317 = vpack.c.b16 %v1757, %v1753
  %v3318 = vpack.c.b16 %v1758, %v1754
  %v3319 = vpack.c.b16 %v1759, %v1755
  %v3320 = vpack.c.b16 %v1764, %v1760
  %v3321 = vpack.c.b16 %v1765, %v1761
  %v3322 = vpack.c.b16 %v1766, %v1762
  %v3323 = vpack.c.b16 %v1767, %v1763
  %v3324 = vpack.c.b16 %v1772, %v1768
  %v3325 = vpack.c.b16 %v1773, %v1769
  %v3326 = vpack.c.b16 %v1774, %v1770
  %v3327 = vpack.c.b16 %v1775, %v1771
  %v3328 = vpack.c.b16 %v1780, %v1776
  %v3329 = vpack.c.b16 %v1781, %v1777
  %v3330 = vpack.c.b16 %v1782, %v1778
  %v3331 = vpack.c.b16 %v1783, %v1779
  %v3332 = vpack.c.b16 %v1788, %v1784
  %v3333 = vpack.c.b16 %v1789, %v1785
  %v3334 = vpack.c.b16 %v1790, %v1786
  %v3335 = vpack.c.b16 %v1791, %v1787
  %v3336 = vpack.c.b16 %v1796, %v1792
  %v3337 = vpack.c.b16 %v1797, %v1793
  %v3338 = vpack.c.b16 %v1798, %v1794
  %v3339 = vpack.c.b16 %v1799, %v1795
  %v3340 = vpack.c.b16 %v1804, %v1800
  %v3341 = vpack.c.b16 %v1805, %v1801
  %v3342 = vpack.c.b16 %v1806, %v1802
  %v3343 = vpack.c.b16 %v1807, %v1803
  %v3344 = vpack.c.b16 %v1812, %v1808
  %v3345 = vpack.c.b16 %v1813, %v1809
  %v3346 = vpack.c.b16 %v1814, %v1810
  %v3347 = vpack.c.b16 %v1815, %v1811
  %v3348 = vpack.c.b16 %v1820, %v1816
  %v3349 = vpack.c.b16 %v1821, %v1817
  %v3350 = vpack.c.b16 %v1822, %v1818
  %v3351 = vpack.c.b16 %v1823, %v1819
  %v3352 = vpack.c.b16 %v1828, %v1824
  %v3353 = vpack.c.b16 %v1829, %v1825
  %v3354 = vpack.c.b16 %v1830, %v1826
  %v3355 = vpack.c.b16 %v1831, %v1827
  %v3356 = vpack.c.b16 %v1836, %v1832
  %v3357 = vpack.c.b16 %v1837, %v1833
  %v3358 = vpack.c.b16 %v1838, %v1834
  %v3359 = vpack.c.b16 %v1839, %v1835
  %v3360 = vpack.c.b16 %v1844, %v1840
  %v3361 = vpack.c.b16 %v1845, %v1841
  %v3362 = vpack.c.b16 %v1846, %v1842
  %v3363 = vpack.c.b16 %v1847, %v1843
  %v3364 = vpack.c.b16 %v1852, %v1848
  %v3365 = vpack.c.b16 %v1853, %v1849
  %v3366 = vpack.c.b16 %v1854, %v1850
  %v3367 = vpack.c.b16 %v1855, %v1851
  %v3368 = vpack.c.b16 %v1860, %v1856
  %v3369 = vpack.c.b16 %v1861, %v1857
  %v3370 = vpack.c.b16 %v1862, %v1858
  %v3371 = vpack.c.b16 %v1863, %v1859
  %v3372 = vpack.c.b16 %v1868, %v1864
  %v3373 = vpack.c.b16 %v1869, %v1865
  %v3374 = vpack.c.b16 %v1870, %v1866
  %v3375 = vpack.c.b16 %v1871, %v1867
  %v3376 = vpack.c.b16 %v1876, %v1872
  %v3377 = vpack.c.b16 %v1877, %v1873
  %v3378 = vpack.c.b16 %v1878, %v1874
  %v3379 = vpack.c.b16 %v1879, %v1875
  %v3380 = vpack.c.b16 %v1884, %v1880
  %v3381 = vpack.c.b16 %v1885, %v1881
  %v3382 = vpack.c.b16 %v1886, %v1882
  %v3383 = vpack.c.b16 %v1887, %v1883
  %v3384 = vpack.c.b16 %v1892, %v1888
  %v3385 = vpack.c.b16 %v1893, %v1889
  %v3386 = vpack.c.b16 %v1894, %v1890
  %v3387 = vpack.c.b16 %v1895, %v1891
  %v3388 = vpack.c.b16 %v1900, %v1896
  %v3389 = vpack.c.b16 %v1901, %v1897
  %v3390 = vpack.c.b16 %v1902, %v1898
  %v3391 = vpack.c.b16 %v1903, %v1899
  %v3392 = vpack.c.b16 %v1908, %v1904
  %v3393 = vpack.c.b16 %v1909, %v1905
  %v3394 = vpack.c.b16 %v1910, %v1906
  %v3395 = vpack.c.b16 %v1911, %v1907
  %v3396 = vpack.c.b16 %v1916, %v1912
  %v3397 = vpack.c.b16 %v1917, %v1913
  %v3398 = vpack.c.b16 %v1918, %v1914
  %v3399 = vpack.c.b16 %v1919, %v1915
  %v3400 = vpack.c.b16 %v1924, %v1920
  %v3401 = vpack.c.b16 %v1925, %v1921
  %v3402 = vpack.c.b16 %v1926, %v1922
  %v3403 = vpack.c.b16 %v1927, %v1923
  %v3404 = vpack.c.b16 %v1932, %v1928
  %v3405 = vpack.c.b16 %v1933, %v1929
  %v3406 = vpack.c.b16 %v1934, %v1930
  %v3407 = vpack.c.b16 %v1935, %v1931
  %v3408 = vpack.c.b16 %v1940, %v1936
  %v3409 = vpack.c.b16 %v1941, %v1937
  %v3410 = vpack.c.b16 %v1942, %v1938
  %v3411 = vpack.c.b16 %v1943, %v1939
  %v3412 = vpack.c.b16 %v1948, %v1944
  %v3413 = vpack.c.b16 %v1949, %v1945
  %v3414 = vpack.c.b16 %v1950, %v1946
  %v3415 = vpack.c.b16 %v1951, %v1947
  %v3416 = vpack.c.b16 %v1956, %v1952
  %v3417 = vpack.c.b16 %v1957, %v1953
  %v3418 = vpack.c.b16 %v1958, %v1954
  %v3419 = vpack.c.b16 %v1959, %v1955
  %v3420 = vpack.c.b16 %v1964, %v1960
  %v3421 = vpack.c.b16 %v1965, %v1961
  %v3422 = vpack.c.b16 %v1966, %v1962
  %v3423 = vpack.c.b16 %v1967, %v1963
  %v3424 = vpack.c.b16 %v1972, %v1968
  %v3425 = vpack.c.b16 %v1973, %v1969
  %v3426 = vpack.c.b16 %v1974, %v1970
  %v3427 = vpack.c.b16 %v1975, %v1971
  %v3428 = vpack.c.b16 %v1980, %v1976
  %v3429 = vpack.c.b16 %v1981, %v1977
  %v3430 = vpack.c.b16 %v1982, %v1978
  %v3431 = vpack.c.b16 %v1983, %v1979
  %v3432 = vpack.c.b16 %v1988, %v1984
  %v3433 = vpack.c.b16 %v1989, %v1985
  %v3434 = vpack.c.b16 %v1990, %v1986
  %v3435 = vpack.c.b16 %v1991, %v1987
  %v3436 = vpack.c.b16 %v1996, %v1992
  %v3437 = vpack.c.b16 %v1997, %v1993
  %v3438 = vpack.c.b16 %v1998, %v1994
  %v3439 = vpack.c.b16 %v1999, %v1995
  %v3440 = vpack.c.b16 %v2004, %v2000
  %v3441 = vpack.c.b16 %v2005, %v2001
  %v3442 = vpack.c.b16 %v2006, %v2002
  %v3443 = vpack.c.b16 %v2007, %v2003
  %v3444 = vpack.c.b16 %v2012, %v2008
  %v3445 = vpack.c.b16 %v2013, %v2009
  %v3446 = vpack.c.b16 %v2014, %v2010
  %v3447 = vpack.c.b16 %v2015, %v2011
  %v3448 = vpack.c.b16 %v2020, %v2016
  %v3449 = vpack.c.b16 %v2021, %v2017
  %v3450 = vpack.c.b16 %v2022, %v2018
  %v3451 = vpack.c.b16 %v2023, %v2019
  %v3452 = vpack.c.b16 %v2028, %v2024
  %v3453 = vpack.c.b16 %v2029, %v2025
  %v3454 = vpack.c.b16 %v2030, %v2026
  %v3455 = vpack.c.b16 %v2031, %v2027
  %v3456 = vpack.c.b16 %v2036, %v2032
  %v3457 = vpack.c.b16 %v2037, %v2033
  %v3458 = vpack.c.b16 %v2038, %v2034
  %v3459 = vpack.c.b16 %v2039, %v2035
  %v3460 = vpack.c.b16 %v2044, %v2040
  %v3461 = vpack.c.b16 %v2045, %v2041
  %v3462 = vpack.c.b16 %v2046, %v2042
  %v3463 = vpack.c.b16 %v2047, %v2043
  %v3464 = vpack.c.b16 %v2052, %v2048
  %v3465 = vpack.c.b16 %v2053, %v2049
  %v3466 = vpack.c.b16 %v2054, %v2050
  %v3467 = vpack.c.b16 %v2055, %v2051
  %v3468 = vpack.c.b16 %v2060, %v2056
  %v3469 = vpack.c.b16 %v2061, %v2057
  %v3470 = vpack.c.b16 %v2062, %v2058
  %v3471 = vpack.c.b16 %v2063, %v2059
  %v3472 = vpack.c.b16 %v2068, %v2064
  %v3473 = vpack.c.b16 %v2069, %v2065
  %v3474 = vpack.c.b16 %v2070, %v2066
  %v3475 = vpack.c.b16 %v2071, %v2067
  %v3476 = vpack.c.b16 %v2076, %v2072
  %v3477 = vpack.c.b16 %v2077, %v2073
  %v3478 = vpack.c.b16 %v2078, %v2074
  %v3479 = vpack.c.b16 %v2079, %v2075
  %v3480 = vpack.c.b16 %v2084, %v2080
  %v3481 = vpack.c.b16 %v2085, %v2081
  %v3482 = vpack.c.b16 %v2086, %v2082
  %v3483 = vpack.c.b16 %v2087, %v2083
  %v3484 = vpack.c.b16 %v2092, %v2088
  %v3485 = vpack.c.b16 %v2093, %v2089
  %v3486 = vpack.c.b16 %v2094, %v2090
  %v3487 = vpack.c.b16 %v2095, %v2091
  %v3488 = vpack.c.b16 %v2100, %v2096
  %v3489 = vpack.c.b16 %v2101, %v2097
  %v3490 = vpack.c.b16 %v2102, %v2098
  %v3491 = vpack.c.b16 %v2103, %v2099
  %v3492 = vpack.c.b16 %v2108, %v2104
  %v3493 = vpack.c.b16 %v2109, %v2105
  %v3494 = vpack.c.b16 %v2110, %v2106
  %v3495 = vpack.c.b16 %v2111, %v2107
  %v3496 = vpack.c.b16 %v2116, %v2112
  %v3497 = vpack.c.b16 %v2117, %v2113
  %v3498 = vpack.c.b16 %v2118, %v2114
  %v3499 = vpack.c.b16 %v2119, %v2115
  %v3500 = vpack.c.b16 %v2124, %v2120
  %v3501 = vpack.c.b16 %v2125, %v2121
  %v3502 = vpack.c.b16 %v2126, %v2122
  %v3503 = vpack.c.b16 %v2127, %v2123
  %v3504 = vpack.c.b16 %v2132, %v2128
  %v3505 = vpack.c.b16 %v2133, %v2129
  %v3506 = vpack.c.b16 %v2134, %v2130
  %v3507 = vpack.c.b16 %v2135, %v2131
  %v3508 = vpack.c.b16 %v2140, %v2136
  %v3509 = vpack.c.b16 %v2141, %v2137
  %v3510 = vpack.c.b16 %v2142, %v2138
  %v3511 = vpack.c.b16 %v2143, %v2139
  %v3512 = vpack.c.b16 %v2148, %v2144
  %v3513 = vpack.c.b16 %v2149, %v2145
  %v3514 = vpack.c.b16 %v2150, %v2146
  %v3515 = vpack.c.b16 %v2151, %v2147
  %v3516 = vpack.c.b16 %v2156, %v2152
  %v3517 = vpack.c.b16 %v2157, %v2153
  %v3518 = vpack.c.b16 %v2158, %v2154
  %v3519 = vpack.c.b16 %v2159, %v2155
  %v3520 = vpack.c.b16 %v2164, %v2160
  %v3521 = vpack.c.b16 %v2165, %v2161
  %v3522 = vpack.c.b16 %v2166, %v2162
  %v3523 = vpack.c.b16 %v2167, %v2163
  %v3524 = vpack.c.b16 %v2172, %v2168
  %v3525 = vpack.c.b16 %v2173, %v2169
  %v3526 = vpack.c.b16 %v2174, %v2170
  %v3527 = vpack.c.b16 %v2175, %v2171
  %v3528 = vpack.c.b16 %v2180, %v2176
  %v3529 = vpack.c.b16 %v2181, %v2177
  %v3530 = vpack.c.b16 %v2182, %v2178
  %v3531 = vpack.c.b16 %v2183, %v2179
  %v3532 = vpack.c.b16 %v2188, %v2184
  %v3533 = vpack.c.b16 %v2189, %v2185
  %v3534 = vpack.c.b16 %v2190, %v2186
  %v3535 = vpack.c.b16 %v2191, %v2187
  %v3536 = vpack.c.b16 %v2196, %v2192
  %v3537 = vpack.c.b16 %v2197, %v2193
  %v3538 = vpack.c.b16 %v2198, %v2194
  %v3539 = vpack.c.b16 %v2199, %v2195
  %v3540 = vpack.c.b16 %v2204, %v2200
  %v3541 = vpack.c.b16 %v2205, %v2201
  %v3542 = vpack.c.b16 %v2206, %v2202
  %v3543 = vpack.c.b16 %v2207, %v2203
  %v3544 = vpack.c.b16 %v2212, %v2208
  %v3545 = vpack.c.b16 %v2213, %v2209
  %v3546 = vpack.c.b16 %v2214, %v2210
  %v3547 = vpack.c.b16 %v2215, %v2211
  %v3548 = vpack.c.b16 %v2220, %v2216
  %v3549 = vpack.c.b16 %v2221, %v2217
  %v3550 = vpack.c.b16 %v2222, %v2218
  %v3551 = vpack.c.b16 %v2223, %v2219
  %v3552 = vpack.c.b16 %v2228, %v2224
  %v3553 = vpack.c.b16 %v2229, %v2225
  %v3554 = vpack.c.b16 %v2230, %v2226
  %v3555 = vpack.c.b16 %v2231, %v2227
  %v3556 = vpack.c.b16 %v2236, %v2232
  %v3557 = vpack.c.b16 %v2237, %v2233
  %v3558 = vpack.c.b16 %v2238, %v2234
  %v3559 = vpack.c.b16 %v2239, %v2235
  %v3560 = vpack.c.b16 %v2244, %v2240
  %v3561 = vpack.c.b16 %v2245, %v2241
  %v3562 = vpack.c.b16 %v2246, %v2242
  %v3563 = vpack.c.b16 %v2247, %v2243
  %v3564 = vpack.c.b16 %v2252, %v2248
  %v3565 = vpack.c.b16 %v2253, %v2249
  %v3566 = vpack.c.b16 %v2254, %v2250
  %v3567 = vpack.c.b16 %v2255, %v2251
  %v3568 = vpack.c.b16 %v2260, %v2256
  %v3569 = vpack.c.b16 %v2261, %v2257
  %v3570 = vpack.c.b16 %v2262, %v2258
  %v3571 = vpack.c.b16 %v2263, %v2259
  %v3572 = vpack.c.b16 %v2268, %v2264
  %v3573 = vpack.c.b16 %v2269, %v2265
  %v3574 = vpack.c.b16 %v2270, %v2266
  %v3575 = vpack.c.b16 %v2271, %v2267
  %v3576 = vpack.c.b16 %v2276, %v2272
  %v3577 = vpack.c.b16 %v2277, %v2273
  %v3578 = vpack.c.b16 %v2278, %v2274
  %v3579 = vpack.c.b16 %v2279, %v2275
  %v3580 = vpack.c.b16 %v2284, %v2280
  %v3581 = vpack.c.b16 %v2285, %v2281
  %v3582 = vpack.c.b16 %v2286, %v2282
  %v3583 = vpack.c.b16 %v2287, %v2283
  %v3584 = vpack.c.b16 %v2292, %v2288
  %v3585 = vpack.c.b16 %v2293, %v2289
  %v3586 = vpack.c.b16 %v2294, %v2290
  %v3587 = vpack.c.b16 %v2295, %v2291
  %v3588 = vpack.c.b16 %v2300, %v2296
  %v3589 = vpack.c.b16 %v2301, %v2297
  %v3590 = vpack.c.b16 %v2302, %v2298
  %v3591 = vpack.c.b16 %v2303, %v2299
  %v3592 = vpack.c.b16 %v2308, %v2304
  %v3593 = vpack.c.b16 %v2309, %v2305
  %v3594 = vpack.c.b16 %v2310, %v2306
  %v3595 = vpack.c.b16 %v2311, %v2307
  %v3596 = vpack.c.b16 %v2316, %v2312
  %v3597 = vpack.c.b16 %v2317, %v2313
  %v3598 = vpack.c.b16 %v2318, %v2314
  %v3599 = vpack.c.b16 %v2319, %v2315
  %v3600 = vpack.c.b16 %v2324, %v2320
  %v3601 = vpack.c.b16 %v2325, %v2321
  %v3602 = vpack.c.b16 %v2326, %v2322
  %v3603 = vpack.c.b16 %v2327, %v2323
  %v3604 = vpack.c.b16 %v2332, %v2328
  %v3605 = vpack.c.b16 %v2333, %v2329
  %v3606 = vpack.c.b16 %v2334, %v2330
  %v3607 = vpack.c.b16 %v2335, %v2331
  %v3608 = vpack.c.b16 %v2340, %v2336
  %v3609 = vpack.c.b16 %v2341, %v2337
  %v3610 = vpack.c.b16 %v2342, %v2338
  %v3611 = vpack.c.b16 %v2343, %v2339
  %v3612 = vpack.c.b16 %v2348, %v2344
  %v3613 = vpack.c.b16 %v2349, %v2345
  %v3614 = vpack.c.b16 %v2350, %v2346
  %v3615 = vpack.c.b16 %v2351, %v2347
  %v3616 = vpack.c.b16 %v2356, %v2352
  %v3617 = vpack.c.b16 %v2357, %v2353
  %v3618 = vpack.c.b16 %v2358, %v2354
  %v3619 = vpack.c.b16 %v2359, %v2355
  %v3620 = vpack.c.b16 %v2364, %v2360
  %v3621 = vpack.c.b16 %v2365, %v2361
  %v3622 = vpack.c.b16 %v2366, %v2362
  %v3623 = vpack.c.b16 %v2367, %v2363
  %v3624 = vpack.c.b16 %v2372, %v2368
  %v3625 = vpack.c.b16 %v2373, %v2369
  %v3626 = vpack.c.b16 %v2374, %v2370
  %v3627 = vpack.c.b16 %v2375, %v2371
  %v3628 = vpack.c.b16 %v2380, %v2376
  %v3629 = vpack.c.b16 %v2381, %v2377
  %v3630 = vpack.c.b16 %v2382, %v2378
  %v3631 = vpack.c.b16 %v2383, %v2379
  %v3632 = vpack.c.b16 %v2388, %v2384
  %v3633 = vpack.c.b16 %v2389, %v2385
  %v3634 = vpack.c.b16 %v2390, %v2386
  %v3635 = vpack.c.b16 %v2391, %v2387
  %v3636 = vpack.c.b16 %v2396, %v2392
  %v3637 = vpack.c.b16 %v2397, %v2393
  %v3638 = vpack.c.b16 %v2398, %v2394
  %v3639 = vpack.c.b16 %v2399, %v2395
  %v3640 = vpack.c.b16 %v2404, %v2400
  %v3641 = vpack.c.b16 %v2405, %v2401
  %v3642 = vpack.c.b16 %v2406, %v2402
  %v3643 = vpack.c.b16 %v2407, %v2403
  %v3644 = vpack.c.b16 %v2412, %v2408
  %v3645 = vpack.c.b16 %v2413, %v2409
  %v3646 = vpack.c.b16 %v2414, %v2410
  %v3647 = vpack.c.b16 %v2415, %v2411
  %v3648 = vpack.c.b16 %v2420, %v2416
  %v3649 = vpack.c.b16 %v2421, %v2417
  %v3650 = vpack.c.b16 %v2422, %v2418
  %v3651 = vpack.c.b16 %v2423, %v2419
  %v3652 = vpack.c.b16 %v2428, %v2424
  %v3653 = vpack.c.b16 %v2429, %v2425
  %v3654 = vpack.c.b16 %v2430, %v2426
  %v3655 = vpack.c.b16 %v2431, %v2427
  %v3656 = vpack.c.b16 %v2436, %v2432
  %v3657 = vpack.c.b16 %v2437, %v2433
  %v3658 = vpack.c.b16 %v2438, %v2434
  %v3659 = vpack.c.b16 %v2439, %v2435
  %v3660 = vpack.c.b16 %v2444, %v2440
  %v3661 = vpack.c.b16 %v2445, %v2441
  %v3662 = vpack.c.b16 %v2446, %v2442
  %v3663 = vpack.c.b16 %v2447, %v2443
  %v3664 = vpack.c.b16 %v2452, %v2448
  %v3665 = vpack.c.b16 %v2453, %v2449
  %v3666 = vpack.c.b16 %v2454, %v2450
  %v3667 = vpack.c.b16 %v2455, %v2451
  %v3668 = vpack.c.b16 %v2460, %v2456
  %v3669 = vpack.c.b16 %v2461, %v2457
  %v3670 = vpack.c.b16 %v2462, %v2458
  %v3671 = vpack.c.b16 %v2463, %v2459
  %v3672 = vpack.c.b16 %v2468, %v2464
  %v3673 = vpack.c.b16 %v2469, %v2465
  %v3674 = vpack.c.b16 %v2470, %v2466
  %v3675 = vpack.c.b16 %v2471, %v2467
  %v3676 = vpack.c.b16 %v2476, %v2472
  %v3677 = vpack.c.b16 %v2477, %v2473
  %v3678 = vpack.c.b16 %v2478, %v2474
  %v3679 = vpack.c.b16 %v2479, %v2475
  %v3680 = vpack.c.b16 %v2484, %v2480
  %v3681 = vpack.c.b16 %v2485, %v2481
  %v3682 = vpack.c.b16 %v2486, %v2482
  %v3683 = vpack.c.b16 %v2487, %v2483
  %v3684 = vpack.c.b16 %v2492, %v2488
  %v3685 = vpack.c.b16 %v2493, %v2489
  %v3686 = vpack.c.b16 %v2494, %v2490
  %v3687 = vpack.c.b16 %v2495, %v2491
  %v3688 = vpack.c.b16 %v2500, %v2496
  %v3689 = vpack.c.b16 %v2501, %v2497
  %v3690 = vpack.c.b16 %v2502, %v2498
  %v3691 = vpack.c.b16 %v2503, %v2499
  %v3692 = vpack.c.b16 %v2508, %v2504
  %v3693 = vpack.c.b16 %v2509, %v2505
  %v3694 = vpack.c.b16 %v2510, %v2506
  %v3695 = vpack.c.b16 %v2511, %v2507
  %v3696 = vpack.c.b16 %v2516, %v2512
  %v3697 = vpack.c.b16 %v2517, %v2513
  %v3698 = vpack.c.b16 %v2518, %v2514
  %v3699 = vpack.c.b16 %v2519, %v2515
  %v3700 = vpack.c.b16 %v2524, %v2520
  %v3701 = vpack.c.b16 %v2525, %v2521
  %v3702 = vpack.c.b16 %v2526, %v2522
  %v3703 = vpack.c.b16 %v2527, %v2523
  %v3704 = vpack.c.b16 %v2532, %v2528
  %v3705 = vpack.c.b16 %v2533, %v2529
  %v3706 = vpack.c.b16 %v2534, %v2530
  %v3707 = vpack.c.b16 %v2535, %v2531
  %v3708 = vpack.c.b16 %v2540, %v2536
  %v3709 = vpack.c.b16 %v2541, %v2537
  %v3710 = vpack.c.b16 %v2542, %v2538
  %v3711 = vpack.c.b16 %v2543, %v2539
  %v3712 = vpack.c.b16 %v2548, %v2544
  %v3713 = vpack.c.b16 %v2549, %v2545
  %v3714 = vpack.c.b16 %v2550, %v2546
  %v3715 = vpack.c.b16 %v2551, %v2547
  %v3716 = vpack.c.b16 %v2556, %v2552
  %v3717 = vpack.c.b16 %v2557, %v2553
  %v3718 = vpack.c.b16 %v2558, %v2554
  %v3719 = vpack.c.b16 %v2559, %v2555
  %v3720 = vpack.c.b16 %v2564, %v2560
  %v3721 = vpack.c.b16 %v2565, %v2561
  %v3722 = vpack.c.b16 %v2566, %v2562
  %v3723 = vpack.c.b16 %v2567, %v2563
  %v3724 = vpack.c.b16 %v2572, %v2568
  %v3725 = vpack.c.b16 %v2573, %v2569
  %v3726 = vpack.c.b16 %v2574, %v2570
  %v3727 = vpack.c.b16 %v2575, %v2571
  %v3728 = vpack.c.b16 %v2580, %v2576
  %v3729 = vpack.c.b16 %v2581, %v2577
  %v3730 = vpack.c.b16 %v2582, %v2578
  %v3731 = vpack.c.b16 %v2583, %v2579
  %v3732 = vpack.c.b16 %v2588, %v2584
  %v3733 = vpack.c.b16 %v2589, %v2585
  %v3734 = vpack.c.b16 %v2590, %v2586
  %v3735 = vpack.c.b16 %v2591, %v2587
  %v3736 = vpack.c.b16 %v2596, %v2592
  %v3737 = vpack.c.b16 %v2597, %v2593
  %v3738 = vpack.c.b16 %v2598, %v2594
  %v3739 = vpack.c.b16 %v2599, %v2595
  %v3740 = vpack.c.b16 %v2604, %v2600
  %v3741 = vpack.c.b16 %v2605, %v2601
  %v3742 = vpack.c.b16 %v2606, %v2602
  %v3743 = vpack.c.b16 %v2607, %v2603
  %v3744 = vpack.c.b16 %v2612, %v2608
  %v3745 = vpack.c.b16 %v2613, %v2609
  %v3746 = vpack.c.b16 %v2614, %v2610
  %v3747 = vpack.c.b16 %v2615, %v2611
  %v3748 = vpack.c.b16 %v2620, %v2616
  %v3749 = vpack.c.b16 %v2621, %v2617
  %v3750 = vpack.c.b16 %v2622, %v2618
  %v3751 = vpack.c.b16 %v2623, %v2619
  %v3752 = vpack.c.b16 %v2628, %v2624
  %v3753 = vpack.c.b16 %v2629, %v2625
  %v3754 = vpack.c.b16 %v2630, %v2626
  %v3755 = vpack.c.b16 %v2631, %v2627
  %v3756 = vpack.c.b16 %v2636, %v2632
  %v3757 = vpack.c.b16 %v2637, %v2633
  %v3758 = vpack.c.b16 %v2638, %v2634
  %v3759 = vpack.c.b16 %v2639, %v2635
  %v3760 = vpack.c.b16 %v2644, %v2640
  %v3761 = vpack.c.b16 %v2645, %v2641
  %v3762 = vpack.c.b16 %v2646, %v2642
  %v3763 = vpack.c.b16 %v2647, %v2643
  %v3764 = vpack.c.b16 %v2652, %v2648
  %v3765 = vpack.c.b16 %v2653, %v2649
  %v3766 = vpack.c.b16 %v2654, %v2650
  %v3767 = vpack.c.b16 %v2655, %v2651
  %v3768 = vpack.c.b16 %v2660, %v2656
  %v3769 = vpack.c.b16 %v2661, %v2657
  %v3770 = vpack.c.b16 %v2662, %v2658
  %v3771 = vpack.c.b16 %v2663, %v2659
  %v3772 = vpack.c.b16 %v2668, %v2664
  %v3773 = vpack.c.b16 %v2669, %v2665
  %v3774 = vpack.c.b16 %v2670, %v2666
  %v3775 = vpack.c.b16 %v2671, %v2667
  %v3776 = vpack.c.b16 %v2676, %v2672
  %v3777 = vpack.c.b16 %v2677, %v2673
  %v3778 = vpack.c.b16 %v2678, %v2674
  %v3779 = vpack.c.b16 %v2679, %v2675
  %v3780 = vpack.c.b16 %v2684, %v2680
  %v3781 = vpack.c.b16 %v2685, %v2681
  %v3782 = vpack.c.b16 %v2686, %v2682
  %v3783 = vpack.c.b16 %v2687, %v2683
  %v3784 = vpack.c.b16 %v2692, %v2688
  %v3785 = vpack.c.b16 %v2693, %v2689
  %v3786 = vpack.c.b16 %v2694, %v2690
  %v3787 = vpack.c.b16 %v2695, %v2691
  %v3788 = vpack.c.b16 %v2700, %v2696
  %v3789 = vpack.c.b16 %v2701, %v2697
  %v3790 = vpack.c.b16 %v2702, %v2698
  %v3791 = vpack.c.b16 %v2703, %v2699
  %v3792 = vpack.c.b16 %v2708, %v2704
  %v3793 = vpack.c.b16 %v2709, %v2705
  %v3794 = vpack.c.b16 %v2710, %v2706
  %v3795 = vpack.c.b16 %v2711, %v2707
  %v3796 = vpack.c.b16 %v2716, %v2712
  %v3797 = vpack.c.b16 %v2717, %v2713
  %v3798 = vpack.c.b16 %v2718, %v2714
  %v3799 = vpack.c.b16 %v2719, %v2715
  %v3800 = vpack.c.b16 %v2724, %v2720
  %v3801 = vpack.c.b16 %v2725, %v2721
  %v3802 = vpack.c.b16 %v2726, %v2722
  %v3803 = vpack.c.b16 %v2727, %v2723
  %v3804 = vpack.c.b16 %v2732, %v2728
  %v3805 = vpack.c.b16 %v2733, %v2729
  %v3806 = vpack.c.b16 %v2734, %v2730
  %v3807 = vpack.c.b16 %v2735, %v2731
  %v3808 = vpack.c.b16 %v2740, %v2736
  %v3809 = vpack.c.b16 %v2741, %v2737
  %v3810 = vpack.c.b16 %v2742, %v2738
  %v3811 = vpack.c.b16 %v2743, %v2739
  %v3812 = vpack.c.b16 %v2748, %v2744
  %v3813 = vpack.c.b16 %v2749, %v2745
  %v3814 = vpack.c.b16 %v2750, %v2746
  %v3815 = vpack.c.b16 %v2751, %v2747
  %v3816 = vpack.c.b16 %v2756, %v2752
  %v3817 = vpack.c.b16 %v2757, %v2753
  %v3818 = vpack.c.b16 %v2758, %v2754
  %v3819 = vpack.c.b16 %v2759, %v2755
  %v3820 = vpack.c.b16 %v2764, %v2760
  %v3821 = vpack.c.b16 %v2765, %v2761
  %v3822 = vpack.c.b16 %v2766, %v2762
  %v3823 = vpack.c.b16 %v2767, %v2763
  %v3824 = vpack.c.b16 %v2772, %v2768
  %v3825 = vpack.c.b16 %v2773, %v2769
  %v3826 = vpack.c.b16 %v2774, %v2770
  %v3827 = vpack.c.b16 %v2775, %v2771
  %v3828 = vpack.c.b16 %v2780, %v2776
  %v3829 = vpack.c.b16 %v2781, %v2777
  %v3830 = vpack.c.b16 %v2782, %v2778
  %v3831 = vpack.c.b16 %v2783, %v2779
  %v3832 = vpack.c.b16 %v2788, %v2784
  %v3833 = vpack.c.b16 %v2789, %v2785
  %v3834 = vpack.c.b16 %v2790, %v2786
  %v3835 = vpack.c.b16 %v2791, %v2787
  %v3836 = vpack.c.b16 %v2796, %v2792
  %v3837 = vpack.c.b16 %v2797, %v2793
  %v3838 = vpack.c.b16 %v2798, %v2794
  %v3839 = vpack.c.b16 %v2799, %v2795
  %v3840 = vpack.c.b16 %v2804, %v2800
  %v3841 = vpack.c.b16 %v2805, %v2801
  %v3842 = vpack.c.b16 %v2806, %v2802
  %v3843 = vpack.c.b16 %v2807, %v2803
  %v3844 = vpack.c.b16 %v2812, %v2808
  %v3845 = vpack.c.b16 %v2813, %v2809
  %v3846 = vpack.c.b16 %v2814, %v2810
  %v3847 = vpack.c.b16 %v2815, %v2811
  %v3848 = vpack.c.b16 %v2820, %v2816
  %v3849 = vpack.c.b16 %v2821, %v2817
  %v3850 = vpack.c.b16 %v2822, %v2818
  %v3851 = vpack.c.b16 %v2823, %v2819
  %v3852 = vpack.c.b16 %v2828, %v2824
  %v3853 = vpack.c.b16 %v2829, %v2825
  %v3854 = vpack.c.b16 %v2830, %v2826
  %v3855 = vpack.c.b16 %v2831, %v2827
  %v3856 = vpack.c.b16 %v2836, %v2832
  %v3857 = vpack.c.b16 %v2837, %v2833
  %v3858 = vpack.c.b16 %v2838, %v2834
  %v3859 = vpack.c.b16 %v2839, %v2835
  %v3860 = vpack.c.b16 %v2844, %v2840
  %v3861 = vpack.c.b16 %v2845, %v2841
  %v3862 = vpack.c.b16 %v2846, %v2842
  %v3863 = vpack.c.b16 %v2847, %v2843
  %v3864 = vpack.c.b16 %v2852, %v2848
  %v3865 = vpack.c.b16 %v2853, %v2849
  %v3866 = vpack.c.b16 %v2854, %v2850
  %v3867 = vpack.c.b16 %v2855, %v2851
  %v3868 = vpack.c.b16 %v2860, %v2856
  %v3869 = vpack.c.b16 %v2861, %v2857
  %v3870 = vpack.c.b16 %v2862, %v2858
  %v3871 = vpack.c.b16 %v2863, %v2859
  %v3872 = vpack.c.b16 %v2868, %v2864
  %v3873 = vpack.c.b16 %v2869, %v2865
  %v3874 = vpack.c.b16 %v2870, %v2866
  %v3875 = vpack.c.b16 %v2871, %v2867
  %v3876 = vpack.c.b16 %v2876, %v2872
  %v3877 = vpack.c.b16 %v2877, %v2873
  %v3878 = vpack.c.b16 %v2878, %v2874
  %v3879 = vpack.c.b16 %v2879, %v2875
  %v3880 = vpack.c.b16 %v2884, %v2880
  %v3881 = vpack.c.b16 %v2885, %v2881
  %v3882 = vpack.c.b16 %v2886, %v2882
  %v3883 = vpack.c.b16 %v2887, %v2883
  %v3884 = vpack.c.b16 %v2892, %v2888
  %v3885 = vpack.c.b16 %v2893, %v2889
  %v3886 = vpack.c.b16 %v2894, %v2890
  %v3887 = vpack.c.b16 %v2895, %v2891
  %v3888 = vpack.c.b16 %v2900, %v2896
  %v3889 = vpack.c.b16 %v2901, %v2897
  %v3890 = vpack.c.b16 %v2902, %v2898
  %v3891 = vpack.c.b16 %v2903, %v2899
  %v3892 = vpack.c.b16 %v2908, %v2904
  %v3893 = vpack.c.b16 %v2909, %v2905
  %v3894 = vpack.c.b16 %v2910, %v2906
  %v3895 = vpack.c.b16 %v2911, %v2907
  %v3896 = vpack.c.b16 %v2916, %v2912
  %v3897 = vpack.c.b16 %v2917, %v2913
  %v3898 = vpack.c.b16 %v2918, %v2914
  %v3899 = vpack.c.b16 %v2919, %v2915
  %v3900 = vpack.c.b16 %v2924, %v2920
  %v3901 = vpack.c.b16 %v2925, %v2921
  %v3902 = vpack.c.b16 %v2926, %v2922
  %v3903 = vpack.c.b16 %v2927, %v2923
  %v3904 = vpack.c.b16 %v2932, %v2928
  %v3905 = vpack.c.b16 %v2933, %v2929
  %v3906 = vpack.c.b16 %v2934, %v2930
  %v3907 = vpack.c.b16 %v2935, %v2931
  %v3908 = vpack.c.b16 %v2940, %v2936
  %v3909 = vpack.c.b16 %v2941, %v2937
  %v3910 = vpack.c.b16 %v2942, %v2938
  %v3911 = vpack.c.b16 %v2943, %v2939
  %v3912 = vpack.c.b16 %v2948, %v2944
  %v3913 = vpack.c.b16 %v2949, %v2945
  %v3914 = vpack.c.b16 %v2950, %v2946
  %v3915 = vpack.c.b16 %v2951, %v2947
  %v3916 = vpack.c.b16 %v2956, %v2952
  %v3917 = vpack.c.b16 %v2957, %v2953
  %v3918 = vpack.c.b16 %v2958, %v2954
  %v3919 = vpack.c.b16 %v2959, %v2955
  %v3920 = vpack.c.b16 %v2964, %v2960
  %v3921 = vpack.c.b16 %v2965, %v2961
  %v3922 = vpack.c.b16 %v2966, %v2962
  %v3923 = vpack.c.b16 %v2967, %v2963
  %v3924 = vpack.c.b16 %v2972, %v2968
  %v3925 = vpack.c.b16 %v2973, %v2969
  %v3926 = vpack.c.b16 %v2974, %v2970
  %v3927 = vpack.c.b16 %v2975, %v2971
  %v3928 = vpack.c.b16 %v2980, %v2976
  %v3929 = vpack.c.b16 %v2981, %v2977
  %v3930 = vpack.c.b16 %v2982, %v2978
  %v3931 = vpack.c.b16 %v2983, %v2979
  %v3932 = vpack.c.b16 %v2988, %v2984
  %v3933 = vpack.c.b16 %v2989, %v2985
  %v3934 = vpack.c.b16 %v2990, %v2986
  %v3935 = vpack.c.b16 %v2991, %v2987
  %v3936 = vpack.c.b16 %v2996, %v2992
  %v3937 = vpack.c.b16 %v2997, %v2993
  %v3938 = vpack.c.b16 %v2998, %v2994
  %v3939 = vpack.c.b16 %v2999, %v2995
  %v3940 = vpack.c.b16 %v3004, %v3000
  %v3941 = vpack.c.b16 %v3005, %v3001
  %v3942 = vpack.c.b16 %v3006, %v3002
  %v3943 = vpack.c.b16 %v3007, %v3003
  %v3944 = vpack.c.b16 %v3012, %v3008
  %v3945 = vpack.c.b16 %v3013, %v3009
  %v3946 = vpack.c.b16 %v3014, %v3010
  %v3947 = vpack.c.b16 %v3015, %v3011
  %v3948 = vpack.c.b16 %v3020, %v3016
  %v3949 = vpack.c.b16 %v3021, %v3017
  %v3950 = vpack.c.b16 %v3022, %v3018
  %v3951 = vpack.c.b16 %v3023, %v3019
  %v3952 = vpack.c.b16 %v3028, %v3024
  %v3953 = vpack.c.b16 %v3029, %v3025
  %v3954 = vpack.c.b16 %v3030, %v3026
  %v3955 = vpack.c.b16 %v3031, %v3027
  %v3956 = vpack.c.b16 %v3036, %v3032
  %v3957 = vpack.c.b16 %v3037, %v3033
  %v3958 = vpack.c.b16 %v3038, %v3034
  %v3959 = vpack.c.b16 %v3039, %v3035
  %v3960 = vpack.c.b16 %v3044, %v3040
  %v3961 = vpack.c.b16 %v3045, %v3041
  %v3962 = vpack.c.b16 %v3046, %v3042
  %v3963 = vpack.c.b16 %v3047, %v3043
  %v3964 = vpack.c.b16 %v3052, %v3048
  %v3965 = vpack.c.b16 %v3053, %v3049
  %v3966 = vpack.c.b16 %v3054, %v3050
  %v3967 = vpack.c.b16 %v3055, %v3051
  %v3968 = vpack.c.b16 %v3060, %v3056
  %v3969 = vpack.c.b16 %v3061, %v3057
  %v3970 = vpack.c.b16 %v3062, %v3058
  %v3971 = vpack.c.b16 %v3063, %v3059
  %v3972 = vpack.c.b16 %v3068, %v3064
  %v3973 = vpack.c.b16 %v3069, %v3065
  %v3974 = vpack.c.b16 %v3070, %v3066
  %v3975 = vpack.c.b16 %v3071, %v3067
  %v3976 = vpack.c.b16 %v3076, %v3072
  %v3977 = vpack.c.b16 %v3077, %v3073
  %v3978 = vpack.c.b16 %v3078, %v3074
  %v3979 = vpack.c.b16 %v3079, %v3075
  %v3980 = vpack.c.b16 %v3084, %v3080
  %v3981 = vpack.c.b16 %v3085, %v3081
  %v3982 = vpack.c.b16 %v3086, %v3082
  %v3983 = vpack.c.b16 %v3087, %v3083
  %v3984 = vpack.c.b16 %v3092, %v3088
  %v3985 = vpack.c.b16 %v3093, %v3089
  %v3986 = vpack.c.b16 %v3094, %v3090
  %v3987 = vpack.c.b16 %v3095, %v3091
  %v3988 = vpack.c.b16 %v3100, %v3096
  %v3989 = vpack.c.b16 %v3101, %v3097
  %v3990 = vpack.c.b16 %v3102, %v3098
  %v3991 = vpack.c.b16 %v3103, %v3099
  %v3992 = vpack.c.b16 %v3108, %v3104
  %v3993 = vpack.c.b16 %v3109, %v3105
  %v3994 = vpack.c.b16 %v3110, %v3106
  %v3995 = vpack.c.b16 %v3111, %v3107
  %v3996 = vpack.c.b16 %v3116, %v3112
  %v3997 = vpack.c.b16 %v3117, %v3113
  %v3998 = vpack.c.b16 %v3118, %v3114
  %v3999 = vpack.c.b16 %v3119, %v3115
  %v4000 = vpack.c.b16 %v3124, %v3120
  %v4001 = vpack.c.b16 %v3125, %v3121
  %v4002 = vpack.c.b16 %v3126, %v3122
  %v4003 = vpack.c.b16 %v3127, %v3123
  %v4004 = vpack.c.b16 %v3132, %v3128
  %v4005 = vpack.c.b16 %v3133, %v3129
  %v4006 = vpack.c.b16 %v3134, %v3130
  %v4007 = vpack.c.b16 %v3135, %v3131
  %v4008 = vpack.c.b16 %v3140, %v3136
  %v4009 = vpack.c.b16 %v3141, %v3137
  %v4010 = vpack.c.b16 %v3142, %v3138
  %v4011 = vpack.c.b16 %v3143, %v3139
  %v4012 = vpack.c.b16 %v3148, %v3144
  %v4013 = vpack.c.b16 %v3149, %v3145
  %v4014 = vpack.c.b16 %v3150, %v3146
  %v4015 = vpack.c.b16 %v3151, %v3147
  %v4016 = vpack.c.b16 %v3156, %v3152
  %v4017 = vpack.c.b16 %v3157, %v3153
  %v4018 = vpack.c.b16 %v3158, %v3154
  %v4019 = vpack.c.b16 %v3159, %v3155
  %v4020 = vpack.c.b16 %v3164, %v3160
  %v4021 = vpack.c.b16 %v3165, %v3161
  %v4022 = vpack.c.b16 %v3166, %v3162
  %v4023 = vpack.c.b16 %v3167, %v3163
  %v4024 = vpack.c.b16 %v3172, %v3168
  %v4025 = vpack.c.b16 %v3173, %v3169
  %v4026 = vpack.c.b16 %v3174, %v3170
  %v4027 = vpack.c.b16 %v3175, %v3171
  %v4028 = vpack.c.b16 %v3180, %v3176
  %v4029 = vpack.c.b16 %v3181, %v3177
  %v4030 = vpack.c.b16 %v3182, %v3178
  %v4031 = vpack.c.b16 %v3183, %v3179
  %v4032 = vpack.c.b16 %v3188, %v3184
  %v4033 = vpack.c.b16 %v3189, %v3185
  %v4034 = vpack.c.b16 %v3190, %v3186
  %v4035 = vpack.c.b16 %v3191, %v3187
  %v4036 = vpack.c.b16 %v3196, %v3192
  %v4037 = vpack.c.b16 %v3197, %v3193
  %v4038 = vpack.c.b16 %v3198, %v3194
  %v4039 = vpack.c.b16 %v3199, %v3195
  %v4040 = vpack.c.b16 %v3204, %v3200
  %v4041 = vpack.c.b16 %v3205, %v3201
  %v4042 = vpack.c.b16 %v3206, %v3202
  %v4043 = vpack.c.b16 %v3207, %v3203
  %v4044 = vpack.c.b16 %v3212, %v3208
  %v4045 = vpack.c.b16 %v3213, %v3209
  %v4046 = vpack.c.b16 %v3214, %v3210
  %v4047 = vpack.c.b16 %v3215, %v3211
  %v4048 = vpack.c.b16 %v3220, %v3216
  %v4049 = vpack.c.b16 %v3221, %v3217
  %v4050 = vpack.c.b16 %v3222, %v3218
  %v4051 = vpack.c.b16 %v3223, %v3219
  %v4052 = vpack.c.b16 %v3228, %v3224
  %v4053 = vpack.c.b16 %v3229, %v3225
  %v4054 = vpack.c.b16 %v3230, %v3226
  %v4055 = vpack.c.b16 %v3231, %v3227
  %v4056 = vpack.c.b16 %v3236, %v3232
  %v4057 = vpack.c.b16 %v3237, %v3233
  %v4058 = vpack.c.b16 %v3238, %v3234
  %v4059 = vpack.c.b16 %v3239, %v3235
  %v4060 = vpack.c.b16 %v3244, %v3240
  %v4061 = vpack.c.b16 %v3245, %v3241
  %v4062 = vpack.c.b16 %v3246, %v3242
  %v4063 = vpack.c.b16 %v3247, %v3243
  %v4064 = vpack.c.b16 %v3252, %v3248
  %v4065 = vpack.c.b16 %v3253, %v3249
  %v4066 = vpack.c.b16 %v3254, %v3250
  %v4067 = vpack.c.b16 %v3255, %v3251
  %v4068 = vpack.c.b16 %v3260, %v3256
  %v4069 = vpack.c.b16 %v3261, %v3257
  %v4070 = vpack.c.b16 %v3262, %v3258
  %v4071 = vpack.c.b16 %v3263, %v3259
  %v4072 = vpack.c.b16 %v3268, %v3264
  %v4073 = vpack.c.b16 %v3269, %v3265
  %v4074 = vpack.c.b16 %v3270, %v3266
  %v4075 = vpack.c.b16 %v3271, %v3267
  %v4076 = vpack.c.b16 %v3276, %v3272
  %v4077 = vpack.c.b16 %v3277, %v3273
  %v4078 = vpack.c.b16 %v3278, %v3274
  %v4079 = vpack.c.b16 %v3279, %v3275
  %4880 = vmatpush.bf16.msra.mxu0 %v3308
  %4881 = vmatpush.bf16.msra.mxu0 %v3304
  %4882 = vmatpush.bf16.msra.mxu0 %v3300
  %4883 = vmatpush.bf16.msra.mxu0 %v3296
  %4884 = vmatpush.bf16.msra.mxu0 %v3292
  %4885 = vmatpush.bf16.msra.mxu0 %v3288
  %4886 = vmatpush.bf16.msra.mxu0 %v3284
  %4887 = vmatpush.bf16.msra.mxu0 %v3280
  %4888 = vmatmul.bf16.gmra.mxu0 %v45
  %v4889 = vpop.f32.mrf.mxu0
  %v4890 = vadd.f32 %v872, %v4889
  %v4891 = vpop.f32.mrf.mxu0
  %4892 = vdwg.mxu0
  %4893 = vmatpush.bf16.msra.mxu0 %v3340
  %4894 = vmatpush.bf16.msra.mxu0 %v3336
  %4895 = vmatpush.bf16.msra.mxu0 %v3332
  %4896 = vmatpush.bf16.msra.mxu0 %v3328
  %4897 = vmatpush.bf16.msra.mxu0 %v3324
  %4898 = vmatpush.bf16.msra.mxu0 %v3320
  %4899 = vmatpush.bf16.msra.mxu0 %v3316
  %4900 = vmatpush.bf16.msra.mxu0 %v3312
  %4901 = vmatmul.bf16.gmra.mxu0 %v46
  %v4902 = vpop.f32.mrf.mxu0
  %v4903 = vadd.f32 %v4890, %v4902
  %v4904 = vpop.f32.mrf.mxu0
  %4905 = vdwg.mxu0
  %4906 = vmatpush.bf16.msra.mxu0 %v3372
  %4907 = vmatpush.bf16.msra.mxu0 %v3368
  %4908 = vmatpush.bf16.msra.mxu0 %v3364
  %4909 = vmatpush.bf16.msra.mxu0 %v3360
  %4910 = vmatpush.bf16.msra.mxu0 %v3356
  %4911 = vmatpush.bf16.msra.mxu0 %v3352
  %4912 = vmatpush.bf16.msra.mxu0 %v3348
  %4913 = vmatpush.bf16.msra.mxu0 %v3344
  %4914 = vmatmul.bf16.gmra.mxu0 %v47
  %v4915 = vpop.f32.mrf.mxu0
  %v4916 = vadd.f32 %v4903, %v4915
  %v4917 = vpop.f32.mrf.mxu0
  %4918 = vdwg.mxu0
  %4919 = vmatpush.bf16.msra.mxu0 %v3404
  %4920 = vmatpush.bf16.msra.mxu0 %v3400
  %4921 = vmatpush.bf16.msra.mxu0 %v3396
  %4922 = vmatpush.bf16.msra.mxu0 %v3392
  %4923 = vmatpush.bf16.msra.mxu0 %v3388
  %4924 = vmatpush.bf16.msra.mxu0 %v3384
  %4925 = vmatpush.bf16.msra.mxu0 %v3380
  %4926 = vmatpush.bf16.msra.mxu0 %v3376
  %4927 = vmatmul.bf16.gmra.mxu0 %v48
  %v4928 = vpop.f32.mrf.mxu0
  %v4929 = vadd.f32 %v4916, %v4928
  %v4930 = vpop.f32.mrf.mxu0
  %4931 = vdwg.mxu0
  %4932 = vmatpush.bf16.msra.mxu0 %v3436
  %4933 = vmatpush.bf16.msra.mxu0 %v3432
  %4934 = vmatpush.bf16.msra.mxu0 %v3428
  %4935 = vmatpush.bf16.msra.mxu0 %v3424
  %4936 = vmatpush.bf16.msra.mxu0 %v3420
  %4937 = vmatpush.bf16.msra.mxu0 %v3416
  %4938 = vmatpush.bf16.msra.mxu0 %v3412
  %4939 = vmatpush.bf16.msra.mxu0 %v3408
  %4940 = vmatmul.bf16.gmra.mxu0 %v49
  %v4941 = vpop.f32.mrf.mxu0
  %v4942 = vadd.f32 %v4929, %v4941
  %v4943 = vpop.f32.mrf.mxu0
  %4944 = vdwg.mxu0
  %4945 = vmatpush.bf16.msra.mxu0 %v3468
  %4946 = vmatpush.bf16.msra.mxu0 %v3464
  %4947 = vmatpush.bf16.msra.mxu0 %v3460
  %4948 = vmatpush.bf16.msra.mxu0 %v3456
  %4949 = vmatpush.bf16.msra.mxu0 %v3452
  %4950 = vmatpush.bf16.msra.mxu0 %v3448
  %4951 = vmatpush.bf16.msra.mxu0 %v3444
  %4952 = vmatpush.bf16.msra.mxu0 %v3440
  %4953 = vmatmul.bf16.gmra.mxu0 %v50
  %v4954 = vpop.f32.mrf.mxu0
  %v4955 = vadd.f32 %v4942, %v4954
  %v4956 = vpop.f32.mrf.mxu0
  %4957 = vdwg.mxu0
  %4958 = vmatpush.bf16.msra.mxu0 %v3500
  %4959 = vmatpush.bf16.msra.mxu0 %v3496
  %4960 = vmatpush.bf16.msra.mxu0 %v3492
  %4961 = vmatpush.bf16.msra.mxu0 %v3488
  %4962 = vmatpush.bf16.msra.mxu0 %v3484
  %4963 = vmatpush.bf16.msra.mxu0 %v3480
  %4964 = vmatpush.bf16.msra.mxu0 %v3476
  %4965 = vmatpush.bf16.msra.mxu0 %v3472
  %4966 = vmatmul.bf16.gmra.mxu0 %v51
  %v4967 = vpop.f32.mrf.mxu0
  %v4968 = vadd.f32 %v4955, %v4967
  %v4969 = vpop.f32.mrf.mxu0
  %4970 = vdwg.mxu0
  %4971 = vmatpush.bf16.msra.mxu0 %v3532
  %4972 = vmatpush.bf16.msra.mxu0 %v3528
  %4973 = vmatpush.bf16.msra.mxu0 %v3524
  %4974 = vmatpush.bf16.msra.mxu0 %v3520
  %4975 = vmatpush.bf16.msra.mxu0 %v3516
  %4976 = vmatpush.bf16.msra.mxu0 %v3512
  %4977 = vmatpush.bf16.msra.mxu0 %v3508
  %4978 = vmatpush.bf16.msra.mxu0 %v3504
  %4979 = vmatmul.bf16.gmra.mxu0 %v52
  %v4980 = vpop.f32.mrf.mxu0
  %v4981 = vadd.f32 %v4968, %v4980
  %v4982 = vpop.f32.mrf.mxu0
  %4983 = vdwg.mxu0
  %4984 = vmatpush.bf16.msra.mxu0 %v3564
  %4985 = vmatpush.bf16.msra.mxu0 %v3560
  %4986 = vmatpush.bf16.msra.mxu0 %v3556
  %4987 = vmatpush.bf16.msra.mxu0 %v3552
  %4988 = vmatpush.bf16.msra.mxu0 %v3548
  %4989 = vmatpush.bf16.msra.mxu0 %v3544
  %4990 = vmatpush.bf16.msra.mxu0 %v3540
  %4991 = vmatpush.bf16.msra.mxu0 %v3536
  %4992 = vmatmul.bf16.gmra.mxu0 %v53
  %v4993 = vpop.f32.mrf.mxu0
  %v4994 = vadd.f32 %v4981, %v4993
  %v4995 = vpop.f32.mrf.mxu0
  %4996 = vdwg.mxu0
  %4997 = vmatpush.bf16.msra.mxu0 %v3596
  %4998 = vmatpush.bf16.msra.mxu0 %v3592
  %4999 = vmatpush.bf16.msra.mxu0 %v3588
  %5000 = vmatpush.bf16.msra.mxu0 %v3584
  %5001 = vmatpush.bf16.msra.mxu0 %v3580
  %5002 = vmatpush.bf16.msra.mxu0 %v3576
  %5003 = vmatpush.bf16.msra.mxu0 %v3572
  %5004 = vmatpush.bf16.msra.mxu0 %v3568
  %5005 = vmatmul.bf16.gmra.mxu0 %v54
  %v5006 = vpop.f32.mrf.mxu0
  %v5007 = vadd.f32 %v4994, %v5006
  %v5008 = vpop.f32.mrf.mxu0
  %5009 = vdwg.mxu0
  %5010 = vmatpush.bf16.msra.mxu0 %v3628
  %5011 = vmatpush.bf16.msra.mxu0 %v3624
  %5012 = vmatpush.bf16.msra.mxu0 %v3620
  %5013 = vmatpush.bf16.msra.mxu0 %v3616
  %5014 = vmatpush.bf16.msra.mxu0 %v3612
  %5015 = vmatpush.bf16.msra.mxu0 %v3608
  %5016 = vmatpush.bf16.msra.mxu0 %v3604
  %5017 = vmatpush.bf16.msra.mxu0 %v3600
  %5018 = vmatmul.bf16.gmra.mxu0 %v55
  %v5019 = vpop.f32.mrf.mxu0
  %v5020 = vadd.f32 %v5007, %v5019
  %v5021 = vpop.f32.mrf.mxu0
  %5022 = vdwg.mxu0
  %5023 = vmatpush.bf16.msra.mxu0 %v3660
  %5024 = vmatpush.bf16.msra.mxu0 %v3656
  %5025 = vmatpush.bf16.msra.mxu0 %v3652
  %5026 = vmatpush.bf16.msra.mxu0 %v3648
  %5027 = vmatpush.bf16.msra.mxu0 %v3644
  %5028 = vmatpush.bf16.msra.mxu0 %v3640
  %5029 = vmatpush.bf16.msra.mxu0 %v3636
  %5030 = vmatpush.bf16.msra.mxu0 %v3632
  %5031 = vmatmul.bf16.gmra.mxu0 %v56
  %v5032 = vpop.f32.mrf.mxu0
  %v5033 = vadd.f32 %v5020, %v5032
  %v5034 = vpop.f32.mrf.mxu0
  %5035 = vdwg.mxu0
  %5036 = vmatpush.bf16.msra.mxu0 %v3692
  %5037 = vmatpush.bf16.msra.mxu0 %v3688
  %5038 = vmatpush.bf16.msra.mxu0 %v3684
  %5039 = vmatpush.bf16.msra.mxu0 %v3680
  %5040 = vmatpush.bf16.msra.mxu0 %v3676
  %5041 = vmatpush.bf16.msra.mxu0 %v3672
  %5042 = vmatpush.bf16.msra.mxu0 %v3668
  %5043 = vmatpush.bf16.msra.mxu0 %v3664
  %5044 = vmatmul.bf16.gmra.mxu0 %v57
  %v5045 = vpop.f32.mrf.mxu0
  %v5046 = vadd.f32 %v5033, %v5045
  %v5047 = vpop.f32.mrf.mxu0
  %5048 = vdwg.mxu0
  %5049 = vmatpush.bf16.msra.mxu0 %v3724
  %5050 = vmatpush.bf16.msra.mxu0 %v3720
  %5051 = vmatpush.bf16.msra.mxu0 %v3716
  %5052 = vmatpush.bf16.msra.mxu0 %v3712
  %5053 = vmatpush.bf16.msra.mxu0 %v3708
  %5054 = vmatpush.bf16.msra.mxu0 %v3704
  %5055 = vmatpush.bf16.msra.mxu0 %v3700
  %5056 = vmatpush.bf16.msra.mxu0 %v3696
  %5057 = vmatmul.bf16.gmra.mxu0 %v58
  %v5058 = vpop.f32.mrf.mxu0
  %v5059 = vadd.f32 %v5046, %v5058
  %v5060 = vpop.f32.mrf.mxu0
  %5061 = vdwg.mxu0
  %5062 = vmatpush.bf16.msra.mxu0 %v3756
  %5063 = vmatpush.bf16.msra.mxu0 %v3752
  %5064 = vmatpush.bf16.msra.mxu0 %v3748
  %5065 = vmatpush.bf16.msra.mxu0 %v3744
  %5066 = vmatpush.bf16.msra.mxu0 %v3740
  %5067 = vmatpush.bf16.msra.mxu0 %v3736
  %5068 = vmatpush.bf16.msra.mxu0 %v3732
  %5069 = vmatpush.bf16.msra.mxu0 %v3728
  %5070 = vmatmul.bf16.gmra.mxu0 %v59
  %v5071 = vpop.f32.mrf.mxu0
  %v5072 = vadd.f32 %v5059, %v5071
  %v5073 = vpop.f32.mrf.mxu0
  %5074 = vdwg.mxu0
  %5075 = vmatpush.bf16.msra.mxu0 %v3788
  %5076 = vmatpush.bf16.msra.mxu0 %v3784
  %5077 = vmatpush.bf16.msra.mxu0 %v3780
  %5078 = vmatpush.bf16.msra.mxu0 %v3776
  %5079 = vmatpush.bf16.msra.mxu0 %v3772
  %5080 = vmatpush.bf16.msra.mxu0 %v3768
  %5081 = vmatpush.bf16.msra.mxu0 %v3764
  %5082 = vmatpush.bf16.msra.mxu0 %v3760
  %5083 = vmatmul.bf16.gmra.mxu0 %v60
  %v5084 = vpop.f32.mrf.mxu0
  %v5085 = vadd.f32 %v5072, %v5084
  %v5086 = vpop.f32.mrf.mxu0
  %5087 = vdwg.mxu0
  %5088 = vmatpush.bf16.msra.mxu0 %v3820
  %5089 = vmatpush.bf16.msra.mxu0 %v3816
  %5090 = vmatpush.bf16.msra.mxu0 %v3812
  %5091 = vmatpush.bf16.msra.mxu0 %v3808
  %5092 = vmatpush.bf16.msra.mxu0 %v3804
  %5093 = vmatpush.bf16.msra.mxu0 %v3800
  %5094 = vmatpush.bf16.msra.mxu0 %v3796
  %5095 = vmatpush.bf16.msra.mxu0 %v3792
  %5096 = vmatmul.bf16.gmra.mxu0 %v61
  %v5097 = vpop.f32.mrf.mxu0
  %v5098 = vadd.f32 %v5085, %v5097
  %v5099 = vpop.f32.mrf.mxu0
  %5100 = vdwg.mxu0
  %5101 = vmatpush.bf16.msra.mxu0 %v3852
  %5102 = vmatpush.bf16.msra.mxu0 %v3848
  %5103 = vmatpush.bf16.msra.mxu0 %v3844
  %5104 = vmatpush.bf16.msra.mxu0 %v3840
  %5105 = vmatpush.bf16.msra.mxu0 %v3836
  %5106 = vmatpush.bf16.msra.mxu0 %v3832
  %5107 = vmatpush.bf16.msra.mxu0 %v3828
  %5108 = vmatpush.bf16.msra.mxu0 %v3824
  %5109 = vmatmul.bf16.gmra.mxu0 %v62
  %v5110 = vpop.f32.mrf.mxu0
  %v5111 = vadd.f32 %v5098, %v5110
  %v5112 = vpop.f32.mrf.mxu0
  %5113 = vdwg.mxu0
  %5114 = vmatpush.bf16.msra.mxu0 %v3884
  %5115 = vmatpush.bf16.msra.mxu0 %v3880
  %5116 = vmatpush.bf16.msra.mxu0 %v3876
  %5117 = vmatpush.bf16.msra.mxu0 %v3872
  %5118 = vmatpush.bf16.msra.mxu0 %v3868
  %5119 = vmatpush.bf16.msra.mxu0 %v3864
  %5120 = vmatpush.bf16.msra.mxu0 %v3860
  %5121 = vmatpush.bf16.msra.mxu0 %v3856
  %5122 = vmatmul.bf16.gmra.mxu0 %v63
  %v5123 = vpop.f32.mrf.mxu0
  %v5124 = vadd.f32 %v5111, %v5123
  %v5125 = vpop.f32.mrf.mxu0
  %5126 = vdwg.mxu0
  %5127 = vmatpush.bf16.msra.mxu0 %v3916
  %5128 = vmatpush.bf16.msra.mxu0 %v3912
  %5129 = vmatpush.bf16.msra.mxu0 %v3908
  %5130 = vmatpush.bf16.msra.mxu0 %v3904
  %5131 = vmatpush.bf16.msra.mxu0 %v3900
  %5132 = vmatpush.bf16.msra.mxu0 %v3896
  %5133 = vmatpush.bf16.msra.mxu0 %v3892
  %5134 = vmatpush.bf16.msra.mxu0 %v3888
  %5135 = vmatmul.bf16.gmra.mxu0 %v64
  %v5136 = vpop.f32.mrf.mxu0
  %v5137 = vadd.f32 %v5124, %v5136
  %v5138 = vpop.f32.mrf.mxu0
  %5139 = vdwg.mxu0
  %5140 = vmatpush.bf16.msra.mxu0 %v3948
  %5141 = vmatpush.bf16.msra.mxu0 %v3944
  %5142 = vmatpush.bf16.msra.mxu0 %v3940
  %5143 = vmatpush.bf16.msra.mxu0 %v3936
  %5144 = vmatpush.bf16.msra.mxu0 %v3932
  %5145 = vmatpush.bf16.msra.mxu0 %v3928
  %5146 = vmatpush.bf16.msra.mxu0 %v3924
  %5147 = vmatpush.bf16.msra.mxu0 %v3920
  %5148 = vmatmul.bf16.gmra.mxu0 %v65
  %v5149 = vpop.f32.mrf.mxu0
  %v5150 = vadd.f32 %v5137, %v5149
  %v5151 = vpop.f32.mrf.mxu0
  %5152 = vdwg.mxu0
  %5153 = vmatpush.bf16.msra.mxu0 %v3980
  %5154 = vmatpush.bf16.msra.mxu0 %v3976
  %5155 = vmatpush.bf16.msra.mxu0 %v3972
  %5156 = vmatpush.bf16.msra.mxu0 %v3968
  %5157 = vmatpush.bf16.msra.mxu0 %v3964
  %5158 = vmatpush.bf16.msra.mxu0 %v3960
  %5159 = vmatpush.bf16.msra.mxu0 %v3956
  %5160 = vmatpush.bf16.msra.mxu0 %v3952
  %5161 = vmatmul.bf16.gmra.mxu0 %v66
  %v5162 = vpop.f32.mrf.mxu0
  %v5163 = vadd.f32 %v5150, %v5162
  %v5164 = vpop.f32.mrf.mxu0
  %5165 = vdwg.mxu0
  %5166 = vmatpush.bf16.msra.mxu0 %v4012
  %5167 = vmatpush.bf16.msra.mxu0 %v4008
  %5168 = vmatpush.bf16.msra.mxu0 %v4004
  %5169 = vmatpush.bf16.msra.mxu0 %v4000
  %5170 = vmatpush.bf16.msra.mxu0 %v3996
  %5171 = vmatpush.bf16.msra.mxu0 %v3992
  %5172 = vmatpush.bf16.msra.mxu0 %v3988
  %5173 = vmatpush.bf16.msra.mxu0 %v3984
  %5174 = vmatmul.bf16.gmra.mxu0 %v67
  %v5175 = vpop.f32.mrf.mxu0
  %v5176 = vadd.f32 %v5163, %v5175
  %v5177 = vpop.f32.mrf.mxu0
  %5178 = vdwg.mxu0
  %5179 = vmatpush.bf16.msra.mxu0 %v4044
  %5180 = vmatpush.bf16.msra.mxu0 %v4040
  %5181 = vmatpush.bf16.msra.mxu0 %v4036
  %5182 = vmatpush.bf16.msra.mxu0 %v4032
  %5183 = vmatpush.bf16.msra.mxu0 %v4028
  %5184 = vmatpush.bf16.msra.mxu0 %v4024
  %5185 = vmatpush.bf16.msra.mxu0 %v4020
  %5186 = vmatpush.bf16.msra.mxu0 %v4016
  %5187 = vmatmul.bf16.gmra.mxu0 %v68
  %v5188 = vpop.f32.mrf.mxu0
  %v5189 = vadd.f32 %v5176, %v5188
  %v5190 = vpop.f32.mrf.mxu0
  %5191 = vdwg.mxu0
  %5192 = vmatpush.bf16.msra.mxu0 %v4076
  %5193 = vmatpush.bf16.msra.mxu0 %v4072
  %5194 = vmatpush.bf16.msra.mxu0 %v4068
  %5195 = vmatpush.bf16.msra.mxu0 %v4064
  %5196 = vmatpush.bf16.msra.mxu0 %v4060
  %5197 = vmatpush.bf16.msra.mxu0 %v4056
  %5198 = vmatpush.bf16.msra.mxu0 %v4052
  %5199 = vmatpush.bf16.msra.mxu0 %v4048
  %5200 = vmatmul.bf16.gmra.mxu0 %v69
  %v5201 = vpop.f32.mrf.mxu0
  %v5202 = vadd.f32 %v5189, %v5201
  %v5203 = vpop.f32.mrf.mxu0
  %5204 = vdwg.mxu0
  %5205 = vmatpush.bf16.msra.mxu0 %v3309
  %5206 = vmatpush.bf16.msra.mxu0 %v3305
  %5207 = vmatpush.bf16.msra.mxu0 %v3301
  %5208 = vmatpush.bf16.msra.mxu0 %v3297
  %5209 = vmatpush.bf16.msra.mxu0 %v3293
  %5210 = vmatpush.bf16.msra.mxu0 %v3289
  %5211 = vmatpush.bf16.msra.mxu0 %v3285
  %5212 = vmatpush.bf16.msra.mxu0 %v3281
  %5213 = vmatmul.bf16.gmra.mxu0 %v45
  %v5214 = vpop.f32.mrf.mxu0
  %v5215 = vadd.f32 %v873, %v5214
  %v5216 = vpop.f32.mrf.mxu0
  %5217 = vdwg.mxu0
  %5218 = vmatpush.bf16.msra.mxu0 %v3341
  %5219 = vmatpush.bf16.msra.mxu0 %v3337
  %5220 = vmatpush.bf16.msra.mxu0 %v3333
  %5221 = vmatpush.bf16.msra.mxu0 %v3329
  %5222 = vmatpush.bf16.msra.mxu0 %v3325
  %5223 = vmatpush.bf16.msra.mxu0 %v3321
  %5224 = vmatpush.bf16.msra.mxu0 %v3317
  %5225 = vmatpush.bf16.msra.mxu0 %v3313
  %5226 = vmatmul.bf16.gmra.mxu0 %v46
  %v5227 = vpop.f32.mrf.mxu0
  %v5228 = vadd.f32 %v5215, %v5227
  %v5229 = vpop.f32.mrf.mxu0
  %5230 = vdwg.mxu0
  %5231 = vmatpush.bf16.msra.mxu0 %v3373
  %5232 = vmatpush.bf16.msra.mxu0 %v3369
  %5233 = vmatpush.bf16.msra.mxu0 %v3365
  %5234 = vmatpush.bf16.msra.mxu0 %v3361
  %5235 = vmatpush.bf16.msra.mxu0 %v3357
  %5236 = vmatpush.bf16.msra.mxu0 %v3353
  %5237 = vmatpush.bf16.msra.mxu0 %v3349
  %5238 = vmatpush.bf16.msra.mxu0 %v3345
  %5239 = vmatmul.bf16.gmra.mxu0 %v47
  %v5240 = vpop.f32.mrf.mxu0
  %v5241 = vadd.f32 %v5228, %v5240
  %v5242 = vpop.f32.mrf.mxu0
  %5243 = vdwg.mxu0
  %5244 = vmatpush.bf16.msra.mxu0 %v3405
  %5245 = vmatpush.bf16.msra.mxu0 %v3401
  %5246 = vmatpush.bf16.msra.mxu0 %v3397
  %5247 = vmatpush.bf16.msra.mxu0 %v3393
  %5248 = vmatpush.bf16.msra.mxu0 %v3389
  %5249 = vmatpush.bf16.msra.mxu0 %v3385
  %5250 = vmatpush.bf16.msra.mxu0 %v3381
  %5251 = vmatpush.bf16.msra.mxu0 %v3377
  %5252 = vmatmul.bf16.gmra.mxu0 %v48
  %v5253 = vpop.f32.mrf.mxu0
  %v5254 = vadd.f32 %v5241, %v5253
  %v5255 = vpop.f32.mrf.mxu0
  %5256 = vdwg.mxu0
  %5257 = vmatpush.bf16.msra.mxu0 %v3437
  %5258 = vmatpush.bf16.msra.mxu0 %v3433
  %5259 = vmatpush.bf16.msra.mxu0 %v3429
  %5260 = vmatpush.bf16.msra.mxu0 %v3425
  %5261 = vmatpush.bf16.msra.mxu0 %v3421
  %5262 = vmatpush.bf16.msra.mxu0 %v3417
  %5263 = vmatpush.bf16.msra.mxu0 %v3413
  %5264 = vmatpush.bf16.msra.mxu0 %v3409
  %5265 = vmatmul.bf16.gmra.mxu0 %v49
  %v5266 = vpop.f32.mrf.mxu0
  %v5267 = vadd.f32 %v5254, %v5266
  %v5268 = vpop.f32.mrf.mxu0
  %5269 = vdwg.mxu0
  %5270 = vmatpush.bf16.msra.mxu0 %v3469
  %5271 = vmatpush.bf16.msra.mxu0 %v3465
  %5272 = vmatpush.bf16.msra.mxu0 %v3461
  %5273 = vmatpush.bf16.msra.mxu0 %v3457
  %5274 = vmatpush.bf16.msra.mxu0 %v3453
  %5275 = vmatpush.bf16.msra.mxu0 %v3449
  %5276 = vmatpush.bf16.msra.mxu0 %v3445
  %5277 = vmatpush.bf16.msra.mxu0 %v3441
  %5278 = vmatmul.bf16.gmra.mxu0 %v50
  %v5279 = vpop.f32.mrf.mxu0
  %v5280 = vadd.f32 %v5267, %v5279
  %v5281 = vpop.f32.mrf.mxu0
  %5282 = vdwg.mxu0
  %5283 = vmatpush.bf16.msra.mxu0 %v3501
  %5284 = vmatpush.bf16.msra.mxu0 %v3497
  %5285 = vmatpush.bf16.msra.mxu0 %v3493
  %5286 = vmatpush.bf16.msra.mxu0 %v3489
  %5287 = vmatpush.bf16.msra.mxu0 %v3485
  %5288 = vmatpush.bf16.msra.mxu0 %v3481
  %5289 = vmatpush.bf16.msra.mxu0 %v3477
  %5290 = vmatpush.bf16.msra.mxu0 %v3473
  %5291 = vmatmul.bf16.gmra.mxu0 %v51
  %v5292 = vpop.f32.mrf.mxu0
  %v5293 = vadd.f32 %v5280, %v5292
  %v5294 = vpop.f32.mrf.mxu0
  %5295 = vdwg.mxu0
  %5296 = vmatpush.bf16.msra.mxu0 %v3533
  %5297 = vmatpush.bf16.msra.mxu0 %v3529
  %5298 = vmatpush.bf16.msra.mxu0 %v3525
  %5299 = vmatpush.bf16.msra.mxu0 %v3521
  %5300 = vmatpush.bf16.msra.mxu0 %v3517
  %5301 = vmatpush.bf16.msra.mxu0 %v3513
  %5302 = vmatpush.bf16.msra.mxu0 %v3509
  %5303 = vmatpush.bf16.msra.mxu0 %v3505
  %5304 = vmatmul.bf16.gmra.mxu0 %v52
  %v5305 = vpop.f32.mrf.mxu0
  %v5306 = vadd.f32 %v5293, %v5305
  %v5307 = vpop.f32.mrf.mxu0
  %5308 = vdwg.mxu0
  %5309 = vmatpush.bf16.msra.mxu0 %v3565
  %5310 = vmatpush.bf16.msra.mxu0 %v3561
  %5311 = vmatpush.bf16.msra.mxu0 %v3557
  %5312 = vmatpush.bf16.msra.mxu0 %v3553
  %5313 = vmatpush.bf16.msra.mxu0 %v3549
  %5314 = vmatpush.bf16.msra.mxu0 %v3545
  %5315 = vmatpush.bf16.msra.mxu0 %v3541
  %5316 = vmatpush.bf16.msra.mxu0 %v3537
  %5317 = vmatmul.bf16.gmra.mxu0 %v53
  %v5318 = vpop.f32.mrf.mxu0
  %v5319 = vadd.f32 %v5306, %v5318
  %v5320 = vpop.f32.mrf.mxu0
  %5321 = vdwg.mxu0
  %5322 = vmatpush.bf16.msra.mxu0 %v3597
  %5323 = vmatpush.bf16.msra.mxu0 %v3593
  %5324 = vmatpush.bf16.msra.mxu0 %v3589
  %5325 = vmatpush.bf16.msra.mxu0 %v3585
  %5326 = vmatpush.bf16.msra.mxu0 %v3581
  %5327 = vmatpush.bf16.msra.mxu0 %v3577
  %5328 = vmatpush.bf16.msra.mxu0 %v3573
  %5329 = vmatpush.bf16.msra.mxu0 %v3569
  %5330 = vmatmul.bf16.gmra.mxu0 %v54
  %v5331 = vpop.f32.mrf.mxu0
  %v5332 = vadd.f32 %v5319, %v5331
  %v5333 = vpop.f32.mrf.mxu0
  %5334 = vdwg.mxu0
  %5335 = vmatpush.bf16.msra.mxu0 %v3629
  %5336 = vmatpush.bf16.msra.mxu0 %v3625
  %5337 = vmatpush.bf16.msra.mxu0 %v3621
  %5338 = vmatpush.bf16.msra.mxu0 %v3617
  %5339 = vmatpush.bf16.msra.mxu0 %v3613
  %5340 = vmatpush.bf16.msra.mxu0 %v3609
  %5341 = vmatpush.bf16.msra.mxu0 %v3605
  %5342 = vmatpush.bf16.msra.mxu0 %v3601
  %5343 = vmatmul.bf16.gmra.mxu0 %v55
  %v5344 = vpop.f32.mrf.mxu0
  %v5345 = vadd.f32 %v5332, %v5344
  %v5346 = vpop.f32.mrf.mxu0
  %5347 = vdwg.mxu0
  %5348 = vmatpush.bf16.msra.mxu0 %v3661
  %5349 = vmatpush.bf16.msra.mxu0 %v3657
  %5350 = vmatpush.bf16.msra.mxu0 %v3653
  %5351 = vmatpush.bf16.msra.mxu0 %v3649
  %5352 = vmatpush.bf16.msra.mxu0 %v3645
  %5353 = vmatpush.bf16.msra.mxu0 %v3641
  %5354 = vmatpush.bf16.msra.mxu0 %v3637
  %5355 = vmatpush.bf16.msra.mxu0 %v3633
  %5356 = vmatmul.bf16.gmra.mxu0 %v56
  %v5357 = vpop.f32.mrf.mxu0
  %v5358 = vadd.f32 %v5345, %v5357
  %v5359 = vpop.f32.mrf.mxu0
  %5360 = vdwg.mxu0
  %5361 = vmatpush.bf16.msra.mxu0 %v3693
  %5362 = vmatpush.bf16.msra.mxu0 %v3689
  %5363 = vmatpush.bf16.msra.mxu0 %v3685
  %5364 = vmatpush.bf16.msra.mxu0 %v3681
  %5365 = vmatpush.bf16.msra.mxu0 %v3677
  %5366 = vmatpush.bf16.msra.mxu0 %v3673
  %5367 = vmatpush.bf16.msra.mxu0 %v3669
  %5368 = vmatpush.bf16.msra.mxu0 %v3665
  %5369 = vmatmul.bf16.gmra.mxu0 %v57
  %v5370 = vpop.f32.mrf.mxu0
  %v5371 = vadd.f32 %v5358, %v5370
  %v5372 = vpop.f32.mrf.mxu0
  %5373 = vdwg.mxu0
  %5374 = vmatpush.bf16.msra.mxu0 %v3725
  %5375 = vmatpush.bf16.msra.mxu0 %v3721
  %5376 = vmatpush.bf16.msra.mxu0 %v3717
  %5377 = vmatpush.bf16.msra.mxu0 %v3713
  %5378 = vmatpush.bf16.msra.mxu0 %v3709
  %5379 = vmatpush.bf16.msra.mxu0 %v3705
  %5380 = vmatpush.bf16.msra.mxu0 %v3701
  %5381 = vmatpush.bf16.msra.mxu0 %v3697
  %5382 = vmatmul.bf16.gmra.mxu0 %v58
  %v5383 = vpop.f32.mrf.mxu0
  %v5384 = vadd.f32 %v5371, %v5383
  %v5385 = vpop.f32.mrf.mxu0
  %5386 = vdwg.mxu0
  %5387 = vmatpush.bf16.msra.mxu0 %v3757
  %5388 = vmatpush.bf16.msra.mxu0 %v3753
  %5389 = vmatpush.bf16.msra.mxu0 %v3749
  %5390 = vmatpush.bf16.msra.mxu0 %v3745
  %5391 = vmatpush.bf16.msra.mxu0 %v3741
  %5392 = vmatpush.bf16.msra.mxu0 %v3737
  %5393 = vmatpush.bf16.msra.mxu0 %v3733
  %5394 = vmatpush.bf16.msra.mxu0 %v3729
  %5395 = vmatmul.bf16.gmra.mxu0 %v59
  %v5396 = vpop.f32.mrf.mxu0
  %v5397 = vadd.f32 %v5384, %v5396
  %v5398 = vpop.f32.mrf.mxu0
  %5399 = vdwg.mxu0
  %5400 = vmatpush.bf16.msra.mxu0 %v3789
  %5401 = vmatpush.bf16.msra.mxu0 %v3785
  %5402 = vmatpush.bf16.msra.mxu0 %v3781
  %5403 = vmatpush.bf16.msra.mxu0 %v3777
  %5404 = vmatpush.bf16.msra.mxu0 %v3773
  %5405 = vmatpush.bf16.msra.mxu0 %v3769
  %5406 = vmatpush.bf16.msra.mxu0 %v3765
  %5407 = vmatpush.bf16.msra.mxu0 %v3761
  %5408 = vmatmul.bf16.gmra.mxu0 %v60
  %v5409 = vpop.f32.mrf.mxu0
  %v5410 = vadd.f32 %v5397, %v5409
  %v5411 = vpop.f32.mrf.mxu0
  %5412 = vdwg.mxu0
  %5413 = vmatpush.bf16.msra.mxu0 %v3821
  %5414 = vmatpush.bf16.msra.mxu0 %v3817
  %5415 = vmatpush.bf16.msra.mxu0 %v3813
  %5416 = vmatpush.bf16.msra.mxu0 %v3809
  %5417 = vmatpush.bf16.msra.mxu0 %v3805
  %5418 = vmatpush.bf16.msra.mxu0 %v3801
  %5419 = vmatpush.bf16.msra.mxu0 %v3797
  %5420 = vmatpush.bf16.msra.mxu0 %v3793
  %5421 = vmatmul.bf16.gmra.mxu0 %v61
  %v5422 = vpop.f32.mrf.mxu0
  %v5423 = vadd.f32 %v5410, %v5422
  %v5424 = vpop.f32.mrf.mxu0
  %5425 = vdwg.mxu0
  %5426 = vmatpush.bf16.msra.mxu0 %v3853
  %5427 = vmatpush.bf16.msra.mxu0 %v3849
  %5428 = vmatpush.bf16.msra.mxu0 %v3845
  %5429 = vmatpush.bf16.msra.mxu0 %v3841
  %5430 = vmatpush.bf16.msra.mxu0 %v3837
  %5431 = vmatpush.bf16.msra.mxu0 %v3833
  %5432 = vmatpush.bf16.msra.mxu0 %v3829
  %5433 = vmatpush.bf16.msra.mxu0 %v3825
  %5434 = vmatmul.bf16.gmra.mxu0 %v62
  %v5435 = vpop.f32.mrf.mxu0
  %v5436 = vadd.f32 %v5423, %v5435
  %v5437 = vpop.f32.mrf.mxu0
  %5438 = vdwg.mxu0
  %5439 = vmatpush.bf16.msra.mxu0 %v3885
  %5440 = vmatpush.bf16.msra.mxu0 %v3881
  %5441 = vmatpush.bf16.msra.mxu0 %v3877
  %5442 = vmatpush.bf16.msra.mxu0 %v3873
  %5443 = vmatpush.bf16.msra.mxu0 %v3869
  %5444 = vmatpush.bf16.msra.mxu0 %v3865
  %5445 = vmatpush.bf16.msra.mxu0 %v3861
  %5446 = vmatpush.bf16.msra.mxu0 %v3857
  %5447 = vmatmul.bf16.gmra.mxu0 %v63
  %v5448 = vpop.f32.mrf.mxu0
  %v5449 = vadd.f32 %v5436, %v5448
  %v5450 = vpop.f32.mrf.mxu0
  %5451 = vdwg.mxu0
  %5452 = vmatpush.bf16.msra.mxu0 %v3917
  %5453 = vmatpush.bf16.msra.mxu0 %v3913
  %5454 = vmatpush.bf16.msra.mxu0 %v3909
  %5455 = vmatpush.bf16.msra.mxu0 %v3905
  %5456 = vmatpush.bf16.msra.mxu0 %v3901
  %5457 = vmatpush.bf16.msra.mxu0 %v3897
  %5458 = vmatpush.bf16.msra.mxu0 %v3893
  %5459 = vmatpush.bf16.msra.mxu0 %v3889
  %5460 = vmatmul.bf16.gmra.mxu0 %v64
  %v5461 = vpop.f32.mrf.mxu0
  %v5462 = vadd.f32 %v5449, %v5461
  %v5463 = vpop.f32.mrf.mxu0
  %5464 = vdwg.mxu0
  %5465 = vmatpush.bf16.msra.mxu0 %v3949
  %5466 = vmatpush.bf16.msra.mxu0 %v3945
  %5467 = vmatpush.bf16.msra.mxu0 %v3941
  %5468 = vmatpush.bf16.msra.mxu0 %v3937
  %5469 = vmatpush.bf16.msra.mxu0 %v3933
  %5470 = vmatpush.bf16.msra.mxu0 %v3929
  %5471 = vmatpush.bf16.msra.mxu0 %v3925
  %5472 = vmatpush.bf16.msra.mxu0 %v3921
  %5473 = vmatmul.bf16.gmra.mxu0 %v65
  %v5474 = vpop.f32.mrf.mxu0
  %v5475 = vadd.f32 %v5462, %v5474
  %v5476 = vpop.f32.mrf.mxu0
  %5477 = vdwg.mxu0
  %5478 = vmatpush.bf16.msra.mxu0 %v3981
  %5479 = vmatpush.bf16.msra.mxu0 %v3977
  %5480 = vmatpush.bf16.msra.mxu0 %v3973
  %5481 = vmatpush.bf16.msra.mxu0 %v3969
  %5482 = vmatpush.bf16.msra.mxu0 %v3965
  %5483 = vmatpush.bf16.msra.mxu0 %v3961
  %5484 = vmatpush.bf16.msra.mxu0 %v3957
  %5485 = vmatpush.bf16.msra.mxu0 %v3953
  %5486 = vmatmul.bf16.gmra.mxu0 %v66
  %v5487 = vpop.f32.mrf.mxu0
  %v5488 = vadd.f32 %v5475, %v5487
  %v5489 = vpop.f32.mrf.mxu0
  %5490 = vdwg.mxu0
  %5491 = vmatpush.bf16.msra.mxu0 %v4013
  %5492 = vmatpush.bf16.msra.mxu0 %v4009
  %5493 = vmatpush.bf16.msra.mxu0 %v4005
  %5494 = vmatpush.bf16.msra.mxu0 %v4001
  %5495 = vmatpush.bf16.msra.mxu0 %v3997
  %5496 = vmatpush.bf16.msra.mxu0 %v3993
  %5497 = vmatpush.bf16.msra.mxu0 %v3989
  %5498 = vmatpush.bf16.msra.mxu0 %v3985
  %5499 = vmatmul.bf16.gmra.mxu0 %v67
  %v5500 = vpop.f32.mrf.mxu0
  %v5501 = vadd.f32 %v5488, %v5500
  %v5502 = vpop.f32.mrf.mxu0
  %5503 = vdwg.mxu0
  %5504 = vmatpush.bf16.msra.mxu0 %v4045
  %5505 = vmatpush.bf16.msra.mxu0 %v4041
  %5506 = vmatpush.bf16.msra.mxu0 %v4037
  %5507 = vmatpush.bf16.msra.mxu0 %v4033
  %5508 = vmatpush.bf16.msra.mxu0 %v4029
  %5509 = vmatpush.bf16.msra.mxu0 %v4025
  %5510 = vmatpush.bf16.msra.mxu0 %v4021
  %5511 = vmatpush.bf16.msra.mxu0 %v4017
  %5512 = vmatmul.bf16.gmra.mxu0 %v68
  %v5513 = vpop.f32.mrf.mxu0
  %v5514 = vadd.f32 %v5501, %v5513
  %v5515 = vpop.f32.mrf.mxu0
  %5516 = vdwg.mxu0
  %5517 = vmatpush.bf16.msra.mxu0 %v4077
  %5518 = vmatpush.bf16.msra.mxu0 %v4073
  %5519 = vmatpush.bf16.msra.mxu0 %v4069
  %5520 = vmatpush.bf16.msra.mxu0 %v4065
  %5521 = vmatpush.bf16.msra.mxu0 %v4061
  %5522 = vmatpush.bf16.msra.mxu0 %v4057
  %5523 = vmatpush.bf16.msra.mxu0 %v4053
  %5524 = vmatpush.bf16.msra.mxu0 %v4049
  %5525 = vmatmul.bf16.gmra.mxu0 %v69
  %v5526 = vpop.f32.mrf.mxu0
  %v5527 = vadd.f32 %v5514, %v5526
  %v5528 = vpop.f32.mrf.mxu0
  %5529 = vdwg.mxu0
  %5530 = vmatpush.bf16.msra.mxu0 %v3310
  %5531 = vmatpush.bf16.msra.mxu0 %v3306
  %5532 = vmatpush.bf16.msra.mxu0 %v3302
  %5533 = vmatpush.bf16.msra.mxu0 %v3298
  %5534 = vmatpush.bf16.msra.mxu0 %v3294
  %5535 = vmatpush.bf16.msra.mxu0 %v3290
  %5536 = vmatpush.bf16.msra.mxu0 %v3286
  %5537 = vmatpush.bf16.msra.mxu0 %v3282
  %5538 = vmatmul.bf16.gmra.mxu0 %v45
  %v5539 = vpop.f32.mrf.mxu0
  %v5540 = vadd.f32 %v874, %v5539
  %v5541 = vpop.f32.mrf.mxu0
  %5542 = vdwg.mxu0
  %5543 = vmatpush.bf16.msra.mxu0 %v3342
  %5544 = vmatpush.bf16.msra.mxu0 %v3338
  %5545 = vmatpush.bf16.msra.mxu0 %v3334
  %5546 = vmatpush.bf16.msra.mxu0 %v3330
  %5547 = vmatpush.bf16.msra.mxu0 %v3326
  %5548 = vmatpush.bf16.msra.mxu0 %v3322
  %5549 = vmatpush.bf16.msra.mxu0 %v3318
  %5550 = vmatpush.bf16.msra.mxu0 %v3314
  %5551 = vmatmul.bf16.gmra.mxu0 %v46
  %v5552 = vpop.f32.mrf.mxu0
  %v5553 = vadd.f32 %v5540, %v5552
  %v5554 = vpop.f32.mrf.mxu0
  %5555 = vdwg.mxu0
  %5556 = vmatpush.bf16.msra.mxu0 %v3374
  %5557 = vmatpush.bf16.msra.mxu0 %v3370
  %5558 = vmatpush.bf16.msra.mxu0 %v3366
  %5559 = vmatpush.bf16.msra.mxu0 %v3362
  %5560 = vmatpush.bf16.msra.mxu0 %v3358
  %5561 = vmatpush.bf16.msra.mxu0 %v3354
  %5562 = vmatpush.bf16.msra.mxu0 %v3350
  %5563 = vmatpush.bf16.msra.mxu0 %v3346
  %5564 = vmatmul.bf16.gmra.mxu0 %v47
  %v5565 = vpop.f32.mrf.mxu0
  %v5566 = vadd.f32 %v5553, %v5565
  %v5567 = vpop.f32.mrf.mxu0
  %5568 = vdwg.mxu0
  %5569 = vmatpush.bf16.msra.mxu0 %v3406
  %5570 = vmatpush.bf16.msra.mxu0 %v3402
  %5571 = vmatpush.bf16.msra.mxu0 %v3398
  %5572 = vmatpush.bf16.msra.mxu0 %v3394
  %5573 = vmatpush.bf16.msra.mxu0 %v3390
  %5574 = vmatpush.bf16.msra.mxu0 %v3386
  %5575 = vmatpush.bf16.msra.mxu0 %v3382
  %5576 = vmatpush.bf16.msra.mxu0 %v3378
  %5577 = vmatmul.bf16.gmra.mxu0 %v48
  %v5578 = vpop.f32.mrf.mxu0
  %v5579 = vadd.f32 %v5566, %v5578
  %v5580 = vpop.f32.mrf.mxu0
  %5581 = vdwg.mxu0
  %5582 = vmatpush.bf16.msra.mxu0 %v3438
  %5583 = vmatpush.bf16.msra.mxu0 %v3434
  %5584 = vmatpush.bf16.msra.mxu0 %v3430
  %5585 = vmatpush.bf16.msra.mxu0 %v3426
  %5586 = vmatpush.bf16.msra.mxu0 %v3422
  %5587 = vmatpush.bf16.msra.mxu0 %v3418
  %5588 = vmatpush.bf16.msra.mxu0 %v3414
  %5589 = vmatpush.bf16.msra.mxu0 %v3410
  %5590 = vmatmul.bf16.gmra.mxu0 %v49
  %v5591 = vpop.f32.mrf.mxu0
  %v5592 = vadd.f32 %v5579, %v5591
  %v5593 = vpop.f32.mrf.mxu0
  %5594 = vdwg.mxu0
  %5595 = vmatpush.bf16.msra.mxu0 %v3470
  %5596 = vmatpush.bf16.msra.mxu0 %v3466
  %5597 = vmatpush.bf16.msra.mxu0 %v3462
  %5598 = vmatpush.bf16.msra.mxu0 %v3458
  %5599 = vmatpush.bf16.msra.mxu0 %v3454
  %5600 = vmatpush.bf16.msra.mxu0 %v3450
  %5601 = vmatpush.bf16.msra.mxu0 %v3446
  %5602 = vmatpush.bf16.msra.mxu0 %v3442
  %5603 = vmatmul.bf16.gmra.mxu0 %v50
  %v5604 = vpop.f32.mrf.mxu0
  %v5605 = vadd.f32 %v5592, %v5604
  %v5606 = vpop.f32.mrf.mxu0
  %5607 = vdwg.mxu0
  %5608 = vmatpush.bf16.msra.mxu0 %v3502
  %5609 = vmatpush.bf16.msra.mxu0 %v3498
  %5610 = vmatpush.bf16.msra.mxu0 %v3494
  %5611 = vmatpush.bf16.msra.mxu0 %v3490
  %5612 = vmatpush.bf16.msra.mxu0 %v3486
  %5613 = vmatpush.bf16.msra.mxu0 %v3482
  %5614 = vmatpush.bf16.msra.mxu0 %v3478
  %5615 = vmatpush.bf16.msra.mxu0 %v3474
  %5616 = vmatmul.bf16.gmra.mxu0 %v51
  %v5617 = vpop.f32.mrf.mxu0
  %v5618 = vadd.f32 %v5605, %v5617
  %v5619 = vpop.f32.mrf.mxu0
  %5620 = vdwg.mxu0
  %5621 = vmatpush.bf16.msra.mxu0 %v3534
  %5622 = vmatpush.bf16.msra.mxu0 %v3530
  %5623 = vmatpush.bf16.msra.mxu0 %v3526
  %5624 = vmatpush.bf16.msra.mxu0 %v3522
  %5625 = vmatpush.bf16.msra.mxu0 %v3518
  %5626 = vmatpush.bf16.msra.mxu0 %v3514
  %5627 = vmatpush.bf16.msra.mxu0 %v3510
  %5628 = vmatpush.bf16.msra.mxu0 %v3506
  %5629 = vmatmul.bf16.gmra.mxu0 %v52
  %v5630 = vpop.f32.mrf.mxu0
  %v5631 = vadd.f32 %v5618, %v5630
  %v5632 = vpop.f32.mrf.mxu0
  %5633 = vdwg.mxu0
  %5634 = vmatpush.bf16.msra.mxu0 %v3566
  %5635 = vmatpush.bf16.msra.mxu0 %v3562
  %5636 = vmatpush.bf16.msra.mxu0 %v3558
  %5637 = vmatpush.bf16.msra.mxu0 %v3554
  %5638 = vmatpush.bf16.msra.mxu0 %v3550
  %5639 = vmatpush.bf16.msra.mxu0 %v3546
  %5640 = vmatpush.bf16.msra.mxu0 %v3542
  %5641 = vmatpush.bf16.msra.mxu0 %v3538
  %5642 = vmatmul.bf16.gmra.mxu0 %v53
  %v5643 = vpop.f32.mrf.mxu0
  %v5644 = vadd.f32 %v5631, %v5643
  %v5645 = vpop.f32.mrf.mxu0
  %5646 = vdwg.mxu0
  %5647 = vmatpush.bf16.msra.mxu0 %v3598
  %5648 = vmatpush.bf16.msra.mxu0 %v3594
  %5649 = vmatpush.bf16.msra.mxu0 %v3590
  %5650 = vmatpush.bf16.msra.mxu0 %v3586
  %5651 = vmatpush.bf16.msra.mxu0 %v3582
  %5652 = vmatpush.bf16.msra.mxu0 %v3578
  %5653 = vmatpush.bf16.msra.mxu0 %v3574
  %5654 = vmatpush.bf16.msra.mxu0 %v3570
  %5655 = vmatmul.bf16.gmra.mxu0 %v54
  %v5656 = vpop.f32.mrf.mxu0
  %v5657 = vadd.f32 %v5644, %v5656
  %v5658 = vpop.f32.mrf.mxu0
  %5659 = vdwg.mxu0
  %5660 = vmatpush.bf16.msra.mxu0 %v3630
  %5661 = vmatpush.bf16.msra.mxu0 %v3626
  %5662 = vmatpush.bf16.msra.mxu0 %v3622
  %5663 = vmatpush.bf16.msra.mxu0 %v3618
  %5664 = vmatpush.bf16.msra.mxu0 %v3614
  %5665 = vmatpush.bf16.msra.mxu0 %v3610
  %5666 = vmatpush.bf16.msra.mxu0 %v3606
  %5667 = vmatpush.bf16.msra.mxu0 %v3602
  %5668 = vmatmul.bf16.gmra.mxu0 %v55
  %v5669 = vpop.f32.mrf.mxu0
  %v5670 = vadd.f32 %v5657, %v5669
  %v5671 = vpop.f32.mrf.mxu0
  %5672 = vdwg.mxu0
  %5673 = vmatpush.bf16.msra.mxu0 %v3662
  %5674 = vmatpush.bf16.msra.mxu0 %v3658
  %5675 = vmatpush.bf16.msra.mxu0 %v3654
  %5676 = vmatpush.bf16.msra.mxu0 %v3650
  %5677 = vmatpush.bf16.msra.mxu0 %v3646
  %5678 = vmatpush.bf16.msra.mxu0 %v3642
  %5679 = vmatpush.bf16.msra.mxu0 %v3638
  %5680 = vmatpush.bf16.msra.mxu0 %v3634
  %5681 = vmatmul.bf16.gmra.mxu0 %v56
  %v5682 = vpop.f32.mrf.mxu0
  %v5683 = vadd.f32 %v5670, %v5682
  %v5684 = vpop.f32.mrf.mxu0
  %5685 = vdwg.mxu0
  %5686 = vmatpush.bf16.msra.mxu0 %v3694
  %5687 = vmatpush.bf16.msra.mxu0 %v3690
  %5688 = vmatpush.bf16.msra.mxu0 %v3686
  %5689 = vmatpush.bf16.msra.mxu0 %v3682
  %5690 = vmatpush.bf16.msra.mxu0 %v3678
  %5691 = vmatpush.bf16.msra.mxu0 %v3674
  %5692 = vmatpush.bf16.msra.mxu0 %v3670
  %5693 = vmatpush.bf16.msra.mxu0 %v3666
  %5694 = vmatmul.bf16.gmra.mxu0 %v57
  %v5695 = vpop.f32.mrf.mxu0
  %v5696 = vadd.f32 %v5683, %v5695
  %v5697 = vpop.f32.mrf.mxu0
  %5698 = vdwg.mxu0
  %5699 = vmatpush.bf16.msra.mxu0 %v3726
  %5700 = vmatpush.bf16.msra.mxu0 %v3722
  %5701 = vmatpush.bf16.msra.mxu0 %v3718
  %5702 = vmatpush.bf16.msra.mxu0 %v3714
  %5703 = vmatpush.bf16.msra.mxu0 %v3710
  %5704 = vmatpush.bf16.msra.mxu0 %v3706
  %5705 = vmatpush.bf16.msra.mxu0 %v3702
  %5706 = vmatpush.bf16.msra.mxu0 %v3698
  %5707 = vmatmul.bf16.gmra.mxu0 %v58
  %v5708 = vpop.f32.mrf.mxu0
  %v5709 = vadd.f32 %v5696, %v5708
  %v5710 = vpop.f32.mrf.mxu0
  %5711 = vdwg.mxu0
  %5712 = vmatpush.bf16.msra.mxu0 %v3758
  %5713 = vmatpush.bf16.msra.mxu0 %v3754
  %5714 = vmatpush.bf16.msra.mxu0 %v3750
  %5715 = vmatpush.bf16.msra.mxu0 %v3746
  %5716 = vmatpush.bf16.msra.mxu0 %v3742
  %5717 = vmatpush.bf16.msra.mxu0 %v3738
  %5718 = vmatpush.bf16.msra.mxu0 %v3734
  %5719 = vmatpush.bf16.msra.mxu0 %v3730
  %5720 = vmatmul.bf16.gmra.mxu0 %v59
  %v5721 = vpop.f32.mrf.mxu0
  %v5722 = vadd.f32 %v5709, %v5721
  %v5723 = vpop.f32.mrf.mxu0
  %5724 = vdwg.mxu0
  %5725 = vmatpush.bf16.msra.mxu0 %v3790
  %5726 = vmatpush.bf16.msra.mxu0 %v3786
  %5727 = vmatpush.bf16.msra.mxu0 %v3782
  %5728 = vmatpush.bf16.msra.mxu0 %v3778
  %5729 = vmatpush.bf16.msra.mxu0 %v3774
  %5730 = vmatpush.bf16.msra.mxu0 %v3770
  %5731 = vmatpush.bf16.msra.mxu0 %v3766
  %5732 = vmatpush.bf16.msra.mxu0 %v3762
  %5733 = vmatmul.bf16.gmra.mxu0 %v60
  %v5734 = vpop.f32.mrf.mxu0
  %v5735 = vadd.f32 %v5722, %v5734
  %v5736 = vpop.f32.mrf.mxu0
  %5737 = vdwg.mxu0
  %5738 = vmatpush.bf16.msra.mxu0 %v3822
  %5739 = vmatpush.bf16.msra.mxu0 %v3818
  %5740 = vmatpush.bf16.msra.mxu0 %v3814
  %5741 = vmatpush.bf16.msra.mxu0 %v3810
  %5742 = vmatpush.bf16.msra.mxu0 %v3806
  %5743 = vmatpush.bf16.msra.mxu0 %v3802
  %5744 = vmatpush.bf16.msra.mxu0 %v3798
  %5745 = vmatpush.bf16.msra.mxu0 %v3794
  %5746 = vmatmul.bf16.gmra.mxu0 %v61
  %v5747 = vpop.f32.mrf.mxu0
  %v5748 = vadd.f32 %v5735, %v5747
  %v5749 = vpop.f32.mrf.mxu0
  %5750 = vdwg.mxu0
  %5751 = vmatpush.bf16.msra.mxu0 %v3854
  %5752 = vmatpush.bf16.msra.mxu0 %v3850
  %5753 = vmatpush.bf16.msra.mxu0 %v3846
  %5754 = vmatpush.bf16.msra.mxu0 %v3842
  %5755 = vmatpush.bf16.msra.mxu0 %v3838
  %5756 = vmatpush.bf16.msra.mxu0 %v3834
  %5757 = vmatpush.bf16.msra.mxu0 %v3830
  %5758 = vmatpush.bf16.msra.mxu0 %v3826
  %5759 = vmatmul.bf16.gmra.mxu0 %v62
  %v5760 = vpop.f32.mrf.mxu0
  %v5761 = vadd.f32 %v5748, %v5760
  %v5762 = vpop.f32.mrf.mxu0
  %5763 = vdwg.mxu0
  %5764 = vmatpush.bf16.msra.mxu0 %v3886
  %5765 = vmatpush.bf16.msra.mxu0 %v3882
  %5766 = vmatpush.bf16.msra.mxu0 %v3878
  %5767 = vmatpush.bf16.msra.mxu0 %v3874
  %5768 = vmatpush.bf16.msra.mxu0 %v3870
  %5769 = vmatpush.bf16.msra.mxu0 %v3866
  %5770 = vmatpush.bf16.msra.mxu0 %v3862
  %5771 = vmatpush.bf16.msra.mxu0 %v3858
  %5772 = vmatmul.bf16.gmra.mxu0 %v63
  %v5773 = vpop.f32.mrf.mxu0
  %v5774 = vadd.f32 %v5761, %v5773
  %v5775 = vpop.f32.mrf.mxu0
  %5776 = vdwg.mxu0
  %5777 = vmatpush.bf16.msra.mxu0 %v3918
  %5778 = vmatpush.bf16.msra.mxu0 %v3914
  %5779 = vmatpush.bf16.msra.mxu0 %v3910
  %5780 = vmatpush.bf16.msra.mxu0 %v3906
  %5781 = vmatpush.bf16.msra.mxu0 %v3902
  %5782 = vmatpush.bf16.msra.mxu0 %v3898
  %5783 = vmatpush.bf16.msra.mxu0 %v3894
  %5784 = vmatpush.bf16.msra.mxu0 %v3890
  %5785 = vmatmul.bf16.gmra.mxu0 %v64
  %v5786 = vpop.f32.mrf.mxu0
  %v5787 = vadd.f32 %v5774, %v5786
  %v5788 = vpop.f32.mrf.mxu0
  %5789 = vdwg.mxu0
  %5790 = vmatpush.bf16.msra.mxu0 %v3950
  %5791 = vmatpush.bf16.msra.mxu0 %v3946
  %5792 = vmatpush.bf16.msra.mxu0 %v3942
  %5793 = vmatpush.bf16.msra.mxu0 %v3938
  %5794 = vmatpush.bf16.msra.mxu0 %v3934
  %5795 = vmatpush.bf16.msra.mxu0 %v3930
  %5796 = vmatpush.bf16.msra.mxu0 %v3926
  %5797 = vmatpush.bf16.msra.mxu0 %v3922
  %5798 = vmatmul.bf16.gmra.mxu0 %v65
  %v5799 = vpop.f32.mrf.mxu0
  %v5800 = vadd.f32 %v5787, %v5799
  %v5801 = vpop.f32.mrf.mxu0
  %5802 = vdwg.mxu0
  %5803 = vmatpush.bf16.msra.mxu0 %v3982
  %5804 = vmatpush.bf16.msra.mxu0 %v3978
  %5805 = vmatpush.bf16.msra.mxu0 %v3974
  %5806 = vmatpush.bf16.msra.mxu0 %v3970
  %5807 = vmatpush.bf16.msra.mxu0 %v3966
  %5808 = vmatpush.bf16.msra.mxu0 %v3962
  %5809 = vmatpush.bf16.msra.mxu0 %v3958
  %5810 = vmatpush.bf16.msra.mxu0 %v3954
  %5811 = vmatmul.bf16.gmra.mxu0 %v66
  %v5812 = vpop.f32.mrf.mxu0
  %v5813 = vadd.f32 %v5800, %v5812
  %v5814 = vpop.f32.mrf.mxu0
  %5815 = vdwg.mxu0
  %5816 = vmatpush.bf16.msra.mxu0 %v4014
  %5817 = vmatpush.bf16.msra.mxu0 %v4010
  %5818 = vmatpush.bf16.msra.mxu0 %v4006
  %5819 = vmatpush.bf16.msra.mxu0 %v4002
  %5820 = vmatpush.bf16.msra.mxu0 %v3998
  %5821 = vmatpush.bf16.msra.mxu0 %v3994
  %5822 = vmatpush.bf16.msra.mxu0 %v3990
  %5823 = vmatpush.bf16.msra.mxu0 %v3986
  %5824 = vmatmul.bf16.gmra.mxu0 %v67
  %v5825 = vpop.f32.mrf.mxu0
  %v5826 = vadd.f32 %v5813, %v5825
  %v5827 = vpop.f32.mrf.mxu0
  %5828 = vdwg.mxu0
  %5829 = vmatpush.bf16.msra.mxu0 %v4046
  %5830 = vmatpush.bf16.msra.mxu0 %v4042
  %5831 = vmatpush.bf16.msra.mxu0 %v4038
  %5832 = vmatpush.bf16.msra.mxu0 %v4034
  %5833 = vmatpush.bf16.msra.mxu0 %v4030
  %5834 = vmatpush.bf16.msra.mxu0 %v4026
  %5835 = vmatpush.bf16.msra.mxu0 %v4022
  %5836 = vmatpush.bf16.msra.mxu0 %v4018
  %5837 = vmatmul.bf16.gmra.mxu0 %v68
  %v5838 = vpop.f32.mrf.mxu0
  %v5839 = vadd.f32 %v5826, %v5838
  %v5840 = vpop.f32.mrf.mxu0
  %5841 = vdwg.mxu0
  %5842 = vmatpush.bf16.msra.mxu0 %v4078
  %5843 = vmatpush.bf16.msra.mxu0 %v4074
  %5844 = vmatpush.bf16.msra.mxu0 %v4070
  %5845 = vmatpush.bf16.msra.mxu0 %v4066
  %5846 = vmatpush.bf16.msra.mxu0 %v4062
  %5847 = vmatpush.bf16.msra.mxu0 %v4058
  %5848 = vmatpush.bf16.msra.mxu0 %v4054
  %5849 = vmatpush.bf16.msra.mxu0 %v4050
  %5850 = vmatmul.bf16.gmra.mxu0 %v69
  %v5851 = vpop.f32.mrf.mxu0
  %v5852 = vadd.f32 %v5839, %v5851
  %v5853 = vpop.f32.mrf.mxu0
  %5854 = vdwg.mxu0
  %5855 = vmatpush.bf16.msra.mxu0 %v3311
  %5856 = vmatpush.bf16.msra.mxu0 %v3307
  %5857 = vmatpush.bf16.msra.mxu0 %v3303
  %5858 = vmatpush.bf16.msra.mxu0 %v3299
  %5859 = vmatpush.bf16.msra.mxu0 %v3295
  %5860 = vmatpush.bf16.msra.mxu0 %v3291
  %5861 = vmatpush.bf16.msra.mxu0 %v3287
  %5862 = vmatpush.bf16.msra.mxu0 %v3283
  %5863 = vmatmul.bf16.gmra.mxu0 %v45
  %v5864 = vpop.f32.mrf.mxu0
  %v5865 = vadd.f32 %v875, %v5864
  %v5866 = vpop.f32.mrf.mxu0
  %5867 = vdwg.mxu0
  %5868 = vmatpush.bf16.msra.mxu0 %v3343
  %5869 = vmatpush.bf16.msra.mxu0 %v3339
  %5870 = vmatpush.bf16.msra.mxu0 %v3335
  %5871 = vmatpush.bf16.msra.mxu0 %v3331
  %5872 = vmatpush.bf16.msra.mxu0 %v3327
  %5873 = vmatpush.bf16.msra.mxu0 %v3323
  %5874 = vmatpush.bf16.msra.mxu0 %v3319
  %5875 = vmatpush.bf16.msra.mxu0 %v3315
  %5876 = vmatmul.bf16.gmra.mxu0 %v46
  %v5877 = vpop.f32.mrf.mxu0
  %v5878 = vadd.f32 %v5865, %v5877
  %v5879 = vpop.f32.mrf.mxu0
  %5880 = vdwg.mxu0
  %5881 = vmatpush.bf16.msra.mxu0 %v3375
  %5882 = vmatpush.bf16.msra.mxu0 %v3371
  %5883 = vmatpush.bf16.msra.mxu0 %v3367
  %5884 = vmatpush.bf16.msra.mxu0 %v3363
  %5885 = vmatpush.bf16.msra.mxu0 %v3359
  %5886 = vmatpush.bf16.msra.mxu0 %v3355
  %5887 = vmatpush.bf16.msra.mxu0 %v3351
  %5888 = vmatpush.bf16.msra.mxu0 %v3347
  %5889 = vmatmul.bf16.gmra.mxu0 %v47
  %v5890 = vpop.f32.mrf.mxu0
  %v5891 = vadd.f32 %v5878, %v5890
  %v5892 = vpop.f32.mrf.mxu0
  %5893 = vdwg.mxu0
  %5894 = vmatpush.bf16.msra.mxu0 %v3407
  %5895 = vmatpush.bf16.msra.mxu0 %v3403
  %5896 = vmatpush.bf16.msra.mxu0 %v3399
  %5897 = vmatpush.bf16.msra.mxu0 %v3395
  %5898 = vmatpush.bf16.msra.mxu0 %v3391
  %5899 = vmatpush.bf16.msra.mxu0 %v3387
  %5900 = vmatpush.bf16.msra.mxu0 %v3383
  %5901 = vmatpush.bf16.msra.mxu0 %v3379
  %5902 = vmatmul.bf16.gmra.mxu0 %v48
  %v5903 = vpop.f32.mrf.mxu0
  %v5904 = vadd.f32 %v5891, %v5903
  %v5905 = vpop.f32.mrf.mxu0
  %5906 = vdwg.mxu0
  %5907 = vmatpush.bf16.msra.mxu0 %v3439
  %5908 = vmatpush.bf16.msra.mxu0 %v3435
  %5909 = vmatpush.bf16.msra.mxu0 %v3431
  %5910 = vmatpush.bf16.msra.mxu0 %v3427
  %5911 = vmatpush.bf16.msra.mxu0 %v3423
  %5912 = vmatpush.bf16.msra.mxu0 %v3419
  %5913 = vmatpush.bf16.msra.mxu0 %v3415
  %5914 = vmatpush.bf16.msra.mxu0 %v3411
  %5915 = vmatmul.bf16.gmra.mxu0 %v49
  %v5916 = vpop.f32.mrf.mxu0
  %v5917 = vadd.f32 %v5904, %v5916
  %v5918 = vpop.f32.mrf.mxu0
  %5919 = vdwg.mxu0
  %5920 = vmatpush.bf16.msra.mxu0 %v3471
  %5921 = vmatpush.bf16.msra.mxu0 %v3467
  %5922 = vmatpush.bf16.msra.mxu0 %v3463
  %5923 = vmatpush.bf16.msra.mxu0 %v3459
  %5924 = vmatpush.bf16.msra.mxu0 %v3455
  %5925 = vmatpush.bf16.msra.mxu0 %v3451
  %5926 = vmatpush.bf16.msra.mxu0 %v3447
  %5927 = vmatpush.bf16.msra.mxu0 %v3443
  %5928 = vmatmul.bf16.gmra.mxu0 %v50
  %v5929 = vpop.f32.mrf.mxu0
  %v5930 = vadd.f32 %v5917, %v5929
  %v5931 = vpop.f32.mrf.mxu0
  %5932 = vdwg.mxu0
  %5933 = vmatpush.bf16.msra.mxu0 %v3503
  %5934 = vmatpush.bf16.msra.mxu0 %v3499
  %5935 = vmatpush.bf16.msra.mxu0 %v3495
  %5936 = vmatpush.bf16.msra.mxu0 %v3491
  %5937 = vmatpush.bf16.msra.mxu0 %v3487
  %5938 = vmatpush.bf16.msra.mxu0 %v3483
  %5939 = vmatpush.bf16.msra.mxu0 %v3479
  %5940 = vmatpush.bf16.msra.mxu0 %v3475
  %5941 = vmatmul.bf16.gmra.mxu0 %v51
  %v5942 = vpop.f32.mrf.mxu0
  %v5943 = vadd.f32 %v5930, %v5942
  %v5944 = vpop.f32.mrf.mxu0
  %5945 = vdwg.mxu0
  %5946 = vmatpush.bf16.msra.mxu0 %v3535
  %5947 = vmatpush.bf16.msra.mxu0 %v3531
  %5948 = vmatpush.bf16.msra.mxu0 %v3527
  %5949 = vmatpush.bf16.msra.mxu0 %v3523
  %5950 = vmatpush.bf16.msra.mxu0 %v3519
  %5951 = vmatpush.bf16.msra.mxu0 %v3515
  %5952 = vmatpush.bf16.msra.mxu0 %v3511
  %5953 = vmatpush.bf16.msra.mxu0 %v3507
  %5954 = vmatmul.bf16.gmra.mxu0 %v52
  %v5955 = vpop.f32.mrf.mxu0
  %v5956 = vadd.f32 %v5943, %v5955
  %v5957 = vpop.f32.mrf.mxu0
  %5958 = vdwg.mxu0
  %5959 = vmatpush.bf16.msra.mxu0 %v3567
  %5960 = vmatpush.bf16.msra.mxu0 %v3563
  %5961 = vmatpush.bf16.msra.mxu0 %v3559
  %5962 = vmatpush.bf16.msra.mxu0 %v3555
  %5963 = vmatpush.bf16.msra.mxu0 %v3551
  %5964 = vmatpush.bf16.msra.mxu0 %v3547
  %5965 = vmatpush.bf16.msra.mxu0 %v3543
  %5966 = vmatpush.bf16.msra.mxu0 %v3539
  %5967 = vmatmul.bf16.gmra.mxu0 %v53
  %v5968 = vpop.f32.mrf.mxu0
  %v5969 = vadd.f32 %v5956, %v5968
  %v5970 = vpop.f32.mrf.mxu0
  %5971 = vdwg.mxu0
  %5972 = vmatpush.bf16.msra.mxu0 %v3599
  %5973 = vmatpush.bf16.msra.mxu0 %v3595
  %5974 = vmatpush.bf16.msra.mxu0 %v3591
  %5975 = vmatpush.bf16.msra.mxu0 %v3587
  %5976 = vmatpush.bf16.msra.mxu0 %v3583
  %5977 = vmatpush.bf16.msra.mxu0 %v3579
  %5978 = vmatpush.bf16.msra.mxu0 %v3575
  %5979 = vmatpush.bf16.msra.mxu0 %v3571
  %5980 = vmatmul.bf16.gmra.mxu0 %v54
  %v5981 = vpop.f32.mrf.mxu0
  %v5982 = vadd.f32 %v5969, %v5981
  %v5983 = vpop.f32.mrf.mxu0
  %5984 = vdwg.mxu0
  %5985 = vmatpush.bf16.msra.mxu0 %v3631
  %5986 = vmatpush.bf16.msra.mxu0 %v3627
  %5987 = vmatpush.bf16.msra.mxu0 %v3623
  %5988 = vmatpush.bf16.msra.mxu0 %v3619
  %5989 = vmatpush.bf16.msra.mxu0 %v3615
  %5990 = vmatpush.bf16.msra.mxu0 %v3611
  %5991 = vmatpush.bf16.msra.mxu0 %v3607
  %5992 = vmatpush.bf16.msra.mxu0 %v3603
  %5993 = vmatmul.bf16.gmra.mxu0 %v55
  %v5994 = vpop.f32.mrf.mxu0
  %v5995 = vadd.f32 %v5982, %v5994
  %v5996 = vpop.f32.mrf.mxu0
  %5997 = vdwg.mxu0
  %5998 = vmatpush.bf16.msra.mxu0 %v3663
  %5999 = vmatpush.bf16.msra.mxu0 %v3659
  %6000 = vmatpush.bf16.msra.mxu0 %v3655
  %6001 = vmatpush.bf16.msra.mxu0 %v3651
  %6002 = vmatpush.bf16.msra.mxu0 %v3647
  %6003 = vmatpush.bf16.msra.mxu0 %v3643
  %6004 = vmatpush.bf16.msra.mxu0 %v3639
  %6005 = vmatpush.bf16.msra.mxu0 %v3635
  %6006 = vmatmul.bf16.gmra.mxu0 %v56
  %v6007 = vpop.f32.mrf.mxu0
  %v6008 = vadd.f32 %v5995, %v6007
  %v6009 = vpop.f32.mrf.mxu0
  %6010 = vdwg.mxu0
  %6011 = vmatpush.bf16.msra.mxu0 %v3695
  %6012 = vmatpush.bf16.msra.mxu0 %v3691
  %6013 = vmatpush.bf16.msra.mxu0 %v3687
  %6014 = vmatpush.bf16.msra.mxu0 %v3683
  %6015 = vmatpush.bf16.msra.mxu0 %v3679
  %6016 = vmatpush.bf16.msra.mxu0 %v3675
  %6017 = vmatpush.bf16.msra.mxu0 %v3671
  %6018 = vmatpush.bf16.msra.mxu0 %v3667
  %6019 = vmatmul.bf16.gmra.mxu0 %v57
  %v6020 = vpop.f32.mrf.mxu0
  %v6021 = vadd.f32 %v6008, %v6020
  %v6022 = vpop.f32.mrf.mxu0
  %6023 = vdwg.mxu0
  %6024 = vmatpush.bf16.msra.mxu0 %v3727
  %6025 = vmatpush.bf16.msra.mxu0 %v3723
  %6026 = vmatpush.bf16.msra.mxu0 %v3719
  %6027 = vmatpush.bf16.msra.mxu0 %v3715
  %6028 = vmatpush.bf16.msra.mxu0 %v3711
  %6029 = vmatpush.bf16.msra.mxu0 %v3707
  %6030 = vmatpush.bf16.msra.mxu0 %v3703
  %6031 = vmatpush.bf16.msra.mxu0 %v3699
  %6032 = vmatmul.bf16.gmra.mxu0 %v58
  %v6033 = vpop.f32.mrf.mxu0
  %v6034 = vadd.f32 %v6021, %v6033
  %v6035 = vpop.f32.mrf.mxu0
  %6036 = vdwg.mxu0
  %6037 = vmatpush.bf16.msra.mxu0 %v3759
  %6038 = vmatpush.bf16.msra.mxu0 %v3755
  %6039 = vmatpush.bf16.msra.mxu0 %v3751
  %6040 = vmatpush.bf16.msra.mxu0 %v3747
  %6041 = vmatpush.bf16.msra.mxu0 %v3743
  %6042 = vmatpush.bf16.msra.mxu0 %v3739
  %6043 = vmatpush.bf16.msra.mxu0 %v3735
  %6044 = vmatpush.bf16.msra.mxu0 %v3731
  %6045 = vmatmul.bf16.gmra.mxu0 %v59
  %v6046 = vpop.f32.mrf.mxu0
  %v6047 = vadd.f32 %v6034, %v6046
  %v6048 = vpop.f32.mrf.mxu0
  %6049 = vdwg.mxu0
  %6050 = vmatpush.bf16.msra.mxu0 %v3791
  %6051 = vmatpush.bf16.msra.mxu0 %v3787
  %6052 = vmatpush.bf16.msra.mxu0 %v3783
  %6053 = vmatpush.bf16.msra.mxu0 %v3779
  %6054 = vmatpush.bf16.msra.mxu0 %v3775
  %6055 = vmatpush.bf16.msra.mxu0 %v3771
  %6056 = vmatpush.bf16.msra.mxu0 %v3767
  %6057 = vmatpush.bf16.msra.mxu0 %v3763
  %6058 = vmatmul.bf16.gmra.mxu0 %v60
  %v6059 = vpop.f32.mrf.mxu0
  %v6060 = vadd.f32 %v6047, %v6059
  %v6061 = vpop.f32.mrf.mxu0
  %6062 = vdwg.mxu0
  %6063 = vmatpush.bf16.msra.mxu0 %v3823
  %6064 = vmatpush.bf16.msra.mxu0 %v3819
  %6065 = vmatpush.bf16.msra.mxu0 %v3815
  %6066 = vmatpush.bf16.msra.mxu0 %v3811
  %6067 = vmatpush.bf16.msra.mxu0 %v3807
  %6068 = vmatpush.bf16.msra.mxu0 %v3803
  %6069 = vmatpush.bf16.msra.mxu0 %v3799
  %6070 = vmatpush.bf16.msra.mxu0 %v3795
  %6071 = vmatmul.bf16.gmra.mxu0 %v61
  %v6072 = vpop.f32.mrf.mxu0
  %v6073 = vadd.f32 %v6060, %v6072
  %v6074 = vpop.f32.mrf.mxu0
  %6075 = vdwg.mxu0
  %6076 = vmatpush.bf16.msra.mxu0 %v3855
  %6077 = vmatpush.bf16.msra.mxu0 %v3851
  %6078 = vmatpush.bf16.msra.mxu0 %v3847
  %6079 = vmatpush.bf16.msra.mxu0 %v3843
  %6080 = vmatpush.bf16.msra.mxu0 %v3839
  %6081 = vmatpush.bf16.msra.mxu0 %v3835
  %6082 = vmatpush.bf16.msra.mxu0 %v3831
  %6083 = vmatpush.bf16.msra.mxu0 %v3827
  %6084 = vmatmul.bf16.gmra.mxu0 %v62
  %v6085 = vpop.f32.mrf.mxu0
  %v6086 = vadd.f32 %v6073, %v6085
  %v6087 = vpop.f32.mrf.mxu0
  %6088 = vdwg.mxu0
  %6089 = vmatpush.bf16.msra.mxu0 %v3887
  %6090 = vmatpush.bf16.msra.mxu0 %v3883
  %6091 = vmatpush.bf16.msra.mxu0 %v3879
  %6092 = vmatpush.bf16.msra.mxu0 %v3875
  %6093 = vmatpush.bf16.msra.mxu0 %v3871
  %6094 = vmatpush.bf16.msra.mxu0 %v3867
  %6095 = vmatpush.bf16.msra.mxu0 %v3863
  %6096 = vmatpush.bf16.msra.mxu0 %v3859
  %6097 = vmatmul.bf16.gmra.mxu0 %v63
  %v6098 = vpop.f32.mrf.mxu0
  %v6099 = vadd.f32 %v6086, %v6098
  %v6100 = vpop.f32.mrf.mxu0
  %6101 = vdwg.mxu0
  %6102 = vmatpush.bf16.msra.mxu0 %v3919
  %6103 = vmatpush.bf16.msra.mxu0 %v3915
  %6104 = vmatpush.bf16.msra.mxu0 %v3911
  %6105 = vmatpush.bf16.msra.mxu0 %v3907
  %6106 = vmatpush.bf16.msra.mxu0 %v3903
  %6107 = vmatpush.bf16.msra.mxu0 %v3899
  %6108 = vmatpush.bf16.msra.mxu0 %v3895
  %6109 = vmatpush.bf16.msra.mxu0 %v3891
  %6110 = vmatmul.bf16.gmra.mxu0 %v64
  %v6111 = vpop.f32.mrf.mxu0
  %v6112 = vadd.f32 %v6099, %v6111
  %v6113 = vpop.f32.mrf.mxu0
  %6114 = vdwg.mxu0
  %6115 = vmatpush.bf16.msra.mxu0 %v3951
  %6116 = vmatpush.bf16.msra.mxu0 %v3947
  %6117 = vmatpush.bf16.msra.mxu0 %v3943
  %6118 = vmatpush.bf16.msra.mxu0 %v3939
  %6119 = vmatpush.bf16.msra.mxu0 %v3935
  %6120 = vmatpush.bf16.msra.mxu0 %v3931
  %6121 = vmatpush.bf16.msra.mxu0 %v3927
  %6122 = vmatpush.bf16.msra.mxu0 %v3923
  %6123 = vmatmul.bf16.gmra.mxu0 %v65
  %v6124 = vpop.f32.mrf.mxu0
  %v6125 = vadd.f32 %v6112, %v6124
  %v6126 = vpop.f32.mrf.mxu0
  %6127 = vdwg.mxu0
  %6128 = vmatpush.bf16.msra.mxu0 %v3983
  %6129 = vmatpush.bf16.msra.mxu0 %v3979
  %6130 = vmatpush.bf16.msra.mxu0 %v3975
  %6131 = vmatpush.bf16.msra.mxu0 %v3971
  %6132 = vmatpush.bf16.msra.mxu0 %v3967
  %6133 = vmatpush.bf16.msra.mxu0 %v3963
  %6134 = vmatpush.bf16.msra.mxu0 %v3959
  %6135 = vmatpush.bf16.msra.mxu0 %v3955
  %6136 = vmatmul.bf16.gmra.mxu0 %v66
  %v6137 = vpop.f32.mrf.mxu0
  %v6138 = vadd.f32 %v6125, %v6137
  %v6139 = vpop.f32.mrf.mxu0
  %6140 = vdwg.mxu0
  %6141 = vmatpush.bf16.msra.mxu0 %v4015
  %6142 = vmatpush.bf16.msra.mxu0 %v4011
  %6143 = vmatpush.bf16.msra.mxu0 %v4007
  %6144 = vmatpush.bf16.msra.mxu0 %v4003
  %6145 = vmatpush.bf16.msra.mxu0 %v3999
  %6146 = vmatpush.bf16.msra.mxu0 %v3995
  %6147 = vmatpush.bf16.msra.mxu0 %v3991
  %6148 = vmatpush.bf16.msra.mxu0 %v3987
  %6149 = vmatmul.bf16.gmra.mxu0 %v67
  %v6150 = vpop.f32.mrf.mxu0
  %v6151 = vadd.f32 %v6138, %v6150
  %v6152 = vpop.f32.mrf.mxu0
  %6153 = vdwg.mxu0
  %6154 = vmatpush.bf16.msra.mxu0 %v4047
  %6155 = vmatpush.bf16.msra.mxu0 %v4043
  %6156 = vmatpush.bf16.msra.mxu0 %v4039
  %6157 = vmatpush.bf16.msra.mxu0 %v4035
  %6158 = vmatpush.bf16.msra.mxu0 %v4031
  %6159 = vmatpush.bf16.msra.mxu0 %v4027
  %6160 = vmatpush.bf16.msra.mxu0 %v4023
  %6161 = vmatpush.bf16.msra.mxu0 %v4019
  %6162 = vmatmul.bf16.gmra.mxu0 %v68
  %v6163 = vpop.f32.mrf.mxu0
  %v6164 = vadd.f32 %v6151, %v6163
  %v6165 = vpop.f32.mrf.mxu0
  %6166 = vdwg.mxu0
  %6167 = vmatpush.bf16.msra.mxu0 %v4079
  %6168 = vmatpush.bf16.msra.mxu0 %v4075
  %6169 = vmatpush.bf16.msra.mxu0 %v4071
  %6170 = vmatpush.bf16.msra.mxu0 %v4067
  %6171 = vmatpush.bf16.msra.mxu0 %v4063
  %6172 = vmatpush.bf16.msra.mxu0 %v4059
  %6173 = vmatpush.bf16.msra.mxu0 %v4055
  %6174 = vmatpush.bf16.msra.mxu0 %v4051
  %6175 = vmatmul.bf16.gmra.mxu0 %v69
  %v6176 = vpop.f32.mrf.mxu0
  %v6177 = vadd.f32 %v6164, %v6176
  %v6178 = vpop.f32.mrf.mxu0
  %6179 = vdwg.mxu0
  %v6180 = vmax.f32 %v5202, 0.0
  %v6181 = vmax.f32 %v5527, 0.0
  %v6182 = vmax.f32 %v5852, 0.0
  %v6183 = vmax.f32 %v6177, 0.0
  %v6184 = vpack.c.bf16 %v6180, %v6180
  %v6185 = vpack.c.bf16 %v6181, %v6181
  %v6186 = vpack.c.bf16 %v6182, %v6182
  %v6187 = vpack.c.bf16 %v6183, %v6183
  %v6188 = vld [vmem:[%s3] sm:$0xf]
  %v6189 = vld [vmem:[%s3 + $0x4] sm:$0xf]
  %v6190 = vld [vmem:[%s3 + $0x8] sm:$0xf]
  %v6191 = vld [vmem:[%s3 + $0xc] sm:$0xf]
  %v6192 = vld [vmem:[%s3 + $0x10] sm:$0xf]
  %v6193 = vld [vmem:[%s3 + $0x14] sm:$0xf]
  %v6194 = vld [vmem:[%s3 + $0x18] sm:$0xf]
  %v6195 = vld [vmem:[%s3 + $0x1c] sm:$0xf]
  %v6196 = vld [vmem:[%s3 + $0x20] sm:$0xf]
  %v6197 = vld [vmem:[%s3 + $0x24] sm:$0xf]
  %v6198 = vld [vmem:[%s3 + $0x28] sm:$0xf]
  %v6199 = vld [vmem:[%s3 + $0x2c] sm:$0xf]
  %v6200 = vld [vmem:[%s3 + $0x30] sm:$0xf]
  %v6201 = vld [vmem:[%s3 + $0x34] sm:$0xf]
  %v6202 = vld [vmem:[%s3 + $0x38] sm:$0xf]
  %v6203 = vld [vmem:[%s3 + $0x3c] sm:$0xf]
  %v6204 = vld [vmem:[%s3 + $0x40] sm:$0xf]
  %v6205 = vld [vmem:[%s3 + $0x44] sm:$0xf]
  %v6206 = vld [vmem:[%s3 + $0x48] sm:$0xf]
  %v6207 = vld [vmem:[%s3 + $0x4c] sm:$0xf]
  %v6208 = vld [vmem:[%s3 + $0x50] sm:$0xf]
  %v6209 = vld [vmem:[%s3 + $0x54] sm:$0xf]
  %v6210 = vld [vmem:[%s3 + $0x58] sm:$0xf]
  %v6211 = vld [vmem:[%s3 + $0x5c] sm:$0xf]
  %v6212 = vld [vmem:[%s3 + $0x60] sm:$0xf]
  %v6213 = vld [vmem:[%s3 + $0x64] sm:$0xf]
  %v6214 = vld [vmem:[%s3 + $0x68] sm:$0xf]
  %v6215 = vld [vmem:[%s3 + $0x6c] sm:$0xf]
  %v6216 = vld [vmem:[%s3 + $0x70] sm:$0xf]
  %v6217 = vld [vmem:[%s3 + $0x74] sm:$0xf]
  %v6218 = vld [vmem:[%s3 + $0x78] sm:$0xf]
  %v6219 = vld [vmem:[%s3 + $0x7c] sm:$0xf]
  %v6220 = vld [vmem:[%s3 + $0x80] sm:$0xf]
  %v6221 = vld [vmem:[%s3 + $0x84] sm:$0xf]
  %v6222 = vld [vmem:[%s3 + $0x88] sm:$0xf]
  %v6223 = vld [vmem:[%s3 + $0x8c] sm:$0xf]
  %v6224 = vld [vmem:[%s3 + $0x90] sm:$0xf]
  %v6225 = vld [vmem:[%s3 + $0x94] sm:$0xf]
  %v6226 = vld [vmem:[%s3 + $0x98] sm:$0xf]
  %v6227 = vld [vmem:[%s3 + $0x9c] sm:$0xf]
  %v6228 = vld [vmem:[%s3 + $0xa0] sm:$0xf]
  %v6229 = vld [vmem:[%s3 + $0xa4] sm:$0xf]
  %v6230 = vld [vmem:[%s3 + $0xa8] sm:$0xf]
  %v6231 = vld [vmem:[%s3 + $0xac] sm:$0xf]
  %v6232 = vld [vmem:[%s3 + $0xb0] sm:$0xf]
  %v6233 = vld [vmem:[%s3 + $0xb4] sm:$0xf]
  %v6234 = vld [vmem:[%s3 + $0xb8] sm:$0xf]
  %v6235 = vld [vmem:[%s3 + $0xbc] sm:$0xf]
  %v6236 = vld [vmem:[%s3 + $0xc0] sm:$0xf]
  %v6237 = vld [vmem:[%s3 + $0xc4] sm:$0xf]
  %v6238 = vld [vmem:[%s3 + $0xc8] sm:$0xf]
  %v6239 = vld [vmem:[%s3 + $0xcc] sm:$0xf]
  %v6240 = vld [vmem:[%s3 + $0xd0] sm:$0xf]
  %v6241 = vld [vmem:[%s3 + $0xd4] sm:$0xf]
  %v6242 = vld [vmem:[%s3 + $0xd8] sm:$0xf]
  %v6243 = vld [vmem:[%s3 + $0xdc] sm:$0xf]
  %v6244 = vld [vmem:[%s3 + $0xe0] sm:$0xf]
  %v6245 = vld [vmem:[%s3 + $0xe4] sm:$0xf]
  %v6246 = vld [vmem:[%s3 + $0xe8] sm:$0xf]
  %v6247 = vld [vmem:[%s3 + $0xec] sm:$0xf]
  %v6248 = vld [vmem:[%s3 + $0xf0] sm:$0xf]
  %v6249 = vld [vmem:[%s3 + $0xf4] sm:$0xf]
  %v6250 = vld [vmem:[%s3 + $0xf8] sm:$0xf]
  %v6251 = vld [vmem:[%s3 + $0xfc] sm:$0xf]
  %v6252 = vld [vmem:[%s4] sm:$0x1]
  %v6254 = vperm.slane %v6252, 0
  %v6320 = vunpack.c.l.b16 %v6188
  %v6321 = vunpack.c.l.b16 %v6189
  %v6322 = vunpack.c.l.b16 %v6190
  %v6323 = vunpack.c.l.b16 %v6191
  %v6324 = vunpack.c.l.b16 %v6192
  %v6325 = vunpack.c.l.b16 %v6193
  %v6326 = vunpack.c.l.b16 %v6194
  %v6327 = vunpack.c.l.b16 %v6195
  %v6328 = vunpack.c.l.b16 %v6196
  %v6329 = vunpack.c.l.b16 %v6197
  %v6330 = vunpack.c.l.b16 %v6198
  %v6331 = vunpack.c.l.b16 %v6199
  %v6332 = vunpack.c.l.b16 %v6200
  %v6333 = vunpack.c.l.b16 %v6201
  %v6334 = vunpack.c.l.b16 %v6202
  %v6335 = vunpack.c.l.b16 %v6203
  %v6336 = vunpack.c.l.b16 %v6204
  %v6337 = vunpack.c.l.b16 %v6205
  %v6338 = vunpack.c.l.b16 %v6206
  %v6339 = vunpack.c.l.b16 %v6207
  %v6340 = vunpack.c.l.b16 %v6208
  %v6341 = vunpack.c.l.b16 %v6209
  %v6342 = vunpack.c.l.b16 %v6210
  %v6343 = vunpack.c.l.b16 %v6211
  %v6344 = vunpack.c.l.b16 %v6212
  %v6345 = vunpack.c.l.b16 %v6213
  %v6346 = vunpack.c.l.b16 %v6214
  %v6347 = vunpack.c.l.b16 %v6215
  %v6348 = vunpack.c.l.b16 %v6216
  %v6349 = vunpack.c.l.b16 %v6217
  %v6350 = vunpack.c.l.b16 %v6218
  %v6351 = vunpack.c.l.b16 %v6219
  %v6352 = vunpack.c.l.b16 %v6220
  %v6353 = vunpack.c.l.b16 %v6221
  %v6354 = vunpack.c.l.b16 %v6222
  %v6355 = vunpack.c.l.b16 %v6223
  %v6356 = vunpack.c.l.b16 %v6224
  %v6357 = vunpack.c.l.b16 %v6225
  %v6358 = vunpack.c.l.b16 %v6226
  %v6359 = vunpack.c.l.b16 %v6227
  %v6360 = vunpack.c.l.b16 %v6228
  %v6361 = vunpack.c.l.b16 %v6229
  %v6362 = vunpack.c.l.b16 %v6230
  %v6363 = vunpack.c.l.b16 %v6231
  %v6364 = vunpack.c.l.b16 %v6232
  %v6365 = vunpack.c.l.b16 %v6233
  %v6366 = vunpack.c.l.b16 %v6234
  %v6367 = vunpack.c.l.b16 %v6235
  %v6368 = vunpack.c.l.b16 %v6236
  %v6369 = vunpack.c.l.b16 %v6237
  %v6370 = vunpack.c.l.b16 %v6238
  %v6371 = vunpack.c.l.b16 %v6239
  %v6372 = vunpack.c.l.b16 %v6240
  %v6373 = vunpack.c.l.b16 %v6241
  %v6374 = vunpack.c.l.b16 %v6242
  %v6375 = vunpack.c.l.b16 %v6243
  %v6376 = vunpack.c.l.b16 %v6244
  %v6377 = vunpack.c.l.b16 %v6245
  %v6378 = vunpack.c.l.b16 %v6246
  %v6379 = vunpack.c.l.b16 %v6247
  %v6380 = vunpack.c.l.b16 %v6248
  %v6381 = vunpack.c.l.b16 %v6249
  %v6382 = vunpack.c.l.b16 %v6250
  %v6383 = vunpack.c.l.b16 %v6251
  %v6384 = vpack.c.b16 %v6321, %v6320
  %v6385 = vpack.c.b16 %v6323, %v6322
  %v6386 = vpack.c.b16 %v6325, %v6324
  %v6387 = vpack.c.b16 %v6327, %v6326
  %v6388 = vpack.c.b16 %v6329, %v6328
  %v6389 = vpack.c.b16 %v6331, %v6330
  %v6390 = vpack.c.b16 %v6333, %v6332
  %v6391 = vpack.c.b16 %v6335, %v6334
  %v6392 = vpack.c.b16 %v6337, %v6336
  %v6393 = vpack.c.b16 %v6339, %v6338
  %v6394 = vpack.c.b16 %v6341, %v6340
  %v6395 = vpack.c.b16 %v6343, %v6342
  %v6396 = vpack.c.b16 %v6345, %v6344
  %v6397 = vpack.c.b16 %v6347, %v6346
  %v6398 = vpack.c.b16 %v6349, %v6348
  %v6399 = vpack.c.b16 %v6351, %v6350
  %v6400 = vpack.c.b16 %v6353, %v6352
  %v6401 = vpack.c.b16 %v6355, %v6354
  %v6402 = vpack.c.b16 %v6357, %v6356
  %v6403 = vpack.c.b16 %v6359, %v6358
  %v6404 = vpack.c.b16 %v6361, %v6360
  %v6405 = vpack.c.b16 %v6363, %v6362
  %v6406 = vpack.c.b16 %v6365, %v6364
  %v6407 = vpack.c.b16 %v6367, %v6366
  %v6408 = vpack.c.b16 %v6369, %v6368
  %v6409 = vpack.c.b16 %v6371, %v6370
  %v6410 = vpack.c.b16 %v6373, %v6372
  %v6411 = vpack.c.b16 %v6375, %v6374
  %v6412 = vpack.c.b16 %v6377, %v6376
  %v6413 = vpack.c.b16 %v6379, %v6378
  %v6414 = vpack.c.b16 %v6381, %v6380
  %v6415 = vpack.c.b16 %v6383, %v6382
  %6448 = vmatpush.bf16.msra.mxu0 %v6391
  %6449 = vmatpush.bf16.msra.mxu0 %v6390
  %6450 = vmatpush.bf16.msra.mxu0 %v6389
  %6451 = vmatpush.bf16.msra.mxu0 %v6388
  %6452 = vmatpush.bf16.msra.mxu0 %v6387
  %6453 = vmatpush.bf16.msra.mxu0 %v6386
  %6454 = vmatpush.bf16.msra.mxu0 %v6385
  %6455 = vmatpush.bf16.msra.mxu0 %v6384
  %6456 = vmatmul.bf16.gmra.mxu0 %v6184
  %v6457 = vpop.f32.mrf.mxu0
  %v6458 = vadd.f32 %v6254, %v6457
  %v6459 = vpop.f32.mrf.mxu0
  %6460 = vdwg.mxu0
  %6461 = vmatpush.bf16.msra.mxu0 %v6399
  %6462 = vmatpush.bf16.msra.mxu0 %v6398
  %6463 = vmatpush.bf16.msra.mxu0 %v6397
  %6464 = vmatpush.bf16.msra.mxu0 %v6396
  %6465 = vmatpush.bf16.msra.mxu0 %v6395
  %6466 = vmatpush.bf16.msra.mxu0 %v6394
  %6467 = vmatpush.bf16.msra.mxu0 %v6393
  %6468 = vmatpush.bf16.msra.mxu0 %v6392
  %6469 = vmatmul.bf16.gmra.mxu0 %v6185
  %v6470 = vpop.f32.mrf.mxu0
  %v6471 = vadd.f32 %v6458, %v6470
  %v6472 = vpop.f32.mrf.mxu0
  %6473 = vdwg.mxu0
  %6474 = vmatpush.bf16.msra.mxu0 %v6407
  %6475 = vmatpush.bf16.msra.mxu0 %v6406
  %6476 = vmatpush.bf16.msra.mxu0 %v6405
  %6477 = vmatpush.bf16.msra.mxu0 %v6404
  %6478 = vmatpush.bf16.msra.mxu0 %v6403
  %6479 = vmatpush.bf16.msra.mxu0 %v6402
  %6480 = vmatpush.bf16.msra.mxu0 %v6401
  %6481 = vmatpush.bf16.msra.mxu0 %v6400
  %6482 = vmatmul.bf16.gmra.mxu0 %v6186
  %v6483 = vpop.f32.mrf.mxu0
  %v6484 = vadd.f32 %v6471, %v6483
  %v6485 = vpop.f32.mrf.mxu0
  %6486 = vdwg.mxu0
  %6487 = vmatpush.bf16.msra.mxu0 %v6415
  %6488 = vmatpush.bf16.msra.mxu0 %v6414
  %6489 = vmatpush.bf16.msra.mxu0 %v6413
  %6490 = vmatpush.bf16.msra.mxu0 %v6412
  %6491 = vmatpush.bf16.msra.mxu0 %v6411
  %6492 = vmatpush.bf16.msra.mxu0 %v6410
  %6493 = vmatpush.bf16.msra.mxu0 %v6409
  %6494 = vmatpush.bf16.msra.mxu0 %v6408
  %6495 = vmatmul.bf16.gmra.mxu0 %v6187
  %v6496 = vpop.f32.mrf.mxu0
  %v6497 = vadd.f32 %v6484, %v6496
  %v6498 = vpop.f32.mrf.mxu0
  %6499 = vdwg.mxu0
  %6500 = vst [vmem:[%s5] sm:$0xff] %v6497
  // Predicated region
  $region22: #{noisy_dqn_forward.7} parent=0 // pred_check
    _
  $region23: #{noisy_dqn_forward.7} parent=0 // pred_check_branch
    %6502 = sbr.rel (0) target = $region25
  $region24: #{noisy_dqn_forward.7} parent=0 // pred_region
    _
  $region25: #{noisy_dqn_forward.7} parent=0 // pred_fallthru
    _
  // Predicated region
  $region26: #{noisy_dqn_forward.7} parent=0 // pred_check
    _
  $region27: #{noisy_dqn_forward.7} parent=0 // pred_check_branch
    %6504 = sbr.rel (0) target = $region29
  $region28: #{noisy_dqn_forward.7} parent=0 // pred_region
    _
  $region29: #{noisy_dqn_forward.7} parent=0 // pred_fallthru
    _

</llo_original>
